<compile_context>
chip_gen: v7x
topology: tpu7x:2x2x1
jax: 0.10.0
libtpu: 0.0.40
codegen_flags: <defaults>
</compile_context>

<pallas_src>
import math
from functools import partial

import numpy as np
import jax
import jax.numpy as jnp
from jax.experimental import pallas as pl
from jax.experimental.pallas import tpu as pltpu


def _gap(L):
    """Zero gap after each length-L block: gap >= 6 (k=7 halo) and (L+gap) % 8 == 0."""
    return ((L + 6 + 7) // 8) * 8 - L


# --------------------------------------------------------------------------
# Fused GLTB kernel: `chunk` batch elements per grid step
# --------------------------------------------------------------------------
def _gltb_kernel(xd_ref, xp_ref, w1_ref, w2_ref, wq_ref, wk_ref, wv_ref,
                 wfl_ref, wfa_ref, vec_ref, out_ref,
                 xgd_ref, locd_ref, attd_ref, xgp_ref, locp_ref, attp_ref,
                 *, chunk, l_d, l_p, p_d, p_p):
    f32 = jnp.float32
    bf16 = jnp.bfloat16
    n_d = chunk * p_d
    n_p = chunk * p_p

    vec = vec_ref[...]                               # (10, Cp) packed per-channel vectors
    b1, s1, t1 = vec[0:1], vec[1:2], vec[2:3]
    b2, s2, t2 = vec[3:4], vec[4:5], vec[5:6]
    bq, bk, bv = vec[6:7], vec[7:8], vec[8:9]
    bf = vec[9:10]

    w2 = w2_ref[...]
    wq, wk, wv = wq_ref[...], wk_ref[...], wv_ref[...]

    def zero_halo(ref, L, P):
        # Zero only the non-data rows (leading 8, per-block gap, trailing 8).
        W = ref.shape[1]
        g = P - L
        ref[pl.ds(0, 8), :] = jnp.zeros((8, W), ref.dtype)
        for i in range(chunk):
            ref[pl.ds(8 + i * P + L, g), :] = jnp.zeros((g, W), ref.dtype)
        ref[pl.ds(8 + chunk * P, 8), :] = jnp.zeros((8, W), ref.dtype)

    def stage_x(x_ref, xg_ref, L, P):
        zero_halo(xg_ref, L, P)
        for i in range(chunk):
            xg_ref[pl.ds(8 + i * P, L), :] = x_ref[i]

    def local_branch(xg_ref, n):
        # Conv1d(k=3, pad=1): 3 shifted (n, Cin) x (Cin, Cp) MXU matmuls over the
        # flattened chunk; zero gaps between blocks act as each sequence's padding.
        acc = jnp.dot(xg_ref[pl.ds(7, n), :].astype(bf16), w1_ref[0],
                      preferred_element_type=f32)
        acc = acc + jnp.dot(xg_ref[pl.ds(8, n), :].astype(bf16), w1_ref[1],
                            preferred_element_type=f32)
        acc = acc + jnp.dot(xg_ref[pl.ds(9, n), :].astype(bf16), w1_ref[2],
                            preferred_element_type=f32)
        y = jnp.maximum(acc + b1, 0.0) * s1 + t1                 # ReLU + folded BN1
        y = jnp.dot(y.astype(bf16), w2, preferred_element_type=f32) + b2   # Conv1d(k=1)
        return jnp.maximum(y, 0.0) * s2 + t2                     # ReLU + folded BN2

    def qkv(xg_ref, n):
        x = xg_ref[pl.ds(8, n), :].astype(bf16)
        q = jnp.dot(x, wq, preferred_element_type=f32) + bq
        k = jnp.dot(x, wk, preferred_element_type=f32) + bk
        v = jnp.dot(x, wv, preferred_element_type=f32) + bv
        return q, k, v

    def attend(q, k, v, Lq, Pq, Lkv, Pkv, att_ref):
        # softmax(Q K^T) V per batch element (the module applies NO 1/sqrt(d) scale)
        for i in range(chunk):
            qi = q[i * Pq:i * Pq + Lq, :].astype(bf16)
            ki = k[i * Pkv:i * Pkv + Lkv, :].astype(bf16)
            vi = v[i * Pkv:i * Pkv + Lkv, :].astype(bf16)
            s = jax.lax.dot_general(qi, ki, (((1,), (1,)), ((), ())),
                                    preferred_element_type=f32)
            s = s - jnp.max(s, axis=-1, keepdims=True)
            p = jnp.exp(s)
            a = p * pl.reciprocal(jnp.sum(p, axis=-1, keepdims=True), approx=True)
            att_ref[pl.ds(8 + i * Pq, Lq), :] = jnp.dot(
                a.astype(bf16), vi, preferred_element_type=f32)

    def fusion(loc_ref, att_ref, n):
        # Conv1d(k=7, pad=3) over concat([local, att], channel): never materialised,
        # 2x7 shifted matmuls read the zero-haloed scratches directly via pl.ds.
        acc = jnp.dot(loc_ref[pl.ds(5, n), :].astype(bf16), wfl_ref[0],
                      preferred_element_type=f32)
        acc = acc + jnp.dot(att_ref[pl.ds(5, n), :].astype(bf16), wfa_ref[0],
                            preferred_element_type=f32)
        for k in range(1, 7):
            acc = acc + jnp.dot(loc_ref[pl.ds(5 + k, n), :].astype(bf16), wfl_ref[k],
                                preferred_element_type=f32)
            acc = acc + jnp.dot(att_ref[pl.ds(5 + k, n), :].astype(bf16), wfa_ref[k],
                                preferred_element_type=f32)
        return acc + bf

    # ---- stage inputs into gapped, zero-haloed VMEM buffers ----------------
    stage_x(xd_ref, xgd_ref, l_d, p_d)
    stage_x(xp_ref, xgp_ref, l_p, p_p)
    zero_halo(locd_ref, l_d, p_d)
    zero_halo(attd_ref, l_d, p_d)
    zero_halo(locp_ref, l_p, p_p)
    zero_halo(attp_ref, l_p, p_p)

    # ---- local branch (flattened over the chunk) ----------------------------
    yd = local_branch(xgd_ref, n_d)
    yp = local_branch(xgp_ref, n_p)
    for i in range(chunk):
        locd_ref[pl.ds(8 + i * p_d, l_d), :] = yd[i * p_d:i * p_d + l_d, :]
        locp_ref[pl.ds(8 + i * p_p, l_p), :] = yp[i * p_p:i * p_p + l_p, :]

    # ---- cross attention -----------------------------------------------------
    qd, kd, vd = qkv(xgd_ref, n_d)
    qp, kp, vp = qkv(xgp_ref, n_p)
    attend(qd, kp, vp, l_d, p_d, l_p, p_p, attd_ref)   # attention(x_drug, x_protein)
    attend(qp, kd, vd, l_p, p_p, l_d, p_d, attp_ref)   # attention(x_protein, x_drug)

    # ---- fusion conv + single concatenated output ---------------------------
    od = fusion(locd_ref, attd_ref, n_d)
    op = fusion(locp_ref, attp_ref, n_p)
    for i in range(chunk):
        out_ref[i, pl.ds(0, l_d), :] = od[i * p_d:i * p_d + l_d, :].astype(out_ref.dtype)
        out_ref[i, pl.ds(l_d, l_p), :] = op[i * p_p:i * p_p + l_p, :].astype(out_ref.dtype)


# --------------------------------------------------------------------------
# Wrapper: BN folding, bf16 weight layouts, channel padding, pallas_call
# --------------------------------------------------------------------------
def gltb_forward(x_drug, x_protein, params, *, bn_eps=1e-5, chunk=None):
    """GLTB forward. x_drug: (B, L_d, Cin), x_protein: (B, L_p, Cin)."""
    f32, bf16 = jnp.float32, jnp.bfloat16
    B, L_d, Cin = x_drug.shape
    Bp, L_p, Cin_p = x_protein.shape
    assert B == Bp and Cin == Cin_p
    C = params["w1"].shape[0]

    # lane-dense channel padding: pad the output-channel dim to a multiple of 128
    # (zero weights/biases -> padded channels are exactly zero end to end).
    Cp = max(128, ((C + 127) // 128) * 128)

    def padc(a, axis):
        if Cp == C:
            return a
        widths = [(0, 0)] * a.ndim
        widths[axis] = (0, Cp - C)
        return jnp.pad(a, widths)

    # eval-mode BatchNorm folded to per-channel scale / bias
    s1 = params["g1"] / jnp.sqrt(params["v1"] + bn_eps)
    t1 = params["beta1"] - params["m1"] * s1
    s2 = params["g2"] / jnp.sqrt(params["v2"] + bn_eps)
    t2 = params["beta2"] - params["m2"] * s2
    vec = jnp.stack([padc(v.astype(f32), 0) for v in
                     (params["b1"], s1, t1, params["b2"], s2, t2,
                      params["bq"], params["bk"], params["bv"], params["bf"])],
                    axis=0)                                                    # (10, Cp)

    # weights -> bf16, matmul-friendly (in, out) layouts, channel-padded
    w1r = padc(jnp.transpose(params["w1"], (2, 1, 0)), 2).astype(bf16)         # (3, Cin, Cp)
    w2m = padc(padc(jnp.transpose(params["w2"][:, :, 0], (1, 0)), 0), 1).astype(bf16)
    wqm = padc(jnp.transpose(params["wq"], (1, 0)), 1).astype(bf16)            # (Cin, Cp)
    wkm = padc(jnp.transpose(params["wk"], (1, 0)), 1).astype(bf16)
    wvm = padc(jnp.transpose(params["wv"], (1, 0)), 1).astype(bf16)
    wf = params["wf"]                                                          # (C, 2C, 7)
    wfl = padc(padc(jnp.transpose(wf[:, :C, :], (2, 1, 0)), 1), 2).astype(bf16)  # (7,Cp,Cp)
    wfa = padc(padc(jnp.transpose(wf[:, C:, :], (2, 1, 0)), 1), 2).astype(bf16)

    # batch chunking: fold `chunk` batch elements into the matmul M dimension,
    # keeping >= 2 parallel grid steps when possible (v7x has 2 TensorCores).
    G_d, G_p = _gap(L_d), _gap(L_p)
    P_d, P_p = L_d + G_d, L_p + G_p
    if chunk is None:
        cap = max(1, min(256 // max(P_d, P_p), B if B < 2 else B // 2))
        chunk = max(d for d in range(1, cap + 1) if B % d == 0)
    assert B % chunk == 0
    steps = B // chunk

    out = pl.pallas_call(
        partial(_gltb_kernel, chunk=chunk, l_d=L_d, l_p=L_p, p_d=P_d, p_p=P_p),
        out_shape=jax.ShapeDtypeStruct((B, L_d + L_p, Cp), f32),
        grid=(steps,),
        in_specs=[
            pl.BlockSpec((chunk, L_d, Cin), lambda b: (b, 0, 0)),
            pl.BlockSpec((chunk, L_p, Cin), lambda b: (b, 0, 0)),
            pl.BlockSpec((3, Cin, Cp), lambda b: (0, 0, 0)),     # conv1 weight
            pl.BlockSpec((Cp, Cp), lambda b: (0, 0)),            # conv2 weight
            pl.BlockSpec((Cin, Cp), lambda b: (0, 0)),           # Wq
            pl.BlockSpec((Cin, Cp), lambda b: (0, 0)),           # Wk
            pl.BlockSpec((Cin, Cp), lambda b: (0, 0)),           # Wv
            pl.BlockSpec((7, Cp, Cp), lambda b: (0, 0, 0)),      # fusion W (local half)
            pl.BlockSpec((7, Cp, Cp), lambda b: (0, 0, 0)),      # fusion W (attn half)
            pl.BlockSpec((10, Cp), lambda b: (0, 0)),            # packed biases/BN
        ],
        out_specs=pl.BlockSpec((chunk, L_d + L_p, Cp), lambda b: (b, 0, 0)),
        scratch_shapes=[
            pltpu.VMEM((chunk * P_d + 16, Cin), f32),   # gapped x_drug
            pltpu.VMEM((chunk * P_d + 16, Cp), f32),    # gapped local_drug
            pltpu.VMEM((chunk * P_d + 16, Cp), f32),    # gapped att_drug
            pltpu.VMEM((chunk * P_p + 16, Cin), f32),   # gapped x_protein
            pltpu.VMEM((chunk * P_p + 16, Cp), f32),    # gapped local_protein
            pltpu.VMEM((chunk * P_p + 16, Cp), f32),    # gapped att_protein
        ],
        compiler_params=pltpu.CompilerParams(
            dimension_semantics=("parallel",),
            vmem_limit_bytes=48 * 1024 * 1024),
    )(x_drug.astype(f32), x_protein.astype(f32),
      w1r, w2m, wqm, wkm, wvm, wfl, wfa, vec)

    return out[..., :C] if Cp != C else out


# --------------------------------------------------------------------------
# Pure-JAX reference (mirrors the PyTorch module) for verification
# --------------------------------------------------------------------------
def _conv1d_ref(x, w, b, pad):
    B, L, _ = x.shape
    K = w.shape[-1]
    xp = jnp.pad(x, ((0, 0), (pad, pad), (0, 0)))
    y = jnp.zeros((B, L, w.shape[0]), jnp.float32)
    for k in range(K):
        y = y + jnp.einsum('blc,oc->blo', xp[:, k:k + L, :], w[:, :, k])
    return y + b


def _bn_ref(y, g, beta, mean, var, eps=1e-5):
    return (y - mean) * (g / jnp.sqrt(var + eps)) + beta


def gltb_reference(x_drug, x_protein, p):
    def local_branch(x):
        y = jax.nn.relu(_conv1d_ref(x, p["w1"], p["b1"], 1))
        y = _bn_ref(y, p["g1"], p["beta1"], p["m1"], p["v1"])
        y = jax.nn.relu(_conv1d_ref(y, p["w2"], p["b2"], 0))
        return _bn_ref(y, p["g2"], p["beta2"], p["m2"], p["v2"])

    def attention(xq, xkv):
        q = xq @ p["wq"].T + p["bq"]
        k = xkv @ p["wk"].T + p["bk"]
        v = xkv @ p["wv"].T + p["bv"]
        a = jax.nn.softmax(jnp.einsum('bld,bsd->bls', q, k), axis=-1)
        return jnp.einsum('bls,bsd->bld', a, v)

    ld, lp_ = local_branch(x_drug), local_branch(x_protein)
    ad, ap = attention(x_drug, x_protein), attention(x_protein, x_drug)
    od = _conv1d_ref(jnp.concatenate([ld, ad], axis=2), p["wf"], p["bf"], 3)
    op = _conv1d_ref(jnp.concatenate([lp_, ap], axis=2), p["wf"], p["bf"], 3)
    return jnp.concatenate([od, op], axis=1)


if __name__ == "__main__":
    B, L_d, L_p, Cin, C = 4, 16, 24, 32, 64
    keys = jax.random.split(jax.random.PRNGKey(0), 24)

    def uinit(k, shape, fan_in):
        bound = 1.0 / math.sqrt(fan_in)
        return jax.random.uniform(k, shape, jnp.float32, -bound, bound)

    params = {
        "w1": uinit(keys[0], (C, Cin, 3), Cin * 3),
        "b1": uinit(keys[1], (C,), Cin * 3),
        "w2": uinit(keys[2], (C, C, 1), C),
        "b2": uinit(keys[3], (C,), C),
        "g1": 1.0 + 0.1 * jax.random.normal(keys[4], (C,), jnp.float32),
        "beta1": 0.1 * jax.random.normal(keys[5], (C,), jnp.float32),
        "m1": 0.1 * jax.random.normal(keys[6], (C,), jnp.float32),
        "v1": 1.0 + 0.1 * jax.random.uniform(keys[7], (C,), jnp.float32),
        "g2": 1.0 + 0.1 * jax.random.normal(keys[8], (C,), jnp.float32),
        "beta2": 0.1 * jax.random.normal(keys[9], (C,), jnp.float32),
        "m2": 0.1 * jax.random.normal(keys[10], (C,), jnp.float32),
        "v2": 1.0 + 0.1 * jax.random.uniform(keys[11], (C,), jnp.float32),
        "wq": uinit(keys[12], (C, Cin), Cin),
        "bq": uinit(keys[13], (C,), Cin),
        "wk": uinit(keys[14], (C, Cin), Cin),
        "bk": uinit(keys[15], (C,), Cin),
        "wv": uinit(keys[16], (C, Cin), Cin),
        "bv": uinit(keys[17], (C,), Cin),
        "wf": uinit(keys[18], (C, 2 * C, 7), 2 * C * 7),
        "bf": uinit(keys[19], (C,), 2 * C * 7),
    }
    x_drug = jax.random.normal(keys[20], (B, L_d, Cin), jnp.float32)
    x_protein = jax.random.normal(keys[21], (B, L_p, Cin), jnp.float32)

    out = jax.jit(gltb_forward)(x_drug, x_protein, params)
    jax.block_until_ready(out)
    assert out.shape == (B, L_d + L_p, C)

    ref = gltb_reference(x_drug, x_protein, params)
    np.testing.assert_allclose(np.asarray(out), np.asarray(ref),
                               atol=3e-2, rtol=3e-2)
    print("KERNEL_OK")
</pallas_src>

<mosaic_0001>
module attributes {stable_mosaic.version = 11 : i64} {
  func.func @_gltb_kernel(%arg0: i32, %arg1: memref<2x16x32xf32, #tpu.memory_space<vmem>>, %arg2: memref<2x24x32xf32, #tpu.memory_space<vmem>>, %arg3: memref<3x32x128xbf16, #tpu.memory_space<vmem>>, %arg4: memref<128x128xbf16, #tpu.memory_space<vmem>>, %arg5: memref<32x128xbf16, #tpu.memory_space<vmem>>, %arg6: memref<32x128xbf16, #tpu.memory_space<vmem>>, %arg7: memref<32x128xbf16, #tpu.memory_space<vmem>>, %arg8: memref<7x128x128xbf16, #tpu.memory_space<vmem>>, %arg9: memref<7x128x128xbf16, #tpu.memory_space<vmem>>, %arg10: memref<10x128xf32, #tpu.memory_space<vmem>>, %arg11: memref<2x40x128xf32, #tpu.memory_space<vmem>>, %arg12: memref<64x32xf32, #tpu.memory_space<vmem>>, %arg13: memref<64x128xf32, #tpu.memory_space<vmem>>, %arg14: memref<64x128xf32, #tpu.memory_space<vmem>>, %arg15: memref<80x32xf32, #tpu.memory_space<vmem>>, %arg16: memref<80x128xf32, #tpu.memory_space<vmem>>, %arg17: memref<80x128xf32, #tpu.memory_space<vmem>>) attributes {dimension_semantics = [#tpu.dimension_semantics<parallel>], iteration_bounds = array<i64: 2>, scalar_prefetch = 0 : i64, scratch_operands = 6 : i64, tpu.core_type = #tpu.core_type<tc>, window_params = [{transform_indices = @transform_0, window_bounds = array<i64: 2, 16, 32>}, {transform_indices = @transform_1, window_bounds = array<i64: 2, 24, 32>}, {pipeline_mode = #tpu.pipeline_mode<synchronous>, transform_indices = @transform_2, window_bounds = array<i64: 3, 32, 128>}, {pipeline_mode = #tpu.pipeline_mode<synchronous>, transform_indices = @transform_3, window_bounds = array<i64: 128, 128>}, {pipeline_mode = #tpu.pipeline_mode<synchronous>, transform_indices = @transform_4, window_bounds = array<i64: 32, 128>}, {pipeline_mode = #tpu.pipeline_mode<synchronous>, transform_indices = @transform_5, window_bounds = array<i64: 32, 128>}, {pipeline_mode = #tpu.pipeline_mode<synchronous>, transform_indices = @transform_6, window_bounds = array<i64: 32, 128>}, {pipeline_mode = #tpu.pipeline_mode<synchronous>, transform_indices = @transform_7, window_bounds = array<i64: 7, 128, 128>}, {pipeline_mode = #tpu.pipeline_mode<synchronous>, transform_indices = @transform_8, window_bounds = array<i64: 7, 128, 128>}, {pipeline_mode = #tpu.pipeline_mode<synchronous>, transform_indices = @transform_9, window_bounds = array<i64: 10, 128>}, {transform_indices = @transform_10, window_bounds = array<i64: 2, 40, 128>}]} {
    %c0 = arith.constant 0 : index
    %c0_0 = arith.constant 0 : index
    %0 = vector.load %arg10[%c0, %c0_0] : memref<10x128xf32, #tpu.memory_space<vmem>>, vector<10x128xf32>
    %1 = vector.extract_strided_slice %0 {offsets = [0, 0], sizes = [1, 128], strides = [1, 1]} : vector<10x128xf32> to vector<1x128xf32>
    %2 = vector.extract_strided_slice %0 {offsets = [1, 0], sizes = [1, 128], strides = [1, 1]} : vector<10x128xf32> to vector<1x128xf32>
    %3 = vector.extract_strided_slice %0 {offsets = [2, 0], sizes = [1, 128], strides = [1, 1]} : vector<10x128xf32> to vector<1x128xf32>
    %4 = vector.extract_strided_slice %0 {offsets = [3, 0], sizes = [1, 128], strides = [1, 1]} : vector<10x128xf32> to vector<1x128xf32>
    %5 = vector.extract_strided_slice %0 {offsets = [4, 0], sizes = [1, 128], strides = [1, 1]} : vector<10x128xf32> to vector<1x128xf32>
    %6 = vector.extract_strided_slice %0 {offsets = [5, 0], sizes = [1, 128], strides = [1, 1]} : vector<10x128xf32> to vector<1x128xf32>
    %7 = vector.extract_strided_slice %0 {offsets = [6, 0], sizes = [1, 128], strides = [1, 1]} : vector<10x128xf32> to vector<1x128xf32>
    %8 = vector.extract_strided_slice %0 {offsets = [7, 0], sizes = [1, 128], strides = [1, 1]} : vector<10x128xf32> to vector<1x128xf32>
    %9 = vector.extract_strided_slice %0 {offsets = [8, 0], sizes = [1, 128], strides = [1, 1]} : vector<10x128xf32> to vector<1x128xf32>
    %10 = vector.extract_strided_slice %0 {offsets = [9, 0], sizes = [1, 128], strides = [1, 1]} : vector<10x128xf32> to vector<1x128xf32>
    %c0_1 = arith.constant 0 : index
    %c0_2 = arith.constant 0 : index
    %11 = vector.load %arg4[%c0_1, %c0_2] : memref<128x128xbf16, #tpu.memory_space<vmem>>, vector<128x128xbf16>
    %c0_3 = arith.constant 0 : index
    %c0_4 = arith.constant 0 : index
    %12 = vector.load %arg5[%c0_3, %c0_4] : memref<32x128xbf16, #tpu.memory_space<vmem>>, vector<32x128xbf16>
    %c0_5 = arith.constant 0 : index
    %c0_6 = arith.constant 0 : index
    %13 = vector.load %arg6[%c0_5, %c0_6] : memref<32x128xbf16, #tpu.memory_space<vmem>>, vector<32x128xbf16>
    %c0_7 = arith.constant 0 : index
    %c0_8 = arith.constant 0 : index
    %14 = vector.load %arg7[%c0_7, %c0_8] : memref<32x128xbf16, #tpu.memory_space<vmem>>, vector<32x128xbf16>
    %cst = arith.constant 0.000000e+00 : f32
    %15 = vector.broadcast %cst : f32 to vector<8x32xf32>
    %c0_9 = arith.constant 0 : index
    %c0_10 = arith.constant 0 : index
    %16 = vector.load %arg12[%c0_9, %c0_10] : memref<64x32xf32, #tpu.memory_space<vmem>>, vector<8x32xf32>
    tpu.vector_store %arg12[%c0_9, %c0_10], %15 {strides = array<i32>} : memref<64x32xf32, #tpu.memory_space<vmem>>, vector<8x32xf32>,
    %cst_11 = arith.constant 0.000000e+00 : f32
    %17 = vector.broadcast %cst_11 : f32 to vector<8x32xf32>
    %c24 = arith.constant 24 : index
    %c0_12 = arith.constant 0 : index
    %18 = vector.load %arg12[%c24, %c0_12] : memref<64x32xf32, #tpu.memory_space<vmem>>, vector<8x32xf32>
    tpu.vector_store %arg12[%c24, %c0_12], %17 {strides = array<i32>} : memref<64x32xf32, #tpu.memory_space<vmem>>, vector<8x32xf32>,
    %cst_13 = arith.constant 0.000000e+00 : f32
    %19 = vector.broadcast %cst_13 : f32 to vector<8x32xf32>
    %c48 = arith.constant 48 : index
    %c0_14 = arith.constant 0 : index
    %20 = vector.load %arg12[%c48, %c0_14] : memref<64x32xf32, #tpu.memory_space<vmem>>, vector<8x32xf32>
    tpu.vector_store %arg12[%c48, %c0_14], %19 {strides = array<i32>} : memref<64x32xf32, #tpu.memory_space<vmem>>, vector<8x32xf32>,
    %cst_15 = arith.constant 0.000000e+00 : f32
    %21 = vector.broadcast %cst_15 : f32 to vector<8x32xf32>
    %c56 = arith.constant 56 : index
    %c0_16 = arith.constant 0 : index
    %22 = vector.load %arg12[%c56, %c0_16] : memref<64x32xf32, #tpu.memory_space<vmem>>, vector<8x32xf32>
    tpu.vector_store %arg12[%c56, %c0_16], %21 {strides = array<i32>} : memref<64x32xf32, #tpu.memory_space<vmem>>, vector<8x32xf32>,
    %c0_17 = arith.constant 0 : index
    %c0_18 = arith.constant 0 : index
    %c0_19 = arith.constant 0 : index
    %23 = vector.load %arg1[%c0_17, %c0_18, %c0_19] : memref<2x16x32xf32, #tpu.memory_space<vmem>>, vector<1x16x32xf32>
    %24 = vector.shape_cast %23 : vector<1x16x32xf32> to vector<16x32xf32>
    %c8 = arith.constant 8 : index
    %c0_20 = arith.constant 0 : index
    %25 = vector.load %arg12[%c8, %c0_20] : memref<64x32xf32, #tpu.memory_space<vmem>>, vector<16x32xf32>
    tpu.vector_store %arg12[%c8, %c0_20], %24 {strides = array<i32>} : memref<64x32xf32, #tpu.memory_space<vmem>>, vector<16x32xf32>,
    %c1 = arith.constant 1 : index
    %c0_21 = arith.constant 0 : index
    %c0_22 = arith.constant 0 : index
    %26 = vector.load %arg1[%c1, %c0_21, %c0_22] : memref<2x16x32xf32, #tpu.memory_space<vmem>>, vector<1x16x32xf32>
    %27 = vector.shape_cast %26 : vector<1x16x32xf32> to vector<16x32xf32>
    %c32 = arith.constant 32 : index
    %c0_23 = arith.constant 0 : index
    %28 = vector.load %arg12[%c32, %c0_23] : memref<64x32xf32, #tpu.memory_space<vmem>>, vector<16x32xf32>
    tpu.vector_store %arg12[%c32, %c0_23], %27 {strides = array<i32>} : memref<64x32xf32, #tpu.memory_space<vmem>>, vector<16x32xf32>,
    %cst_24 = arith.constant 0.000000e+00 : f32
    %29 = vector.broadcast %cst_24 : f32 to vector<8x32xf32>
    %c0_25 = arith.constant 0 : index
    %c0_26 = arith.constant 0 : index
    %30 = vector.load %arg15[%c0_25, %c0_26] : memref<80x32xf32, #tpu.memory_space<vmem>>, vector<8x32xf32>
    tpu.vector_store %arg15[%c0_25, %c0_26], %29 {strides = array<i32>} : memref<80x32xf32, #tpu.memory_space<vmem>>, vector<8x32xf32>,
    %cst_27 = arith.constant 0.000000e+00 : f32
    %31 = vector.broadcast %cst_27 : f32 to vector<8x32xf32>
    %c32_28 = arith.constant 32 : index
    %c0_29 = arith.constant 0 : index
    %32 = vector.load %arg15[%c32_28, %c0_29] : memref<80x32xf32, #tpu.memory_space<vmem>>, vector<8x32xf32>
    tpu.vector_store %arg15[%c32_28, %c0_29], %31 {strides = array<i32>} : memref<80x32xf32, #tpu.memory_space<vmem>>, vector<8x32xf32>,
    %cst_30 = arith.constant 0.000000e+00 : f32
    %33 = vector.broadcast %cst_30 : f32 to vector<8x32xf32>
    %c64 = arith.constant 64 : index
    %c0_31 = arith.constant 0 : index
    %34 = vector.load %arg15[%c64, %c0_31] : memref<80x32xf32, #tpu.memory_space<vmem>>, vector<8x32xf32>
    tpu.vector_store %arg15[%c64, %c0_31], %33 {strides = array<i32>} : memref<80x32xf32, #tpu.memory_space<vmem>>, vector<8x32xf32>,
    %cst_32 = arith.constant 0.000000e+00 : f32
    %35 = vector.broadcast %cst_32 : f32 to vector<8x32xf32>
    %c72 = arith.constant 72 : index
    %c0_33 = arith.constant 0 : index
    %36 = vector.load %arg15[%c72, %c0_33] : memref<80x32xf32, #tpu.memory_space<vmem>>, vector<8x32xf32>
    tpu.vector_store %arg15[%c72, %c0_33], %35 {strides = array<i32>} : memref<80x32xf32, #tpu.memory_space<vmem>>, vector<8x32xf32>,
    %c0_34 = arith.constant 0 : index
    %c0_35 = arith.constant 0 : index
    %c0_36 = arith.constant 0 : index
    %37 = vector.load %arg2[%c0_34, %c0_35, %c0_36] : memref<2x24x32xf32, #tpu.memory_space<vmem>>, vector<1x24x32xf32>
    %38 = vector.shape_cast %37 : vector<1x24x32xf32> to vector<24x32xf32>
    %c8_37 = arith.constant 8 : index
    %c0_38 = arith.constant 0 : index
    %39 = vector.load %arg15[%c8_37, %c0_38] : memref<80x32xf32, #tpu.memory_space<vmem>>, vector<24x32xf32>
    tpu.vector_store %arg15[%c8_37, %c0_38], %38 {strides = array<i32>} : memref<80x32xf32, #tpu.memory_space<vmem>>, vector<24x32xf32>,
    %c1_39 = arith.constant 1 : index
    %c0_40 = arith.constant 0 : index
    %c0_41 = arith.constant 0 : index
    %40 = vector.load %arg2[%c1_39, %c0_40, %c0_41] : memref<2x24x32xf32, #tpu.memory_space<vmem>>, vector<1x24x32xf32>
    %41 = vector.shape_cast %40 : vector<1x24x32xf32> to vector<24x32xf32>
    %c40 = arith.constant 40 : index
    %c0_42 = arith.constant 0 : index
    %42 = vector.load %arg15[%c40, %c0_42] : memref<80x32xf32, #tpu.memory_space<vmem>>, vector<24x32xf32>
    tpu.vector_store %arg15[%c40, %c0_42], %41 {strides = array<i32>} : memref<80x32xf32, #tpu.memory_space<vmem>>, vector<24x32xf32>,
    %cst_43 = arith.constant 0.000000e+00 : f32
    %43 = vector.broadcast %cst_43 : f32 to vector<8x128xf32>
    %c0_44 = arith.constant 0 : index
    %c0_45 = arith.constant 0 : index
    %44 = vector.load %arg13[%c0_44, %c0_45] : memref<64x128xf32, #tpu.memory_space<vmem>>, vector<8x128xf32>
    tpu.vector_store %arg13[%c0_44, %c0_45], %43 {strides = array<i32>} : memref<64x128xf32, #tpu.memory_space<vmem>>, vector<8x128xf32>,
    %cst_46 = arith.constant 0.000000e+00 : f32
    %45 = vector.broadcast %cst_46 : f32 to vector<8x128xf32>
    %c24_47 = arith.constant 24 : index
    %c0_48 = arith.constant 0 : index
    %46 = vector.load %arg13[%c24_47, %c0_48] : memref<64x128xf32, #tpu.memory_space<vmem>>, vector<8x128xf32>
    tpu.vector_store %arg13[%c24_47, %c0_48], %45 {strides = array<i32>} : memref<64x128xf32, #tpu.memory_space<vmem>>, vector<8x128xf32>,
    %cst_49 = arith.constant 0.000000e+00 : f32
    %47 = vector.broadcast %cst_49 : f32 to vector<8x128xf32>
    %c48_50 = arith.constant 48 : index
    %c0_51 = arith.constant 0 : index
    %48 = vector.load %arg13[%c48_50, %c0_51] : memref<64x128xf32, #tpu.memory_space<vmem>>, vector<8x128xf32>
    tpu.vector_store %arg13[%c48_50, %c0_51], %47 {strides = array<i32>} : memref<64x128xf32, #tpu.memory_space<vmem>>, vector<8x128xf32>,
    %cst_52 = arith.constant 0.000000e+00 : f32
    %49 = vector.broadcast %cst_52 : f32 to vector<8x128xf32>
    %c56_53 = arith.constant 56 : index
    %c0_54 = arith.constant 0 : index
    %50 = vector.load %arg13[%c56_53, %c0_54] : memref<64x128xf32, #tpu.memory_space<vmem>>, vector<8x128xf32>
    tpu.vector_store %arg13[%c56_53, %c0_54], %49 {strides = array<i32>} : memref<64x128xf32, #tpu.memory_space<vmem>>, vector<8x128xf32>,
    %cst_55 = arith.constant 0.000000e+00 : f32
    %51 = vector.broadcast %cst_55 : f32 to vector<8x128xf32>
    %c0_56 = arith.constant 0 : index
    %c0_57 = arith.constant 0 : index
    %52 = vector.load %arg14[%c0_56, %c0_57] : memref<64x128xf32, #tpu.memory_space<vmem>>, vector<8x128xf32>
    tpu.vector_store %arg14[%c0_56, %c0_57], %51 {strides = array<i32>} : memref<64x128xf32, #tpu.memory_space<vmem>>, vector<8x128xf32>,
    %cst_58 = arith.constant 0.000000e+00 : f32
    %53 = vector.broadcast %cst_58 : f32 to vector<8x128xf32>
    %c24_59 = arith.constant 24 : index
    %c0_60 = arith.constant 0 : index
    %54 = vector.load %arg14[%c24_59, %c0_60] : memref<64x128xf32, #tpu.memory_space<vmem>>, vector<8x128xf32>
    tpu.vector_store %arg14[%c24_59, %c0_60], %53 {strides = array<i32>} : memref<64x128xf32, #tpu.memory_space<vmem>>, vector<8x128xf32>,
    %cst_61 = arith.constant 0.000000e+00 : f32
    %55 = vector.broadcast %cst_61 : f32 to vector<8x128xf32>
    %c48_62 = arith.constant 48 : index
    %c0_63 = arith.constant 0 : index
    %56 = vector.load %arg14[%c48_62, %c0_63] : memref<64x128xf32, #tpu.memory_space<vmem>>, vector<8x128xf32>
    tpu.vector_store %arg14[%c48_62, %c0_63], %55 {strides = array<i32>} : memref<64x128xf32, #tpu.memory_space<vmem>>, vector<8x128xf32>,
    %cst_64 = arith.constant 0.000000e+00 : f32
    %57 = vector.broadcast %cst_64 : f32 to vector<8x128xf32>
    %c56_65 = arith.constant 56 : index
    %c0_66 = arith.constant 0 : index
    %58 = vector.load %arg14[%c56_65, %c0_66] : memref<64x128xf32, #tpu.memory_space<vmem>>, vector<8x128xf32>
    tpu.vector_store %arg14[%c56_65, %c0_66], %57 {strides = array<i32>} : memref<64x128xf32, #tpu.memory_space<vmem>>, vector<8x128xf32>,
    %cst_67 = arith.constant 0.000000e+00 : f32
    %59 = vector.broadcast %cst_67 : f32 to vector<8x128xf32>
    %c0_68 = arith.constant 0 : index
    %c0_69 = arith.constant 0 : index
    %60 = vector.load %arg16[%c0_68, %c0_69] : memref<80x128xf32, #tpu.memory_space<vmem>>, vector<8x128xf32>
    tpu.vector_store %arg16[%c0_68, %c0_69], %59 {strides = array<i32>} : memref<80x128xf32, #tpu.memory_space<vmem>>, vector<8x128xf32>,
    %cst_70 = arith.constant 0.000000e+00 : f32
    %61 = vector.broadcast %cst_70 : f32 to vector<8x128xf32>
    %c32_71 = arith.constant 32 : index
    %c0_72 = arith.constant 0 : index
    %62 = vector.load %arg16[%c32_71, %c0_72] : memref<80x128xf32, #tpu.memory_space<vmem>>, vector<8x128xf32>
    tpu.vector_store %arg16[%c32_71, %c0_72], %61 {strides = array<i32>} : memref<80x128xf32, #tpu.memory_space<vmem>>, vector<8x128xf32>,
    %cst_73 = arith.constant 0.000000e+00 : f32
    %63 = vector.broadcast %cst_73 : f32 to vector<8x128xf32>
    %c64_74 = arith.constant 64 : index
    %c0_75 = arith.constant 0 : index
    %64 = vector.load %arg16[%c64_74, %c0_75] : memref<80x128xf32, #tpu.memory_space<vmem>>, vector<8x128xf32>
    tpu.vector_store %arg16[%c64_74, %c0_75], %63 {strides = array<i32>} : memref<80x128xf32, #tpu.memory_space<vmem>>, vector<8x128xf32>,
    %cst_76 = arith.constant 0.000000e+00 : f32
    %65 = vector.broadcast %cst_76 : f32 to vector<8x128xf32>
    %c72_77 = arith.constant 72 : index
    %c0_78 = arith.constant 0 : index
    %66 = vector.load %arg16[%c72_77, %c0_78] : memref<80x128xf32, #tpu.memory_space<vmem>>, vector<8x128xf32>
    tpu.vector_store %arg16[%c72_77, %c0_78], %65 {strides = array<i32>} : memref<80x128xf32, #tpu.memory_space<vmem>>, vector<8x128xf32>,
    %cst_79 = arith.constant 0.000000e+00 : f32
    %67 = vector.broadcast %cst_79 : f32 to vector<8x128xf32>
    %c0_80 = arith.constant 0 : index
    %c0_81 = arith.constant 0 : index
    %68 = vector.load %arg17[%c0_80, %c0_81] : memref<80x128xf32, #tpu.memory_space<vmem>>, vector<8x128xf32>
    tpu.vector_store %arg17[%c0_80, %c0_81], %67 {strides = array<i32>} : memref<80x128xf32, #tpu.memory_space<vmem>>, vector<8x128xf32>,
    %cst_82 = arith.constant 0.000000e+00 : f32
    %69 = vector.broadcast %cst_82 : f32 to vector<8x128xf32>
    %c32_83 = arith.constant 32 : index
    %c0_84 = arith.constant 0 : index
    %70 = vector.load %arg17[%c32_83, %c0_84] : memref<80x128xf32, #tpu.memory_space<vmem>>, vector<8x128xf32>
    tpu.vector_store %arg17[%c32_83, %c0_84], %69 {strides = array<i32>} : memref<80x128xf32, #tpu.memory_space<vmem>>, vector<8x128xf32>,
    %cst_85 = arith.constant 0.000000e+00 : f32
    %71 = vector.broadcast %cst_85 : f32 to vector<8x128xf32>
    %c64_86 = arith.constant 64 : index
    %c0_87 = arith.constant 0 : index
    %72 = vector.load %arg17[%c64_86, %c0_87] : memref<80x128xf32, #tpu.memory_space<vmem>>, vector<8x128xf32>
    tpu.vector_store %arg17[%c64_86, %c0_87], %71 {strides = array<i32>} : memref<80x128xf32, #tpu.memory_space<vmem>>, vector<8x128xf32>,
    %cst_88 = arith.constant 0.000000e+00 : f32
    %73 = vector.broadcast %cst_88 : f32 to vector<8x128xf32>
    %c72_89 = arith.constant 72 : index
    %c0_90 = arith.constant 0 : index
    %74 = vector.load %arg17[%c72_89, %c0_90] : memref<80x128xf32, #tpu.memory_space<vmem>>, vector<8x128xf32>
    tpu.vector_store %arg17[%c72_89, %c0_90], %73 {strides = array<i32>} : memref<80x128xf32, #tpu.memory_space<vmem>>, vector<8x128xf32>,
    %c7 = arith.constant 7 : index
    %c0_91 = arith.constant 0 : index
    %75 = vector.load %arg12[%c7, %c0_91] : memref<64x32xf32, #tpu.memory_space<vmem>>, vector<48x32xf32>
    %76 = arith.truncf %75 : vector<48x32xf32> to vector<48x32xbf16>
    %c0_92 = arith.constant 0 : index
    %c0_93 = arith.constant 0 : index
    %c0_94 = arith.constant 0 : index
    %77 = vector.load %arg3[%c0_92, %c0_93, %c0_94] : memref<3x32x128xbf16, #tpu.memory_space<vmem>>, vector<1x32x128xbf16>
    %78 = vector.shape_cast %77 : vector<1x32x128xbf16> to vector<32x128xbf16>
    %cst_95 = arith.constant dense<0.000000e+00> : vector<48x128xf32>
    %79 = tpu.matmul %76, %78, %cst_95 {dimension_numbers = #tpu.dot_dimension_numbers<[1], [0], [0], [1], [0, 0, 1, 1], [], []>} : vector<48x32xbf16>, vector<32x128xbf16>, vector<48x128xf32> -> vector<48x128xf32>
    %c8_96 = arith.constant 8 : index
    %c0_97 = arith.constant 0 : index
    %80 = vector.load %arg12[%c8_96, %c0_97] : memref<64x32xf32, #tpu.memory_space<vmem>>, vector<48x32xf32>
    %81 = arith.truncf %80 : vector<48x32xf32> to vector<48x32xbf16>
    %c1_98 = arith.constant 1 : index
    %c0_99 = arith.constant 0 : index
    %c0_100 = arith.constant 0 : index
    %82 = vector.load %arg3[%c1_98, %c0_99, %c0_100] : memref<3x32x128xbf16, #tpu.memory_space<vmem>>, vector<1x32x128xbf16>
    %83 = vector.shape_cast %82 : vector<1x32x128xbf16> to vector<32x128xbf16>
    %cst_101 = arith.constant dense<0.000000e+00> : vector<48x128xf32>
    %84 = tpu.matmul %81, %83, %cst_101 {dimension_numbers = #tpu.dot_dimension_numbers<[1], [0], [0], [1], [0, 0, 1, 1], [], []>} : vector<48x32xbf16>, vector<32x128xbf16>, vector<48x128xf32> -> vector<48x128xf32>
    %85 = arith.addf %79, %84 : vector<48x128xf32>
    %c9 = arith.constant 9 : index
    %c0_102 = arith.constant 0 : index
    %86 = vector.load %arg12[%c9, %c0_102] : memref<64x32xf32, #tpu.memory_space<vmem>>, vector<48x32xf32>
    %87 = arith.truncf %86 : vector<48x32xf32> to vector<48x32xbf16>
    %c2 = arith.constant 2 : index
    %c0_103 = arith.constant 0 : index
    %c0_104 = arith.constant 0 : index
    %88 = vector.load %arg3[%c2, %c0_103, %c0_104] : memref<3x32x128xbf16, #tpu.memory_space<vmem>>, vector<1x32x128xbf16>
    %89 = vector.shape_cast %88 : vector<1x32x128xbf16> to vector<32x128xbf16>
    %cst_105 = arith.constant dense<0.000000e+00> : vector<48x128xf32>
    %90 = tpu.matmul %87, %89, %cst_105 {dimension_numbers = #tpu.dot_dimension_numbers<[1], [0], [0], [1], [0, 0, 1, 1], [], []>} : vector<48x32xbf16>, vector<32x128xbf16>, vector<48x128xf32> -> vector<48x128xf32>
    %91 = arith.addf %85, %90 : vector<48x128xf32>
    %92 = vector.broadcast %1 : vector<1x128xf32> to vector<48x128xf32>
    %93 = arith.addf %91, %92 : vector<48x128xf32>
    %cst_106 = arith.constant 0.000000e+00 : f32
    %94 = vector.broadcast %cst_106 : f32 to vector<48x128xf32>
    %95 = arith.maximumf %93, %94 : vector<48x128xf32>
    %96 = vector.broadcast %2 : vector<1x128xf32> to vector<48x128xf32>
    %97 = arith.mulf %95, %96 : vector<48x128xf32>
    %98 = vector.broadcast %3 : vector<1x128xf32> to vector<48x128xf32>
    %99 = arith.addf %97, %98 : vector<48x128xf32>
    %100 = arith.truncf %99 : vector<48x128xf32> to vector<48x128xbf16>
    %cst_107 = arith.constant dense<0.000000e+00> : vector<48x128xf32>
    %101 = tpu.matmul %100, %11, %cst_107 {dimension_numbers = #tpu.dot_dimension_numbers<[1], [0], [0], [1], [0, 0, 1, 1], [], []>} : vector<48x128xbf16>, vector<128x128xbf16>, vector<48x128xf32> -> vector<48x128xf32>
    %102 = vector.broadcast %4 : vector<1x128xf32> to vector<48x128xf32>
    %103 = arith.addf %101, %102 : vector<48x128xf32>
    %cst_108 = arith.constant 0.000000e+00 : f32
    %104 = vector.broadcast %cst_108 : f32 to vector<48x128xf32>
    %105 = arith.maximumf %103, %104 : vector<48x128xf32>
    %106 = vector.broadcast %5 : vector<1x128xf32> to vector<48x128xf32>
    %107 = arith.mulf %105, %106 : vector<48x128xf32>
    %108 = vector.broadcast %6 : vector<1x128xf32> to vector<48x128xf32>
    %109 = arith.addf %107, %108 : vector<48x128xf32>
    %c7_109 = arith.constant 7 : index
    %c0_110 = arith.constant 0 : index
    %110 = vector.load %arg15[%c7_109, %c0_110] : memref<80x32xf32, #tpu.memory_space<vmem>>, vector<64x32xf32>
    %111 = arith.truncf %110 : vector<64x32xf32> to vector<64x32xbf16>
    %c0_111 = arith.constant 0 : index
    %c0_112 = arith.constant 0 : index
    %c0_113 = arith.constant 0 : index
    %112 = vector.load %arg3[%c0_111, %c0_112, %c0_113] : memref<3x32x128xbf16, #tpu.memory_space<vmem>>, vector<1x32x128xbf16>
    %113 = vector.shape_cast %112 : vector<1x32x128xbf16> to vector<32x128xbf16>
    %cst_114 = arith.constant dense<0.000000e+00> : vector<64x128xf32>
    %114 = tpu.matmul %111, %113, %cst_114 {dimension_numbers = #tpu.dot_dimension_numbers<[1], [0], [0], [1], [0, 0, 1, 1], [], []>} : vector<64x32xbf16>, vector<32x128xbf16>, vector<64x128xf32> -> vector<64x128xf32>
    %c8_115 = arith.constant 8 : index
    %c0_116 = arith.constant 0 : index
    %115 = vector.load %arg15[%c8_115, %c0_116] : memref<80x32xf32, #tpu.memory_space<vmem>>, vector<64x32xf32>
    %116 = arith.truncf %115 : vector<64x32xf32> to vector<64x32xbf16>
    %c1_117 = arith.constant 1 : index
    %c0_118 = arith.constant 0 : index
    %c0_119 = arith.constant 0 : index
    %117 = vector.load %arg3[%c1_117, %c0_118, %c0_119] : memref<3x32x128xbf16, #tpu.memory_space<vmem>>, vector<1x32x128xbf16>
    %118 = vector.shape_cast %117 : vector<1x32x128xbf16> to vector<32x128xbf16>
    %cst_120 = arith.constant dense<0.000000e+00> : vector<64x128xf32>
    %119 = tpu.matmul %116, %118, %cst_120 {dimension_numbers = #tpu.dot_dimension_numbers<[1], [0], [0], [1], [0, 0, 1, 1], [], []>} : vector<64x32xbf16>, vector<32x128xbf16>, vector<64x128xf32> -> vector<64x128xf32>
    %120 = arith.addf %114, %119 : vector<64x128xf32>
    %c9_121 = arith.constant 9 : index
    %c0_122 = arith.constant 0 : index
    %121 = vector.load %arg15[%c9_121, %c0_122] : memref<80x32xf32, #tpu.memory_space<vmem>>, vector<64x32xf32>
    %122 = arith.truncf %121 : vector<64x32xf32> to vector<64x32xbf16>
    %c2_123 = arith.constant 2 : index
    %c0_124 = arith.constant 0 : index
    %c0_125 = arith.constant 0 : index
    %123 = vector.load %arg3[%c2_123, %c0_124, %c0_125] : memref<3x32x128xbf16, #tpu.memory_space<vmem>>, vector<1x32x128xbf16>
    %124 = vector.shape_cast %123 : vector<1x32x128xbf16> to vector<32x128xbf16>
    %cst_126 = arith.constant dense<0.000000e+00> : vector<64x128xf32>
    %125 = tpu.matmul %122, %124, %cst_126 {dimension_numbers = #tpu.dot_dimension_numbers<[1], [0], [0], [1], [0, 0, 1, 1], [], []>} : vector<64x32xbf16>, vector<32x128xbf16>, vector<64x128xf32> -> vector<64x128xf32>
    %126 = arith.addf %120, %125 : vector<64x128xf32>
    %127 = vector.broadcast %1 : vector<1x128xf32> to vector<64x128xf32>
    %128 = arith.addf %126, %127 : vector<64x128xf32>
    %cst_127 = arith.constant 0.000000e+00 : f32
    %129 = vector.broadcast %cst_127 : f32 to vector<64x128xf32>
    %130 = arith.maximumf %128, %129 : vector<64x128xf32>
    %131 = vector.broadcast %2 : vector<1x128xf32> to vector<64x128xf32>
    %132 = arith.mulf %130, %131 : vector<64x128xf32>
    %133 = vector.broadcast %3 : vector<1x128xf32> to vector<64x128xf32>
    %134 = arith.addf %132, %133 : vector<64x128xf32>
    %135 = arith.truncf %134 : vector<64x128xf32> to vector<64x128xbf16>
    %cst_128 = arith.constant dense<0.000000e+00> : vector<64x128xf32>
    %136 = tpu.matmul %135, %11, %cst_128 {dimension_numbers = #tpu.dot_dimension_numbers<[1], [0], [0], [1], [0, 0, 1, 1], [], []>} : vector<64x128xbf16>, vector<128x128xbf16>, vector<64x128xf32> -> vector<64x128xf32>
    %137 = vector.broadcast %4 : vector<1x128xf32> to vector<64x128xf32>
    %138 = arith.addf %136, %137 : vector<64x128xf32>
    %cst_129 = arith.constant 0.000000e+00 : f32
    %139 = vector.broadcast %cst_129 : f32 to vector<64x128xf32>
    %140 = arith.maximumf %138, %139 : vector<64x128xf32>
    %141 = vector.broadcast %5 : vector<1x128xf32> to vector<64x128xf32>
    %142 = arith.mulf %140, %141 : vector<64x128xf32>
    %143 = vector.broadcast %6 : vector<1x128xf32> to vector<64x128xf32>
    %144 = arith.addf %142, %143 : vector<64x128xf32>
    %145 = vector.extract_strided_slice %109 {offsets = [0, 0], sizes = [16, 128], strides = [1, 1]} : vector<48x128xf32> to vector<16x128xf32>
    %c8_130 = arith.constant 8 : index
    %c0_131 = arith.constant 0 : index
    %146 = vector.load %arg13[%c8_130, %c0_131] : memref<64x128xf32, #tpu.memory_space<vmem>>, vector<16x128xf32>
    tpu.vector_store %arg13[%c8_130, %c0_131], %145 {strides = array<i32>} : memref<64x128xf32, #tpu.memory_space<vmem>>, vector<16x128xf32>,
    %147 = vector.extract_strided_slice %144 {offsets = [0, 0], sizes = [24, 128], strides = [1, 1]} : vector<64x128xf32> to vector<24x128xf32>
    %c8_132 = arith.constant 8 : index
    %c0_133 = arith.constant 0 : index
    %148 = vector.load %arg16[%c8_132, %c0_133] : memref<80x128xf32, #tpu.memory_space<vmem>>, vector<24x128xf32>
    tpu.vector_store %arg16[%c8_132, %c0_133], %147 {strides = array<i32>} : memref<80x128xf32, #tpu.memory_space<vmem>>, vector<24x128xf32>,
    %149 = vector.extract_strided_slice %109 {offsets = [24, 0], sizes = [16, 128], strides = [1, 1]} : vector<48x128xf32> to vector<16x128xf32>
    %c32_134 = arith.constant 32 : index
    %c0_135 = arith.constant 0 : index
    %150 = vector.load %arg13[%c32_134, %c0_135] : memref<64x128xf32, #tpu.memory_space<vmem>>, vector<16x128xf32>
    tpu.vector_store %arg13[%c32_134, %c0_135], %149 {strides = array<i32>} : memref<64x128xf32, #tpu.memory_space<vmem>>, vector<16x128xf32>,
    %151 = vector.extract_strided_slice %144 {offsets = [32, 0], sizes = [24, 128], strides = [1, 1]} : vector<64x128xf32> to vector<24x128xf32>
    %c40_136 = arith.constant 40 : index
    %c0_137 = arith.constant 0 : index
    %152 = vector.load %arg16[%c40_136, %c0_137] : memref<80x128xf32, #tpu.memory_space<vmem>>, vector<24x128xf32>
    tpu.vector_store %arg16[%c40_136, %c0_137], %151 {strides = array<i32>} : memref<80x128xf32, #tpu.memory_space<vmem>>, vector<24x128xf32>,
    %c8_138 = arith.constant 8 : index
    %c0_139 = arith.constant 0 : index
    %153 = vector.load %arg12[%c8_138, %c0_139] : memref<64x32xf32, #tpu.memory_space<vmem>>, vector<48x32xf32>
    %154 = arith.truncf %153 : vector<48x32xf32> to vector<48x32xbf16>
    %cst_140 = arith.constant dense<0.000000e+00> : vector<48x128xf32>
    %155 = tpu.matmul %154, %12, %cst_140 {dimension_numbers = #tpu.dot_dimension_numbers<[1], [0], [0], [1], [0, 0, 1, 1], [], []>} : vector<48x32xbf16>, vector<32x128xbf16>, vector<48x128xf32> -> vector<48x128xf32>
    %156 = vector.broadcast %7 : vector<1x128xf32> to vector<48x128xf32>
    %157 = arith.addf %155, %156 : vector<48x128xf32>
    %cst_141 = arith.constant dense<0.000000e+00> : vector<48x128xf32>
    %158 = tpu.matmul %154, %13, %cst_141 {dimension_numbers = #tpu.dot_dimension_numbers<[1], [0], [0], [1], [0, 0, 1, 1], [], []>} : vector<48x32xbf16>, vector<32x128xbf16>, vector<48x128xf32> -> vector<48x128xf32>
    %159 = vector.broadcast %8 : vector<1x128xf32> to vector<48x128xf32>
    %160 = arith.addf %158, %159 : vector<48x128xf32>
    %cst_142 = arith.constant dense<0.000000e+00> : vector<48x128xf32>
    %161 = tpu.matmul %154, %14, %cst_142 {dimension_numbers = #tpu.dot_dimension_numbers<[1], [0], [0], [1], [0, 0, 1, 1], [], []>} : vector<48x32xbf16>, vector<32x128xbf16>, vector<48x128xf32> -> vector<48x128xf32>
    %162 = vector.broadcast %9 : vector<1x128xf32> to vector<48x128xf32>
    %163 = arith.addf %161, %162 : vector<48x128xf32>
    %c8_143 = arith.constant 8 : index
    %c0_144 = arith.constant 0 : index
    %164 = vector.load %arg15[%c8_143, %c0_144] : memref<80x32xf32, #tpu.memory_space<vmem>>, vector<64x32xf32>
    %165 = arith.truncf %164 : vector<64x32xf32> to vector<64x32xbf16>
    %cst_145 = arith.constant dense<0.000000e+00> : vector<64x128xf32>
    %166 = tpu.matmul %165, %12, %cst_145 {dimension_numbers = #tpu.dot_dimension_numbers<[1], [0], [0], [1], [0, 0, 1, 1], [], []>} : vector<64x32xbf16>, vector<32x128xbf16>, vector<64x128xf32> -> vector<64x128xf32>
    %167 = vector.broadcast %7 : vector<1x128xf32> to vector<64x128xf32>
    %168 = arith.addf %166, %167 : vector<64x128xf32>
    %cst_146 = arith.constant dense<0.000000e+00> : vector<64x128xf32>
    %169 = tpu.matmul %165, %13, %cst_146 {dimension_numbers = #tpu.dot_dimension_numbers<[1], [0], [0], [1], [0, 0, 1, 1], [], []>} : vector<64x32xbf16>, vector<32x128xbf16>, vector<64x128xf32> -> vector<64x128xf32>
    %170 = vector.broadcast %8 : vector<1x128xf32> to vector<64x128xf32>
    %171 = arith.addf %169, %170 : vector<64x128xf32>
    %cst_147 = arith.constant dense<0.000000e+00> : vector<64x128xf32>
    %172 = tpu.matmul %165, %14, %cst_147 {dimension_numbers = #tpu.dot_dimension_numbers<[1], [0], [0], [1], [0, 0, 1, 1], [], []>} : vector<64x32xbf16>, vector<32x128xbf16>, vector<64x128xf32> -> vector<64x128xf32>
    %173 = vector.broadcast %9 : vector<1x128xf32> to vector<64x128xf32>
    %174 = arith.addf %172, %173 : vector<64x128xf32>
    %175 = vector.extract_strided_slice %157 {offsets = [0, 0], sizes = [16, 128], strides = [1, 1]} : vector<48x128xf32> to vector<16x128xf32>
    %176 = arith.truncf %175 : vector<16x128xf32> to vector<16x128xbf16>
    %177 = vector.extract_strided_slice %171 {offsets = [0, 0], sizes = [24, 128], strides = [1, 1]} : vector<64x128xf32> to vector<24x128xf32>
    %178 = arith.truncf %177 : vector<24x128xf32> to vector<24x128xbf16>
    %179 = vector.extract_strided_slice %174 {offsets = [0, 0], sizes = [24, 128], strides = [1, 1]} : vector<64x128xf32> to vector<24x128xf32>
    %180 = arith.truncf %179 : vector<24x128xf32> to vector<24x128xbf16>
    %cst_148 = arith.constant dense<0.000000e+00> : vector<16x24xf32>
    %181 = tpu.matmul %176, %178, %cst_148 {dimension_numbers = #tpu.dot_dimension_numbers<[1], [1], [0], [0], [0, 0, 1, 0], [], []>} : vector<16x128xbf16>, vector<24x128xbf16>, vector<16x24xf32> -> vector<16x24xf32>
    %cst_149 = arith.constant dense<0xFF800000> : vector<16xf32>
    %182 = vector.multi_reduction <maximumf>, %181, %cst_149 [1] : vector<16x24xf32> to vector<16xf32>
    %183 = vector.shape_cast %182 : vector<16xf32> to vector<16x1xf32>
    %184 = vector.broadcast %183 : vector<16x1xf32> to vector<16x24xf32>
    %185 = arith.subf %181, %184 : vector<16x24xf32>
    %186 = math.exp %185 : vector<16x24xf32>
    %cst_150 = arith.constant dense<0.000000e+00> : vector<16xf32>
    %187 = vector.multi_reduction <add>, %186, %cst_150 [1] : vector<16x24xf32> to vector<16xf32>
    %188 = vector.shape_cast %187 : vector<16xf32> to vector<16x1xf32>
    %189 = tpu.reciprocal %188 {approx = true} : vector<16x1xf32> -> vector<16x1xf32>
    %190 = vector.broadcast %189 : vector<16x1xf32> to vector<16x24xf32>
    %191 = arith.mulf %186, %190 : vector<16x24xf32>
    %192 = arith.truncf %191 : vector<16x24xf32> to vector<16x24xbf16>
    %cst_151 = arith.constant dense<0.000000e+00> : vector<16x128xf32>
    %193 = tpu.matmul %192, %180, %cst_151 {dimension_numbers = #tpu.dot_dimension_numbers<[1], [0], [0], [1], [0, 0, 1, 1], [], []>} : vector<16x24xbf16>, vector<24x128xbf16>, vector<16x128xf32> -> vector<16x128xf32>
    %c8_152 = arith.constant 8 : index
    %c0_153 = arith.constant 0 : index
    %194 = vector.load %arg14[%c8_152, %c0_153] : memref<64x128xf32, #tpu.memory_space<vmem>>, vector<16x128xf32>
    tpu.vector_store %arg14[%c8_152, %c0_153], %193 {strides = array<i32>} : memref<64x128xf32, #tpu.memory_space<vmem>>, vector<16x128xf32>,
    %195 = vector.extract_strided_slice %157 {offsets = [24, 0], sizes = [16, 128], strides = [1, 1]} : vector<48x128xf32> to vector<16x128xf32>
    %196 = arith.truncf %195 : vector<16x128xf32> to vector<16x128xbf16>
    %197 = vector.extract_strided_slice %171 {offsets = [32, 0], sizes = [24, 128], strides = [1, 1]} : vector<64x128xf32> to vector<24x128xf32>
    %198 = arith.truncf %197 : vector<24x128xf32> to vector<24x128xbf16>
    %199 = vector.extract_strided_slice %174 {offsets = [32, 0], sizes = [24, 128], strides = [1, 1]} : vector<64x128xf32> to vector<24x128xf32>
    %200 = arith.truncf %199 : vector<24x128xf32> to vector<24x128xbf16>
    %cst_154 = arith.constant dense<0.000000e+00> : vector<16x24xf32>
    %201 = tpu.matmul %196, %198, %cst_154 {dimension_numbers = #tpu.dot_dimension_numbers<[1], [1], [0], [0], [0, 0, 1, 0], [], []>} : vector<16x128xbf16>, vector<24x128xbf16>, vector<16x24xf32> -> vector<16x24xf32>
    %cst_155 = arith.constant dense<0xFF800000> : vector<16xf32>
    %202 = vector.multi_reduction <maximumf>, %201, %cst_155 [1] : vector<16x24xf32> to vector<16xf32>
    %203 = vector.shape_cast %202 : vector<16xf32> to vector<16x1xf32>
    %204 = vector.broadcast %203 : vector<16x1xf32> to vector<16x24xf32>
    %205 = arith.subf %201, %204 : vector<16x24xf32>
    %206 = math.exp %205 : vector<16x24xf32>
    %cst_156 = arith.constant dense<0.000000e+00> : vector<16xf32>
    %207 = vector.multi_reduction <add>, %206, %cst_156 [1] : vector<16x24xf32> to vector<16xf32>
    %208 = vector.shape_cast %207 : vector<16xf32> to vector<16x1xf32>
    %209 = tpu.reciprocal %208 {approx = true} : vector<16x1xf32> -> vector<16x1xf32>
    %210 = vector.broadcast %209 : vector<16x1xf32> to vector<16x24xf32>
    %211 = arith.mulf %206, %210 : vector<16x24xf32>
    %212 = arith.truncf %211 : vector<16x24xf32> to vector<16x24xbf16>
    %cst_157 = arith.constant dense<0.000000e+00> : vector<16x128xf32>
    %213 = tpu.matmul %212, %200, %cst_157 {dimension_numbers = #tpu.dot_dimension_numbers<[1], [0], [0], [1], [0, 0, 1, 1], [], []>} : vector<16x24xbf16>, vector<24x128xbf16>, vector<16x128xf32> -> vector<16x128xf32>
    %c32_158 = arith.constant 32 : index
    %c0_159 = arith.constant 0 : index
    %214 = vector.load %arg14[%c32_158, %c0_159] : memref<64x128xf32, #tpu.memory_space<vmem>>, vector<16x128xf32>
    tpu.vector_store %arg14[%c32_158, %c0_159], %213 {strides = array<i32>} : memref<64x128xf32, #tpu.memory_space<vmem>>, vector<16x128xf32>,
    %215 = vector.extract_strided_slice %168 {offsets = [0, 0], sizes = [24, 128], strides = [1, 1]} : vector<64x128xf32> to vector<24x128xf32>
    %216 = arith.truncf %215 : vector<24x128xf32> to vector<24x128xbf16>
    %217 = vector.extract_strided_slice %160 {offsets = [0, 0], sizes = [16, 128], strides = [1, 1]} : vector<48x128xf32> to vector<16x128xf32>
    %218 = arith.truncf %217 : vector<16x128xf32> to vector<16x128xbf16>
    %219 = vector.extract_strided_slice %163 {offsets = [0, 0], sizes = [16, 128], strides = [1, 1]} : vector<48x128xf32> to vector<16x128xf32>
    %220 = arith.truncf %219 : vector<16x128xf32> to vector<16x128xbf16>
    %cst_160 = arith.constant dense<0.000000e+00> : vector<24x16xf32>
    %221 = tpu.matmul %216, %218, %cst_160 {dimension_numbers = #tpu.dot_dimension_numbers<[1], [1], [0], [0], [0, 0, 1, 0], [], []>} : vector<24x128xbf16>, vector<16x128xbf16>, vector<24x16xf32> -> vector<24x16xf32>
    %cst_161 = arith.constant dense<0xFF800000> : vector<24xf32>
    %222 = vector.multi_reduction <maximumf>, %221, %cst_161 [1] : vector<24x16xf32> to vector<24xf32>
    %223 = vector.shape_cast %222 : vector<24xf32> to vector<24x1xf32>
    %224 = vector.broadcast %223 : vector<24x1xf32> to vector<24x16xf32>
    %225 = arith.subf %221, %224 : vector<24x16xf32>
    %226 = math.exp %225 : vector<24x16xf32>
    %cst_162 = arith.constant dense<0.000000e+00> : vector<24xf32>
    %227 = vector.multi_reduction <add>, %226, %cst_162 [1] : vector<24x16xf32> to vector<24xf32>
    %228 = vector.shape_cast %227 : vector<24xf32> to vector<24x1xf32>
    %229 = tpu.reciprocal %228 {approx = true} : vector<24x1xf32> -> vector<24x1xf32>
    %230 = vector.broadcast %229 : vector<24x1xf32> to vector<24x16xf32>
    %231 = arith.mulf %226, %230 : vector<24x16xf32>
    %232 = arith.truncf %231 : vector<24x16xf32> to vector<24x16xbf16>
    %cst_163 = arith.constant dense<0.000000e+00> : vector<24x128xf32>
    %233 = tpu.matmul %232, %220, %cst_163 {dimension_numbers = #tpu.dot_dimension_numbers<[1], [0], [0], [1], [0, 0, 1, 1], [], []>} : vector<24x16xbf16>, vector<16x128xbf16>, vector<24x128xf32> -> vector<24x128xf32>
    %c8_164 = arith.constant 8 : index
    %c0_165 = arith.constant 0 : index
    %234 = vector.load %arg17[%c8_164, %c0_165] : memref<80x128xf32, #tpu.memory_space<vmem>>, vector<24x128xf32>
    tpu.vector_store %arg17[%c8_164, %c0_165], %233 {strides = array<i32>} : memref<80x128xf32, #tpu.memory_space<vmem>>, vector<24x128xf32>,
    %235 = vector.extract_strided_slice %168 {offsets = [32, 0], sizes = [24, 128], strides = [1, 1]} : vector<64x128xf32> to vector<24x128xf32>
    %236 = arith.truncf %235 : vector<24x128xf32> to vector<24x128xbf16>
    %237 = vector.extract_strided_slice %160 {offsets = [24, 0], sizes = [16, 128], strides = [1, 1]} : vector<48x128xf32> to vector<16x128xf32>
    %238 = arith.truncf %237 : vector<16x128xf32> to vector<16x128xbf16>
    %239 = vector.extract_strided_slice %163 {offsets = [24, 0], sizes = [16, 128], strides = [1, 1]} : vector<48x128xf32> to vector<16x128xf32>
    %240 = arith.truncf %239 : vector<16x128xf32> to vector<16x128xbf16>
    %cst_166 = arith.constant dense<0.000000e+00> : vector<24x16xf32>
    %241 = tpu.matmul %236, %238, %cst_166 {dimension_numbers = #tpu.dot_dimension_numbers<[1], [1], [0], [0], [0, 0, 1, 0], [], []>} : vector<24x128xbf16>, vector<16x128xbf16>, vector<24x16xf32> -> vector<24x16xf32>
    %cst_167 = arith.constant dense<0xFF800000> : vector<24xf32>
    %242 = vector.multi_reduction <maximumf>, %241, %cst_167 [1] : vector<24x16xf32> to vector<24xf32>
    %243 = vector.shape_cast %242 : vector<24xf32> to vector<24x1xf32>
    %244 = vector.broadcast %243 : vector<24x1xf32> to vector<24x16xf32>
    %245 = arith.subf %241, %244 : vector<24x16xf32>
    %246 = math.exp %245 : vector<24x16xf32>
    %cst_168 = arith.constant dense<0.000000e+00> : vector<24xf32>
    %247 = vector.multi_reduction <add>, %246, %cst_168 [1] : vector<24x16xf32> to vector<24xf32>
    %248 = vector.shape_cast %247 : vector<24xf32> to vector<24x1xf32>
    %249 = tpu.reciprocal %248 {approx = true} : vector<24x1xf32> -> vector<24x1xf32>
    %250 = vector.broadcast %249 : vector<24x1xf32> to vector<24x16xf32>
    %251 = arith.mulf %246, %250 : vector<24x16xf32>
    %252 = arith.truncf %251 : vector<24x16xf32> to vector<24x16xbf16>
    %cst_169 = arith.constant dense<0.000000e+00> : vector<24x128xf32>
    %253 = tpu.matmul %252, %240, %cst_169 {dimension_numbers = #tpu.dot_dimension_numbers<[1], [0], [0], [1], [0, 0, 1, 1], [], []>} : vector<24x16xbf16>, vector<16x128xbf16>, vector<24x128xf32> -> vector<24x128xf32>
    %c40_170 = arith.constant 40 : index
    %c0_171 = arith.constant 0 : index
    %254 = vector.load %arg17[%c40_170, %c0_171] : memref<80x128xf32, #tpu.memory_space<vmem>>, vector<24x128xf32>
    tpu.vector_store %arg17[%c40_170, %c0_171], %253 {strides = array<i32>} : memref<80x128xf32, #tpu.memory_space<vmem>>, vector<24x128xf32>,
    %c5 = arith.constant 5 : index
    %c0_172 = arith.constant 0 : index
    %255 = vector.load %arg13[%c5, %c0_172] : memref<64x128xf32, #tpu.memory_space<vmem>>, vector<48x128xf32>
    %256 = arith.truncf %255 : vector<48x128xf32> to vector<48x128xbf16>
    %c0_173 = arith.constant 0 : index
    %c0_174 = arith.constant 0 : index
    %c0_175 = arith.constant 0 : index
    %257 = vector.load %arg8[%c0_173, %c0_174, %c0_175] : memref<7x128x128xbf16, #tpu.memory_space<vmem>>, vector<1x128x128xbf16>
    %258 = vector.shape_cast %257 : vector<1x128x128xbf16> to vector<128x128xbf16>
    %cst_176 = arith.constant dense<0.000000e+00> : vector<48x128xf32>
    %259 = tpu.matmul %256, %258, %cst_176 {dimension_numbers = #tpu.dot_dimension_numbers<[1], [0], [0], [1], [0, 0, 1, 1], [], []>} : vector<48x128xbf16>, vector<128x128xbf16>, vector<48x128xf32> -> vector<48x128xf32>
    %c5_177 = arith.constant 5 : index
    %c0_178 = arith.constant 0 : index
    %260 = vector.load %arg14[%c5_177, %c0_178] : memref<64x128xf32, #tpu.memory_space<vmem>>, vector<48x128xf32>
    %261 = arith.truncf %260 : vector<48x128xf32> to vector<48x128xbf16>
    %c0_179 = arith.constant 0 : index
    %c0_180 = arith.constant 0 : index
    %c0_181 = arith.constant 0 : index
    %262 = vector.load %arg9[%c0_179, %c0_180, %c0_181] : memref<7x128x128xbf16, #tpu.memory_space<vmem>>, vector<1x128x128xbf16>
    %263 = vector.shape_cast %262 : vector<1x128x128xbf16> to vector<128x128xbf16>
    %cst_182 = arith.constant dense<0.000000e+00> : vector<48x128xf32>
    %264 = tpu.matmul %261, %263, %cst_182 {dimension_numbers = #tpu.dot_dimension_numbers<[1], [0], [0], [1], [0, 0, 1, 1], [], []>} : vector<48x128xbf16>, vector<128x128xbf16>, vector<48x128xf32> -> vector<48x128xf32>
    %265 = arith.addf %259, %264 : vector<48x128xf32>
    %c6 = arith.constant 6 : index
    %c0_183 = arith.constant 0 : index
    %266 = vector.load %arg13[%c6, %c0_183] : memref<64x128xf32, #tpu.memory_space<vmem>>, vector<48x128xf32>
    %267 = arith.truncf %266 : vector<48x128xf32> to vector<48x128xbf16>
    %c1_184 = arith.constant 1 : index
    %c0_185 = arith.constant 0 : index
    %c0_186 = arith.constant 0 : index
    %268 = vector.load %arg8[%c1_184, %c0_185, %c0_186] : memref<7x128x128xbf16, #tpu.memory_space<vmem>>, vector<1x128x128xbf16>
    %269 = vector.shape_cast %268 : vector<1x128x128xbf16> to vector<128x128xbf16>
    %cst_187 = arith.constant dense<0.000000e+00> : vector<48x128xf32>
    %270 = tpu.matmul %267, %269, %cst_187 {dimension_numbers = #tpu.dot_dimension_numbers<[1], [0], [0], [1], [0, 0, 1, 1], [], []>} : vector<48x128xbf16>, vector<128x128xbf16>, vector<48x128xf32> -> vector<48x128xf32>
    %271 = arith.addf %265, %270 : vector<48x128xf32>
    %c6_188 = arith.constant 6 : index
    %c0_189 = arith.constant 0 : index
    %272 = vector.load %arg14[%c6_188, %c0_189] : memref<64x128xf32, #tpu.memory_space<vmem>>, vector<48x128xf32>
    %273 = arith.truncf %272 : vector<48x128xf32> to vector<48x128xbf16>
    %c1_190 = arith.constant 1 : index
    %c0_191 = arith.constant 0 : index
    %c0_192 = arith.constant 0 : index
    %274 = vector.load %arg9[%c1_190, %c0_191, %c0_192] : memref<7x128x128xbf16, #tpu.memory_space<vmem>>, vector<1x128x128xbf16>
    %275 = vector.shape_cast %274 : vector<1x128x128xbf16> to vector<128x128xbf16>
    %cst_193 = arith.constant dense<0.000000e+00> : vector<48x128xf32>
    %276 = tpu.matmul %273, %275, %cst_193 {dimension_numbers = #tpu.dot_dimension_numbers<[1], [0], [0], [1], [0, 0, 1, 1], [], []>} : vector<48x128xbf16>, vector<128x128xbf16>, vector<48x128xf32> -> vector<48x128xf32>
    %277 = arith.addf %271, %276 : vector<48x128xf32>
    %c7_194 = arith.constant 7 : index
    %c0_195 = arith.constant 0 : index
    %278 = vector.load %arg13[%c7_194, %c0_195] : memref<64x128xf32, #tpu.memory_space<vmem>>, vector<48x128xf32>
    %279 = arith.truncf %278 : vector<48x128xf32> to vector<48x128xbf16>
    %c2_196 = arith.constant 2 : index
    %c0_197 = arith.constant 0 : index
    %c0_198 = arith.constant 0 : index
    %280 = vector.load %arg8[%c2_196, %c0_197, %c0_198] : memref<7x128x128xbf16, #tpu.memory_space<vmem>>, vector<1x128x128xbf16>
    %281 = vector.shape_cast %280 : vector<1x128x128xbf16> to vector<128x128xbf16>
    %cst_199 = arith.constant dense<0.000000e+00> : vector<48x128xf32>
    %282 = tpu.matmul %279, %281, %cst_199 {dimension_numbers = #tpu.dot_dimension_numbers<[1], [0], [0], [1], [0, 0, 1, 1], [], []>} : vector<48x128xbf16>, vector<128x128xbf16>, vector<48x128xf32> -> vector<48x128xf32>
    %283 = arith.addf %277, %282 : vector<48x128xf32>
    %c7_200 = arith.constant 7 : index
    %c0_201 = arith.constant 0 : index
    %284 = vector.load %arg14[%c7_200, %c0_201] : memref<64x128xf32, #tpu.memory_space<vmem>>, vector<48x128xf32>
    %285 = arith.truncf %284 : vector<48x128xf32> to vector<48x128xbf16>
    %c2_202 = arith.constant 2 : index
    %c0_203 = arith.constant 0 : index
    %c0_204 = arith.constant 0 : index
    %286 = vector.load %arg9[%c2_202, %c0_203, %c0_204] : memref<7x128x128xbf16, #tpu.memory_space<vmem>>, vector<1x128x128xbf16>
    %287 = vector.shape_cast %286 : vector<1x128x128xbf16> to vector<128x128xbf16>
    %cst_205 = arith.constant dense<0.000000e+00> : vector<48x128xf32>
    %288 = tpu.matmul %285, %287, %cst_205 {dimension_numbers = #tpu.dot_dimension_numbers<[1], [0], [0], [1], [0, 0, 1, 1], [], []>} : vector<48x128xbf16>, vector<128x128xbf16>, vector<48x128xf32> -> vector<48x128xf32>
    %289 = arith.addf %283, %288 : vector<48x128xf32>
    %c8_206 = arith.constant 8 : index
    %c0_207 = arith.constant 0 : index
    %290 = vector.load %arg13[%c8_206, %c0_207] : memref<64x128xf32, #tpu.memory_space<vmem>>, vector<48x128xf32>
    %291 = arith.truncf %290 : vector<48x128xf32> to vector<48x128xbf16>
    %c3 = arith.constant 3 : index
    %c0_208 = arith.constant 0 : index
    %c0_209 = arith.constant 0 : index
    %292 = vector.load %arg8[%c3, %c0_208, %c0_209] : memref<7x128x128xbf16, #tpu.memory_space<vmem>>, vector<1x128x128xbf16>
    %293 = vector.shape_cast %292 : vector<1x128x128xbf16> to vector<128x128xbf16>
    %cst_210 = arith.constant dense<0.000000e+00> : vector<48x128xf32>
    %294 = tpu.matmul %291, %293, %cst_210 {dimension_numbers = #tpu.dot_dimension_numbers<[1], [0], [0], [1], [0, 0, 1, 1], [], []>} : vector<48x128xbf16>, vector<128x128xbf16>, vector<48x128xf32> -> vector<48x128xf32>
    %295 = arith.addf %289, %294 : vector<48x128xf32>
    %c8_211 = arith.constant 8 : index
    %c0_212 = arith.constant 0 : index
    %296 = vector.load %arg14[%c8_211, %c0_212] : memref<64x128xf32, #tpu.memory_space<vmem>>, vector<48x128xf32>
    %297 = arith.truncf %296 : vector<48x128xf32> to vector<48x128xbf16>
    %c3_213 = arith.constant 3 : index
    %c0_214 = arith.constant 0 : index
    %c0_215 = arith.constant 0 : index
    %298 = vector.load %arg9[%c3_213, %c0_214, %c0_215] : memref<7x128x128xbf16, #tpu.memory_space<vmem>>, vector<1x128x128xbf16>
    %299 = vector.shape_cast %298 : vector<1x128x128xbf16> to vector<128x128xbf16>
    %cst_216 = arith.constant dense<0.000000e+00> : vector<48x128xf32>
    %300 = tpu.matmul %297, %299, %cst_216 {dimension_numbers = #tpu.dot_dimension_numbers<[1], [0], [0], [1], [0, 0, 1, 1], [], []>} : vector<48x128xbf16>, vector<128x128xbf16>, vector<48x128xf32> -> vector<48x128xf32>
    %301 = arith.addf %295, %300 : vector<48x128xf32>
    %c9_217 = arith.constant 9 : index
    %c0_218 = arith.constant 0 : index
    %302 = vector.load %arg13[%c9_217, %c0_218] : memref<64x128xf32, #tpu.memory_space<vmem>>, vector<48x128xf32>
    %303 = arith.truncf %302 : vector<48x128xf32> to vector<48x128xbf16>
    %c4 = arith.constant 4 : index
    %c0_219 = arith.constant 0 : index
    %c0_220 = arith.constant 0 : index
    %304 = vector.load %arg8[%c4, %c0_219, %c0_220] : memref<7x128x128xbf16, #tpu.memory_space<vmem>>, vector<1x128x128xbf16>
    %305 = vector.shape_cast %304 : vector<1x128x128xbf16> to vector<128x128xbf16>
    %cst_221 = arith.constant dense<0.000000e+00> : vector<48x128xf32>
    %306 = tpu.matmul %303, %305, %cst_221 {dimension_numbers = #tpu.dot_dimension_numbers<[1], [0], [0], [1], [0, 0, 1, 1], [], []>} : vector<48x128xbf16>, vector<128x128xbf16>, vector<48x128xf32> -> vector<48x128xf32>
    %307 = arith.addf %301, %306 : vector<48x128xf32>
    %c9_222 = arith.constant 9 : index
    %c0_223 = arith.constant 0 : index
    %308 = vector.load %arg14[%c9_222, %c0_223] : memref<64x128xf32, #tpu.memory_space<vmem>>, vector<48x128xf32>
    %309 = arith.truncf %308 : vector<48x128xf32> to vector<48x128xbf16>
    %c4_224 = arith.constant 4 : index
    %c0_225 = arith.constant 0 : index
    %c0_226 = arith.constant 0 : index
    %310 = vector.load %arg9[%c4_224, %c0_225, %c0_226] : memref<7x128x128xbf16, #tpu.memory_space<vmem>>, vector<1x128x128xbf16>
    %311 = vector.shape_cast %310 : vector<1x128x128xbf16> to vector<128x128xbf16>
    %cst_227 = arith.constant dense<0.000000e+00> : vector<48x128xf32>
    %312 = tpu.matmul %309, %311, %cst_227 {dimension_numbers = #tpu.dot_dimension_numbers<[1], [0], [0], [1], [0, 0, 1, 1], [], []>} : vector<48x128xbf16>, vector<128x128xbf16>, vector<48x128xf32> -> vector<48x128xf32>
    %313 = arith.addf %307, %312 : vector<48x128xf32>
    %c10 = arith.constant 10 : index
    %c0_228 = arith.constant 0 : index
    %314 = vector.load %arg13[%c10, %c0_228] : memref<64x128xf32, #tpu.memory_space<vmem>>, vector<48x128xf32>
    %315 = arith.truncf %314 : vector<48x128xf32> to vector<48x128xbf16>
    %c5_229 = arith.constant 5 : index
    %c0_230 = arith.constant 0 : index
    %c0_231 = arith.constant 0 : index
    %316 = vector.load %arg8[%c5_229, %c0_230, %c0_231] : memref<7x128x128xbf16, #tpu.memory_space<vmem>>, vector<1x128x128xbf16>
    %317 = vector.shape_cast %316 : vector<1x128x128xbf16> to vector<128x128xbf16>
    %cst_232 = arith.constant dense<0.000000e+00> : vector<48x128xf32>
    %318 = tpu.matmul %315, %317, %cst_232 {dimension_numbers = #tpu.dot_dimension_numbers<[1], [0], [0], [1], [0, 0, 1, 1], [], []>} : vector<48x128xbf16>, vector<128x128xbf16>, vector<48x128xf32> -> vector<48x128xf32>
    %319 = arith.addf %313, %318 : vector<48x128xf32>
    %c10_233 = arith.constant 10 : index
    %c0_234 = arith.constant 0 : index
    %320 = vector.load %arg14[%c10_233, %c0_234] : memref<64x128xf32, #tpu.memory_space<vmem>>, vector<48x128xf32>
    %321 = arith.truncf %320 : vector<48x128xf32> to vector<48x128xbf16>
    %c5_235 = arith.constant 5 : index
    %c0_236 = arith.constant 0 : index
    %c0_237 = arith.constant 0 : index
    %322 = vector.load %arg9[%c5_235, %c0_236, %c0_237] : memref<7x128x128xbf16, #tpu.memory_space<vmem>>, vector<1x128x128xbf16>
    %323 = vector.shape_cast %322 : vector<1x128x128xbf16> to vector<128x128xbf16>
    %cst_238 = arith.constant dense<0.000000e+00> : vector<48x128xf32>
    %324 = tpu.matmul %321, %323, %cst_238 {dimension_numbers = #tpu.dot_dimension_numbers<[1], [0], [0], [1], [0, 0, 1, 1], [], []>} : vector<48x128xbf16>, vector<128x128xbf16>, vector<48x128xf32> -> vector<48x128xf32>
    %325 = arith.addf %319, %324 : vector<48x128xf32>
    %c11 = arith.constant 11 : index
    %c0_239 = arith.constant 0 : index
    %326 = vector.load %arg13[%c11, %c0_239] : memref<64x128xf32, #tpu.memory_space<vmem>>, vector<48x128xf32>
    %327 = arith.truncf %326 : vector<48x128xf32> to vector<48x128xbf16>
    %c6_240 = arith.constant 6 : index
    %c0_241 = arith.constant 0 : index
    %c0_242 = arith.constant 0 : index
    %328 = vector.load %arg8[%c6_240, %c0_241, %c0_242] : memref<7x128x128xbf16, #tpu.memory_space<vmem>>, vector<1x128x128xbf16>
    %329 = vector.shape_cast %328 : vector<1x128x128xbf16> to vector<128x128xbf16>
    %cst_243 = arith.constant dense<0.000000e+00> : vector<48x128xf32>
    %330 = tpu.matmul %327, %329, %cst_243 {dimension_numbers = #tpu.dot_dimension_numbers<[1], [0], [0], [1], [0, 0, 1, 1], [], []>} : vector<48x128xbf16>, vector<128x128xbf16>, vector<48x128xf32> -> vector<48x128xf32>
    %331 = arith.addf %325, %330 : vector<48x128xf32>
    %c11_244 = arith.constant 11 : index
    %c0_245 = arith.constant 0 : index
    %332 = vector.load %arg14[%c11_244, %c0_245] : memref<64x128xf32, #tpu.memory_space<vmem>>, vector<48x128xf32>
    %333 = arith.truncf %332 : vector<48x128xf32> to vector<48x128xbf16>
    %c6_246 = arith.constant 6 : index
    %c0_247 = arith.constant 0 : index
    %c0_248 = arith.constant 0 : index
    %334 = vector.load %arg9[%c6_246, %c0_247, %c0_248] : memref<7x128x128xbf16, #tpu.memory_space<vmem>>, vector<1x128x128xbf16>
    %335 = vector.shape_cast %334 : vector<1x128x128xbf16> to vector<128x128xbf16>
    %cst_249 = arith.constant dense<0.000000e+00> : vector<48x128xf32>
    %336 = tpu.matmul %333, %335, %cst_249 {dimension_numbers = #tpu.dot_dimension_numbers<[1], [0], [0], [1], [0, 0, 1, 1], [], []>} : vector<48x128xbf16>, vector<128x128xbf16>, vector<48x128xf32> -> vector<48x128xf32>
    %337 = arith.addf %331, %336 : vector<48x128xf32>
    %338 = vector.broadcast %10 : vector<1x128xf32> to vector<48x128xf32>
    %339 = arith.addf %337, %338 : vector<48x128xf32>
    %c5_250 = arith.constant 5 : index
    %c0_251 = arith.constant 0 : index
    %340 = vector.load %arg16[%c5_250, %c0_251] : memref<80x128xf32, #tpu.memory_space<vmem>>, vector<64x128xf32>
    %341 = arith.truncf %340 : vector<64x128xf32> to vector<64x128xbf16>
    %c0_252 = arith.constant 0 : index
    %c0_253 = arith.constant 0 : index
    %c0_254 = arith.constant 0 : index
    %342 = vector.load %arg8[%c0_252, %c0_253, %c0_254] : memref<7x128x128xbf16, #tpu.memory_space<vmem>>, vector<1x128x128xbf16>
    %343 = vector.shape_cast %342 : vector<1x128x128xbf16> to vector<128x128xbf16>
    %cst_255 = arith.constant dense<0.000000e+00> : vector<64x128xf32>
    %344 = tpu.matmul %341, %343, %cst_255 {dimension_numbers = #tpu.dot_dimension_numbers<[1], [0], [0], [1], [0, 0, 1, 1], [], []>} : vector<64x128xbf16>, vector<128x128xbf16>, vector<64x128xf32> -> vector<64x128xf32>
    %c5_256 = arith.constant 5 : index
    %c0_257 = arith.constant 0 : index
    %345 = vector.load %arg17[%c5_256, %c0_257] : memref<80x128xf32, #tpu.memory_space<vmem>>, vector<64x128xf32>
    %346 = arith.truncf %345 : vector<64x128xf32> to vector<64x128xbf16>
    %c0_258 = arith.constant 0 : index
    %c0_259 = arith.constant 0 : index
    %c0_260 = arith.constant 0 : index
    %347 = vector.load %arg9[%c0_258, %c0_259, %c0_260] : memref<7x128x128xbf16, #tpu.memory_space<vmem>>, vector<1x128x128xbf16>
    %348 = vector.shape_cast %347 : vector<1x128x128xbf16> to vector<128x128xbf16>
    %cst_261 = arith.constant dense<0.000000e+00> : vector<64x128xf32>
    %349 = tpu.matmul %346, %348, %cst_261 {dimension_numbers = #tpu.dot_dimension_numbers<[1], [0], [0], [1], [0, 0, 1, 1], [], []>} : vector<64x128xbf16>, vector<128x128xbf16>, vector<64x128xf32> -> vector<64x128xf32>
    %350 = arith.addf %344, %349 : vector<64x128xf32>
    %c6_262 = arith.constant 6 : index
    %c0_263 = arith.constant 0 : index
    %351 = vector.load %arg16[%c6_262, %c0_263] : memref<80x128xf32, #tpu.memory_space<vmem>>, vector<64x128xf32>
    %352 = arith.truncf %351 : vector<64x128xf32> to vector<64x128xbf16>
    %c1_264 = arith.constant 1 : index
    %c0_265 = arith.constant 0 : index
    %c0_266 = arith.constant 0 : index
    %353 = vector.load %arg8[%c1_264, %c0_265, %c0_266] : memref<7x128x128xbf16, #tpu.memory_space<vmem>>, vector<1x128x128xbf16>
    %354 = vector.shape_cast %353 : vector<1x128x128xbf16> to vector<128x128xbf16>
    %cst_267 = arith.constant dense<0.000000e+00> : vector<64x128xf32>
    %355 = tpu.matmul %352, %354, %cst_267 {dimension_numbers = #tpu.dot_dimension_numbers<[1], [0], [0], [1], [0, 0, 1, 1], [], []>} : vector<64x128xbf16>, vector<128x128xbf16>, vector<64x128xf32> -> vector<64x128xf32>
    %356 = arith.addf %350, %355 : vector<64x128xf32>
    %c6_268 = arith.constant 6 : index
    %c0_269 = arith.constant 0 : index
    %357 = vector.load %arg17[%c6_268, %c0_269] : memref<80x128xf32, #tpu.memory_space<vmem>>, vector<64x128xf32>
    %358 = arith.truncf %357 : vector<64x128xf32> to vector<64x128xbf16>
    %c1_270 = arith.constant 1 : index
    %c0_271 = arith.constant 0 : index
    %c0_272 = arith.constant 0 : index
    %359 = vector.load %arg9[%c1_270, %c0_271, %c0_272] : memref<7x128x128xbf16, #tpu.memory_space<vmem>>, vector<1x128x128xbf16>
    %360 = vector.shape_cast %359 : vector<1x128x128xbf16> to vector<128x128xbf16>
    %cst_273 = arith.constant dense<0.000000e+00> : vector<64x128xf32>
    %361 = tpu.matmul %358, %360, %cst_273 {dimension_numbers = #tpu.dot_dimension_numbers<[1], [0], [0], [1], [0, 0, 1, 1], [], []>} : vector<64x128xbf16>, vector<128x128xbf16>, vector<64x128xf32> -> vector<64x128xf32>
    %362 = arith.addf %356, %361 : vector<64x128xf32>
    %c7_274 = arith.constant 7 : index
    %c0_275 = arith.constant 0 : index
    %363 = vector.load %arg16[%c7_274, %c0_275] : memref<80x128xf32, #tpu.memory_space<vmem>>, vector<64x128xf32>
    %364 = arith.truncf %363 : vector<64x128xf32> to vector<64x128xbf16>
    %c2_276 = arith.constant 2 : index
    %c0_277 = arith.constant 0 : index
    %c0_278 = arith.constant 0 : index
    %365 = vector.load %arg8[%c2_276, %c0_277, %c0_278] : memref<7x128x128xbf16, #tpu.memory_space<vmem>>, vector<1x128x128xbf16>
    %366 = vector.shape_cast %365 : vector<1x128x128xbf16> to vector<128x128xbf16>
    %cst_279 = arith.constant dense<0.000000e+00> : vector<64x128xf32>
    %367 = tpu.matmul %364, %366, %cst_279 {dimension_numbers = #tpu.dot_dimension_numbers<[1], [0], [0], [1], [0, 0, 1, 1], [], []>} : vector<64x128xbf16>, vector<128x128xbf16>, vector<64x128xf32> -> vector<64x128xf32>
    %368 = arith.addf %362, %367 : vector<64x128xf32>
    %c7_280 = arith.constant 7 : index
    %c0_281 = arith.constant 0 : index
    %369 = vector.load %arg17[%c7_280, %c0_281] : memref<80x128xf32, #tpu.memory_space<vmem>>, vector<64x128xf32>
    %370 = arith.truncf %369 : vector<64x128xf32> to vector<64x128xbf16>
    %c2_282 = arith.constant 2 : index
    %c0_283 = arith.constant 0 : index
    %c0_284 = arith.constant 0 : index
    %371 = vector.load %arg9[%c2_282, %c0_283, %c0_284] : memref<7x128x128xbf16, #tpu.memory_space<vmem>>, vector<1x128x128xbf16>
    %372 = vector.shape_cast %371 : vector<1x128x128xbf16> to vector<128x128xbf16>
    %cst_285 = arith.constant dense<0.000000e+00> : vector<64x128xf32>
    %373 = tpu.matmul %370, %372, %cst_285 {dimension_numbers = #tpu.dot_dimension_numbers<[1], [0], [0], [1], [0, 0, 1, 1], [], []>} : vector<64x128xbf16>, vector<128x128xbf16>, vector<64x128xf32> -> vector<64x128xf32>
    %374 = arith.addf %368, %373 : vector<64x128xf32>
    %c8_286 = arith.constant 8 : index
    %c0_287 = arith.constant 0 : index
    %375 = vector.load %arg16[%c8_286, %c0_287] : memref<80x128xf32, #tpu.memory_space<vmem>>, vector<64x128xf32>
    %376 = arith.truncf %375 : vector<64x128xf32> to vector<64x128xbf16>
    %c3_288 = arith.constant 3 : index
    %c0_289 = arith.constant 0 : index
    %c0_290 = arith.constant 0 : index
    %377 = vector.load %arg8[%c3_288, %c0_289, %c0_290] : memref<7x128x128xbf16, #tpu.memory_space<vmem>>, vector<1x128x128xbf16>
    %378 = vector.shape_cast %377 : vector<1x128x128xbf16> to vector<128x128xbf16>
    %cst_291 = arith.constant dense<0.000000e+00> : vector<64x128xf32>
    %379 = tpu.matmul %376, %378, %cst_291 {dimension_numbers = #tpu.dot_dimension_numbers<[1], [0], [0], [1], [0, 0, 1, 1], [], []>} : vector<64x128xbf16>, vector<128x128xbf16>, vector<64x128xf32> -> vector<64x128xf32>
    %380 = arith.addf %374, %379 : vector<64x128xf32>
    %c8_292 = arith.constant 8 : index
    %c0_293 = arith.constant 0 : index
    %381 = vector.load %arg17[%c8_292, %c0_293] : memref<80x128xf32, #tpu.memory_space<vmem>>, vector<64x128xf32>
    %382 = arith.truncf %381 : vector<64x128xf32> to vector<64x128xbf16>
    %c3_294 = arith.constant 3 : index
    %c0_295 = arith.constant 0 : index
    %c0_296 = arith.constant 0 : index
    %383 = vector.load %arg9[%c3_294, %c0_295, %c0_296] : memref<7x128x128xbf16, #tpu.memory_space<vmem>>, vector<1x128x128xbf16>
    %384 = vector.shape_cast %383 : vector<1x128x128xbf16> to vector<128x128xbf16>
    %cst_297 = arith.constant dense<0.000000e+00> : vector<64x128xf32>
    %385 = tpu.matmul %382, %384, %cst_297 {dimension_numbers = #tpu.dot_dimension_numbers<[1], [0], [0], [1], [0, 0, 1, 1], [], []>} : vector<64x128xbf16>, vector<128x128xbf16>, vector<64x128xf32> -> vector<64x128xf32>
    %386 = arith.addf %380, %385 : vector<64x128xf32>
    %c9_298 = arith.constant 9 : index
    %c0_299 = arith.constant 0 : index
    %387 = vector.load %arg16[%c9_298, %c0_299] : memref<80x128xf32, #tpu.memory_space<vmem>>, vector<64x128xf32>
    %388 = arith.truncf %387 : vector<64x128xf32> to vector<64x128xbf16>
    %c4_300 = arith.constant 4 : index
    %c0_301 = arith.constant 0 : index
    %c0_302 = arith.constant 0 : index
    %389 = vector.load %arg8[%c4_300, %c0_301, %c0_302] : memref<7x128x128xbf16, #tpu.memory_space<vmem>>, vector<1x128x128xbf16>
    %390 = vector.shape_cast %389 : vector<1x128x128xbf16> to vector<128x128xbf16>
    %cst_303 = arith.constant dense<0.000000e+00> : vector<64x128xf32>
    %391 = tpu.matmul %388, %390, %cst_303 {dimension_numbers = #tpu.dot_dimension_numbers<[1], [0], [0], [1], [0, 0, 1, 1], [], []>} : vector<64x128xbf16>, vector<128x128xbf16>, vector<64x128xf32> -> vector<64x128xf32>
    %392 = arith.addf %386, %391 : vector<64x128xf32>
    %c9_304 = arith.constant 9 : index
    %c0_305 = arith.constant 0 : index
    %393 = vector.load %arg17[%c9_304, %c0_305] : memref<80x128xf32, #tpu.memory_space<vmem>>, vector<64x128xf32>
    %394 = arith.truncf %393 : vector<64x128xf32> to vector<64x128xbf16>
    %c4_306 = arith.constant 4 : index
    %c0_307 = arith.constant 0 : index
    %c0_308 = arith.constant 0 : index
    %395 = vector.load %arg9[%c4_306, %c0_307, %c0_308] : memref<7x128x128xbf16, #tpu.memory_space<vmem>>, vector<1x128x128xbf16>
    %396 = vector.shape_cast %395 : vector<1x128x128xbf16> to vector<128x128xbf16>
    %cst_309 = arith.constant dense<0.000000e+00> : vector<64x128xf32>
    %397 = tpu.matmul %394, %396, %cst_309 {dimension_numbers = #tpu.dot_dimension_numbers<[1], [0], [0], [1], [0, 0, 1, 1], [], []>} : vector<64x128xbf16>, vector<128x128xbf16>, vector<64x128xf32> -> vector<64x128xf32>
    %398 = arith.addf %392, %397 : vector<64x128xf32>
    %c10_310 = arith.constant 10 : index
    %c0_311 = arith.constant 0 : index
    %399 = vector.load %arg16[%c10_310, %c0_311] : memref<80x128xf32, #tpu.memory_space<vmem>>, vector<64x128xf32>
    %400 = arith.truncf %399 : vector<64x128xf32> to vector<64x128xbf16>
    %c5_312 = arith.constant 5 : index
    %c0_313 = arith.constant 0 : index
    %c0_314 = arith.constant 0 : index
    %401 = vector.load %arg8[%c5_312, %c0_313, %c0_314] : memref<7x128x128xbf16, #tpu.memory_space<vmem>>, vector<1x128x128xbf16>
    %402 = vector.shape_cast %401 : vector<1x128x128xbf16> to vector<128x128xbf16>
    %cst_315 = arith.constant dense<0.000000e+00> : vector<64x128xf32>
    %403 = tpu.matmul %400, %402, %cst_315 {dimension_numbers = #tpu.dot_dimension_numbers<[1], [0], [0], [1], [0, 0, 1, 1], [], []>} : vector<64x128xbf16>, vector<128x128xbf16>, vector<64x128xf32> -> vector<64x128xf32>
    %404 = arith.addf %398, %403 : vector<64x128xf32>
    %c10_316 = arith.constant 10 : index
    %c0_317 = arith.constant 0 : index
    %405 = vector.load %arg17[%c10_316, %c0_317] : memref<80x128xf32, #tpu.memory_space<vmem>>, vector<64x128xf32>
    %406 = arith.truncf %405 : vector<64x128xf32> to vector<64x128xbf16>
    %c5_318 = arith.constant 5 : index
    %c0_319 = arith.constant 0 : index
    %c0_320 = arith.constant 0 : index
    %407 = vector.load %arg9[%c5_318, %c0_319, %c0_320] : memref<7x128x128xbf16, #tpu.memory_space<vmem>>, vector<1x128x128xbf16>
    %408 = vector.shape_cast %407 : vector<1x128x128xbf16> to vector<128x128xbf16>
    %cst_321 = arith.constant dense<0.000000e+00> : vector<64x128xf32>
    %409 = tpu.matmul %406, %408, %cst_321 {dimension_numbers = #tpu.dot_dimension_numbers<[1], [0], [0], [1], [0, 0, 1, 1], [], []>} : vector<64x128xbf16>, vector<128x128xbf16>, vector<64x128xf32> -> vector<64x128xf32>
    %410 = arith.addf %404, %409 : vector<64x128xf32>
    %c11_322 = arith.constant 11 : index
    %c0_323 = arith.constant 0 : index
    %411 = vector.load %arg16[%c11_322, %c0_323] : memref<80x128xf32, #tpu.memory_space<vmem>>, vector<64x128xf32>
    %412 = arith.truncf %411 : vector<64x128xf32> to vector<64x128xbf16>
    %c6_324 = arith.constant 6 : index
    %c0_325 = arith.constant 0 : index
    %c0_326 = arith.constant 0 : index
    %413 = vector.load %arg8[%c6_324, %c0_325, %c0_326] : memref<7x128x128xbf16, #tpu.memory_space<vmem>>, vector<1x128x128xbf16>
    %414 = vector.shape_cast %413 : vector<1x128x128xbf16> to vector<128x128xbf16>
    %cst_327 = arith.constant dense<0.000000e+00> : vector<64x128xf32>
    %415 = tpu.matmul %412, %414, %cst_327 {dimension_numbers = #tpu.dot_dimension_numbers<[1], [0], [0], [1], [0, 0, 1, 1], [], []>} : vector<64x128xbf16>, vector<128x128xbf16>, vector<64x128xf32> -> vector<64x128xf32>
    %416 = arith.addf %410, %415 : vector<64x128xf32>
    %c11_328 = arith.constant 11 : index
    %c0_329 = arith.constant 0 : index
    %417 = vector.load %arg17[%c11_328, %c0_329] : memref<80x128xf32, #tpu.memory_space<vmem>>, vector<64x128xf32>
    %418 = arith.truncf %417 : vector<64x128xf32> to vector<64x128xbf16>
    %c6_330 = arith.constant 6 : index
    %c0_331 = arith.constant 0 : index
    %c0_332 = arith.constant 0 : index
    %419 = vector.load %arg9[%c6_330, %c0_331, %c0_332] : memref<7x128x128xbf16, #tpu.memory_space<vmem>>, vector<1x128x128xbf16>
    %420 = vector.shape_cast %419 : vector<1x128x128xbf16> to vector<128x128xbf16>
    %cst_333 = arith.constant dense<0.000000e+00> : vector<64x128xf32>
    %421 = tpu.matmul %418, %420, %cst_333 {dimension_numbers = #tpu.dot_dimension_numbers<[1], [0], [0], [1], [0, 0, 1, 1], [], []>} : vector<64x128xbf16>, vector<128x128xbf16>, vector<64x128xf32> -> vector<64x128xf32>
    %422 = arith.addf %416, %421 : vector<64x128xf32>
    %423 = vector.broadcast %10 : vector<1x128xf32> to vector<64x128xf32>
    %424 = arith.addf %422, %423 : vector<64x128xf32>
    %425 = vector.extract_strided_slice %339 {offsets = [0, 0], sizes = [16, 128], strides = [1, 1]} : vector<48x128xf32> to vector<16x128xf32>
    %c0_334 = arith.constant 0 : index
    %c0_335 = arith.constant 0 : index
    %c0_336 = arith.constant 0 : index
    %426 = vector.load %arg11[%c0_334, %c0_335, %c0_336] : memref<2x40x128xf32, #tpu.memory_space<vmem>>, vector<1x16x128xf32>
    %427 = vector.shape_cast %426 : vector<1x16x128xf32> to vector<16x128xf32>
    %428 = vector.shape_cast %425 : vector<16x128xf32> to vector<1x16x128xf32>
    tpu.vector_store %arg11[%c0_334, %c0_335, %c0_336], %428 {strides = array<i32>} : memref<2x40x128xf32, #tpu.memory_space<vmem>>, vector<1x16x128xf32>,
    %429 = vector.extract_strided_slice %424 {offsets = [0, 0], sizes = [24, 128], strides = [1, 1]} : vector<64x128xf32> to vector<24x128xf32>
    %c0_337 = arith.constant 0 : index
    %c16 = arith.constant 16 : index
    %c0_338 = arith.constant 0 : index
    %430 = vector.load %arg11[%c0_337, %c16, %c0_338] : memref<2x40x128xf32, #tpu.memory_space<vmem>>, vector<1x24x128xf32>
    %431 = vector.shape_cast %430 : vector<1x24x128xf32> to vector<24x128xf32>
    %432 = vector.shape_cast %429 : vector<24x128xf32> to vector<1x24x128xf32>
    tpu.vector_store %arg11[%c0_337, %c16, %c0_338], %432 {strides = array<i32>} : memref<2x40x128xf32, #tpu.memory_space<vmem>>, vector<1x24x128xf32>,
    %433 = vector.extract_strided_slice %339 {offsets = [24, 0], sizes = [16, 128], strides = [1, 1]} : vector<48x128xf32> to vector<16x128xf32>
    %c1_339 = arith.constant 1 : index
    %c0_340 = arith.constant 0 : index
    %c0_341 = arith.constant 0 : index
    %434 = vector.load %arg11[%c1_339, %c0_340, %c0_341] : memref<2x40x128xf32, #tpu.memory_space<vmem>>, vector<1x16x128xf32>
    %435 = vector.shape_cast %434 : vector<1x16x128xf32> to vector<16x128xf32>
    %436 = vector.shape_cast %433 : vector<16x128xf32> to vector<1x16x128xf32>
    tpu.vector_store %arg11[%c1_339, %c0_340, %c0_341], %436 {strides = array<i32>} : memref<2x40x128xf32, #tpu.memory_space<vmem>>, vector<1x16x128xf32>,
    %437 = vector.extract_strided_slice %424 {offsets = [32, 0], sizes = [24, 128], strides = [1, 1]} : vector<64x128xf32> to vector<24x128xf32>
    %c1_342 = arith.constant 1 : index
    %c16_343 = arith.constant 16 : index
    %c0_344 = arith.constant 0 : index
    %438 = vector.load %arg11[%c1_342, %c16_343, %c0_344] : memref<2x40x128xf32, #tpu.memory_space<vmem>>, vector<1x24x128xf32>
    %439 = vector.shape_cast %438 : vector<1x24x128xf32> to vector<24x128xf32>
    %440 = vector.shape_cast %437 : vector<24x128xf32> to vector<1x24x128xf32>
    tpu.vector_store %arg11[%c1_342, %c16_343, %c0_344], %440 {strides = array<i32>} : memref<2x40x128xf32, #tpu.memory_space<vmem>>, vector<1x24x128xf32>,
    return
  }
  func.func @transform_0(%arg0: i32) -> (i32, i32, i32) {
    %c0_i32 = arith.constant 0 : i32
    %c0_i32_0 = arith.constant 0 : i32
    %c0_i32_1 = arith.constant 0 : i32
    return %arg0, %c0_i32, %c0_i32_0 : i32, i32, i32
  }
  func.func @transform_1(%arg0: i32) -> (i32, i32, i32) {
    %c0_i32 = arith.constant 0 : i32
    %c0_i32_0 = arith.constant 0 : i32
    %c0_i32_1 = arith.constant 0 : i32
    return %arg0, %c0_i32, %c0_i32_0 : i32, i32, i32
  }
  func.func @transform_2(%arg0: i32) -> (i32, i32, i32) {
    %c0_i32 = arith.constant 0 : i32
    %c0_i32_0 = arith.constant 0 : i32
    %c0_i32_1 = arith.constant 0 : i32
    %c0_i32_2 = arith.constant 0 : i32
    return %c0_i32, %c0_i32_0, %c0_i32_1 : i32, i32, i32
  }
  func.func @transform_3(%arg0: i32) -> (i32, i32) {
    %c0_i32 = arith.constant 0 : i32
    %c0_i32_0 = arith.constant 0 : i32
    %c0_i32_1 = arith.constant 0 : i32
    return %c0_i32, %c0_i32_0 : i32, i32
  }
  func.func @transform_4(%arg0: i32) -> (i32, i32) {
    %c0_i32 = arith.constant 0 : i32
    %c0_i32_0 = arith.constant 0 : i32
    %c0_i32_1 = arith.constant 0 : i32
    return %c0_i32, %c0_i32_0 : i32, i32
  }
  func.func @transform_5(%arg0: i32) -> (i32, i32) {
    %c0_i32 = arith.constant 0 : i32
    %c0_i32_0 = arith.constant 0 : i32
    %c0_i32_1 = arith.constant 0 : i32
    return %c0_i32, %c0_i32_0 : i32, i32
  }
  func.func @transform_6(%arg0: i32) -> (i32, i32) {
    %c0_i32 = arith.constant 0 : i32
    %c0_i32_0 = arith.constant 0 : i32
    %c0_i32_1 = arith.constant 0 : i32
    return %c0_i32, %c0_i32_0 : i32, i32
  }
  func.func @transform_7(%arg0: i32) -> (i32, i32, i32) {
    %c0_i32 = arith.constant 0 : i32
    %c0_i32_0 = arith.constant 0 : i32
    %c0_i32_1 = arith.constant 0 : i32
    %c0_i32_2 = arith.constant 0 : i32
    return %c0_i32, %c0_i32_0, %c0_i32_1 : i32, i32, i32
  }
  func.func @transform_8(%arg0: i32) -> (i32, i32, i32) {
    %c0_i32 = arith.constant 0 : i32
    %c0_i32_0 = arith.constant 0 : i32
    %c0_i32_1 = arith.constant 0 : i32
    %c0_i32_2 = arith.constant 0 : i32
    return %c0_i32, %c0_i32_0, %c0_i32_1 : i32, i32, i32
  }
  func.func @transform_9(%arg0: i32) -> (i32, i32) {
    %c0_i32 = arith.constant 0 : i32
    %c0_i32_0 = arith.constant 0 : i32
    %c0_i32_1 = arith.constant 0 : i32
    return %c0_i32, %c0_i32_0 : i32, i32
  }
  func.func @transform_10(%arg0: i32) -> (i32, i32, i32) {
    %c0_i32 = arith.constant 0 : i32
    %c0_i32_0 = arith.constant 0 : i32
    %c0_i32_1 = arith.constant 0 : i32
    return %arg0, %c0_i32, %c0_i32_0 : i32, i32, i32
  }
}

</mosaic_0001>

<llo_original>
// kernel: gltb_forward.1
$region0: #{gltb_forward.1}
  #allocation0 [shape = 'u32[]', space=smem, size = 0x4, offset = 0x4, fixed_abs, tag = 'smem constant byte address 0x4 - core index']
  #allocation1 [shape = 'u32[144,128]{1,0:T(1,128)}', space=vmem, size = 0x12000, scoped, tag = 'internal scratch']
  #allocation2 [shape = 'f32[64,32]{1,0:T(8,128)}', space=vmem, size = 0x8000, scoped, tag = 'scratch operand']
  #allocation3 [shape = 'f32[64,128]{1,0:T(8,128)}', space=vmem, size = 0x8000, scoped, tag = 'scratch operand']
  #allocation4 [shape = 'f32[64,128]{1,0:T(8,128)}', space=vmem, size = 0x8000, scoped, tag = 'scratch operand']
  #allocation5 [shape = 'f32[80,32]{1,0:T(8,128)}', space=vmem, size = 0xa000, scoped, tag = 'scratch operand']
  #allocation6 [shape = 'f32[80,128]{1,0:T(8,128)}', space=vmem, size = 0xa000, scoped, tag = 'scratch operand']
  #allocation7 [shape = 'f32[80,128]{1,0:T(8,128)}', space=vmem, size = 0xa000, scoped, tag = 'scratch operand']
  %s0 = inlined_call_operand.vmem [shape: f32[4,16,32], index: 0, kind: input, shape index: {}]
  %s1 = inlined_call_operand.vmem [shape: f32[4,24,32], index: 1, kind: input, shape index: {}]
  %s2 = inlined_call_operand.vmem [shape: bf16[3,32,128], index: 2, kind: input, shape index: {}]
  %s3 = inlined_call_operand.vmem [shape: bf16[128,128], index: 3, kind: input, shape index: {}]
  %s4 = inlined_call_operand.vmem [shape: bf16[32,128], index: 4, kind: input, shape index: {}]
  %s5 = inlined_call_operand.vmem [shape: bf16[32,128], index: 5, kind: input, shape index: {}]
  %s6 = inlined_call_operand.vmem [shape: bf16[32,128], index: 6, kind: input, shape index: {}]
  %s7 = inlined_call_operand.vmem [shape: bf16[7,128,128], index: 7, kind: input, shape index: {}]
  %s8 = inlined_call_operand.vmem [shape: bf16[7,128,128], index: 8, kind: input, shape index: {}]
  %s9 = inlined_call_operand.vmem [shape: f32[10,128], index: 9, kind: input, shape index: {}]
  %s10 = inlined_call_operand.hbm [shape: f32[4,40,128], index: 10, kind: output, shape index: {}]
  %s11 = sld [smem:[#allocation0]]
  $region73: #{gltb_forward.1} parent=0
    _
  %s13 = ssub.s32 1, %s11
  %s14 = scalar_select 0, %s13, %s11
  $region1: #{gltb_forward.1} parent=0
    #allocation8 [shape = 'u8[81920]{0}', space=vmem, size = 0x14000, scoped, tag = 'output window, operand 0']
    #allocation9 [shape = 's32[2]{0}', space=sflag, size = 0x8, scoped, tag = 'scoped memory for gltb_forward.1']
    %15 = vsyncpa [#allocation9], 0
    %s16 = scalar_lea.sflag [#allocation9], 1
    %17 = vsyncpa %s16, 0
    loop: start=0, step=1, limit=4
    $region2: #{gltb_forward.1} parent=1 // loop_pre_header
      _
    $region3: #{gltb_forward.1} parent=1 // loop_header
      %s19 = sphi 0, %s23
      %p20 = scmp.ge.s32.totalorder %s19, 4
      %s29 = sphi 0, %s31
      %s32 = sphi 0, %s29
      %s33 = sphi 0, %s32
      %s49 = sphi 0, %s33
      %s55 = sphi 0, %s57
      %s58 = sphi 0, %s55
      %s59 = sphi 0, %s58
      %s75 = sphi 0, %s59
      %s79 = sphi 0, %s79
      %s81 = sphi 0, %s79
      %s82 = sphi 0, %s81
      %s96 = sphi 0, %s82
      %s100 = sphi 0, %s100
      %s102 = sphi 0, %s100
      %s103 = sphi 0, %s102
      %s117 = sphi 0, %s103
      %s121 = sphi 0, %s121
      %s123 = sphi 0, %s121
      %s124 = sphi 0, %s123
      %s138 = sphi 0, %s124
      %s142 = sphi 0, %s142
      %s144 = sphi 0, %s142
      %s145 = sphi 0, %s144
      %s159 = sphi 0, %s145
      %s163 = sphi 0, %s163
      %s165 = sphi 0, %s163
      %s166 = sphi 0, %s165
      %s180 = sphi 0, %s166
      %s184 = sphi 0, %s184
      %s186 = sphi 0, %s184
      %s187 = sphi 0, %s186
      %s201 = sphi 0, %s187
      %s205 = sphi 0, %s205
      %s207 = sphi 0, %s205
      %s208 = sphi 0, %s207
      %s222 = sphi 0, %s208
      %s226 = sphi 0, %s226
      %s228 = sphi 0, %s226
      %s229 = sphi 0, %s228
      %s243 = sphi 0, %s229
      %s249 = sphi 0, %s251
      %s252 = sphi 0, %s249
      %s253 = sphi 0, %s252
      %s269 = sphi 0, %s253
    $region4: #{gltb_forward.1} parent=1 // loop_header_branch
      %22 = sbr.rel (%p20) target = $region8
    $region5: #{gltb_forward.1} parent=1 // loop_body
      %s24 = ssub.s32 %s19, 1
      %s25 = ssub.s32 %s19, 2
      %s26 = sadd.s32 %s19, 1
      %s27 = ssub.s32 %s19, %s26
      %p28 = scmp.eq.s32.totalorder %s27, 0
      %s30 = sadd.s32 %s29, 1
      %s31 = scalar_select %p28, %s29, %s30
      %p34 = pneg %p28
      %p35 = scmp.eq.s32.totalorder %s19, 1
      %p36 = por %p34, %p35
      %p37 = scmp.ne.s32.totalorder %s29, %s32
      %p38 = scmp.eq.s32.totalorder %s19, 0
      %p39 = por %p37, %p38
      %p40 = scmp.ne.s32.totalorder %s29, %s32
      %p41 = scmp.eq.s32.totalorder %s24, 1
      %p42 = por %p40, %p41
      %p43 = scmp.ne.s32.totalorder %s32, %s33
      %p44 = scmp.eq.s32.totalorder %s24, 0
      %p45 = por %p43, %p44
      %p46 = scmp.ne.s32.totalorder %s32, %s33
      %p47 = scmp.eq.s32.totalorder %s25, 1
      %p48 = por %p46, %p47
      %p50 = scmp.ne.s32.totalorder %s33, %s49
      %p51 = scmp.eq.s32.totalorder %s25, 0
      %p52 = por %p50, %p51
      %s53 = ssub.s32 %s19, %s26
      %p54 = scmp.eq.s32.totalorder %s53, 0
      %s56 = sadd.s32 %s55, 1
      %s57 = scalar_select %p54, %s55, %s56
      %p60 = pneg %p54
      %p61 = scmp.eq.s32.totalorder %s19, 1
      %p62 = por %p60, %p61
      %p63 = scmp.ne.s32.totalorder %s55, %s58
      %p64 = scmp.eq.s32.totalorder %s19, 0
      %p65 = por %p63, %p64
      %p66 = scmp.ne.s32.totalorder %s55, %s58
      %p67 = scmp.eq.s32.totalorder %s24, 1
      %p68 = por %p66, %p67
      %p69 = scmp.ne.s32.totalorder %s58, %s59
      %p70 = scmp.eq.s32.totalorder %s24, 0
      %p71 = por %p69, %p70
      %p72 = scmp.ne.s32.totalorder %s58, %s59
      %p73 = scmp.eq.s32.totalorder %s25, 1
      %p74 = por %p72, %p73
      %p76 = scmp.ne.s32.totalorder %s59, %s75
      %p77 = scmp.eq.s32.totalorder %s25, 0
      %p78 = por %p76, %p77
      %s80 = sadd.s32 %s79, 1
      %p83 = scmp.eq.s32.totalorder %s19, 1
      %p84 = scmp.ne.s32.totalorder %s79, %s81
      %p85 = scmp.eq.s32.totalorder %s19, 0
      %p86 = por %p84, %p85
      %p87 = scmp.ne.s32.totalorder %s79, %s81
      %p88 = scmp.eq.s32.totalorder %s24, 1
      %p89 = por %p87, %p88
      %p90 = scmp.ne.s32.totalorder %s81, %s82
      %p91 = scmp.eq.s32.totalorder %s24, 0
      %p92 = por %p90, %p91
      %p93 = scmp.ne.s32.totalorder %s81, %s82
      %p94 = scmp.eq.s32.totalorder %s25, 1
      %p95 = por %p93, %p94
      %p97 = scmp.ne.s32.totalorder %s82, %s96
      %p98 = scmp.eq.s32.totalorder %s25, 0
      %p99 = por %p97, %p98
      %s101 = sadd.s32 %s100, 1
      %p104 = scmp.eq.s32.totalorder %s19, 1
      %p105 = scmp.ne.s32.totalorder %s100, %s102
      %p106 = scmp.eq.s32.totalorder %s19, 0
      %p107 = por %p105, %p106
      %p108 = scmp.ne.s32.totalorder %s100, %s102
      %p109 = scmp.eq.s32.totalorder %s24, 1
      %p110 = por %p108, %p109
      %p111 = scmp.ne.s32.totalorder %s102, %s103
      %p112 = scmp.eq.s32.totalorder %s24, 0
      %p113 = por %p111, %p112
      %p114 = scmp.ne.s32.totalorder %s102, %s103
      %p115 = scmp.eq.s32.totalorder %s25, 1
      %p116 = por %p114, %p115
      %p118 = scmp.ne.s32.totalorder %s103, %s117
      %p119 = scmp.eq.s32.totalorder %s25, 0
      %p120 = por %p118, %p119
      %s122 = sadd.s32 %s121, 1
      %p125 = scmp.eq.s32.totalorder %s19, 1
      %p126 = scmp.ne.s32.totalorder %s121, %s123
      %p127 = scmp.eq.s32.totalorder %s19, 0
      %p128 = por %p126, %p127
      %p129 = scmp.ne.s32.totalorder %s121, %s123
      %p130 = scmp.eq.s32.totalorder %s24, 1
      %p131 = por %p129, %p130
      %p132 = scmp.ne.s32.totalorder %s123, %s124
      %p133 = scmp.eq.s32.totalorder %s24, 0
      %p134 = por %p132, %p133
      %p135 = scmp.ne.s32.totalorder %s123, %s124
      %p136 = scmp.eq.s32.totalorder %s25, 1
      %p137 = por %p135, %p136
      %p139 = scmp.ne.s32.totalorder %s124, %s138
      %p140 = scmp.eq.s32.totalorder %s25, 0
      %p141 = por %p139, %p140
      %s143 = sadd.s32 %s142, 1
      %p146 = scmp.eq.s32.totalorder %s19, 1
      %p147 = scmp.ne.s32.totalorder %s142, %s144
      %p148 = scmp.eq.s32.totalorder %s19, 0
      %p149 = por %p147, %p148
      %p150 = scmp.ne.s32.totalorder %s142, %s144
      %p151 = scmp.eq.s32.totalorder %s24, 1
      %p152 = por %p150, %p151
      %p153 = scmp.ne.s32.totalorder %s144, %s145
      %p154 = scmp.eq.s32.totalorder %s24, 0
      %p155 = por %p153, %p154
      %p156 = scmp.ne.s32.totalorder %s144, %s145
      %p157 = scmp.eq.s32.totalorder %s25, 1
      %p158 = por %p156, %p157
      %p160 = scmp.ne.s32.totalorder %s145, %s159
      %p161 = scmp.eq.s32.totalorder %s25, 0
      %p162 = por %p160, %p161
      %s164 = sadd.s32 %s163, 1
      %p167 = scmp.eq.s32.totalorder %s19, 1
      %p168 = scmp.ne.s32.totalorder %s163, %s165
      %p169 = scmp.eq.s32.totalorder %s19, 0
      %p170 = por %p168, %p169
      %p171 = scmp.ne.s32.totalorder %s163, %s165
      %p172 = scmp.eq.s32.totalorder %s24, 1
      %p173 = por %p171, %p172
      %p174 = scmp.ne.s32.totalorder %s165, %s166
      %p175 = scmp.eq.s32.totalorder %s24, 0
      %p176 = por %p174, %p175
      %p177 = scmp.ne.s32.totalorder %s165, %s166
      %p178 = scmp.eq.s32.totalorder %s25, 1
      %p179 = por %p177, %p178
      %p181 = scmp.ne.s32.totalorder %s166, %s180
      %p182 = scmp.eq.s32.totalorder %s25, 0
      %p183 = por %p181, %p182
      %s185 = sadd.s32 %s184, 1
      %p188 = scmp.eq.s32.totalorder %s19, 1
      %p189 = scmp.ne.s32.totalorder %s184, %s186
      %p190 = scmp.eq.s32.totalorder %s19, 0
      %p191 = por %p189, %p190
      %p192 = scmp.ne.s32.totalorder %s184, %s186
      %p193 = scmp.eq.s32.totalorder %s24, 1
      %p194 = por %p192, %p193
      %p195 = scmp.ne.s32.totalorder %s186, %s187
      %p196 = scmp.eq.s32.totalorder %s24, 0
      %p197 = por %p195, %p196
      %p198 = scmp.ne.s32.totalorder %s186, %s187
      %p199 = scmp.eq.s32.totalorder %s25, 1
      %p200 = por %p198, %p199
      %p202 = scmp.ne.s32.totalorder %s187, %s201
      %p203 = scmp.eq.s32.totalorder %s25, 0
      %p204 = por %p202, %p203
      %s206 = sadd.s32 %s205, 1
      %p209 = scmp.eq.s32.totalorder %s19, 1
      %p210 = scmp.ne.s32.totalorder %s205, %s207
      %p211 = scmp.eq.s32.totalorder %s19, 0
      %p212 = por %p210, %p211
      %p213 = scmp.ne.s32.totalorder %s205, %s207
      %p214 = scmp.eq.s32.totalorder %s24, 1
      %p215 = por %p213, %p214
      %p216 = scmp.ne.s32.totalorder %s207, %s208
      %p217 = scmp.eq.s32.totalorder %s24, 0
      %p218 = por %p216, %p217
      %p219 = scmp.ne.s32.totalorder %s207, %s208
      %p220 = scmp.eq.s32.totalorder %s25, 1
      %p221 = por %p219, %p220
      %p223 = scmp.ne.s32.totalorder %s208, %s222
      %p224 = scmp.eq.s32.totalorder %s25, 0
      %p225 = por %p223, %p224
      %s227 = sadd.s32 %s226, 1
      %p230 = scmp.eq.s32.totalorder %s19, 1
      %p231 = scmp.ne.s32.totalorder %s226, %s228
      %p232 = scmp.eq.s32.totalorder %s19, 0
      %p233 = por %p231, %p232
      %p234 = scmp.ne.s32.totalorder %s226, %s228
      %p235 = scmp.eq.s32.totalorder %s24, 1
      %p236 = por %p234, %p235
      %p237 = scmp.ne.s32.totalorder %s228, %s229
      %p238 = scmp.eq.s32.totalorder %s24, 0
      %p239 = por %p237, %p238
      %p240 = scmp.ne.s32.totalorder %s228, %s229
      %p241 = scmp.eq.s32.totalorder %s25, 1
      %p242 = por %p240, %p241
      %p244 = scmp.ne.s32.totalorder %s229, %s243
      %p245 = scmp.eq.s32.totalorder %s25, 0
      %p246 = por %p244, %p245
      %s247 = ssub.s32 %s19, %s26
      %p248 = scmp.eq.s32.totalorder %s247, 0
      %s250 = sadd.s32 %s249, 1
      %s251 = scalar_select %p248, %s249, %s250
      %p254 = pneg %p248
      %p255 = scmp.eq.s32.totalorder %s19, 1
      %p256 = por %p254, %p255
      %p257 = scmp.ne.s32.totalorder %s249, %s252
      %p258 = scmp.eq.s32.totalorder %s19, 0
      %p259 = por %p257, %p258
      %p260 = scmp.ne.s32.totalorder %s249, %s252
      %p261 = scmp.eq.s32.totalorder %s24, 1
      %p262 = por %p260, %p261
      %p263 = scmp.ne.s32.totalorder %s252, %s253
      %p264 = scmp.eq.s32.totalorder %s24, 0
      %p265 = por %p263, %p264
      %p266 = scmp.ne.s32.totalorder %s252, %s253
      %p267 = scmp.eq.s32.totalorder %s25, 1
      %p268 = por %p266, %p267
      %p270 = scmp.ne.s32.totalorder %s253, %s269
      %p271 = scmp.eq.s32.totalorder %s25, 0
      %p272 = por %p270, %p271
      %p273 = scmp.le.s32.totalorder 1, %s19
      %p274 = scmp.lt.s32.totalorder %s19, 3
      %p275 = pnand %p273, %p274
      %p276 = pneg %p275
      // Predicated region
      $region9: #{gltb_forward.1} parent=5 // pred_check
        _
      $region10: #{gltb_forward.1} parent=5 // pred_check_branch
        %278 = sbr.rel (%p275) target = $region12
      $region11: #{gltb_forward.1} parent=5 // pred_region
        %s279 = ssub.s32 %s19, 1
        // Predicated region
        $region13: #{gltb_forward.1} parent=11 // pred_check
          %p280 = pneg %p92
        $region14: #{gltb_forward.1} parent=11 // pred_check_branch
          %282 = sbr.rel (%p280) target = $region16
        $region15: #{gltb_forward.1} parent=11 // pred_region
          _
        $region16: #{gltb_forward.1} parent=11 // pred_fallthru
          _
        // Predicated region
        $region17: #{gltb_forward.1} parent=11 // pred_check
          %p283 = pneg %p113
        $region18: #{gltb_forward.1} parent=11 // pred_check_branch
          %285 = sbr.rel (%p283) target = $region20
        $region19: #{gltb_forward.1} parent=11 // pred_region
          _
        $region20: #{gltb_forward.1} parent=11 // pred_fallthru
          _
        // Predicated region
        $region21: #{gltb_forward.1} parent=11 // pred_check
          %p286 = pneg %p134
        $region22: #{gltb_forward.1} parent=11 // pred_check_branch
          %288 = sbr.rel (%p286) target = $region24
        $region23: #{gltb_forward.1} parent=11 // pred_region
          _
        $region24: #{gltb_forward.1} parent=11 // pred_fallthru
          _
        // Predicated region
        $region25: #{gltb_forward.1} parent=11 // pred_check
          %p289 = pneg %p155
        $region26: #{gltb_forward.1} parent=11 // pred_check_branch
          %291 = sbr.rel (%p289) target = $region28
        $region27: #{gltb_forward.1} parent=11 // pred_region
          _
        $region28: #{gltb_forward.1} parent=11 // pred_fallthru
          _
        // Predicated region
        $region29: #{gltb_forward.1} parent=11 // pred_check
          %p292 = pneg %p176
        $region30: #{gltb_forward.1} parent=11 // pred_check_branch
          %294 = sbr.rel (%p292) target = $region32
        $region31: #{gltb_forward.1} parent=11 // pred_region
          _
        $region32: #{gltb_forward.1} parent=11 // pred_fallthru
          _
        // Predicated region
        $region33: #{gltb_forward.1} parent=11 // pred_check
          %p295 = pneg %p197
        $region34: #{gltb_forward.1} parent=11 // pred_check_branch
          %297 = sbr.rel (%p295) target = $region36
        $region35: #{gltb_forward.1} parent=11 // pred_region
          _
        $region36: #{gltb_forward.1} parent=11 // pred_fallthru
          _
        // Predicated region
        $region37: #{gltb_forward.1} parent=11 // pred_check
          %p298 = pneg %p218
        $region38: #{gltb_forward.1} parent=11 // pred_check_branch
          %300 = sbr.rel (%p298) target = $region40
        $region39: #{gltb_forward.1} parent=11 // pred_region
          _
        $region40: #{gltb_forward.1} parent=11 // pred_fallthru
          _
        // Predicated region
        $region41: #{gltb_forward.1} parent=11 // pred_check
          %p301 = pneg %p239
        $region42: #{gltb_forward.1} parent=11 // pred_check_branch
          %303 = sbr.rel (%p301) target = $region44
        $region43: #{gltb_forward.1} parent=11 // pred_region
          _
        $region44: #{gltb_forward.1} parent=11 // pred_fallthru
          _
      $region12: #{gltb_forward.1} parent=5 // pred_fallthru
        _
      %p304 = scmp.lt.s32.totalorder %s19, 2
      // Predicated region
      $region45: #{gltb_forward.1} parent=5 // pred_check
        %p305 = pneg %p304
      $region46: #{gltb_forward.1} parent=5 // pred_check_branch
        %307 = sbr.rel (%p305) target = $region48
      $region47: #{gltb_forward.1} parent=5 // pred_region
        // Predicated region
        $region49: #{gltb_forward.1} parent=47 // pred_check
          %p308 = pneg %p39
        $region50: #{gltb_forward.1} parent=47 // pred_check_branch
          %310 = sbr.rel (%p308) target = $region52
        $region51: #{gltb_forward.1} parent=47 // pred_region
          %s311 = smul.u32 2, %s19
          %p312 = scmp.lt.s32.totalorder %s311, 3
          %s313 = scalar_select %p312, %s311, 3
          %s314 = smul.addr %s313, 2
          %s315 = smul.addr %s314, 8
          %s316 = scalar_lea.vmem %s0, %s315
          %s317 = smul.u32 2, %s19
        $region52: #{gltb_forward.1} parent=47 // pred_fallthru
          _
        // Predicated region
        $region53: #{gltb_forward.1} parent=47 // pred_check
          %p318 = pneg %p65
        $region54: #{gltb_forward.1} parent=47 // pred_check_branch
          %320 = sbr.rel (%p318) target = $region56
        $region55: #{gltb_forward.1} parent=47 // pred_region
          %s321 = smul.u32 2, %s19
          %p322 = scmp.lt.s32.totalorder %s321, 3
          %s323 = scalar_select %p322, %s321, 3
          %s324 = smul.addr %s323, 3
          %s325 = smul.addr %s324, 8
          %s326 = scalar_lea.vmem %s1, %s325
          %s327 = smul.u32 2, %s19
        $region56: #{gltb_forward.1} parent=47 // pred_fallthru
          _
      $region48: #{gltb_forward.1} parent=5 // pred_fallthru
        _
      %p328 = scmp.le.s32.totalorder 1, %s19
      %p329 = scmp.lt.s32.totalorder %s19, 3
      %p330 = pnand %p328, %p329
      %p331 = pneg %p330
      // Predicated region
      $region57: #{gltb_forward.1} parent=5 // pred_check
        _
      $region58: #{gltb_forward.1} parent=5 // pred_check_branch
        %333 = sbr.rel (%p330) target = $region60
      $region59: #{gltb_forward.1} parent=5 // pred_region
        %s334 = ssub.s32 %s19, 1
        %s335 = smul.u32 2, %s24
        %p336 = scmp.lt.s32.totalorder %s335, 3
        %s337 = scalar_select %p336, %s335, 3
        %s338 = smul.addr %s337, 2
        %s339 = smul.addr %s338, 8
        %s340 = scalar_lea.vmem %s0, %s339
        %p341 = pneg %p45
        %p342 = pneg %p42
        %s343 = smul.u32 2, %s24
        %p344 = scmp.lt.s32.totalorder %s343, 3
        %s345 = scalar_select %p344, %s343, 3
        %s346 = smul.addr %s345, 3
        %s347 = smul.addr %s346, 8
        %s348 = scalar_lea.vmem %s1, %s347
        %p349 = pneg %p71
        %p350 = pneg %p68
        %p351 = pneg %p92
        %p352 = pneg %p89
        %p353 = pneg %p113
        %p354 = pneg %p110
        %p355 = pneg %p134
        %p356 = pneg %p131
        %p357 = pneg %p155
        %p358 = pneg %p152
        %p359 = pneg %p176
        %p360 = pneg %p173
        %p361 = pneg %p197
        %p362 = pneg %p194
        %p363 = pneg %p218
        %p364 = pneg %p215
        %p365 = pneg %p239
        %p366 = pneg %p236
        %p367 = pneg %p265
        %p368 = pneg %p262
        %s369 = sand.u32 %s252, 1
        %s370 = scalar_lea.sflag [#allocation9], %s369
        %s371 = sand.u32 %s252, 1
        %s372 = smul.addr %s371, 80
        %s373 = scalar_lea.vmem [#allocation8], %s372
        %s374 = smul.u32 2, %s24
        %p375 = scmp.lt.s32.totalorder %s374, 3
        %s376 = scalar_select %p375, %s374, 3
        %s377 = smul.addr %s376, 2
        %s378 = smul.addr %s377, 8
        %s379 = scalar_lea.vmem %s0, %s378
        %s380 = smul.u32 2, %s24
        %s381 = smul.u32 2, %s24
        %p382 = scmp.lt.s32.totalorder %s381, 3
        %s383 = scalar_select %p382, %s381, 3
        %s384 = smul.addr %s383, 3
        %s385 = smul.addr %s384, 8
        %s386 = scalar_lea.vmem %s1, %s385
        %s387 = smul.u32 2, %s24
        %s388 = smul.u32 2, %s24
        %v390 = vld [vmem:[%s9] sm:$0xff]
        %v391 = vld [vmem:[%s9 + $0x8] sm:$0x3]
        %v392 = vld [vmem:[%s3] sm:$0xf]
        %v393 = vld [vmem:[%s3 + $0x4] sm:$0xf]
        %v394 = vld [vmem:[%s3 + $0x8] sm:$0xf]
        %v395 = vld [vmem:[%s3 + $0xc] sm:$0xf]
        %v396 = vld [vmem:[%s3 + $0x10] sm:$0xf]
        %v397 = vld [vmem:[%s3 + $0x14] sm:$0xf]
        %v398 = vld [vmem:[%s3 + $0x18] sm:$0xf]
        %v399 = vld [vmem:[%s3 + $0x1c] sm:$0xf]
        %v400 = vld [vmem:[%s3 + $0x20] sm:$0xf]
        %v401 = vld [vmem:[%s3 + $0x24] sm:$0xf]
        %v402 = vld [vmem:[%s3 + $0x28] sm:$0xf]
        %v403 = vld [vmem:[%s3 + $0x2c] sm:$0xf]
        %v404 = vld [vmem:[%s3 + $0x30] sm:$0xf]
        %v405 = vld [vmem:[%s3 + $0x34] sm:$0xf]
        %v406 = vld [vmem:[%s3 + $0x38] sm:$0xf]
        %v407 = vld [vmem:[%s3 + $0x3c] sm:$0xf]
        %v408 = vld [vmem:[%s4] sm:$0xf]
        %v409 = vld [vmem:[%s4 + $0x4] sm:$0xf]
        %v410 = vld [vmem:[%s4 + $0x8] sm:$0xf]
        %v411 = vld [vmem:[%s4 + $0xc] sm:$0xf]
        %v412 = vld [vmem:[%s5] sm:$0xf]
        %v413 = vld [vmem:[%s5 + $0x4] sm:$0xf]
        %v414 = vld [vmem:[%s5 + $0x8] sm:$0xf]
        %v415 = vld [vmem:[%s5 + $0xc] sm:$0xf]
        %v416 = vld [vmem:[%s6] sm:$0xf]
        %v417 = vld [vmem:[%s6 + $0x4] sm:$0xf]
        %v418 = vld [vmem:[%s6 + $0x8] sm:$0xf]
        %v419 = vld [vmem:[%s6 + $0xc] sm:$0xf]
        %vm420 = vcmask 261120
        %421 = vst.msk [vmem:[#allocation2] sm:$0xff] %vm420, 0.0
        %422 = vst.msk [vmem:[#allocation2 + $0x18] sm:$0xff] %vm420, 0.0
        %423 = vst.msk [vmem:[#allocation2 + $0x30] sm:$0xff] %vm420, 0.0
        %424 = vst.msk [vmem:[#allocation2 + $0x38] sm:$0xff] %vm420, 0.0
        %v425 = vld [vmem:[%s379] sm:$0xff]
        %v426 = vld [vmem:[%s379 + $0x8] sm:$0xff]
        %427 = vst.msk [vmem:[#allocation2 + $0x8] sm:$0xff] %vm420, %v425
        %428 = vst.msk [vmem:[#allocation2 + $0x10] sm:$0xff] %vm420, %v426
        %s429 = scalar_lea.vmem %s379, 16
        %v430 = vld [vmem:[%s429] sm:$0xff]
        %v431 = vld [vmem:[%s429 + $0x8] sm:$0xff]
        %432 = vst.msk [vmem:[#allocation2 + $0x20] sm:$0xff] %vm420, %v430
        %433 = vst.msk [vmem:[#allocation2 + $0x28] sm:$0xff] %vm420, %v431
        %434 = vst.msk [vmem:[#allocation5] sm:$0xff] %vm420, 0.0
        %435 = vst.msk [vmem:[#allocation5 + $0x20] sm:$0xff] %vm420, 0.0
        %436 = vst.msk [vmem:[#allocation5 + $0x40] sm:$0xff] %vm420, 0.0
        %437 = vst.msk [vmem:[#allocation5 + $0x48] sm:$0xff] %vm420, 0.0
        %v438 = vld [vmem:[%s386] sm:$0xff]
        %v439 = vld [vmem:[%s386 + $0x8] sm:$0xff]
        %v440 = vld [vmem:[%s386 + $0x10] sm:$0xff]
        %441 = vst.msk [vmem:[#allocation5 + $0x8] sm:$0xff] %vm420, %v438
        %442 = vst.msk [vmem:[#allocation5 + $0x10] sm:$0xff] %vm420, %v439
        %443 = vst.msk [vmem:[#allocation5 + $0x18] sm:$0xff] %vm420, %v440
        %s444 = scalar_lea.vmem %s386, 24
        %v445 = vld [vmem:[%s444] sm:$0xff]
        %v446 = vld [vmem:[%s444 + $0x8] sm:$0xff]
        %v447 = vld [vmem:[%s444 + $0x10] sm:$0xff]
        %448 = vst.msk [vmem:[#allocation5 + $0x28] sm:$0xff] %vm420, %v445
        %449 = vst.msk [vmem:[#allocation5 + $0x30] sm:$0xff] %vm420, %v446
        %450 = vst.msk [vmem:[#allocation5 + $0x38] sm:$0xff] %vm420, %v447
        %451 = vst [vmem:[#allocation3] sm:$0xff] 0.0
        %452 = vst [vmem:[#allocation3 + $0x18] sm:$0xff] 0.0
        %453 = vst [vmem:[#allocation3 + $0x30] sm:$0xff] 0.0
        %454 = vst [vmem:[#allocation3 + $0x38] sm:$0xff] 0.0
        %455 = vst [vmem:[#allocation4] sm:$0xff] 0.0
        %456 = vst [vmem:[#allocation4 + $0x18] sm:$0xff] 0.0
        %457 = vst [vmem:[#allocation4 + $0x30] sm:$0xff] 0.0
        %458 = vst [vmem:[#allocation4 + $0x38] sm:$0xff] 0.0
        %459 = vst [vmem:[#allocation6] sm:$0xff] 0.0
        %460 = vst [vmem:[#allocation6 + $0x20] sm:$0xff] 0.0
        %461 = vst [vmem:[#allocation6 + $0x40] sm:$0xff] 0.0
        %462 = vst [vmem:[#allocation6 + $0x48] sm:$0xff] 0.0
        %463 = vst [vmem:[#allocation7] sm:$0xff] 0.0
        %464 = vst [vmem:[#allocation7 + $0x20] sm:$0xff] 0.0
        %465 = vst [vmem:[#allocation7 + $0x40] sm:$0xff] 0.0
        %466 = vst [vmem:[#allocation7 + $0x48] sm:$0xff] 0.0
        %v467 = vld [vmem:[#allocation2 + $0x7] sm:$0xff]
        %v468 = vld [vmem:[#allocation2 + $0xf] sm:$0xff]
        %v469 = vld [vmem:[#allocation2 + $0x17] sm:$0xff]
        %v470 = vld [vmem:[#allocation2 + $0x1f] sm:$0xff]
        %v471 = vld [vmem:[#allocation2 + $0x27] sm:$0xff]
        %v472 = vld [vmem:[#allocation2 + $0x2f] sm:$0xff]
        %v473 = vpack.c.bf16 %v468, %v467
        %v474 = vpack.c.bf16 %v470, %v469
        %v475 = vpack.c.bf16 %v472, %v471
        %v476 = vld [vmem:[%s2] sm:$0xf]
        %v477 = vld [vmem:[%s2 + $0x4] sm:$0xf]
        %v478 = vld [vmem:[%s2 + $0x8] sm:$0xf]
        %v479 = vld [vmem:[%s2 + $0xc] sm:$0xf]
        %v480 = vld [vmem:[#allocation2 + $0x8] sm:$0xff]
        %v481 = vld [vmem:[#allocation2 + $0x10] sm:$0xff]
        %v482 = vld [vmem:[#allocation2 + $0x18] sm:$0xff]
        %v483 = vld [vmem:[#allocation2 + $0x20] sm:$0xff]
        %v484 = vld [vmem:[#allocation2 + $0x28] sm:$0xff]
        %v485 = vld [vmem:[#allocation2 + $0x30] sm:$0xff]
        %v486 = vpack.c.bf16 %v481, %v480
        %v487 = vpack.c.bf16 %v483, %v482
        %v488 = vpack.c.bf16 %v485, %v484
        %s489 = scalar_lea.vmem %s2, 16
        %v490 = vld [vmem:[%s489] sm:$0xf]
        %v491 = vld [vmem:[%s489 + $0x4] sm:$0xf]
        %v492 = vld [vmem:[%s489 + $0x8] sm:$0xf]
        %v493 = vld [vmem:[%s489 + $0xc] sm:$0xf]
        %v498 = vunpack.c.l.b16 %v490
        %v499 = vunpack.c.l.b16 %v491
        %v500 = vunpack.c.l.b16 %v492
        %v501 = vunpack.c.l.b16 %v493
        %v502 = vpack.c.b16 %v499, %v498
        %v503 = vpack.c.b16 %v501, %v500
        %v507 = vsel %vm420, %v486, 0
        %v510 = vsel %vm420, %v487, 0
        %v513 = vsel %vm420, %v488, 0
        %515 = vmatprep.subr.bf16.mxu0 0
        %516 = vmatpush1.bf16.msra.mxu0 %v502
        %517 = vmatprep.subr.bf16.mxu0 0
        %518 = vmatpush1.bf16.msra.mxu0 %v503
        %519 = vmatprep.subr.bf16.mxu0 0
        %520 = vmatpush1.bf16.msra.mxu0 0
        %521 = vmatprep.subr.bf16.mxu0 0
        %522 = vmatpush1.bf16.msra.mxu0 0
        %523 = vmatprep.subr.bf16.mxu0 0
        %524 = vmatpush1.bf16.msra.mxu0 0
        %525 = vmatprep.subr.bf16.mxu0 0
        %526 = vmatpush1.bf16.msra.mxu0 0
        %527 = vmatprep.subr.bf16.mxu0 0
        %528 = vmatpush1.bf16.msra.mxu0 0
        %529 = vmatprep.subr.bf16.mxu0 0
        %530 = vmatpush1.bf16.msra.mxu0 0
        %531 = vmatprep.subr.bf16.mxu0 0
        %532 = vmatpush1.bf16.msra.mxu0 0
        %533 = vmatprep.subr.bf16.mxu0 0
        %534 = vmatpush1.bf16.msra.mxu0 0
        %535 = vmatprep.subr.bf16.mxu0 0
        %536 = vmatpush1.bf16.msra.mxu0 0
        %537 = vmatprep.subr.bf16.mxu0 0
        %538 = vmatpush1.bf16.msra.mxu0 0
        %539 = vmatprep.subr.bf16.mxu0 0
        %540 = vmatpush1.bf16.msra.mxu0 0
        %541 = vmatprep.subr.bf16.mxu0 0
        %542 = vmatpush1.bf16.msra.mxu0 0
        %543 = vmatprep.subr.bf16.mxu0 0
        %544 = vmatpush1.bf16.msra.mxu0 0
        %545 = vmatprep.subr.bf16.mxu0 0
        %546 = vmatpush1.bf16.msra.mxu0 0
        %547 = vmatprep.mubr.bf16.mxu0 0
        %548 = vmatmul.mubr.bf16.gmra.mrb[0].mxu0 %v507
        %v549 = vpop.f32.mrb[0].mxu0
        %v550 = vadd.f32 0.0, %v549
        %v551 = vpop.f32.mrb[0].mxu0
        %v552 = vpop.f32.mrb[0].mxu0
        %v553 = vadd.f32 0.0, %v552
        %v554 = vpop.f32.mrb[0].mxu0
        %555 = vmatprep.mubr.bf16.mxu0 0
        %556 = vmatmul.mubr.bf16.gmra.mrb[0].mxu0 %v510
        %v557 = vpop.f32.mrb[0].mxu0
        %v558 = vadd.f32 0.0, %v557
        %v559 = vpop.f32.mrb[0].mxu0
        %v560 = vpop.f32.mrb[0].mxu0
        %v561 = vadd.f32 0.0, %v560
        %v562 = vpop.f32.mrb[0].mxu0
        %563 = vmatprep.mubr.bf16.mxu0 0
        %564 = vmatmul.mubr.bf16.gmra.mrb[0].mxu0 %v513
        %v565 = vpop.f32.mrb[0].mxu0
        %v566 = vadd.f32 0.0, %v565
        %v567 = vpop.f32.mrb[0].mxu0
        %v568 = vpop.f32.mrb[0].mxu0
        %v569 = vadd.f32 0.0, %v568
        %v570 = vpop.f32.mrb[0].mxu0
        %571 = vdwg.mxu0
        %v576 = vunpack.c.l.b16 %v476
        %v577 = vunpack.c.l.b16 %v477
        %v578 = vunpack.c.l.b16 %v478
        %v579 = vunpack.c.l.b16 %v479
        %v580 = vpack.c.b16 %v577, %v576
        %v581 = vpack.c.b16 %v579, %v578
        %v585 = vsel %vm420, %v473, 0
        %v588 = vsel %vm420, %v474, 0
        %v591 = vsel %vm420, %v475, 0
        %593 = vmatprep.subr.bf16.mxu0 0
        %594 = vmatpush1.bf16.msra.mxu0 %v580
        %595 = vmatprep.subr.bf16.mxu0 0
        %596 = vmatpush1.bf16.msra.mxu0 %v581
        %597 = vmatprep.subr.bf16.mxu0 0
        %598 = vmatpush1.bf16.msra.mxu0 0
        %599 = vmatprep.subr.bf16.mxu0 0
        %600 = vmatpush1.bf16.msra.mxu0 0
        %601 = vmatprep.subr.bf16.mxu0 0
        %602 = vmatpush1.bf16.msra.mxu0 0
        %603 = vmatprep.subr.bf16.mxu0 0
        %604 = vmatpush1.bf16.msra.mxu0 0
        %605 = vmatprep.subr.bf16.mxu0 0
        %606 = vmatpush1.bf16.msra.mxu0 0
        %607 = vmatprep.subr.bf16.mxu0 0
        %608 = vmatpush1.bf16.msra.mxu0 0
        %609 = vmatprep.subr.bf16.mxu0 0
        %610 = vmatpush1.bf16.msra.mxu0 0
        %611 = vmatprep.subr.bf16.mxu0 0
        %612 = vmatpush1.bf16.msra.mxu0 0
        %613 = vmatprep.subr.bf16.mxu0 0
        %614 = vmatpush1.bf16.msra.mxu0 0
        %615 = vmatprep.subr.bf16.mxu0 0
        %616 = vmatpush1.bf16.msra.mxu0 0
        %617 = vmatprep.subr.bf16.mxu0 0
        %618 = vmatpush1.bf16.msra.mxu0 0
        %619 = vmatprep.subr.bf16.mxu0 0
        %620 = vmatpush1.bf16.msra.mxu0 0
        %621 = vmatprep.subr.bf16.mxu0 0
        %622 = vmatpush1.bf16.msra.mxu0 0
        %623 = vmatprep.subr.bf16.mxu0 0
        %624 = vmatpush1.bf16.msra.mxu0 0
        %625 = vmatprep.mubr.bf16.mxu0 0
        %626 = vmatmul.mubr.bf16.gmra.mrb[0].mxu0 %v585
        %v627 = vpop.f32.mrb[0].mxu0
        %v628 = vadd.f32 %v550, %v627
        %v629 = vpop.f32.mrb[0].mxu0
        %v630 = vpop.f32.mrb[0].mxu0
        %v631 = vadd.f32 %v553, %v630
        %v632 = vpop.f32.mrb[0].mxu0
        %633 = vmatprep.mubr.bf16.mxu0 0
        %634 = vmatmul.mubr.bf16.gmra.mrb[0].mxu0 %v588
        %v635 = vpop.f32.mrb[0].mxu0
        %v636 = vadd.f32 %v558, %v635
        %v637 = vpop.f32.mrb[0].mxu0
        %v638 = vpop.f32.mrb[0].mxu0
        %v639 = vadd.f32 %v561, %v638
        %v640 = vpop.f32.mrb[0].mxu0
        %641 = vmatprep.mubr.bf16.mxu0 0
        %642 = vmatmul.mubr.bf16.gmra.mrb[0].mxu0 %v591
        %v643 = vpop.f32.mrb[0].mxu0
        %v644 = vadd.f32 %v566, %v643
        %v645 = vpop.f32.mrb[0].mxu0
        %v646 = vpop.f32.mrb[0].mxu0
        %v647 = vadd.f32 %v569, %v646
        %v648 = vpop.f32.mrb[0].mxu0
        %649 = vdwg.mxu0
        %v650 = vld [vmem:[#allocation2 + $0x9] sm:$0xff]
        %v651 = vld [vmem:[#allocation2 + $0x11] sm:$0xff]
        %v652 = vld [vmem:[#allocation2 + $0x19] sm:$0xff]
        %v653 = vld [vmem:[#allocation2 + $0x21] sm:$0xff]
        %v654 = vld [vmem:[#allocation2 + $0x29] sm:$0xff]
        %v655 = vld [vmem:[#allocation2 + $0x31] sm:$0xff]
        %v656 = vpack.c.bf16 %v651, %v650
        %v657 = vpack.c.bf16 %v653, %v652
        %v658 = vpack.c.bf16 %v655, %v654
        %s659 = scalar_lea.vmem %s2, 32
        %v660 = vld [vmem:[%s659] sm:$0xf]
        %v661 = vld [vmem:[%s659 + $0x4] sm:$0xf]
        %v662 = vld [vmem:[%s659 + $0x8] sm:$0xf]
        %v663 = vld [vmem:[%s659 + $0xc] sm:$0xf]
        %v668 = vunpack.c.l.b16 %v660
        %v669 = vunpack.c.l.b16 %v661
        %v670 = vunpack.c.l.b16 %v662
        %v671 = vunpack.c.l.b16 %v663
        %v672 = vpack.c.b16 %v669, %v668
        %v673 = vpack.c.b16 %v671, %v670
        %v677 = vsel %vm420, %v656, 0
        %v680 = vsel %vm420, %v657, 0
        %v683 = vsel %vm420, %v658, 0
        %685 = vmatprep.subr.bf16.mxu0 0
        %686 = vmatpush1.bf16.msra.mxu0 %v672
        %687 = vmatprep.subr.bf16.mxu0 0
        %688 = vmatpush1.bf16.msra.mxu0 %v673
        %689 = vmatprep.subr.bf16.mxu0 0
        %690 = vmatpush1.bf16.msra.mxu0 0
        %691 = vmatprep.subr.bf16.mxu0 0
        %692 = vmatpush1.bf16.msra.mxu0 0
        %693 = vmatprep.subr.bf16.mxu0 0
        %694 = vmatpush1.bf16.msra.mxu0 0
        %695 = vmatprep.subr.bf16.mxu0 0
        %696 = vmatpush1.bf16.msra.mxu0 0
        %697 = vmatprep.subr.bf16.mxu0 0
        %698 = vmatpush1.bf16.msra.mxu0 0
        %699 = vmatprep.subr.bf16.mxu0 0
        %700 = vmatpush1.bf16.msra.mxu0 0
        %701 = vmatprep.subr.bf16.mxu0 0
        %702 = vmatpush1.bf16.msra.mxu0 0
        %703 = vmatprep.subr.bf16.mxu0 0
        %704 = vmatpush1.bf16.msra.mxu0 0
        %705 = vmatprep.subr.bf16.mxu0 0
        %706 = vmatpush1.bf16.msra.mxu0 0
        %707 = vmatprep.subr.bf16.mxu0 0
        %708 = vmatpush1.bf16.msra.mxu0 0
        %709 = vmatprep.subr.bf16.mxu0 0
        %710 = vmatpush1.bf16.msra.mxu0 0
        %711 = vmatprep.subr.bf16.mxu0 0
        %712 = vmatpush1.bf16.msra.mxu0 0
        %713 = vmatprep.subr.bf16.mxu0 0
        %714 = vmatpush1.bf16.msra.mxu0 0
        %715 = vmatprep.subr.bf16.mxu0 0
        %716 = vmatpush1.bf16.msra.mxu0 0
        %717 = vmatprep.mubr.bf16.mxu0 0
        %718 = vmatmul.mubr.bf16.gmra.mrb[0].mxu0 %v677
        %v719 = vpop.f32.mrb[0].mxu0
        %v720 = vadd.f32 0.0, %v719
        %v721 = vpop.f32.mrb[0].mxu0
        %v722 = vpop.f32.mrb[0].mxu0
        %v723 = vadd.f32 0.0, %v722
        %v724 = vpop.f32.mrb[0].mxu0
        %725 = vmatprep.mubr.bf16.mxu0 0
        %726 = vmatmul.mubr.bf16.gmra.mrb[0].mxu0 %v680
        %v727 = vpop.f32.mrb[0].mxu0
        %v728 = vadd.f32 0.0, %v727
        %v729 = vpop.f32.mrb[0].mxu0
        %v730 = vpop.f32.mrb[0].mxu0
        %v731 = vadd.f32 0.0, %v730
        %v732 = vpop.f32.mrb[0].mxu0
        %733 = vmatprep.mubr.bf16.mxu0 0
        %734 = vmatmul.mubr.bf16.gmra.mrb[0].mxu0 %v683
        %v735 = vpop.f32.mrb[0].mxu0
        %v736 = vadd.f32 0.0, %v735
        %v737 = vpop.f32.mrb[0].mxu0
        %v738 = vpop.f32.mrb[0].mxu0
        %v739 = vadd.f32 0.0, %v738
        %v740 = vpop.f32.mrb[0].mxu0
        %741 = vdwg.mxu0
        %v742 = vadd.f32 %v628, %v720
        %v743 = vadd.f32 %v631, %v723
        %v744 = vadd.f32 %v636, %v728
        %v745 = vadd.f32 %v639, %v731
        %v746 = vadd.f32 %v644, %v736
        %v747 = vadd.f32 %v647, %v739
        %v748 = vlaneseq
        %v749 = vshrl.u32 %v748, 7
        %v750 = vsub.s32 0, %v749
        %v751 = vrot.slane %v390, %v750
        %v752 = vadd.f32 %v742, %v751
        %v753 = vadd.f32 %v743, %v751
        %v754 = vadd.f32 %v744, %v751
        %v755 = vadd.f32 %v745, %v751
        %v756 = vadd.f32 %v746, %v751
        %v757 = vadd.f32 %v747, %v751
        %v758 = vmax.f32 %v752, 0.0
        %v759 = vmax.f32 %v753, 0.0
        %v760 = vmax.f32 %v754, 0.0
        %v761 = vmax.f32 %v755, 0.0
        %v762 = vmax.f32 %v756, 0.0
        %v763 = vmax.f32 %v757, 0.0
        %v764 = vlaneseq
        %v765 = vshrl.u32 %v764, 7
        %v766 = vsub.s32 1, %v765
        %v767 = vrot.slane %v390, %v766
        %v768 = vmul.f32 %v758, %v767
        %v769 = vmul.f32 %v759, %v767
        %v770 = vmul.f32 %v760, %v767
        %v771 = vmul.f32 %v761, %v767
        %v772 = vmul.f32 %v762, %v767
        %v773 = vmul.f32 %v763, %v767
        %v774 = vlaneseq
        %v775 = vshrl.u32 %v774, 7
        %v776 = vsub.s32 2, %v775
        %v777 = vrot.slane %v390, %v776
        %v778 = vadd.f32 %v768, %v777
        %v779 = vadd.f32 %v769, %v777
        %v780 = vadd.f32 %v770, %v777
        %v781 = vadd.f32 %v771, %v777
        %v782 = vadd.f32 %v772, %v777
        %v783 = vadd.f32 %v773, %v777
        %v784 = vpack.c.bf16 %v779, %v778
        %v785 = vpack.c.bf16 %v781, %v780
        %v786 = vpack.c.bf16 %v783, %v782
        %v787 = vlaneseq
        %v788 = vshrl.u32 %v787, 7
        %v789 = vsub.s32 3, %v788
        %v790 = vrot.slane %v390, %v789
        %v807 = vunpack.c.l.b16 %v392
        %v808 = vunpack.c.l.b16 %v393
        %v809 = vunpack.c.l.b16 %v394
        %v810 = vunpack.c.l.b16 %v395
        %v811 = vunpack.c.l.b16 %v396
        %v812 = vunpack.c.l.b16 %v397
        %v813 = vunpack.c.l.b16 %v398
        %v814 = vunpack.c.l.b16 %v399
        %v815 = vunpack.c.l.b16 %v400
        %v816 = vunpack.c.l.b16 %v401
        %v817 = vunpack.c.l.b16 %v402
        %v818 = vunpack.c.l.b16 %v403
        %v819 = vunpack.c.l.b16 %v404
        %v820 = vunpack.c.l.b16 %v405
        %v821 = vunpack.c.l.b16 %v406
        %v822 = vunpack.c.l.b16 %v407
        %v823 = vpack.c.b16 %v808, %v807
        %v824 = vpack.c.b16 %v810, %v809
        %v825 = vpack.c.b16 %v812, %v811
        %v826 = vpack.c.b16 %v814, %v813
        %v827 = vpack.c.b16 %v816, %v815
        %v828 = vpack.c.b16 %v818, %v817
        %v829 = vpack.c.b16 %v820, %v819
        %v830 = vpack.c.b16 %v822, %v821
        %839 = vmatprep.subr.bf16.mxu0 0
        %840 = vmatpush1.bf16.msra.mxu0 %v823
        %841 = vmatprep.subr.bf16.mxu0 0
        %842 = vmatpush1.bf16.msra.mxu0 %v824
        %843 = vmatprep.subr.bf16.mxu0 0
        %844 = vmatpush1.bf16.msra.mxu0 %v825
        %845 = vmatprep.subr.bf16.mxu0 0
        %846 = vmatpush1.bf16.msra.mxu0 %v826
        %847 = vmatprep.subr.bf16.mxu0 0
        %848 = vmatpush1.bf16.msra.mxu0 %v827
        %849 = vmatprep.subr.bf16.mxu0 0
        %850 = vmatpush1.bf16.msra.mxu0 %v828
        %851 = vmatprep.subr.bf16.mxu0 0
        %852 = vmatpush1.bf16.msra.mxu0 %v829
        %853 = vmatprep.subr.bf16.mxu0 0
        %854 = vmatpush1.bf16.msra.mxu0 %v830
        %855 = vmatprep.subr.bf16.mxu0 0
        %856 = vmatpush1.bf16.msra.mxu0 0
        %857 = vmatprep.subr.bf16.mxu0 0
        %858 = vmatpush1.bf16.msra.mxu0 0
        %859 = vmatprep.subr.bf16.mxu0 0
        %860 = vmatpush1.bf16.msra.mxu0 0
        %861 = vmatprep.subr.bf16.mxu0 0
        %862 = vmatpush1.bf16.msra.mxu0 0
        %863 = vmatprep.subr.bf16.mxu0 0
        %864 = vmatpush1.bf16.msra.mxu0 0
        %865 = vmatprep.subr.bf16.mxu0 0
        %866 = vmatpush1.bf16.msra.mxu0 0
        %867 = vmatprep.subr.bf16.mxu0 0
        %868 = vmatpush1.bf16.msra.mxu0 0
        %869 = vmatprep.subr.bf16.mxu0 0
        %870 = vmatpush1.bf16.msra.mxu0 0
        %871 = vmatprep.mubr.bf16.mxu0 0
        %872 = vmatmul.mubr.bf16.gmra.mrb[0].mxu0 %v784
        %v873 = vpop.f32.mrb[0].mxu0
        %v874 = vadd.f32 %v790, %v873
        %v875 = vpop.f32.mrb[0].mxu0
        %v876 = vpop.f32.mrb[0].mxu0
        %v877 = vadd.f32 %v790, %v876
        %v878 = vpop.f32.mrb[0].mxu0
        %879 = vmatprep.mubr.bf16.mxu0 0
        %880 = vmatmul.mubr.bf16.gmra.mrb[0].mxu0 %v785
        %v881 = vpop.f32.mrb[0].mxu0
        %v882 = vpop.f32.mrb[0].mxu0
        %v883 = vpop.f32.mrb[0].mxu0
        %v884 = vadd.f32 %v790, %v883
        %v885 = vpop.f32.mrb[0].mxu0
        %886 = vmatprep.mubr.bf16.mxu0 0
        %887 = vmatmul.mubr.bf16.gmra.mrb[0].mxu0 %v786
        %v888 = vpop.f32.mrb[0].mxu0
        %v889 = vadd.f32 %v790, %v888
        %v890 = vpop.f32.mrb[0].mxu0
        %v891 = vpop.f32.mrb[0].mxu0
        %v892 = vpop.f32.mrb[0].mxu0
        %893 = vdwg.mxu0
        %v894 = vmax.f32 %v874, 0.0
        %v895 = vmax.f32 %v877, 0.0
        %v896 = vmax.f32 %v884, 0.0
        %v897 = vmax.f32 %v889, 0.0
        %v898 = vlaneseq
        %v899 = vshrl.u32 %v898, 7
        %v900 = vsub.s32 4, %v899
        %v901 = vrot.slane %v390, %v900
        %v902 = vmul.f32 %v894, %v901
        %v903 = vmul.f32 %v895, %v901
        %v904 = vmul.f32 %v896, %v901
        %v905 = vmul.f32 %v897, %v901
        %v906 = vlaneseq
        %v907 = vshrl.u32 %v906, 7
        %v908 = vsub.s32 5, %v907
        %v909 = vrot.slane %v390, %v908
        %v910 = vadd.f32 %v902, %v909
        %v911 = vadd.f32 %v903, %v909
        %v912 = vadd.f32 %v904, %v909
        %v913 = vadd.f32 %v905, %v909
        %v914 = vld [vmem:[#allocation5 + $0x7] sm:$0xff]
        %v915 = vld [vmem:[#allocation5 + $0xf] sm:$0xff]
        %v916 = vld [vmem:[#allocation5 + $0x17] sm:$0xff]
        %v917 = vld [vmem:[#allocation5 + $0x1f] sm:$0xff]
        %v918 = vld [vmem:[#allocation5 + $0x27] sm:$0xff]
        %v919 = vld [vmem:[#allocation5 + $0x2f] sm:$0xff]
        %v920 = vld [vmem:[#allocation5 + $0x37] sm:$0xff]
        %v921 = vld [vmem:[#allocation5 + $0x3f] sm:$0xff]
        %v922 = vpack.c.bf16 %v915, %v914
        %v923 = vpack.c.bf16 %v917, %v916
        %v924 = vpack.c.bf16 %v919, %v918
        %v925 = vpack.c.bf16 %v921, %v920
        %v926 = vld [vmem:[#allocation5 + $0x8] sm:$0xff]
        %v927 = vld [vmem:[#allocation5 + $0x10] sm:$0xff]
        %v928 = vld [vmem:[#allocation5 + $0x18] sm:$0xff]
        %v929 = vld [vmem:[#allocation5 + $0x20] sm:$0xff]
        %v930 = vld [vmem:[#allocation5 + $0x28] sm:$0xff]
        %v931 = vld [vmem:[#allocation5 + $0x30] sm:$0xff]
        %v932 = vld [vmem:[#allocation5 + $0x38] sm:$0xff]
        %v933 = vld [vmem:[#allocation5 + $0x40] sm:$0xff]
        %v934 = vpack.c.bf16 %v927, %v926
        %v935 = vpack.c.bf16 %v929, %v928
        %v936 = vpack.c.bf16 %v931, %v930
        %v937 = vpack.c.bf16 %v933, %v932
        %v939 = vsel %vm420, %v934, 0
        %v942 = vsel %vm420, %v935, 0
        %v945 = vsel %vm420, %v936, 0
        %v948 = vsel %vm420, %v937, 0
        %950 = vmatprep.subr.bf16.mxu0 0
        %951 = vmatpush1.bf16.msra.mxu0 %v502
        %952 = vmatprep.subr.bf16.mxu0 0
        %953 = vmatpush1.bf16.msra.mxu0 %v503
        %954 = vmatprep.subr.bf16.mxu0 0
        %955 = vmatpush1.bf16.msra.mxu0 0
        %956 = vmatprep.subr.bf16.mxu0 0
        %957 = vmatpush1.bf16.msra.mxu0 0
        %958 = vmatprep.subr.bf16.mxu0 0
        %959 = vmatpush1.bf16.msra.mxu0 0
        %960 = vmatprep.subr.bf16.mxu0 0
        %961 = vmatpush1.bf16.msra.mxu0 0
        %962 = vmatprep.subr.bf16.mxu0 0
        %963 = vmatpush1.bf16.msra.mxu0 0
        %964 = vmatprep.subr.bf16.mxu0 0
        %965 = vmatpush1.bf16.msra.mxu0 0
        %966 = vmatprep.subr.bf16.mxu0 0
        %967 = vmatpush1.bf16.msra.mxu0 0
        %968 = vmatprep.subr.bf16.mxu0 0
        %969 = vmatpush1.bf16.msra.mxu0 0
        %970 = vmatprep.subr.bf16.mxu0 0
        %971 = vmatpush1.bf16.msra.mxu0 0
        %972 = vmatprep.subr.bf16.mxu0 0
        %973 = vmatpush1.bf16.msra.mxu0 0
        %974 = vmatprep.subr.bf16.mxu0 0
        %975 = vmatpush1.bf16.msra.mxu0 0
        %976 = vmatprep.subr.bf16.mxu0 0
        %977 = vmatpush1.bf16.msra.mxu0 0
        %978 = vmatprep.subr.bf16.mxu0 0
        %979 = vmatpush1.bf16.msra.mxu0 0
        %980 = vmatprep.subr.bf16.mxu0 0
        %981 = vmatpush1.bf16.msra.mxu0 0
        %982 = vmatprep.mubr.bf16.mxu0 0
        %983 = vmatmul.mubr.bf16.gmra.mrb[0].mxu0 %v939
        %v984 = vpop.f32.mrb[0].mxu0
        %v985 = vadd.f32 0.0, %v984
        %v986 = vpop.f32.mrb[0].mxu0
        %v987 = vpop.f32.mrb[0].mxu0
        %v988 = vadd.f32 0.0, %v987
        %v989 = vpop.f32.mrb[0].mxu0
        %990 = vmatprep.mubr.bf16.mxu0 0
        %991 = vmatmul.mubr.bf16.gmra.mrb[0].mxu0 %v942
        %v992 = vpop.f32.mrb[0].mxu0
        %v993 = vadd.f32 0.0, %v992
        %v994 = vpop.f32.mrb[0].mxu0
        %v995 = vpop.f32.mrb[0].mxu0
        %v996 = vadd.f32 0.0, %v995
        %v997 = vpop.f32.mrb[0].mxu0
        %998 = vmatprep.mubr.bf16.mxu0 0
        %999 = vmatmul.mubr.bf16.gmra.mrb[0].mxu0 %v945
        %v1000 = vpop.f32.mrb[0].mxu0
        %v1001 = vadd.f32 0.0, %v1000
        %v1002 = vpop.f32.mrb[0].mxu0
        %v1003 = vpop.f32.mrb[0].mxu0
        %v1004 = vadd.f32 0.0, %v1003
        %v1005 = vpop.f32.mrb[0].mxu0
        %1006 = vmatprep.mubr.bf16.mxu0 0
        %1007 = vmatmul.mubr.bf16.gmra.mrb[0].mxu0 %v948
        %v1008 = vpop.f32.mrb[0].mxu0
        %v1009 = vadd.f32 0.0, %v1008
        %v1010 = vpop.f32.mrb[0].mxu0
        %v1011 = vpop.f32.mrb[0].mxu0
        %v1012 = vadd.f32 0.0, %v1011
        %v1013 = vpop.f32.mrb[0].mxu0
        %1014 = vdwg.mxu0
        %v1016 = vsel %vm420, %v922, 0
        %v1019 = vsel %vm420, %v923, 0
        %v1022 = vsel %vm420, %v924, 0
        %v1025 = vsel %vm420, %v925, 0
        %1027 = vmatprep.subr.bf16.mxu0 0
        %1028 = vmatpush1.bf16.msra.mxu0 %v580
        %1029 = vmatprep.subr.bf16.mxu0 0
        %1030 = vmatpush1.bf16.msra.mxu0 %v581
        %1031 = vmatprep.subr.bf16.mxu0 0
        %1032 = vmatpush1.bf16.msra.mxu0 0
        %1033 = vmatprep.subr.bf16.mxu0 0
        %1034 = vmatpush1.bf16.msra.mxu0 0
        %1035 = vmatprep.subr.bf16.mxu0 0
        %1036 = vmatpush1.bf16.msra.mxu0 0
        %1037 = vmatprep.subr.bf16.mxu0 0
        %1038 = vmatpush1.bf16.msra.mxu0 0
        %1039 = vmatprep.subr.bf16.mxu0 0
        %1040 = vmatpush1.bf16.msra.mxu0 0
        %1041 = vmatprep.subr.bf16.mxu0 0
        %1042 = vmatpush1.bf16.msra.mxu0 0
        %1043 = vmatprep.subr.bf16.mxu0 0
        %1044 = vmatpush1.bf16.msra.mxu0 0
        %1045 = vmatprep.subr.bf16.mxu0 0
        %1046 = vmatpush1.bf16.msra.mxu0 0
        %1047 = vmatprep.subr.bf16.mxu0 0
        %1048 = vmatpush1.bf16.msra.mxu0 0
        %1049 = vmatprep.subr.bf16.mxu0 0
        %1050 = vmatpush1.bf16.msra.mxu0 0
        %1051 = vmatprep.subr.bf16.mxu0 0
        %1052 = vmatpush1.bf16.msra.mxu0 0
        %1053 = vmatprep.subr.bf16.mxu0 0
        %1054 = vmatpush1.bf16.msra.mxu0 0
        %1055 = vmatprep.subr.bf16.mxu0 0
        %1056 = vmatpush1.bf16.msra.mxu0 0
        %1057 = vmatprep.subr.bf16.mxu0 0
        %1058 = vmatpush1.bf16.msra.mxu0 0
        %1059 = vmatprep.mubr.bf16.mxu0 0
        %1060 = vmatmul.mubr.bf16.gmra.mrb[0].mxu0 %v1016
        %v1061 = vpop.f32.mrb[0].mxu0
        %v1062 = vadd.f32 %v985, %v1061
        %v1063 = vpop.f32.mrb[0].mxu0
        %v1064 = vpop.f32.mrb[0].mxu0
        %v1065 = vadd.f32 %v988, %v1064
        %v1066 = vpop.f32.mrb[0].mxu0
        %1067 = vmatprep.mubr.bf16.mxu0 0
        %1068 = vmatmul.mubr.bf16.gmra.mrb[0].mxu0 %v1019
        %v1069 = vpop.f32.mrb[0].mxu0
        %v1070 = vadd.f32 %v993, %v1069
        %v1071 = vpop.f32.mrb[0].mxu0
        %v1072 = vpop.f32.mrb[0].mxu0
        %v1073 = vadd.f32 %v996, %v1072
        %v1074 = vpop.f32.mrb[0].mxu0
        %1075 = vmatprep.mubr.bf16.mxu0 0
        %1076 = vmatmul.mubr.bf16.gmra.mrb[0].mxu0 %v1022
        %v1077 = vpop.f32.mrb[0].mxu0
        %v1078 = vadd.f32 %v1001, %v1077
        %v1079 = vpop.f32.mrb[0].mxu0
        %v1080 = vpop.f32.mrb[0].mxu0
        %v1081 = vadd.f32 %v1004, %v1080
        %v1082 = vpop.f32.mrb[0].mxu0
        %1083 = vmatprep.mubr.bf16.mxu0 0
        %1084 = vmatmul.mubr.bf16.gmra.mrb[0].mxu0 %v1025
        %v1085 = vpop.f32.mrb[0].mxu0
        %v1086 = vadd.f32 %v1009, %v1085
        %v1087 = vpop.f32.mrb[0].mxu0
        %v1088 = vpop.f32.mrb[0].mxu0
        %v1089 = vadd.f32 %v1012, %v1088
        %v1090 = vpop.f32.mrb[0].mxu0
        %1091 = vdwg.mxu0
        %v1092 = vld [vmem:[#allocation5 + $0x9] sm:$0xff]
        %v1093 = vld [vmem:[#allocation5 + $0x11] sm:$0xff]
        %v1094 = vld [vmem:[#allocation5 + $0x19] sm:$0xff]
        %v1095 = vld [vmem:[#allocation5 + $0x21] sm:$0xff]
        %v1096 = vld [vmem:[#allocation5 + $0x29] sm:$0xff]
        %v1097 = vld [vmem:[#allocation5 + $0x31] sm:$0xff]
        %v1098 = vld [vmem:[#allocation5 + $0x39] sm:$0xff]
        %v1099 = vld [vmem:[#allocation5 + $0x41] sm:$0xff]
        %v1100 = vpack.c.bf16 %v1093, %v1092
        %v1101 = vpack.c.bf16 %v1095, %v1094
        %v1102 = vpack.c.bf16 %v1097, %v1096
        %v1103 = vpack.c.bf16 %v1099, %v1098
        %v1105 = vsel %vm420, %v1100, 0
        %v1108 = vsel %vm420, %v1101, 0
        %v1111 = vsel %vm420, %v1102, 0
        %v1114 = vsel %vm420, %v1103, 0
        %1116 = vmatprep.subr.bf16.mxu0 0
        %1117 = vmatpush1.bf16.msra.mxu0 %v672
        %1118 = vmatprep.subr.bf16.mxu0 0
        %1119 = vmatpush1.bf16.msra.mxu0 %v673
        %1120 = vmatprep.subr.bf16.mxu0 0
        %1121 = vmatpush1.bf16.msra.mxu0 0
        %1122 = vmatprep.subr.bf16.mxu0 0
        %1123 = vmatpush1.bf16.msra.mxu0 0
        %1124 = vmatprep.subr.bf16.mxu0 0
        %1125 = vmatpush1.bf16.msra.mxu0 0
        %1126 = vmatprep.subr.bf16.mxu0 0
        %1127 = vmatpush1.bf16.msra.mxu0 0
        %1128 = vmatprep.subr.bf16.mxu0 0
        %1129 = vmatpush1.bf16.msra.mxu0 0
        %1130 = vmatprep.subr.bf16.mxu0 0
        %1131 = vmatpush1.bf16.msra.mxu0 0
        %1132 = vmatprep.subr.bf16.mxu0 0
        %1133 = vmatpush1.bf16.msra.mxu0 0
        %1134 = vmatprep.subr.bf16.mxu0 0
        %1135 = vmatpush1.bf16.msra.mxu0 0
        %1136 = vmatprep.subr.bf16.mxu0 0
        %1137 = vmatpush1.bf16.msra.mxu0 0
        %1138 = vmatprep.subr.bf16.mxu0 0
        %1139 = vmatpush1.bf16.msra.mxu0 0
        %1140 = vmatprep.subr.bf16.mxu0 0
        %1141 = vmatpush1.bf16.msra.mxu0 0
        %1142 = vmatprep.subr.bf16.mxu0 0
        %1143 = vmatpush1.bf16.msra.mxu0 0
        %1144 = vmatprep.subr.bf16.mxu0 0
        %1145 = vmatpush1.bf16.msra.mxu0 0
        %1146 = vmatprep.subr.bf16.mxu0 0
        %1147 = vmatpush1.bf16.msra.mxu0 0
        %1148 = vmatprep.mubr.bf16.mxu0 0
        %1149 = vmatmul.mubr.bf16.gmra.mrb[0].mxu0 %v1105
        %v1150 = vpop.f32.mrb[0].mxu0
        %v1151 = vadd.f32 0.0, %v1150
        %v1152 = vpop.f32.mrb[0].mxu0
        %v1153 = vpop.f32.mrb[0].mxu0
        %v1154 = vadd.f32 0.0, %v1153
        %v1155 = vpop.f32.mrb[0].mxu0
        %1156 = vmatprep.mubr.bf16.mxu0 0
        %1157 = vmatmul.mubr.bf16.gmra.mrb[0].mxu0 %v1108
        %v1158 = vpop.f32.mrb[0].mxu0
        %v1159 = vadd.f32 0.0, %v1158
        %v1160 = vpop.f32.mrb[0].mxu0
        %v1161 = vpop.f32.mrb[0].mxu0
        %v1162 = vadd.f32 0.0, %v1161
        %v1163 = vpop.f32.mrb[0].mxu0
        %1164 = vmatprep.mubr.bf16.mxu0 0
        %1165 = vmatmul.mubr.bf16.gmra.mrb[0].mxu0 %v1111
        %v1166 = vpop.f32.mrb[0].mxu0
        %v1167 = vadd.f32 0.0, %v1166
        %v1168 = vpop.f32.mrb[0].mxu0
        %v1169 = vpop.f32.mrb[0].mxu0
        %v1170 = vadd.f32 0.0, %v1169
        %v1171 = vpop.f32.mrb[0].mxu0
        %1172 = vmatprep.mubr.bf16.mxu0 0
        %1173 = vmatmul.mubr.bf16.gmra.mrb[0].mxu0 %v1114
        %v1174 = vpop.f32.mrb[0].mxu0
        %v1175 = vadd.f32 0.0, %v1174
        %v1176 = vpop.f32.mrb[0].mxu0
        %v1177 = vpop.f32.mrb[0].mxu0
        %v1178 = vadd.f32 0.0, %v1177
        %v1179 = vpop.f32.mrb[0].mxu0
        %1180 = vdwg.mxu0
        %v1181 = vadd.f32 %v1062, %v1151
        %v1182 = vadd.f32 %v1065, %v1154
        %v1183 = vadd.f32 %v1070, %v1159
        %v1184 = vadd.f32 %v1073, %v1162
        %v1185 = vadd.f32 %v1078, %v1167
        %v1186 = vadd.f32 %v1081, %v1170
        %v1187 = vadd.f32 %v1086, %v1175
        %v1188 = vadd.f32 %v1089, %v1178
        %v1189 = vadd.f32 %v1181, %v751
        %v1190 = vadd.f32 %v1182, %v751
        %v1191 = vadd.f32 %v1183, %v751
        %v1192 = vadd.f32 %v1184, %v751
        %v1193 = vadd.f32 %v1185, %v751
        %v1194 = vadd.f32 %v1186, %v751
        %v1195 = vadd.f32 %v1187, %v751
        %v1196 = vadd.f32 %v1188, %v751
        %v1197 = vmax.f32 %v1189, 0.0
        %v1198 = vmax.f32 %v1190, 0.0
        %v1199 = vmax.f32 %v1191, 0.0
        %v1200 = vmax.f32 %v1192, 0.0
        %v1201 = vmax.f32 %v1193, 0.0
        %v1202 = vmax.f32 %v1194, 0.0
        %v1203 = vmax.f32 %v1195, 0.0
        %v1204 = vmax.f32 %v1196, 0.0
        %v1205 = vmul.f32 %v1197, %v767
        %v1206 = vmul.f32 %v1198, %v767
        %v1207 = vmul.f32 %v1199, %v767
        %v1208 = vmul.f32 %v1200, %v767
        %v1209 = vmul.f32 %v1201, %v767
        %v1210 = vmul.f32 %v1202, %v767
        %v1211 = vmul.f32 %v1203, %v767
        %v1212 = vmul.f32 %v1204, %v767
        %v1213 = vadd.f32 %v1205, %v777
        %v1214 = vadd.f32 %v1206, %v777
        %v1215 = vadd.f32 %v1207, %v777
        %v1216 = vadd.f32 %v1208, %v777
        %v1217 = vadd.f32 %v1209, %v777
        %v1218 = vadd.f32 %v1210, %v777
        %v1219 = vadd.f32 %v1211, %v777
        %v1220 = vadd.f32 %v1212, %v777
        %v1221 = vpack.c.bf16 %v1214, %v1213
        %v1222 = vpack.c.bf16 %v1216, %v1215
        %v1223 = vpack.c.bf16 %v1218, %v1217
        %v1224 = vpack.c.bf16 %v1220, %v1219
        %1225 = vmatprep.subr.bf16.mxu0 0
        %1226 = vmatpush1.bf16.msra.mxu0 %v823
        %1227 = vmatprep.subr.bf16.mxu0 0
        %1228 = vmatpush1.bf16.msra.mxu0 %v824
        %1229 = vmatprep.subr.bf16.mxu0 0
        %1230 = vmatpush1.bf16.msra.mxu0 %v825
        %1231 = vmatprep.subr.bf16.mxu0 0
        %1232 = vmatpush1.bf16.msra.mxu0 %v826
        %1233 = vmatprep.subr.bf16.mxu0 0
        %1234 = vmatpush1.bf16.msra.mxu0 %v827
        %1235 = vmatprep.subr.bf16.mxu0 0
        %1236 = vmatpush1.bf16.msra.mxu0 %v828
        %1237 = vmatprep.subr.bf16.mxu0 0
        %1238 = vmatpush1.bf16.msra.mxu0 %v829
        %1239 = vmatprep.subr.bf16.mxu0 0
        %1240 = vmatpush1.bf16.msra.mxu0 %v830
        %1241 = vmatprep.subr.bf16.mxu0 0
        %1242 = vmatpush1.bf16.msra.mxu0 0
        %1243 = vmatprep.subr.bf16.mxu0 0
        %1244 = vmatpush1.bf16.msra.mxu0 0
        %1245 = vmatprep.subr.bf16.mxu0 0
        %1246 = vmatpush1.bf16.msra.mxu0 0
        %1247 = vmatprep.subr.bf16.mxu0 0
        %1248 = vmatpush1.bf16.msra.mxu0 0
        %1249 = vmatprep.subr.bf16.mxu0 0
        %1250 = vmatpush1.bf16.msra.mxu0 0
        %1251 = vmatprep.subr.bf16.mxu0 0
        %1252 = vmatpush1.bf16.msra.mxu0 0
        %1253 = vmatprep.subr.bf16.mxu0 0
        %1254 = vmatpush1.bf16.msra.mxu0 0
        %1255 = vmatprep.subr.bf16.mxu0 0
        %1256 = vmatpush1.bf16.msra.mxu0 0
        %1257 = vmatprep.mubr.bf16.mxu0 0
        %1258 = vmatmul.mubr.bf16.gmra.mrb[0].mxu0 %v1221
        %v1259 = vpop.f32.mrb[0].mxu0
        %v1260 = vadd.f32 %v790, %v1259
        %v1261 = vpop.f32.mrb[0].mxu0
        %v1262 = vpop.f32.mrb[0].mxu0
        %v1263 = vadd.f32 %v790, %v1262
        %v1264 = vpop.f32.mrb[0].mxu0
        %1265 = vmatprep.mubr.bf16.mxu0 0
        %1266 = vmatmul.mubr.bf16.gmra.mrb[0].mxu0 %v1222
        %v1267 = vpop.f32.mrb[0].mxu0
        %v1268 = vadd.f32 %v790, %v1267
        %v1269 = vpop.f32.mrb[0].mxu0
        %v1270 = vpop.f32.mrb[0].mxu0
        %v1271 = vpop.f32.mrb[0].mxu0
        %1272 = vmatprep.mubr.bf16.mxu0 0
        %1273 = vmatmul.mubr.bf16.gmra.mrb[0].mxu0 %v1223
        %v1274 = vpop.f32.mrb[0].mxu0
        %v1275 = vadd.f32 %v790, %v1274
        %v1276 = vpop.f32.mrb[0].mxu0
        %v1277 = vpop.f32.mrb[0].mxu0
        %v1278 = vadd.f32 %v790, %v1277
        %v1279 = vpop.f32.mrb[0].mxu0
        %1280 = vmatprep.mubr.bf16.mxu0 0
        %1281 = vmatmul.mubr.bf16.gmra.mrb[0].mxu0 %v1224
        %v1282 = vpop.f32.mrb[0].mxu0
        %v1283 = vadd.f32 %v790, %v1282
        %v1284 = vpop.f32.mrb[0].mxu0
        %v1285 = vpop.f32.mrb[0].mxu0
        %v1286 = vpop.f32.mrb[0].mxu0
        %1287 = vdwg.mxu0
        %v1288 = vmax.f32 %v1260, 0.0
        %v1289 = vmax.f32 %v1263, 0.0
        %v1290 = vmax.f32 %v1268, 0.0
        %v1291 = vmax.f32 %v1275, 0.0
        %v1292 = vmax.f32 %v1278, 0.0
        %v1293 = vmax.f32 %v1283, 0.0
        %v1294 = vmul.f32 %v1288, %v901
        %v1295 = vmul.f32 %v1289, %v901
        %v1296 = vmul.f32 %v1290, %v901
        %v1297 = vmul.f32 %v1291, %v901
        %v1298 = vmul.f32 %v1292, %v901
        %v1299 = vmul.f32 %v1293, %v901
        %v1300 = vadd.f32 %v1294, %v909
        %v1301 = vadd.f32 %v1295, %v909
        %v1302 = vadd.f32 %v1296, %v909
        %v1303 = vadd.f32 %v1297, %v909
        %v1304 = vadd.f32 %v1298, %v909
        %v1305 = vadd.f32 %v1299, %v909
        %1306 = vst [vmem:[#allocation3 + $0x8] sm:$0xff] %v910
        %1307 = vst [vmem:[#allocation3 + $0x10] sm:$0xff] %v911
        %1308 = vst [vmem:[#allocation6 + $0x8] sm:$0xff] %v1300
        %1309 = vst [vmem:[#allocation6 + $0x10] sm:$0xff] %v1301
        %1310 = vst [vmem:[#allocation6 + $0x18] sm:$0xff] %v1302
        %1311 = vst [vmem:[#allocation3 + $0x20] sm:$0xff] %v912
        %1312 = vst [vmem:[#allocation3 + $0x28] sm:$0xff] %v913
        %1313 = vst [vmem:[#allocation6 + $0x28] sm:$0xff] %v1303
        %1314 = vst [vmem:[#allocation6 + $0x30] sm:$0xff] %v1304
        %1315 = vst [vmem:[#allocation6 + $0x38] sm:$0xff] %v1305
        %v1316 = vld [vmem:[#allocation2 + $0x8] sm:$0xff]
        %v1317 = vld [vmem:[#allocation2 + $0x10] sm:$0xff]
        %v1318 = vld [vmem:[#allocation2 + $0x18] sm:$0xff]
        %v1319 = vld [vmem:[#allocation2 + $0x20] sm:$0xff]
        %v1320 = vld [vmem:[#allocation2 + $0x28] sm:$0xff]
        %v1321 = vld [vmem:[#allocation2 + $0x30] sm:$0xff]
        %v1322 = vpack.c.bf16 %v1317, %v1316
        %v1323 = vpack.c.bf16 %v1319, %v1318
        %v1324 = vpack.c.bf16 %v1321, %v1320
        %v1325 = vlaneseq
        %v1326 = vshrl.u32 %v1325, 7
        %v1327 = vsub.s32 6, %v1326
        %v1328 = vrot.slane %v390, %v1327
        %v1333 = vunpack.c.l.b16 %v408
        %v1334 = vunpack.c.l.b16 %v409
        %v1335 = vunpack.c.l.b16 %v410
        %v1336 = vunpack.c.l.b16 %v411
        %v1337 = vpack.c.b16 %v1334, %v1333
        %v1338 = vpack.c.b16 %v1336, %v1335
        %v1342 = vsel %vm420, %v1322, 0
        %v1345 = vsel %vm420, %v1323, 0
        %v1348 = vsel %vm420, %v1324, 0
        %1350 = vmatprep.subr.bf16.mxu0 0
        %1351 = vmatpush1.bf16.msra.mxu0 %v1337
        %1352 = vmatprep.subr.bf16.mxu0 0
        %1353 = vmatpush1.bf16.msra.mxu0 %v1338
        %1354 = vmatprep.subr.bf16.mxu0 0
        %1355 = vmatpush1.bf16.msra.mxu0 0
        %1356 = vmatprep.subr.bf16.mxu0 0
        %1357 = vmatpush1.bf16.msra.mxu0 0
        %1358 = vmatprep.subr.bf16.mxu0 0
        %1359 = vmatpush1.bf16.msra.mxu0 0
        %1360 = vmatprep.subr.bf16.mxu0 0
        %1361 = vmatpush1.bf16.msra.mxu0 0
        %1362 = vmatprep.subr.bf16.mxu0 0
        %1363 = vmatpush1.bf16.msra.mxu0 0
        %1364 = vmatprep.subr.bf16.mxu0 0
        %1365 = vmatpush1.bf16.msra.mxu0 0
        %1366 = vmatprep.subr.bf16.mxu0 0
        %1367 = vmatpush1.bf16.msra.mxu0 0
        %1368 = vmatprep.subr.bf16.mxu0 0
        %1369 = vmatpush1.bf16.msra.mxu0 0
        %1370 = vmatprep.subr.bf16.mxu0 0
        %1371 = vmatpush1.bf16.msra.mxu0 0
        %1372 = vmatprep.subr.bf16.mxu0 0
        %1373 = vmatpush1.bf16.msra.mxu0 0
        %1374 = vmatprep.subr.bf16.mxu0 0
        %1375 = vmatpush1.bf16.msra.mxu0 0
        %1376 = vmatprep.subr.bf16.mxu0 0
        %1377 = vmatpush1.bf16.msra.mxu0 0
        %1378 = vmatprep.subr.bf16.mxu0 0
        %1379 = vmatpush1.bf16.msra.mxu0 0
        %1380 = vmatprep.subr.bf16.mxu0 0
        %1381 = vmatpush1.bf16.msra.mxu0 0
        %1382 = vmatprep.mubr.bf16.mxu0 0
        %1383 = vmatmul.mubr.bf16.gmra.mrb[0].mxu0 %v1342
        %v1384 = vpop.f32.mrb[0].mxu0
        %v1385 = vadd.f32 %v1328, %v1384
        %v1386 = vpop.f32.mrb[0].mxu0
        %v1387 = vpop.f32.mrb[0].mxu0
        %v1388 = vadd.f32 %v1328, %v1387
        %v1389 = vpop.f32.mrb[0].mxu0
        %1390 = vmatprep.mubr.bf16.mxu0 0
        %1391 = vmatmul.mubr.bf16.gmra.mrb[0].mxu0 %v1345
        %v1392 = vpop.f32.mrb[0].mxu0
        %v1393 = vpop.f32.mrb[0].mxu0
        %v1394 = vpop.f32.mrb[0].mxu0
        %v1395 = vadd.f32 %v1328, %v1394
        %v1396 = vpop.f32.mrb[0].mxu0
        %1397 = vmatprep.mubr.bf16.mxu0 0
        %1398 = vmatmul.mubr.bf16.gmra.mrb[0].mxu0 %v1348
        %v1399 = vpop.f32.mrb[0].mxu0
        %v1400 = vadd.f32 %v1328, %v1399
        %v1401 = vpop.f32.mrb[0].mxu0
        %v1402 = vpop.f32.mrb[0].mxu0
        %v1403 = vpop.f32.mrb[0].mxu0
        %1404 = vdwg.mxu0
        %v1405 = vlaneseq
        %v1406 = vshrl.u32 %v1405, 7
        %v1407 = vsub.s32 7, %v1406
        %v1408 = vrot.slane %v390, %v1407
        %v1413 = vunpack.c.l.b16 %v412
        %v1414 = vunpack.c.l.b16 %v413
        %v1415 = vunpack.c.l.b16 %v414
        %v1416 = vunpack.c.l.b16 %v415
        %v1417 = vpack.c.b16 %v1414, %v1413
        %v1418 = vpack.c.b16 %v1416, %v1415
        %1421 = vmatprep.subr.bf16.mxu0 0
        %1422 = vmatpush1.bf16.msra.mxu0 %v1417
        %1423 = vmatprep.subr.bf16.mxu0 0
        %1424 = vmatpush1.bf16.msra.mxu0 %v1418
        %1425 = vmatprep.subr.bf16.mxu0 0
        %1426 = vmatpush1.bf16.msra.mxu0 0
        %1427 = vmatprep.subr.bf16.mxu0 0
        %1428 = vmatpush1.bf16.msra.mxu0 0
        %1429 = vmatprep.subr.bf16.mxu0 0
        %1430 = vmatpush1.bf16.msra.mxu0 0
        %1431 = vmatprep.subr.bf16.mxu0 0
        %1432 = vmatpush1.bf16.msra.mxu0 0
        %1433 = vmatprep.subr.bf16.mxu0 0
        %1434 = vmatpush1.bf16.msra.mxu0 0
        %1435 = vmatprep.subr.bf16.mxu0 0
        %1436 = vmatpush1.bf16.msra.mxu0 0
        %1437 = vmatprep.subr.bf16.mxu0 0
        %1438 = vmatpush1.bf16.msra.mxu0 0
        %1439 = vmatprep.subr.bf16.mxu0 0
        %1440 = vmatpush1.bf16.msra.mxu0 0
        %1441 = vmatprep.subr.bf16.mxu0 0
        %1442 = vmatpush1.bf16.msra.mxu0 0
        %1443 = vmatprep.subr.bf16.mxu0 0
        %1444 = vmatpush1.bf16.msra.mxu0 0
        %1445 = vmatprep.subr.bf16.mxu0 0
        %1446 = vmatpush1.bf16.msra.mxu0 0
        %1447 = vmatprep.subr.bf16.mxu0 0
        %1448 = vmatpush1.bf16.msra.mxu0 0
        %1449 = vmatprep.subr.bf16.mxu0 0
        %1450 = vmatpush1.bf16.msra.mxu0 0
        %1451 = vmatprep.subr.bf16.mxu0 0
        %1452 = vmatpush1.bf16.msra.mxu0 0
        %1453 = vmatprep.mubr.bf16.mxu0 0
        %1454 = vmatmul.mubr.bf16.gmra.mrb[0].mxu0 %v1342
        %v1455 = vpop.f32.mrb[0].mxu0
        %v1456 = vadd.f32 %v1408, %v1455
        %v1457 = vpop.f32.mrb[0].mxu0
        %v1458 = vpop.f32.mrb[0].mxu0
        %v1459 = vadd.f32 %v1408, %v1458
        %v1460 = vpop.f32.mrb[0].mxu0
        %1461 = vmatprep.mubr.bf16.mxu0 0
        %1462 = vmatmul.mubr.bf16.gmra.mrb[0].mxu0 %v1345
        %v1463 = vpop.f32.mrb[0].mxu0
        %v1464 = vpop.f32.mrb[0].mxu0
        %v1465 = vpop.f32.mrb[0].mxu0
        %v1466 = vadd.f32 %v1408, %v1465
        %v1467 = vpop.f32.mrb[0].mxu0
        %1468 = vmatprep.mubr.bf16.mxu0 0
        %1469 = vmatmul.mubr.bf16.gmra.mrb[0].mxu0 %v1348
        %v1470 = vpop.f32.mrb[0].mxu0
        %v1471 = vadd.f32 %v1408, %v1470
        %v1472 = vpop.f32.mrb[0].mxu0
        %v1473 = vpop.f32.mrb[0].mxu0
        %v1474 = vpop.f32.mrb[0].mxu0
        %1475 = vdwg.mxu0
        %v1476 = vlaneseq
        %v1477 = vshrl.u32 %v1476, 7
        %v1478 = vsub.s32 0, %v1477
        %v1479 = vrot.slane %v391, %v1478
        %v1484 = vunpack.c.l.b16 %v416
        %v1485 = vunpack.c.l.b16 %v417
        %v1486 = vunpack.c.l.b16 %v418
        %v1487 = vunpack.c.l.b16 %v419
        %v1488 = vpack.c.b16 %v1485, %v1484
        %v1489 = vpack.c.b16 %v1487, %v1486
        %1492 = vmatprep.subr.bf16.mxu0 0
        %1493 = vmatpush1.bf16.msra.mxu0 %v1488
        %1494 = vmatprep.subr.bf16.mxu0 0
        %1495 = vmatpush1.bf16.msra.mxu0 %v1489
        %1496 = vmatprep.subr.bf16.mxu0 0
        %1497 = vmatpush1.bf16.msra.mxu0 0
        %1498 = vmatprep.subr.bf16.mxu0 0
        %1499 = vmatpush1.bf16.msra.mxu0 0
        %1500 = vmatprep.subr.bf16.mxu0 0
        %1501 = vmatpush1.bf16.msra.mxu0 0
        %1502 = vmatprep.subr.bf16.mxu0 0
        %1503 = vmatpush1.bf16.msra.mxu0 0
        %1504 = vmatprep.subr.bf16.mxu0 0
        %1505 = vmatpush1.bf16.msra.mxu0 0
        %1506 = vmatprep.subr.bf16.mxu0 0
        %1507 = vmatpush1.bf16.msra.mxu0 0
        %1508 = vmatprep.subr.bf16.mxu0 0
        %1509 = vmatpush1.bf16.msra.mxu0 0
        %1510 = vmatprep.subr.bf16.mxu0 0
        %1511 = vmatpush1.bf16.msra.mxu0 0
        %1512 = vmatprep.subr.bf16.mxu0 0
        %1513 = vmatpush1.bf16.msra.mxu0 0
        %1514 = vmatprep.subr.bf16.mxu0 0
        %1515 = vmatpush1.bf16.msra.mxu0 0
        %1516 = vmatprep.subr.bf16.mxu0 0
        %1517 = vmatpush1.bf16.msra.mxu0 0
        %1518 = vmatprep.subr.bf16.mxu0 0
        %1519 = vmatpush1.bf16.msra.mxu0 0
        %1520 = vmatprep.subr.bf16.mxu0 0
        %1521 = vmatpush1.bf16.msra.mxu0 0
        %1522 = vmatprep.subr.bf16.mxu0 0
        %1523 = vmatpush1.bf16.msra.mxu0 0
        %1524 = vmatprep.mubr.bf16.mxu0 0
        %1525 = vmatmul.mubr.bf16.gmra.mrb[0].mxu0 %v1342
        %v1526 = vpop.f32.mrb[0].mxu0
        %v1527 = vadd.f32 %v1479, %v1526
        %v1528 = vpop.f32.mrb[0].mxu0
        %v1529 = vpop.f32.mrb[0].mxu0
        %v1530 = vadd.f32 %v1479, %v1529
        %v1531 = vpop.f32.mrb[0].mxu0
        %1532 = vmatprep.mubr.bf16.mxu0 0
        %1533 = vmatmul.mubr.bf16.gmra.mrb[0].mxu0 %v1345
        %v1534 = vpop.f32.mrb[0].mxu0
        %v1535 = vpop.f32.mrb[0].mxu0
        %v1536 = vpop.f32.mrb[0].mxu0
        %v1537 = vadd.f32 %v1479, %v1536
        %v1538 = vpop.f32.mrb[0].mxu0
        %1539 = vmatprep.mubr.bf16.mxu0 0
        %1540 = vmatmul.mubr.bf16.gmra.mrb[0].mxu0 %v1348
        %v1541 = vpop.f32.mrb[0].mxu0
        %v1542 = vadd.f32 %v1479, %v1541
        %v1543 = vpop.f32.mrb[0].mxu0
        %v1544 = vpop.f32.mrb[0].mxu0
        %v1545 = vpop.f32.mrb[0].mxu0
        %1546 = vdwg.mxu0
        %v1547 = vld [vmem:[#allocation5 + $0x8] sm:$0xff]
        %v1548 = vld [vmem:[#allocation5 + $0x10] sm:$0xff]
        %v1549 = vld [vmem:[#allocation5 + $0x18] sm:$0xff]
        %v1550 = vld [vmem:[#allocation5 + $0x20] sm:$0xff]
        %v1551 = vld [vmem:[#allocation5 + $0x28] sm:$0xff]
        %v1552 = vld [vmem:[#allocation5 + $0x30] sm:$0xff]
        %v1553 = vld [vmem:[#allocation5 + $0x38] sm:$0xff]
        %v1554 = vld [vmem:[#allocation5 + $0x40] sm:$0xff]
        %v1555 = vpack.c.bf16 %v1548, %v1547
        %v1556 = vpack.c.bf16 %v1550, %v1549
        %v1557 = vpack.c.bf16 %v1552, %v1551
        %v1558 = vpack.c.bf16 %v1554, %v1553
        %v1560 = vsel %vm420, %v1555, 0
        %v1563 = vsel %vm420, %v1556, 0
        %v1566 = vsel %vm420, %v1557, 0
        %v1569 = vsel %vm420, %v1558, 0
        %1571 = vmatprep.subr.bf16.mxu0 0
        %1572 = vmatpush1.bf16.msra.mxu0 %v1337
        %1573 = vmatprep.subr.bf16.mxu0 0
        %1574 = vmatpush1.bf16.msra.mxu0 %v1338
        %1575 = vmatprep.subr.bf16.mxu0 0
        %1576 = vmatpush1.bf16.msra.mxu0 0
        %1577 = vmatprep.subr.bf16.mxu0 0
        %1578 = vmatpush1.bf16.msra.mxu0 0
        %1579 = vmatprep.subr.bf16.mxu0 0
        %1580 = vmatpush1.bf16.msra.mxu0 0
        %1581 = vmatprep.subr.bf16.mxu0 0
        %1582 = vmatpush1.bf16.msra.mxu0 0
        %1583 = vmatprep.subr.bf16.mxu0 0
        %1584 = vmatpush1.bf16.msra.mxu0 0
        %1585 = vmatprep.subr.bf16.mxu0 0
        %1586 = vmatpush1.bf16.msra.mxu0 0
        %1587 = vmatprep.subr.bf16.mxu0 0
        %1588 = vmatpush1.bf16.msra.mxu0 0
        %1589 = vmatprep.subr.bf16.mxu0 0
        %1590 = vmatpush1.bf16.msra.mxu0 0
        %1591 = vmatprep.subr.bf16.mxu0 0
        %1592 = vmatpush1.bf16.msra.mxu0 0
        %1593 = vmatprep.subr.bf16.mxu0 0
        %1594 = vmatpush1.bf16.msra.mxu0 0
        %1595 = vmatprep.subr.bf16.mxu0 0
        %1596 = vmatpush1.bf16.msra.mxu0 0
        %1597 = vmatprep.subr.bf16.mxu0 0
        %1598 = vmatpush1.bf16.msra.mxu0 0
        %1599 = vmatprep.subr.bf16.mxu0 0
        %1600 = vmatpush1.bf16.msra.mxu0 0
        %1601 = vmatprep.subr.bf16.mxu0 0
        %1602 = vmatpush1.bf16.msra.mxu0 0
        %1603 = vmatprep.mubr.bf16.mxu0 0
        %1604 = vmatmul.mubr.bf16.gmra.mrb[0].mxu0 %v1560
        %v1605 = vpop.f32.mrb[0].mxu0
        %v1606 = vadd.f32 %v1328, %v1605
        %v1607 = vpop.f32.mrb[0].mxu0
        %v1608 = vpop.f32.mrb[0].mxu0
        %v1609 = vadd.f32 %v1328, %v1608
        %v1610 = vpop.f32.mrb[0].mxu0
        %1611 = vmatprep.mubr.bf16.mxu0 0
        %1612 = vmatmul.mubr.bf16.gmra.mrb[0].mxu0 %v1563
        %v1613 = vpop.f32.mrb[0].mxu0
        %v1614 = vadd.f32 %v1328, %v1613
        %v1615 = vpop.f32.mrb[0].mxu0
        %v1616 = vpop.f32.mrb[0].mxu0
        %v1617 = vpop.f32.mrb[0].mxu0
        %1618 = vmatprep.mubr.bf16.mxu0 0
        %1619 = vmatmul.mubr.bf16.gmra.mrb[0].mxu0 %v1566
        %v1620 = vpop.f32.mrb[0].mxu0
        %v1621 = vadd.f32 %v1328, %v1620
        %v1622 = vpop.f32.mrb[0].mxu0
        %v1623 = vpop.f32.mrb[0].mxu0
        %v1624 = vadd.f32 %v1328, %v1623
        %v1625 = vpop.f32.mrb[0].mxu0
        %1626 = vmatprep.mubr.bf16.mxu0 0
        %1627 = vmatmul.mubr.bf16.gmra.mrb[0].mxu0 %v1569
        %v1628 = vpop.f32.mrb[0].mxu0
        %v1629 = vadd.f32 %v1328, %v1628
        %v1630 = vpop.f32.mrb[0].mxu0
        %v1631 = vpop.f32.mrb[0].mxu0
        %v1632 = vpop.f32.mrb[0].mxu0
        %1633 = vdwg.mxu0
        %1634 = vmatprep.subr.bf16.mxu0 0
        %1635 = vmatpush1.bf16.msra.mxu0 %v1417
        %1636 = vmatprep.subr.bf16.mxu0 0
        %1637 = vmatpush1.bf16.msra.mxu0 %v1418
        %1638 = vmatprep.subr.bf16.mxu0 0
        %1639 = vmatpush1.bf16.msra.mxu0 0
        %1640 = vmatprep.subr.bf16.mxu0 0
        %1641 = vmatpush1.bf16.msra.mxu0 0
        %1642 = vmatprep.subr.bf16.mxu0 0
        %1643 = vmatpush1.bf16.msra.mxu0 0
        %1644 = vmatprep.subr.bf16.mxu0 0
        %1645 = vmatpush1.bf16.msra.mxu0 0
        %1646 = vmatprep.subr.bf16.mxu0 0
        %1647 = vmatpush1.bf16.msra.mxu0 0
        %1648 = vmatprep.subr.bf16.mxu0 0
        %1649 = vmatpush1.bf16.msra.mxu0 0
        %1650 = vmatprep.subr.bf16.mxu0 0
        %1651 = vmatpush1.bf16.msra.mxu0 0
        %1652 = vmatprep.subr.bf16.mxu0 0
        %1653 = vmatpush1.bf16.msra.mxu0 0
        %1654 = vmatprep.subr.bf16.mxu0 0
        %1655 = vmatpush1.bf16.msra.mxu0 0
        %1656 = vmatprep.subr.bf16.mxu0 0
        %1657 = vmatpush1.bf16.msra.mxu0 0
        %1658 = vmatprep.subr.bf16.mxu0 0
        %1659 = vmatpush1.bf16.msra.mxu0 0
        %1660 = vmatprep.subr.bf16.mxu0 0
        %1661 = vmatpush1.bf16.msra.mxu0 0
        %1662 = vmatprep.subr.bf16.mxu0 0
        %1663 = vmatpush1.bf16.msra.mxu0 0
        %1664 = vmatprep.subr.bf16.mxu0 0
        %1665 = vmatpush1.bf16.msra.mxu0 0
        %1666 = vmatprep.mubr.bf16.mxu0 0
        %1667 = vmatmul.mubr.bf16.gmra.mrb[0].mxu0 %v1560
        %v1668 = vpop.f32.mrb[0].mxu0
        %v1669 = vadd.f32 %v1408, %v1668
        %v1670 = vpop.f32.mrb[0].mxu0
        %v1671 = vpop.f32.mrb[0].mxu0
        %v1672 = vadd.f32 %v1408, %v1671
        %v1673 = vpop.f32.mrb[0].mxu0
        %1674 = vmatprep.mubr.bf16.mxu0 0
        %1675 = vmatmul.mubr.bf16.gmra.mrb[0].mxu0 %v1563
        %v1676 = vpop.f32.mrb[0].mxu0
        %v1677 = vadd.f32 %v1408, %v1676
        %v1678 = vpop.f32.mrb[0].mxu0
        %v1679 = vpop.f32.mrb[0].mxu0
        %v1680 = vpop.f32.mrb[0].mxu0
        %1681 = vmatprep.mubr.bf16.mxu0 0
        %1682 = vmatmul.mubr.bf16.gmra.mrb[0].mxu0 %v1566
        %v1683 = vpop.f32.mrb[0].mxu0
        %v1684 = vadd.f32 %v1408, %v1683
        %v1685 = vpop.f32.mrb[0].mxu0
        %v1686 = vpop.f32.mrb[0].mxu0
        %v1687 = vadd.f32 %v1408, %v1686
        %v1688 = vpop.f32.mrb[0].mxu0
        %1689 = vmatprep.mubr.bf16.mxu0 0
        %1690 = vmatmul.mubr.bf16.gmra.mrb[0].mxu0 %v1569
        %v1691 = vpop.f32.mrb[0].mxu0
        %v1692 = vadd.f32 %v1408, %v1691
        %v1693 = vpop.f32.mrb[0].mxu0
        %v1694 = vpop.f32.mrb[0].mxu0
        %v1695 = vpop.f32.mrb[0].mxu0
        %1696 = vdwg.mxu0
        %1697 = vmatprep.subr.bf16.mxu0 0
        %1698 = vmatpush1.bf16.msra.mxu0 %v1488
        %1699 = vmatprep.subr.bf16.mxu0 0
        %1700 = vmatpush1.bf16.msra.mxu0 %v1489
        %1701 = vmatprep.subr.bf16.mxu0 0
        %1702 = vmatpush1.bf16.msra.mxu0 0
        %1703 = vmatprep.subr.bf16.mxu0 0
        %1704 = vmatpush1.bf16.msra.mxu0 0
        %1705 = vmatprep.subr.bf16.mxu0 0
        %1706 = vmatpush1.bf16.msra.mxu0 0
        %1707 = vmatprep.subr.bf16.mxu0 0
        %1708 = vmatpush1.bf16.msra.mxu0 0
        %1709 = vmatprep.subr.bf16.mxu0 0
        %1710 = vmatpush1.bf16.msra.mxu0 0
        %1711 = vmatprep.subr.bf16.mxu0 0
        %1712 = vmatpush1.bf16.msra.mxu0 0
        %1713 = vmatprep.subr.bf16.mxu0 0
        %1714 = vmatpush1.bf16.msra.mxu0 0
        %1715 = vmatprep.subr.bf16.mxu0 0
        %1716 = vmatpush1.bf16.msra.mxu0 0
        %1717 = vmatprep.subr.bf16.mxu0 0
        %1718 = vmatpush1.bf16.msra.mxu0 0
        %1719 = vmatprep.subr.bf16.mxu0 0
        %1720 = vmatpush1.bf16.msra.mxu0 0
        %1721 = vmatprep.subr.bf16.mxu0 0
        %1722 = vmatpush1.bf16.msra.mxu0 0
        %1723 = vmatprep.subr.bf16.mxu0 0
        %1724 = vmatpush1.bf16.msra.mxu0 0
        %1725 = vmatprep.subr.bf16.mxu0 0
        %1726 = vmatpush1.bf16.msra.mxu0 0
        %1727 = vmatprep.subr.bf16.mxu0 0
        %1728 = vmatpush1.bf16.msra.mxu0 0
        %1729 = vmatprep.mubr.bf16.mxu0 0
        %1730 = vmatmul.mubr.bf16.gmra.mrb[0].mxu0 %v1560
        %v1731 = vpop.f32.mrb[0].mxu0
        %v1732 = vadd.f32 %v1479, %v1731
        %v1733 = vpop.f32.mrb[0].mxu0
        %v1734 = vpop.f32.mrb[0].mxu0
        %v1735 = vadd.f32 %v1479, %v1734
        %v1736 = vpop.f32.mrb[0].mxu0
        %1737 = vmatprep.mubr.bf16.mxu0 0
        %1738 = vmatmul.mubr.bf16.gmra.mrb[0].mxu0 %v1563
        %v1739 = vpop.f32.mrb[0].mxu0
        %v1740 = vadd.f32 %v1479, %v1739
        %v1741 = vpop.f32.mrb[0].mxu0
        %v1742 = vpop.f32.mrb[0].mxu0
        %v1743 = vpop.f32.mrb[0].mxu0
        %1744 = vmatprep.mubr.bf16.mxu0 0
        %1745 = vmatmul.mubr.bf16.gmra.mrb[0].mxu0 %v1566
        %v1746 = vpop.f32.mrb[0].mxu0
        %v1747 = vadd.f32 %v1479, %v1746
        %v1748 = vpop.f32.mrb[0].mxu0
        %v1749 = vpop.f32.mrb[0].mxu0
        %v1750 = vadd.f32 %v1479, %v1749
        %v1751 = vpop.f32.mrb[0].mxu0
        %1752 = vmatprep.mubr.bf16.mxu0 0
        %1753 = vmatmul.mubr.bf16.gmra.mrb[0].mxu0 %v1569
        %v1754 = vpop.f32.mrb[0].mxu0
        %v1755 = vadd.f32 %v1479, %v1754
        %v1756 = vpop.f32.mrb[0].mxu0
        %v1757 = vpop.f32.mrb[0].mxu0
        %v1758 = vpop.f32.mrb[0].mxu0
        %1759 = vdwg.mxu0
        %v1760 = vpack.c.bf16 %v1388, %v1385
        %v1761 = vpack.c.bf16 %v1672, %v1669
        %v1762 = vpack.c.bf16 %v1677, %v1677
        %v1763 = vpack.c.bf16 %v1735, %v1732
        %v1764 = vpack.c.bf16 %v1740, %v1740
        %1765 = vmatprep.subr.bf16.mxu0 0
        %1766 = vmatpush1.bf16.xpose.msra.mxu0 %v1761
        %1767 = vmatprep.subr.bf16.mxu0 0
        %1768 = vmatpush1.bf16.xpose.msra.mxu0 %v1762
        %1769 = vmatprep.subr.bf16.mxu0 0
        %1770 = vmatpush1.bf16.xpose.msra.mxu0 0
        %1771 = vmatprep.subr.bf16.mxu0 0
        %1772 = vmatpush1.bf16.xpose.msra.mxu0 0
        %1773 = vmatprep.subr.bf16.mxu0 0
        %1774 = vmatpush1.bf16.xpose.msra.mxu0 0
        %1775 = vmatprep.subr.bf16.mxu0 0
        %1776 = vmatpush1.bf16.xpose.msra.mxu0 0
        %1777 = vmatprep.subr.bf16.mxu0 0
        %1778 = vmatpush1.bf16.xpose.msra.mxu0 0
        %1779 = vmatprep.subr.bf16.mxu0 0
        %1780 = vmatpush1.bf16.xpose.msra.mxu0 0
        %1781 = vmatprep.subr.bf16.mxu0 0
        %1782 = vmatpush1.bf16.xpose.msra.mxu0 0
        %1783 = vmatprep.subr.bf16.mxu0 0
        %1784 = vmatpush1.bf16.xpose.msra.mxu0 0
        %1785 = vmatprep.subr.bf16.mxu0 0
        %1786 = vmatpush1.bf16.xpose.msra.mxu0 0
        %1787 = vmatprep.subr.bf16.mxu0 0
        %1788 = vmatpush1.bf16.xpose.msra.mxu0 0
        %1789 = vmatprep.subr.bf16.mxu0 0
        %1790 = vmatpush1.bf16.xpose.msra.mxu0 0
        %1791 = vmatprep.subr.bf16.mxu0 0
        %1792 = vmatpush1.bf16.xpose.msra.mxu0 0
        %1793 = vmatprep.subr.bf16.mxu0 0
        %1794 = vmatpush1.bf16.xpose.msra.mxu0 0
        %1795 = vmatprep.subr.bf16.mxu0 0
        %1796 = vmatpush1.bf16.xpose.msra.mxu0 0
        %1797 = vmatprep.mubr.bf16.mxu0 0
        %1798 = vmatmul.mubr.bf16.gmra.mrb[0].mxu0 %v1760
        %v1799 = vpop.f32.mrb[0].mxu0
        %v1800 = vadd.f32 0.0, %v1799
        %v1801 = vpop.f32.mrb[0].mxu0
        %v1802 = vpop.f32.mrb[0].mxu0
        %v1803 = vadd.f32 0.0, %v1802
        %v1804 = vpop.f32.mrb[0].mxu0
        %1805 = vdwg.mxu0
        %vm1806 = vcmask 195584
        %v1807 = vsel %vm1806, %v1800, -inf
        %1808 = vmax.xlane.f32.xlu0 %v1807
        %v1809 = vpop.xlane.xlu0 %1808
        %v1810 = vsel %vm1806, %v1803, -inf
        %1811 = vmax.xlane.f32.xlu0 %v1810
        %v1812 = vpop.xlane.xlu0 %1811
        %v1813 = vsub.f32 %v1800, %v1809
        %v1814 = vsub.f32 %v1803, %v1812
        %v1815 = vmul.f32 %v1813, 1.442695
        %v1816 = vpow.pop %v1815
        %v1817 = vmul.f32 %v1814, 1.442695
        %v1818 = vpow.pop %v1817
        %v1819 = vsel %vm1806, %v1816, 0.0
        %1820 = vadd.xlane.f32.xlu0 %v1819
        %v1821 = vpop.xlane.xlu0 %1820
        %v1822 = vsel %vm1806, %v1818, 0.0
        %1823 = vadd.xlane.f32.xlu0 %v1822
        %v1824 = vpop.xlane.xlu0 %1823
        %v1825 = vrcp.pop %v1821
        %v1826 = vrcp.pop %v1824
        %v1827 = vmul.f32 %v1816, %v1825
        %v1828 = vmul.f32 %v1818, %v1826
        %v1829 = vpack.c.bf16 %v1828, %v1827
        %v1831 = vsel %vm1806, %v1829, 0
        %vm1833 = vcmask 1043456
        %v1835 = vsel %vm1833, %v1764, 0
        %1837 = vmatprep.subr.bf16.mxu0 0
        %1838 = vmatpush1.bf16.msra.mxu0 %v1763
        %1839 = vmatprep.subr.bf16.mxu0 0
        %1840 = vmatpush1.bf16.msra.mxu0 %v1835
        %1841 = vmatprep.subr.bf16.mxu0 0
        %1842 = vmatpush1.bf16.msra.mxu0 0
        %1843 = vmatprep.subr.bf16.mxu0 0
        %1844 = vmatpush1.bf16.msra.mxu0 0
        %1845 = vmatprep.subr.bf16.mxu0 0
        %1846 = vmatpush1.bf16.msra.mxu0 0
        %1847 = vmatprep.subr.bf16.mxu0 0
        %1848 = vmatpush1.bf16.msra.mxu0 0
        %1849 = vmatprep.subr.bf16.mxu0 0
        %1850 = vmatpush1.bf16.msra.mxu0 0
        %1851 = vmatprep.subr.bf16.mxu0 0
        %1852 = vmatpush1.bf16.msra.mxu0 0
        %1853 = vmatprep.subr.bf16.mxu0 0
        %1854 = vmatpush1.bf16.msra.mxu0 0
        %1855 = vmatprep.subr.bf16.mxu0 0
        %1856 = vmatpush1.bf16.msra.mxu0 0
        %1857 = vmatprep.subr.bf16.mxu0 0
        %1858 = vmatpush1.bf16.msra.mxu0 0
        %1859 = vmatprep.subr.bf16.mxu0 0
        %1860 = vmatpush1.bf16.msra.mxu0 0
        %1861 = vmatprep.subr.bf16.mxu0 0
        %1862 = vmatpush1.bf16.msra.mxu0 0
        %1863 = vmatprep.subr.bf16.mxu0 0
        %1864 = vmatpush1.bf16.msra.mxu0 0
        %1865 = vmatprep.subr.bf16.mxu0 0
        %1866 = vmatpush1.bf16.msra.mxu0 0
        %1867 = vmatprep.subr.bf16.mxu0 0
        %1868 = vmatpush1.bf16.msra.mxu0 0
        %1869 = vmatprep.mubr.bf16.mxu0 0
        %1870 = vmatmul.mubr.bf16.gmra.mrb[0].mxu0 %v1831
        %v1871 = vpop.f32.mrb[0].mxu0
        %v1872 = vadd.f32 0.0, %v1871
        %v1873 = vpop.f32.mrb[0].mxu0
        %v1874 = vpop.f32.mrb[0].mxu0
        %v1875 = vadd.f32 0.0, %v1874
        %v1876 = vpop.f32.mrb[0].mxu0
        %1877 = vdwg.mxu0
        %1878 = vst [vmem:[#allocation4 + $0x8] sm:$0xff] %v1872
        %1879 = vst [vmem:[#allocation4 + $0x10] sm:$0xff] %v1875
        %v1880 = vpack.c.bf16 %v1400, %v1395
        %v1881 = vpack.c.bf16 %v1687, %v1684
        %v1882 = vpack.c.bf16 %v1692, %v1692
        %v1883 = vpack.c.bf16 %v1750, %v1747
        %v1884 = vpack.c.bf16 %v1755, %v1755
        %1885 = vmatprep.subr.bf16.mxu0 0
        %1886 = vmatpush1.bf16.xpose.msra.mxu0 %v1881
        %1887 = vmatprep.subr.bf16.mxu0 0
        %1888 = vmatpush1.bf16.xpose.msra.mxu0 %v1882
        %1889 = vmatprep.subr.bf16.mxu0 0
        %1890 = vmatpush1.bf16.xpose.msra.mxu0 0
        %1891 = vmatprep.subr.bf16.mxu0 0
        %1892 = vmatpush1.bf16.xpose.msra.mxu0 0
        %1893 = vmatprep.subr.bf16.mxu0 0
        %1894 = vmatpush1.bf16.xpose.msra.mxu0 0
        %1895 = vmatprep.subr.bf16.mxu0 0
        %1896 = vmatpush1.bf16.xpose.msra.mxu0 0
        %1897 = vmatprep.subr.bf16.mxu0 0
        %1898 = vmatpush1.bf16.xpose.msra.mxu0 0
        %1899 = vmatprep.subr.bf16.mxu0 0
        %1900 = vmatpush1.bf16.xpose.msra.mxu0 0
        %1901 = vmatprep.subr.bf16.mxu0 0
        %1902 = vmatpush1.bf16.xpose.msra.mxu0 0
        %1903 = vmatprep.subr.bf16.mxu0 0
        %1904 = vmatpush1.bf16.xpose.msra.mxu0 0
        %1905 = vmatprep.subr.bf16.mxu0 0
        %1906 = vmatpush1.bf16.xpose.msra.mxu0 0
        %1907 = vmatprep.subr.bf16.mxu0 0
        %1908 = vmatpush1.bf16.xpose.msra.mxu0 0
        %1909 = vmatprep.subr.bf16.mxu0 0
        %1910 = vmatpush1.bf16.xpose.msra.mxu0 0
        %1911 = vmatprep.subr.bf16.mxu0 0
        %1912 = vmatpush1.bf16.xpose.msra.mxu0 0
        %1913 = vmatprep.subr.bf16.mxu0 0
        %1914 = vmatpush1.bf16.xpose.msra.mxu0 0
        %1915 = vmatprep.subr.bf16.mxu0 0
        %1916 = vmatpush1.bf16.xpose.msra.mxu0 0
        %1917 = vmatprep.mubr.bf16.mxu0 0
        %1918 = vmatmul.mubr.bf16.gmra.mrb[0].mxu0 %v1880
        %v1919 = vpop.f32.mrb[0].mxu0
        %v1920 = vadd.f32 0.0, %v1919
        %v1921 = vpop.f32.mrb[0].mxu0
        %v1922 = vpop.f32.mrb[0].mxu0
        %v1923 = vadd.f32 0.0, %v1922
        %v1924 = vpop.f32.mrb[0].mxu0
        %1925 = vdwg.mxu0
        %v1926 = vsel %vm1806, %v1920, -inf
        %1927 = vmax.xlane.f32.xlu0 %v1926
        %v1928 = vpop.xlane.xlu0 %1927
        %v1929 = vsel %vm1806, %v1923, -inf
        %1930 = vmax.xlane.f32.xlu0 %v1929
        %v1931 = vpop.xlane.xlu0 %1930
        %v1932 = vsub.f32 %v1920, %v1928
        %v1933 = vsub.f32 %v1923, %v1931
        %v1934 = vmul.f32 %v1932, 1.442695
        %v1935 = vpow.pop %v1934
        %v1936 = vmul.f32 %v1933, 1.442695
        %v1937 = vpow.pop %v1936
        %v1938 = vsel %vm1806, %v1935, 0.0
        %1939 = vadd.xlane.f32.xlu0 %v1938
        %v1940 = vpop.xlane.xlu0 %1939
        %v1941 = vsel %vm1806, %v1937, 0.0
        %1942 = vadd.xlane.f32.xlu0 %v1941
        %v1943 = vpop.xlane.xlu0 %1942
        %v1944 = vrcp.pop %v1940
        %v1945 = vrcp.pop %v1943
        %v1946 = vmul.f32 %v1935, %v1944
        %v1947 = vmul.f32 %v1937, %v1945
        %v1948 = vpack.c.bf16 %v1947, %v1946
        %v1950 = vsel %vm1806, %v1948, 0
        %v1953 = vsel %vm1833, %v1884, 0
        %1955 = vmatprep.subr.bf16.mxu0 0
        %1956 = vmatpush1.bf16.msra.mxu0 %v1883
        %1957 = vmatprep.subr.bf16.mxu0 0
        %1958 = vmatpush1.bf16.msra.mxu0 %v1953
        %1959 = vmatprep.subr.bf16.mxu0 0
        %1960 = vmatpush1.bf16.msra.mxu0 0
        %1961 = vmatprep.subr.bf16.mxu0 0
        %1962 = vmatpush1.bf16.msra.mxu0 0
        %1963 = vmatprep.subr.bf16.mxu0 0
        %1964 = vmatpush1.bf16.msra.mxu0 0
        %1965 = vmatprep.subr.bf16.mxu0 0
        %1966 = vmatpush1.bf16.msra.mxu0 0
        %1967 = vmatprep.subr.bf16.mxu0 0
        %1968 = vmatpush1.bf16.msra.mxu0 0
        %1969 = vmatprep.subr.bf16.mxu0 0
        %1970 = vmatpush1.bf16.msra.mxu0 0
        %1971 = vmatprep.subr.bf16.mxu0 0
        %1972 = vmatpush1.bf16.msra.mxu0 0
        %1973 = vmatprep.subr.bf16.mxu0 0
        %1974 = vmatpush1.bf16.msra.mxu0 0
        %1975 = vmatprep.subr.bf16.mxu0 0
        %1976 = vmatpush1.bf16.msra.mxu0 0
        %1977 = vmatprep.subr.bf16.mxu0 0
        %1978 = vmatpush1.bf16.msra.mxu0 0
        %1979 = vmatprep.subr.bf16.mxu0 0
        %1980 = vmatpush1.bf16.msra.mxu0 0
        %1981 = vmatprep.subr.bf16.mxu0 0
        %1982 = vmatpush1.bf16.msra.mxu0 0
        %1983 = vmatprep.subr.bf16.mxu0 0
        %1984 = vmatpush1.bf16.msra.mxu0 0
        %1985 = vmatprep.subr.bf16.mxu0 0
        %1986 = vmatpush1.bf16.msra.mxu0 0
        %1987 = vmatprep.mubr.bf16.mxu0 0
        %1988 = vmatmul.mubr.bf16.gmra.mrb[0].mxu0 %v1950
        %v1989 = vpop.f32.mrb[0].mxu0
        %v1990 = vadd.f32 0.0, %v1989
        %v1991 = vpop.f32.mrb[0].mxu0
        %v1992 = vpop.f32.mrb[0].mxu0
        %v1993 = vadd.f32 0.0, %v1992
        %v1994 = vpop.f32.mrb[0].mxu0
        %1995 = vdwg.mxu0
        %1996 = vst [vmem:[#allocation4 + $0x20] sm:$0xff] %v1990
        %1997 = vst [vmem:[#allocation4 + $0x28] sm:$0xff] %v1993
        %v1998 = vpack.c.bf16 %v1609, %v1606
        %v1999 = vpack.c.bf16 %v1614, %v1614
        %v2000 = vpack.c.bf16 %v1459, %v1456
        %v2001 = vpack.c.bf16 %v1530, %v1527
        %2002 = vmatprep.subr.bf16.mxu0 0
        %2003 = vmatpush1.bf16.xpose.msra.mxu0 %v2000
        %2004 = vmatprep.subr.bf16.mxu0 0
        %2005 = vmatpush1.bf16.xpose.msra.mxu0 0
        %2006 = vmatprep.subr.bf16.mxu0 0
        %2007 = vmatpush1.bf16.xpose.msra.mxu0 0
        %2008 = vmatprep.subr.bf16.mxu0 0
        %2009 = vmatpush1.bf16.xpose.msra.mxu0 0
        %2010 = vmatprep.subr.bf16.mxu0 0
        %2011 = vmatpush1.bf16.xpose.msra.mxu0 0
        %2012 = vmatprep.subr.bf16.mxu0 0
        %2013 = vmatpush1.bf16.xpose.msra.mxu0 0
        %2014 = vmatprep.subr.bf16.mxu0 0
        %2015 = vmatpush1.bf16.xpose.msra.mxu0 0
        %2016 = vmatprep.subr.bf16.mxu0 0
        %2017 = vmatpush1.bf16.xpose.msra.mxu0 0
        %2018 = vmatprep.subr.bf16.mxu0 0
        %2019 = vmatpush1.bf16.xpose.msra.mxu0 0
        %2020 = vmatprep.subr.bf16.mxu0 0
        %2021 = vmatpush1.bf16.xpose.msra.mxu0 0
        %2022 = vmatprep.subr.bf16.mxu0 0
        %2023 = vmatpush1.bf16.xpose.msra.mxu0 0
        %2024 = vmatprep.subr.bf16.mxu0 0
        %2025 = vmatpush1.bf16.xpose.msra.mxu0 0
        %2026 = vmatprep.subr.bf16.mxu0 0
        %2027 = vmatpush1.bf16.xpose.msra.mxu0 0
        %2028 = vmatprep.subr.bf16.mxu0 0
        %2029 = vmatpush1.bf16.xpose.msra.mxu0 0
        %2030 = vmatprep.subr.bf16.mxu0 0
        %2031 = vmatpush1.bf16.xpose.msra.mxu0 0
        %2032 = vmatprep.subr.bf16.mxu0 0
        %2033 = vmatpush1.bf16.xpose.msra.mxu0 0
        %2034 = vmatprep.mubr.bf16.mxu0 0
        %2035 = vmatmul.mubr.bf16.gmra.mrb[0].mxu0 %v1998
        %v2036 = vpop.f32.mrb[0].mxu0
        %v2037 = vadd.f32 0.0, %v2036
        %v2038 = vpop.f32.mrb[0].mxu0
        %v2039 = vpop.f32.mrb[0].mxu0
        %v2040 = vadd.f32 0.0, %v2039
        %v2041 = vpop.f32.mrb[0].mxu0
        %2042 = vmatprep.mubr.bf16.mxu0 0
        %2043 = vmatmul.mubr.bf16.gmra.mrb[0].mxu0 %v1999
        %v2044 = vpop.f32.mrb[0].mxu0
        %v2045 = vadd.f32 0.0, %v2044
        %v2046 = vpop.f32.mrb[0].mxu0
        %v2047 = vpop.f32.mrb[0].mxu0
        %v2048 = vpop.f32.mrb[0].mxu0
        %2049 = vdwg.mxu0
        %vm2050 = vcmask 130048
        %v2051 = vsel %vm2050, %v2037, -inf
        %2052 = vmax.xlane.f32.xlu0 %v2051
        %v2053 = vpop.xlane.xlu0 %2052
        %v2054 = vsel %vm2050, %v2040, -inf
        %2055 = vmax.xlane.f32.xlu0 %v2054
        %v2056 = vpop.xlane.xlu0 %2055
        %v2057 = vsel %vm2050, %v2045, -inf
        %2058 = vmax.xlane.f32.xlu0 %v2057
        %v2059 = vpop.xlane.xlu0 %2058
        %v2060 = vsub.f32 %v2037, %v2053
        %v2061 = vsub.f32 %v2040, %v2056
        %v2062 = vsub.f32 %v2045, %v2059
        %v2063 = vmul.f32 %v2060, 1.442695
        %v2064 = vpow.pop %v2063
        %v2065 = vmul.f32 %v2061, 1.442695
        %v2066 = vpow.pop %v2065
        %v2067 = vmul.f32 %v2062, 1.442695
        %v2068 = vpow.pop %v2067
        %v2069 = vsel %vm2050, %v2064, 0.0
        %2070 = vadd.xlane.f32.xlu0 %v2069
        %v2071 = vpop.xlane.xlu0 %2070
        %v2072 = vsel %vm2050, %v2066, 0.0
        %2073 = vadd.xlane.f32.xlu0 %v2072
        %v2074 = vpop.xlane.xlu0 %2073
        %v2075 = vsel %vm2050, %v2068, 0.0
        %2076 = vadd.xlane.f32.xlu0 %v2075
        %v2077 = vpop.xlane.xlu0 %2076
        %v2078 = vrcp.pop %v2071
        %v2079 = vrcp.pop %v2074
        %v2080 = vrcp.pop %v2077
        %v2081 = vmul.f32 %v2064, %v2078
        %v2082 = vmul.f32 %v2066, %v2079
        %v2083 = vmul.f32 %v2068, %v2080
        %v2084 = vpack.c.bf16 %v2082, %v2081
        %v2085 = vpack.c.bf16 %v2083, %v2083
        %v2087 = vsel %vm2050, %v2084, 0
        %v2090 = vsel %vm2050, %v2085, 0
        %2092 = vmatprep.subr.bf16.mxu0 0
        %2093 = vmatpush1.bf16.msra.mxu0 %v2001
        %2094 = vmatprep.subr.bf16.mxu0 0
        %2095 = vmatpush1.bf16.msra.mxu0 0
        %2096 = vmatprep.subr.bf16.mxu0 0
        %2097 = vmatpush1.bf16.msra.mxu0 0
        %2098 = vmatprep.subr.bf16.mxu0 0
        %2099 = vmatpush1.bf16.msra.mxu0 0
        %2100 = vmatprep.subr.bf16.mxu0 0
        %2101 = vmatpush1.bf16.msra.mxu0 0
        %2102 = vmatprep.subr.bf16.mxu0 0
        %2103 = vmatpush1.bf16.msra.mxu0 0
        %2104 = vmatprep.subr.bf16.mxu0 0
        %2105 = vmatpush1.bf16.msra.mxu0 0
        %2106 = vmatprep.subr.bf16.mxu0 0
        %2107 = vmatpush1.bf16.msra.mxu0 0
        %2108 = vmatprep.subr.bf16.mxu0 0
        %2109 = vmatpush1.bf16.msra.mxu0 0
        %2110 = vmatprep.subr.bf16.mxu0 0
        %2111 = vmatpush1.bf16.msra.mxu0 0
        %2112 = vmatprep.subr.bf16.mxu0 0
        %2113 = vmatpush1.bf16.msra.mxu0 0
        %2114 = vmatprep.subr.bf16.mxu0 0
        %2115 = vmatpush1.bf16.msra.mxu0 0
        %2116 = vmatprep.subr.bf16.mxu0 0
        %2117 = vmatpush1.bf16.msra.mxu0 0
        %2118 = vmatprep.subr.bf16.mxu0 0
        %2119 = vmatpush1.bf16.msra.mxu0 0
        %2120 = vmatprep.subr.bf16.mxu0 0
        %2121 = vmatpush1.bf16.msra.mxu0 0
        %2122 = vmatprep.subr.bf16.mxu0 0
        %2123 = vmatpush1.bf16.msra.mxu0 0
        %2124 = vmatprep.mubr.bf16.mxu0 0
        %2125 = vmatmul.mubr.bf16.gmra.mrb[0].mxu0 %v2087
        %v2126 = vpop.f32.mrb[0].mxu0
        %v2127 = vadd.f32 0.0, %v2126
        %v2128 = vpop.f32.mrb[0].mxu0
        %v2129 = vpop.f32.mrb[0].mxu0
        %v2130 = vadd.f32 0.0, %v2129
        %v2131 = vpop.f32.mrb[0].mxu0
        %2132 = vmatprep.mubr.bf16.mxu0 0
        %2133 = vmatmul.mubr.bf16.gmra.mrb[0].mxu0 %v2090
        %v2134 = vpop.f32.mrb[0].mxu0
        %v2135 = vadd.f32 0.0, %v2134
        %v2136 = vpop.f32.mrb[0].mxu0
        %v2137 = vpop.f32.mrb[0].mxu0
        %v2138 = vpop.f32.mrb[0].mxu0
        %2139 = vdwg.mxu0
        %2140 = vst [vmem:[#allocation7 + $0x8] sm:$0xff] %v2127
        %2141 = vst [vmem:[#allocation7 + $0x10] sm:$0xff] %v2130
        %2142 = vst [vmem:[#allocation7 + $0x18] sm:$0xff] %v2135
        %v2143 = vpack.c.bf16 %v1624, %v1621
        %v2144 = vpack.c.bf16 %v1629, %v1629
        %v2145 = vpack.c.bf16 %v1471, %v1466
        %v2146 = vpack.c.bf16 %v1542, %v1537
        %2147 = vmatprep.subr.bf16.mxu0 0
        %2148 = vmatpush1.bf16.xpose.msra.mxu0 %v2145
        %2149 = vmatprep.subr.bf16.mxu0 0
        %2150 = vmatpush1.bf16.xpose.msra.mxu0 0
        %2151 = vmatprep.subr.bf16.mxu0 0
        %2152 = vmatpush1.bf16.xpose.msra.mxu0 0
        %2153 = vmatprep.subr.bf16.mxu0 0
        %2154 = vmatpush1.bf16.xpose.msra.mxu0 0
        %2155 = vmatprep.subr.bf16.mxu0 0
        %2156 = vmatpush1.bf16.xpose.msra.mxu0 0
        %2157 = vmatprep.subr.bf16.mxu0 0
        %2158 = vmatpush1.bf16.xpose.msra.mxu0 0
        %2159 = vmatprep.subr.bf16.mxu0 0
        %2160 = vmatpush1.bf16.xpose.msra.mxu0 0
        %2161 = vmatprep.subr.bf16.mxu0 0
        %2162 = vmatpush1.bf16.xpose.msra.mxu0 0
        %2163 = vmatprep.subr.bf16.mxu0 0
        %2164 = vmatpush1.bf16.xpose.msra.mxu0 0
        %2165 = vmatprep.subr.bf16.mxu0 0
        %2166 = vmatpush1.bf16.xpose.msra.mxu0 0
        %2167 = vmatprep.subr.bf16.mxu0 0
        %2168 = vmatpush1.bf16.xpose.msra.mxu0 0
        %2169 = vmatprep.subr.bf16.mxu0 0
        %2170 = vmatpush1.bf16.xpose.msra.mxu0 0
        %2171 = vmatprep.subr.bf16.mxu0 0
        %2172 = vmatpush1.bf16.xpose.msra.mxu0 0
        %2173 = vmatprep.subr.bf16.mxu0 0
        %2174 = vmatpush1.bf16.xpose.msra.mxu0 0
        %2175 = vmatprep.subr.bf16.mxu0 0
        %2176 = vmatpush1.bf16.xpose.msra.mxu0 0
        %2177 = vmatprep.subr.bf16.mxu0 0
        %2178 = vmatpush1.bf16.xpose.msra.mxu0 0
        %2179 = vmatprep.mubr.bf16.mxu0 0
        %2180 = vmatmul.mubr.bf16.gmra.mrb[0].mxu0 %v2143
        %v2181 = vpop.f32.mrb[0].mxu0
        %v2182 = vadd.f32 0.0, %v2181
        %v2183 = vpop.f32.mrb[0].mxu0
        %v2184 = vpop.f32.mrb[0].mxu0
        %v2185 = vadd.f32 0.0, %v2184
        %v2186 = vpop.f32.mrb[0].mxu0
        %2187 = vmatprep.mubr.bf16.mxu0 0
        %2188 = vmatmul.mubr.bf16.gmra.mrb[0].mxu0 %v2144
        %v2189 = vpop.f32.mrb[0].mxu0
        %v2190 = vadd.f32 0.0, %v2189
        %v2191 = vpop.f32.mrb[0].mxu0
        %v2192 = vpop.f32.mrb[0].mxu0
        %v2193 = vpop.f32.mrb[0].mxu0
        %2194 = vdwg.mxu0
        %v2195 = vsel %vm2050, %v2182, -inf
        %2196 = vmax.xlane.f32.xlu0 %v2195
        %v2197 = vpop.xlane.xlu0 %2196
        %v2198 = vsel %vm2050, %v2185, -inf
        %2199 = vmax.xlane.f32.xlu0 %v2198
        %v2200 = vpop.xlane.xlu0 %2199
        %v2201 = vsel %vm2050, %v2190, -inf
        %2202 = vmax.xlane.f32.xlu0 %v2201
        %v2203 = vpop.xlane.xlu0 %2202
        %v2204 = vsub.f32 %v2182, %v2197
        %v2205 = vsub.f32 %v2185, %v2200
        %v2206 = vsub.f32 %v2190, %v2203
        %v2207 = vmul.f32 %v2204, 1.442695
        %v2208 = vpow.pop %v2207
        %v2209 = vmul.f32 %v2205, 1.442695
        %v2210 = vpow.pop %v2209
        %v2211 = vmul.f32 %v2206, 1.442695
        %v2212 = vpow.pop %v2211
        %v2213 = vsel %vm2050, %v2208, 0.0
        %2214 = vadd.xlane.f32.xlu0 %v2213
        %v2215 = vpop.xlane.xlu0 %2214
        %v2216 = vsel %vm2050, %v2210, 0.0
        %2217 = vadd.xlane.f32.xlu0 %v2216
        %v2218 = vpop.xlane.xlu0 %2217
        %v2219 = vsel %vm2050, %v2212, 0.0
        %2220 = vadd.xlane.f32.xlu0 %v2219
        %v2221 = vpop.xlane.xlu0 %2220
        %v2222 = vrcp.pop %v2215
        %v2223 = vrcp.pop %v2218
        %v2224 = vrcp.pop %v2221
        %v2225 = vmul.f32 %v2208, %v2222
        %v2226 = vmul.f32 %v2210, %v2223
        %v2227 = vmul.f32 %v2212, %v2224
        %v2228 = vpack.c.bf16 %v2226, %v2225
        %v2229 = vpack.c.bf16 %v2227, %v2227
        %v2231 = vsel %vm2050, %v2228, 0
        %v2234 = vsel %vm2050, %v2229, 0
        %2236 = vmatprep.subr.bf16.mxu0 0
        %2237 = vmatpush1.bf16.msra.mxu0 %v2146
        %2238 = vmatprep.subr.bf16.mxu0 0
        %2239 = vmatpush1.bf16.msra.mxu0 0
        %2240 = vmatprep.subr.bf16.mxu0 0
        %2241 = vmatpush1.bf16.msra.mxu0 0
        %2242 = vmatprep.subr.bf16.mxu0 0
        %2243 = vmatpush1.bf16.msra.mxu0 0
        %2244 = vmatprep.subr.bf16.mxu0 0
        %2245 = vmatpush1.bf16.msra.mxu0 0
        %2246 = vmatprep.subr.bf16.mxu0 0
        %2247 = vmatpush1.bf16.msra.mxu0 0
        %2248 = vmatprep.subr.bf16.mxu0 0
        %2249 = vmatpush1.bf16.msra.mxu0 0
        %2250 = vmatprep.subr.bf16.mxu0 0
        %2251 = vmatpush1.bf16.msra.mxu0 0
        %2252 = vmatprep.subr.bf16.mxu0 0
        %2253 = vmatpush1.bf16.msra.mxu0 0
        %2254 = vmatprep.subr.bf16.mxu0 0
        %2255 = vmatpush1.bf16.msra.mxu0 0
        %2256 = vmatprep.subr.bf16.mxu0 0
        %2257 = vmatpush1.bf16.msra.mxu0 0
        %2258 = vmatprep.subr.bf16.mxu0 0
        %2259 = vmatpush1.bf16.msra.mxu0 0
        %2260 = vmatprep.subr.bf16.mxu0 0
        %2261 = vmatpush1.bf16.msra.mxu0 0
        %2262 = vmatprep.subr.bf16.mxu0 0
        %2263 = vmatpush1.bf16.msra.mxu0 0
        %2264 = vmatprep.subr.bf16.mxu0 0
        %2265 = vmatpush1.bf16.msra.mxu0 0
        %2266 = vmatprep.subr.bf16.mxu0 0
        %2267 = vmatpush1.bf16.msra.mxu0 0
        %2268 = vmatprep.mubr.bf16.mxu0 0
        %2269 = vmatmul.mubr.bf16.gmra.mrb[0].mxu0 %v2231
        %v2270 = vpop.f32.mrb[0].mxu0
        %v2271 = vadd.f32 0.0, %v2270
        %v2272 = vpop.f32.mrb[0].mxu0
        %v2273 = vpop.f32.mrb[0].mxu0
        %v2274 = vadd.f32 0.0, %v2273
        %v2275 = vpop.f32.mrb[0].mxu0
        %2276 = vmatprep.mubr.bf16.mxu0 0
        %2277 = vmatmul.mubr.bf16.gmra.mrb[0].mxu0 %v2234
        %v2278 = vpop.f32.mrb[0].mxu0
        %v2279 = vadd.f32 0.0, %v2278
        %v2280 = vpop.f32.mrb[0].mxu0
        %v2281 = vpop.f32.mrb[0].mxu0
        %v2282 = vpop.f32.mrb[0].mxu0
        %2283 = vdwg.mxu0
        %2284 = vst [vmem:[#allocation7 + $0x28] sm:$0xff] %v2271
        %2285 = vst [vmem:[#allocation7 + $0x30] sm:$0xff] %v2274
        %2286 = vst [vmem:[#allocation7 + $0x38] sm:$0xff] %v2279
        %v2287 = vld [vmem:[#allocation3 + $0x5] sm:$0xff]
        %v2288 = vld [vmem:[#allocation3 + $0xd] sm:$0xff]
        %v2289 = vld [vmem:[#allocation3 + $0x15] sm:$0xff]
        %v2290 = vld [vmem:[#allocation3 + $0x1d] sm:$0xff]
        %v2291 = vld [vmem:[#allocation3 + $0x25] sm:$0xff]
        %v2292 = vld [vmem:[#allocation3 + $0x2d] sm:$0xff]
        %v2293 = vpack.c.bf16 %v2288, %v2287
        %v2294 = vpack.c.bf16 %v2290, %v2289
        %v2295 = vpack.c.bf16 %v2292, %v2291
        %v2296 = vld [vmem:[%s7] sm:$0xf]
        %v2297 = vld [vmem:[%s7 + $0x4] sm:$0xf]
        %v2298 = vld [vmem:[%s7 + $0x8] sm:$0xf]
        %v2299 = vld [vmem:[%s7 + $0xc] sm:$0xf]
        %v2300 = vld [vmem:[%s7 + $0x10] sm:$0xf]
        %v2301 = vld [vmem:[%s7 + $0x14] sm:$0xf]
        %v2302 = vld [vmem:[%s7 + $0x18] sm:$0xf]
        %v2303 = vld [vmem:[%s7 + $0x1c] sm:$0xf]
        %v2304 = vld [vmem:[%s7 + $0x20] sm:$0xf]
        %v2305 = vld [vmem:[%s7 + $0x24] sm:$0xf]
        %v2306 = vld [vmem:[%s7 + $0x28] sm:$0xf]
        %v2307 = vld [vmem:[%s7 + $0x2c] sm:$0xf]
        %v2308 = vld [vmem:[%s7 + $0x30] sm:$0xf]
        %v2309 = vld [vmem:[%s7 + $0x34] sm:$0xf]
        %v2310 = vld [vmem:[%s7 + $0x38] sm:$0xf]
        %v2311 = vld [vmem:[%s7 + $0x3c] sm:$0xf]
        %v2312 = vld [vmem:[#allocation4 + $0x5] sm:$0xff]
        %v2313 = vld [vmem:[#allocation4 + $0xd] sm:$0xff]
        %v2314 = vld [vmem:[#allocation4 + $0x15] sm:$0xff]
        %v2315 = vld [vmem:[#allocation4 + $0x1d] sm:$0xff]
        %v2316 = vld [vmem:[#allocation4 + $0x25] sm:$0xff]
        %v2317 = vld [vmem:[#allocation4 + $0x2d] sm:$0xff]
        %v2318 = vpack.c.bf16 %v2313, %v2312
        %v2319 = vpack.c.bf16 %v2315, %v2314
        %v2320 = vpack.c.bf16 %v2317, %v2316
        %v2321 = vld [vmem:[%s8] sm:$0xf]
        %v2322 = vld [vmem:[%s8 + $0x4] sm:$0xf]
        %v2323 = vld [vmem:[%s8 + $0x8] sm:$0xf]
        %v2324 = vld [vmem:[%s8 + $0xc] sm:$0xf]
        %v2325 = vld [vmem:[%s8 + $0x10] sm:$0xf]
        %v2326 = vld [vmem:[%s8 + $0x14] sm:$0xf]
        %v2327 = vld [vmem:[%s8 + $0x18] sm:$0xf]
        %v2328 = vld [vmem:[%s8 + $0x1c] sm:$0xf]
        %v2329 = vld [vmem:[%s8 + $0x20] sm:$0xf]
        %v2330 = vld [vmem:[%s8 + $0x24] sm:$0xf]
        %v2331 = vld [vmem:[%s8 + $0x28] sm:$0xf]
        %v2332 = vld [vmem:[%s8 + $0x2c] sm:$0xf]
        %v2333 = vld [vmem:[%s8 + $0x30] sm:$0xf]
        %v2334 = vld [vmem:[%s8 + $0x34] sm:$0xf]
        %v2335 = vld [vmem:[%s8 + $0x38] sm:$0xf]
        %v2336 = vld [vmem:[%s8 + $0x3c] sm:$0xf]
        %v2353 = vunpack.c.l.b16 %v2321
        %v2354 = vunpack.c.l.b16 %v2322
        %v2355 = vunpack.c.l.b16 %v2323
        %v2356 = vunpack.c.l.b16 %v2324
        %v2357 = vunpack.c.l.b16 %v2325
        %v2358 = vunpack.c.l.b16 %v2326
        %v2359 = vunpack.c.l.b16 %v2327
        %v2360 = vunpack.c.l.b16 %v2328
        %v2361 = vunpack.c.l.b16 %v2329
        %v2362 = vunpack.c.l.b16 %v2330
        %v2363 = vunpack.c.l.b16 %v2331
        %v2364 = vunpack.c.l.b16 %v2332
        %v2365 = vunpack.c.l.b16 %v2333
        %v2366 = vunpack.c.l.b16 %v2334
        %v2367 = vunpack.c.l.b16 %v2335
        %v2368 = vunpack.c.l.b16 %v2336
        %v2369 = vpack.c.b16 %v2354, %v2353
        %v2370 = vpack.c.b16 %v2356, %v2355
        %v2371 = vpack.c.b16 %v2358, %v2357
        %v2372 = vpack.c.b16 %v2360, %v2359
        %v2373 = vpack.c.b16 %v2362, %v2361
        %v2374 = vpack.c.b16 %v2364, %v2363
        %v2375 = vpack.c.b16 %v2366, %v2365
        %v2376 = vpack.c.b16 %v2368, %v2367
        %2385 = vmatprep.subr.bf16.mxu0 0
        %2386 = vmatpush1.bf16.msra.mxu0 %v2369
        %2387 = vmatprep.subr.bf16.mxu0 0
        %2388 = vmatpush1.bf16.msra.mxu0 %v2370
        %2389 = vmatprep.subr.bf16.mxu0 0
        %2390 = vmatpush1.bf16.msra.mxu0 %v2371
        %2391 = vmatprep.subr.bf16.mxu0 0
        %2392 = vmatpush1.bf16.msra.mxu0 %v2372
        %2393 = vmatprep.subr.bf16.mxu0 0
        %2394 = vmatpush1.bf16.msra.mxu0 %v2373
        %2395 = vmatprep.subr.bf16.mxu0 0
        %2396 = vmatpush1.bf16.msra.mxu0 %v2374
        %2397 = vmatprep.subr.bf16.mxu0 0
        %2398 = vmatpush1.bf16.msra.mxu0 %v2375
        %2399 = vmatprep.subr.bf16.mxu0 0
        %2400 = vmatpush1.bf16.msra.mxu0 %v2376
        %2401 = vmatprep.subr.bf16.mxu0 0
        %2402 = vmatpush1.bf16.msra.mxu0 0
        %2403 = vmatprep.subr.bf16.mxu0 0
        %2404 = vmatpush1.bf16.msra.mxu0 0
        %2405 = vmatprep.subr.bf16.mxu0 0
        %2406 = vmatpush1.bf16.msra.mxu0 0
        %2407 = vmatprep.subr.bf16.mxu0 0
        %2408 = vmatpush1.bf16.msra.mxu0 0
        %2409 = vmatprep.subr.bf16.mxu0 0
        %2410 = vmatpush1.bf16.msra.mxu0 0
        %2411 = vmatprep.subr.bf16.mxu0 0
        %2412 = vmatpush1.bf16.msra.mxu0 0
        %2413 = vmatprep.subr.bf16.mxu0 0
        %2414 = vmatpush1.bf16.msra.mxu0 0
        %2415 = vmatprep.subr.bf16.mxu0 0
        %2416 = vmatpush1.bf16.msra.mxu0 0
        %2417 = vmatprep.mubr.bf16.mxu0 0
        %2418 = vmatmul.mubr.bf16.gmra.mrb[0].mxu0 %v2318
        %v2419 = vpop.f32.mrb[0].mxu0
        %v2420 = vadd.f32 0.0, %v2419
        %v2421 = vpop.f32.mrb[0].mxu0
        %v2422 = vpop.f32.mrb[0].mxu0
        %v2423 = vadd.f32 0.0, %v2422
        %v2424 = vpop.f32.mrb[0].mxu0
        %2425 = vmatprep.mubr.bf16.mxu0 0
        %2426 = vmatmul.mubr.bf16.gmra.mrb[0].mxu0 %v2319
        %v2427 = vpop.f32.mrb[0].mxu0
        %v2428 = vpop.f32.mrb[0].mxu0
        %v2429 = vpop.f32.mrb[0].mxu0
        %v2430 = vadd.f32 0.0, %v2429
        %v2431 = vpop.f32.mrb[0].mxu0
        %2432 = vmatprep.mubr.bf16.mxu0 0
        %2433 = vmatmul.mubr.bf16.gmra.mrb[0].mxu0 %v2320
        %v2434 = vpop.f32.mrb[0].mxu0
        %v2435 = vadd.f32 0.0, %v2434
        %v2436 = vpop.f32.mrb[0].mxu0
        %v2437 = vpop.f32.mrb[0].mxu0
        %v2438 = vpop.f32.mrb[0].mxu0
        %2439 = vdwg.mxu0
        %v2456 = vunpack.c.l.b16 %v2296
        %v2457 = vunpack.c.l.b16 %v2297
        %v2458 = vunpack.c.l.b16 %v2298
        %v2459 = vunpack.c.l.b16 %v2299
        %v2460 = vunpack.c.l.b16 %v2300
        %v2461 = vunpack.c.l.b16 %v2301
        %v2462 = vunpack.c.l.b16 %v2302
        %v2463 = vunpack.c.l.b16 %v2303
        %v2464 = vunpack.c.l.b16 %v2304
        %v2465 = vunpack.c.l.b16 %v2305
        %v2466 = vunpack.c.l.b16 %v2306
        %v2467 = vunpack.c.l.b16 %v2307
        %v2468 = vunpack.c.l.b16 %v2308
        %v2469 = vunpack.c.l.b16 %v2309
        %v2470 = vunpack.c.l.b16 %v2310
        %v2471 = vunpack.c.l.b16 %v2311
        %v2472 = vpack.c.b16 %v2457, %v2456
        %v2473 = vpack.c.b16 %v2459, %v2458
        %v2474 = vpack.c.b16 %v2461, %v2460
        %v2475 = vpack.c.b16 %v2463, %v2462
        %v2476 = vpack.c.b16 %v2465, %v2464
        %v2477 = vpack.c.b16 %v2467, %v2466
        %v2478 = vpack.c.b16 %v2469, %v2468
        %v2479 = vpack.c.b16 %v2471, %v2470
        %2488 = vmatprep.subr.bf16.mxu0 0
        %2489 = vmatpush1.bf16.msra.mxu0 %v2472
        %2490 = vmatprep.subr.bf16.mxu0 0
        %2491 = vmatpush1.bf16.msra.mxu0 %v2473
        %2492 = vmatprep.subr.bf16.mxu0 0
        %2493 = vmatpush1.bf16.msra.mxu0 %v2474
        %2494 = vmatprep.subr.bf16.mxu0 0
        %2495 = vmatpush1.bf16.msra.mxu0 %v2475
        %2496 = vmatprep.subr.bf16.mxu0 0
        %2497 = vmatpush1.bf16.msra.mxu0 %v2476
        %2498 = vmatprep.subr.bf16.mxu0 0
        %2499 = vmatpush1.bf16.msra.mxu0 %v2477
        %2500 = vmatprep.subr.bf16.mxu0 0
        %2501 = vmatpush1.bf16.msra.mxu0 %v2478
        %2502 = vmatprep.subr.bf16.mxu0 0
        %2503 = vmatpush1.bf16.msra.mxu0 %v2479
        %2504 = vmatprep.subr.bf16.mxu0 0
        %2505 = vmatpush1.bf16.msra.mxu0 0
        %2506 = vmatprep.subr.bf16.mxu0 0
        %2507 = vmatpush1.bf16.msra.mxu0 0
        %2508 = vmatprep.subr.bf16.mxu0 0
        %2509 = vmatpush1.bf16.msra.mxu0 0
        %2510 = vmatprep.subr.bf16.mxu0 0
        %2511 = vmatpush1.bf16.msra.mxu0 0
        %2512 = vmatprep.subr.bf16.mxu0 0
        %2513 = vmatpush1.bf16.msra.mxu0 0
        %2514 = vmatprep.subr.bf16.mxu0 0
        %2515 = vmatpush1.bf16.msra.mxu0 0
        %2516 = vmatprep.subr.bf16.mxu0 0
        %2517 = vmatpush1.bf16.msra.mxu0 0
        %2518 = vmatprep.subr.bf16.mxu0 0
        %2519 = vmatpush1.bf16.msra.mxu0 0
        %2520 = vmatprep.mubr.bf16.mxu0 0
        %2521 = vmatmul.mubr.bf16.gmra.mrb[0].mxu0 %v2293
        %v2522 = vpop.f32.mrb[0].mxu0
        %v2523 = vadd.f32 %v2420, %v2522
        %v2524 = vpop.f32.mrb[0].mxu0
        %v2525 = vpop.f32.mrb[0].mxu0
        %v2526 = vadd.f32 %v2423, %v2525
        %v2527 = vpop.f32.mrb[0].mxu0
        %2528 = vmatprep.mubr.bf16.mxu0 0
        %2529 = vmatmul.mubr.bf16.gmra.mrb[0].mxu0 %v2294
        %v2530 = vpop.f32.mrb[0].mxu0
        %v2531 = vpop.f32.mrb[0].mxu0
        %v2532 = vpop.f32.mrb[0].mxu0
        %v2533 = vadd.f32 %v2430, %v2532
        %v2534 = vpop.f32.mrb[0].mxu0
        %2535 = vmatprep.mubr.bf16.mxu0 0
        %2536 = vmatmul.mubr.bf16.gmra.mrb[0].mxu0 %v2295
        %v2537 = vpop.f32.mrb[0].mxu0
        %v2538 = vadd.f32 %v2435, %v2537
        %v2539 = vpop.f32.mrb[0].mxu0
        %v2540 = vpop.f32.mrb[0].mxu0
        %v2541 = vpop.f32.mrb[0].mxu0
        %2542 = vdwg.mxu0
        %v2543 = vld [vmem:[#allocation3 + $0x6] sm:$0xff]
        %v2544 = vld [vmem:[#allocation3 + $0xe] sm:$0xff]
        %v2545 = vld [vmem:[#allocation3 + $0x16] sm:$0xff]
        %v2546 = vld [vmem:[#allocation3 + $0x1e] sm:$0xff]
        %v2547 = vld [vmem:[#allocation3 + $0x26] sm:$0xff]
        %v2548 = vld [vmem:[#allocation3 + $0x2e] sm:$0xff]
        %v2549 = vpack.c.bf16 %v2544, %v2543
        %v2550 = vpack.c.bf16 %v2546, %v2545
        %v2551 = vpack.c.bf16 %v2548, %v2547
        %s2552 = scalar_lea.vmem %s7, 64
        %v2553 = vld [vmem:[%s2552] sm:$0xf]
        %v2554 = vld [vmem:[%s2552 + $0x4] sm:$0xf]
        %v2555 = vld [vmem:[%s2552 + $0x8] sm:$0xf]
        %v2556 = vld [vmem:[%s2552 + $0xc] sm:$0xf]
        %v2557 = vld [vmem:[%s2552 + $0x10] sm:$0xf]
        %v2558 = vld [vmem:[%s2552 + $0x14] sm:$0xf]
        %v2559 = vld [vmem:[%s2552 + $0x18] sm:$0xf]
        %v2560 = vld [vmem:[%s2552 + $0x1c] sm:$0xf]
        %v2561 = vld [vmem:[%s2552 + $0x20] sm:$0xf]
        %v2562 = vld [vmem:[%s2552 + $0x24] sm:$0xf]
        %v2563 = vld [vmem:[%s2552 + $0x28] sm:$0xf]
        %v2564 = vld [vmem:[%s2552 + $0x2c] sm:$0xf]
        %v2565 = vld [vmem:[%s2552 + $0x30] sm:$0xf]
        %v2566 = vld [vmem:[%s2552 + $0x34] sm:$0xf]
        %v2567 = vld [vmem:[%s2552 + $0x38] sm:$0xf]
        %v2568 = vld [vmem:[%s2552 + $0x3c] sm:$0xf]
        %v2585 = vunpack.c.l.b16 %v2553
        %v2586 = vunpack.c.l.b16 %v2554
        %v2587 = vunpack.c.l.b16 %v2555
        %v2588 = vunpack.c.l.b16 %v2556
        %v2589 = vunpack.c.l.b16 %v2557
        %v2590 = vunpack.c.l.b16 %v2558
        %v2591 = vunpack.c.l.b16 %v2559
        %v2592 = vunpack.c.l.b16 %v2560
        %v2593 = vunpack.c.l.b16 %v2561
        %v2594 = vunpack.c.l.b16 %v2562
        %v2595 = vunpack.c.l.b16 %v2563
        %v2596 = vunpack.c.l.b16 %v2564
        %v2597 = vunpack.c.l.b16 %v2565
        %v2598 = vunpack.c.l.b16 %v2566
        %v2599 = vunpack.c.l.b16 %v2567
        %v2600 = vunpack.c.l.b16 %v2568
        %v2601 = vpack.c.b16 %v2586, %v2585
        %v2602 = vpack.c.b16 %v2588, %v2587
        %v2603 = vpack.c.b16 %v2590, %v2589
        %v2604 = vpack.c.b16 %v2592, %v2591
        %v2605 = vpack.c.b16 %v2594, %v2593
        %v2606 = vpack.c.b16 %v2596, %v2595
        %v2607 = vpack.c.b16 %v2598, %v2597
        %v2608 = vpack.c.b16 %v2600, %v2599
        %2617 = vmatprep.subr.bf16.mxu0 0
        %2618 = vmatpush1.bf16.msra.mxu0 %v2601
        %2619 = vmatprep.subr.bf16.mxu0 0
        %2620 = vmatpush1.bf16.msra.mxu0 %v2602
        %2621 = vmatprep.subr.bf16.mxu0 0
        %2622 = vmatpush1.bf16.msra.mxu0 %v2603
        %2623 = vmatprep.subr.bf16.mxu0 0
        %2624 = vmatpush1.bf16.msra.mxu0 %v2604
        %2625 = vmatprep.subr.bf16.mxu0 0
        %2626 = vmatpush1.bf16.msra.mxu0 %v2605
        %2627 = vmatprep.subr.bf16.mxu0 0
        %2628 = vmatpush1.bf16.msra.mxu0 %v2606
        %2629 = vmatprep.subr.bf16.mxu0 0
        %2630 = vmatpush1.bf16.msra.mxu0 %v2607
        %2631 = vmatprep.subr.bf16.mxu0 0
        %2632 = vmatpush1.bf16.msra.mxu0 %v2608
        %2633 = vmatprep.subr.bf16.mxu0 0
        %2634 = vmatpush1.bf16.msra.mxu0 0
        %2635 = vmatprep.subr.bf16.mxu0 0
        %2636 = vmatpush1.bf16.msra.mxu0 0
        %2637 = vmatprep.subr.bf16.mxu0 0
        %2638 = vmatpush1.bf16.msra.mxu0 0
        %2639 = vmatprep.subr.bf16.mxu0 0
        %2640 = vmatpush1.bf16.msra.mxu0 0
        %2641 = vmatprep.subr.bf16.mxu0 0
        %2642 = vmatpush1.bf16.msra.mxu0 0
        %2643 = vmatprep.subr.bf16.mxu0 0
        %2644 = vmatpush1.bf16.msra.mxu0 0
        %2645 = vmatprep.subr.bf16.mxu0 0
        %2646 = vmatpush1.bf16.msra.mxu0 0
        %2647 = vmatprep.subr.bf16.mxu0 0
        %2648 = vmatpush1.bf16.msra.mxu0 0
        %2649 = vmatprep.mubr.bf16.mxu0 0
        %2650 = vmatmul.mubr.bf16.gmra.mrb[0].mxu0 %v2549
        %v2651 = vpop.f32.mrb[0].mxu0
        %v2652 = vadd.f32 0.0, %v2651
        %v2653 = vpop.f32.mrb[0].mxu0
        %v2654 = vpop.f32.mrb[0].mxu0
        %v2655 = vadd.f32 0.0, %v2654
        %v2656 = vpop.f32.mrb[0].mxu0
        %2657 = vmatprep.mubr.bf16.mxu0 0
        %2658 = vmatmul.mubr.bf16.gmra.mrb[0].mxu0 %v2550
        %v2659 = vpop.f32.mrb[0].mxu0
        %v2660 = vpop.f32.mrb[0].mxu0
        %v2661 = vpop.f32.mrb[0].mxu0
        %v2662 = vadd.f32 0.0, %v2661
        %v2663 = vpop.f32.mrb[0].mxu0
        %2664 = vmatprep.mubr.bf16.mxu0 0
        %2665 = vmatmul.mubr.bf16.gmra.mrb[0].mxu0 %v2551
        %v2666 = vpop.f32.mrb[0].mxu0
        %v2667 = vadd.f32 0.0, %v2666
        %v2668 = vpop.f32.mrb[0].mxu0
        %v2669 = vpop.f32.mrb[0].mxu0
        %v2670 = vpop.f32.mrb[0].mxu0
        %2671 = vdwg.mxu0
        %v2672 = vadd.f32 %v2523, %v2652
        %v2673 = vadd.f32 %v2526, %v2655
        %v2674 = vadd.f32 %v2533, %v2662
        %v2675 = vadd.f32 %v2538, %v2667
        %v2676 = vld [vmem:[#allocation4 + $0x6] sm:$0xff]
        %v2677 = vld [vmem:[#allocation4 + $0xe] sm:$0xff]
        %v2678 = vld [vmem:[#allocation4 + $0x16] sm:$0xff]
        %v2679 = vld [vmem:[#allocation4 + $0x1e] sm:$0xff]
        %v2680 = vld [vmem:[#allocation4 + $0x26] sm:$0xff]
        %v2681 = vld [vmem:[#allocation4 + $0x2e] sm:$0xff]
        %v2682 = vpack.c.bf16 %v2677, %v2676
        %v2683 = vpack.c.bf16 %v2679, %v2678
        %v2684 = vpack.c.bf16 %v2681, %v2680
        %s2685 = scalar_lea.vmem %s8, 64
        %v2686 = vld [vmem:[%s2685] sm:$0xf]
        %v2687 = vld [vmem:[%s2685 + $0x4] sm:$0xf]
        %v2688 = vld [vmem:[%s2685 + $0x8] sm:$0xf]
        %v2689 = vld [vmem:[%s2685 + $0xc] sm:$0xf]
        %v2690 = vld [vmem:[%s2685 + $0x10] sm:$0xf]
        %v2691 = vld [vmem:[%s2685 + $0x14] sm:$0xf]
        %v2692 = vld [vmem:[%s2685 + $0x18] sm:$0xf]
        %v2693 = vld [vmem:[%s2685 + $0x1c] sm:$0xf]
        %v2694 = vld [vmem:[%s2685 + $0x20] sm:$0xf]
        %v2695 = vld [vmem:[%s2685 + $0x24] sm:$0xf]
        %v2696 = vld [vmem:[%s2685 + $0x28] sm:$0xf]
        %v2697 = vld [vmem:[%s2685 + $0x2c] sm:$0xf]
        %v2698 = vld [vmem:[%s2685 + $0x30] sm:$0xf]
        %v2699 = vld [vmem:[%s2685 + $0x34] sm:$0xf]
        %v2700 = vld [vmem:[%s2685 + $0x38] sm:$0xf]
        %v2701 = vld [vmem:[%s2685 + $0x3c] sm:$0xf]
        %v2718 = vunpack.c.l.b16 %v2686
        %v2719 = vunpack.c.l.b16 %v2687
        %v2720 = vunpack.c.l.b16 %v2688
        %v2721 = vunpack.c.l.b16 %v2689
        %v2722 = vunpack.c.l.b16 %v2690
        %v2723 = vunpack.c.l.b16 %v2691
        %v2724 = vunpack.c.l.b16 %v2692
        %v2725 = vunpack.c.l.b16 %v2693
        %v2726 = vunpack.c.l.b16 %v2694
        %v2727 = vunpack.c.l.b16 %v2695
        %v2728 = vunpack.c.l.b16 %v2696
        %v2729 = vunpack.c.l.b16 %v2697
        %v2730 = vunpack.c.l.b16 %v2698
        %v2731 = vunpack.c.l.b16 %v2699
        %v2732 = vunpack.c.l.b16 %v2700
        %v2733 = vunpack.c.l.b16 %v2701
        %v2734 = vpack.c.b16 %v2719, %v2718
        %v2735 = vpack.c.b16 %v2721, %v2720
        %v2736 = vpack.c.b16 %v2723, %v2722
        %v2737 = vpack.c.b16 %v2725, %v2724
        %v2738 = vpack.c.b16 %v2727, %v2726
        %v2739 = vpack.c.b16 %v2729, %v2728
        %v2740 = vpack.c.b16 %v2731, %v2730
        %v2741 = vpack.c.b16 %v2733, %v2732
        %2750 = vmatprep.subr.bf16.mxu0 0
        %2751 = vmatpush1.bf16.msra.mxu0 %v2734
        %2752 = vmatprep.subr.bf16.mxu0 0
        %2753 = vmatpush1.bf16.msra.mxu0 %v2735
        %2754 = vmatprep.subr.bf16.mxu0 0
        %2755 = vmatpush1.bf16.msra.mxu0 %v2736
        %2756 = vmatprep.subr.bf16.mxu0 0
        %2757 = vmatpush1.bf16.msra.mxu0 %v2737
        %2758 = vmatprep.subr.bf16.mxu0 0
        %2759 = vmatpush1.bf16.msra.mxu0 %v2738
        %2760 = vmatprep.subr.bf16.mxu0 0
        %2761 = vmatpush1.bf16.msra.mxu0 %v2739
        %2762 = vmatprep.subr.bf16.mxu0 0
        %2763 = vmatpush1.bf16.msra.mxu0 %v2740
        %2764 = vmatprep.subr.bf16.mxu0 0
        %2765 = vmatpush1.bf16.msra.mxu0 %v2741
        %2766 = vmatprep.subr.bf16.mxu0 0
        %2767 = vmatpush1.bf16.msra.mxu0 0
        %2768 = vmatprep.subr.bf16.mxu0 0
        %2769 = vmatpush1.bf16.msra.mxu0 0
        %2770 = vmatprep.subr.bf16.mxu0 0
        %2771 = vmatpush1.bf16.msra.mxu0 0
        %2772 = vmatprep.subr.bf16.mxu0 0
        %2773 = vmatpush1.bf16.msra.mxu0 0
        %2774 = vmatprep.subr.bf16.mxu0 0
        %2775 = vmatpush1.bf16.msra.mxu0 0
        %2776 = vmatprep.subr.bf16.mxu0 0
        %2777 = vmatpush1.bf16.msra.mxu0 0
        %2778 = vmatprep.subr.bf16.mxu0 0
        %2779 = vmatpush1.bf16.msra.mxu0 0
        %2780 = vmatprep.subr.bf16.mxu0 0
        %2781 = vmatpush1.bf16.msra.mxu0 0
        %2782 = vmatprep.mubr.bf16.mxu0 0
        %2783 = vmatmul.mubr.bf16.gmra.mrb[0].mxu0 %v2682
        %v2784 = vpop.f32.mrb[0].mxu0
        %v2785 = vadd.f32 0.0, %v2784
        %v2786 = vpop.f32.mrb[0].mxu0
        %v2787 = vpop.f32.mrb[0].mxu0
        %v2788 = vadd.f32 0.0, %v2787
        %v2789 = vpop.f32.mrb[0].mxu0
        %2790 = vmatprep.mubr.bf16.mxu0 0
        %2791 = vmatmul.mubr.bf16.gmra.mrb[0].mxu0 %v2683
        %v2792 = vpop.f32.mrb[0].mxu0
        %v2793 = vpop.f32.mrb[0].mxu0
        %v2794 = vpop.f32.mrb[0].mxu0
        %v2795 = vadd.f32 0.0, %v2794
        %v2796 = vpop.f32.mrb[0].mxu0
        %2797 = vmatprep.mubr.bf16.mxu0 0
        %2798 = vmatmul.mubr.bf16.gmra.mrb[0].mxu0 %v2684
        %v2799 = vpop.f32.mrb[0].mxu0
        %v2800 = vadd.f32 0.0, %v2799
        %v2801 = vpop.f32.mrb[0].mxu0
        %v2802 = vpop.f32.mrb[0].mxu0
        %v2803 = vpop.f32.mrb[0].mxu0
        %2804 = vdwg.mxu0
        %v2805 = vadd.f32 %v2672, %v2785
        %v2806 = vadd.f32 %v2673, %v2788
        %v2807 = vadd.f32 %v2674, %v2795
        %v2808 = vadd.f32 %v2675, %v2800
        %v2809 = vld [vmem:[#allocation3 + $0x7] sm:$0xff]
        %v2810 = vld [vmem:[#allocation3 + $0xf] sm:$0xff]
        %v2811 = vld [vmem:[#allocation3 + $0x17] sm:$0xff]
        %v2812 = vld [vmem:[#allocation3 + $0x1f] sm:$0xff]
        %v2813 = vld [vmem:[#allocation3 + $0x27] sm:$0xff]
        %v2814 = vld [vmem:[#allocation3 + $0x2f] sm:$0xff]
        %v2815 = vpack.c.bf16 %v2810, %v2809
        %v2816 = vpack.c.bf16 %v2812, %v2811
        %v2817 = vpack.c.bf16 %v2814, %v2813
        %s2818 = scalar_lea.vmem %s7, 128
        %v2819 = vld [vmem:[%s2818] sm:$0xf]
        %v2820 = vld [vmem:[%s2818 + $0x4] sm:$0xf]
        %v2821 = vld [vmem:[%s2818 + $0x8] sm:$0xf]
        %v2822 = vld [vmem:[%s2818 + $0xc] sm:$0xf]
        %v2823 = vld [vmem:[%s2818 + $0x10] sm:$0xf]
        %v2824 = vld [vmem:[%s2818 + $0x14] sm:$0xf]
        %v2825 = vld [vmem:[%s2818 + $0x18] sm:$0xf]
        %v2826 = vld [vmem:[%s2818 + $0x1c] sm:$0xf]
        %v2827 = vld [vmem:[%s2818 + $0x20] sm:$0xf]
        %v2828 = vld [vmem:[%s2818 + $0x24] sm:$0xf]
        %v2829 = vld [vmem:[%s2818 + $0x28] sm:$0xf]
        %v2830 = vld [vmem:[%s2818 + $0x2c] sm:$0xf]
        %v2831 = vld [vmem:[%s2818 + $0x30] sm:$0xf]
        %v2832 = vld [vmem:[%s2818 + $0x34] sm:$0xf]
        %v2833 = vld [vmem:[%s2818 + $0x38] sm:$0xf]
        %v2834 = vld [vmem:[%s2818 + $0x3c] sm:$0xf]
        %v2851 = vunpack.c.l.b16 %v2819
        %v2852 = vunpack.c.l.b16 %v2820
        %v2853 = vunpack.c.l.b16 %v2821
        %v2854 = vunpack.c.l.b16 %v2822
        %v2855 = vunpack.c.l.b16 %v2823
        %v2856 = vunpack.c.l.b16 %v2824
        %v2857 = vunpack.c.l.b16 %v2825
        %v2858 = vunpack.c.l.b16 %v2826
        %v2859 = vunpack.c.l.b16 %v2827
        %v2860 = vunpack.c.l.b16 %v2828
        %v2861 = vunpack.c.l.b16 %v2829
        %v2862 = vunpack.c.l.b16 %v2830
        %v2863 = vunpack.c.l.b16 %v2831
        %v2864 = vunpack.c.l.b16 %v2832
        %v2865 = vunpack.c.l.b16 %v2833
        %v2866 = vunpack.c.l.b16 %v2834
        %v2867 = vpack.c.b16 %v2852, %v2851
        %v2868 = vpack.c.b16 %v2854, %v2853
        %v2869 = vpack.c.b16 %v2856, %v2855
        %v2870 = vpack.c.b16 %v2858, %v2857
        %v2871 = vpack.c.b16 %v2860, %v2859
        %v2872 = vpack.c.b16 %v2862, %v2861
        %v2873 = vpack.c.b16 %v2864, %v2863
        %v2874 = vpack.c.b16 %v2866, %v2865
        %2883 = vmatprep.subr.bf16.mxu0 0
        %2884 = vmatpush1.bf16.msra.mxu0 %v2867
        %2885 = vmatprep.subr.bf16.mxu0 0
        %2886 = vmatpush1.bf16.msra.mxu0 %v2868
        %2887 = vmatprep.subr.bf16.mxu0 0
        %2888 = vmatpush1.bf16.msra.mxu0 %v2869
        %2889 = vmatprep.subr.bf16.mxu0 0
        %2890 = vmatpush1.bf16.msra.mxu0 %v2870
        %2891 = vmatprep.subr.bf16.mxu0 0
        %2892 = vmatpush1.bf16.msra.mxu0 %v2871
        %2893 = vmatprep.subr.bf16.mxu0 0
        %2894 = vmatpush1.bf16.msra.mxu0 %v2872
        %2895 = vmatprep.subr.bf16.mxu0 0
        %2896 = vmatpush1.bf16.msra.mxu0 %v2873
        %2897 = vmatprep.subr.bf16.mxu0 0
        %2898 = vmatpush1.bf16.msra.mxu0 %v2874
        %2899 = vmatprep.subr.bf16.mxu0 0
        %2900 = vmatpush1.bf16.msra.mxu0 0
        %2901 = vmatprep.subr.bf16.mxu0 0
        %2902 = vmatpush1.bf16.msra.mxu0 0
        %2903 = vmatprep.subr.bf16.mxu0 0
        %2904 = vmatpush1.bf16.msra.mxu0 0
        %2905 = vmatprep.subr.bf16.mxu0 0
        %2906 = vmatpush1.bf16.msra.mxu0 0
        %2907 = vmatprep.subr.bf16.mxu0 0
        %2908 = vmatpush1.bf16.msra.mxu0 0
        %2909 = vmatprep.subr.bf16.mxu0 0
        %2910 = vmatpush1.bf16.msra.mxu0 0
        %2911 = vmatprep.subr.bf16.mxu0 0
        %2912 = vmatpush1.bf16.msra.mxu0 0
        %2913 = vmatprep.subr.bf16.mxu0 0
        %2914 = vmatpush1.bf16.msra.mxu0 0
        %2915 = vmatprep.mubr.bf16.mxu0 0
        %2916 = vmatmul.mubr.bf16.gmra.mrb[0].mxu0 %v2815
        %v2917 = vpop.f32.mrb[0].mxu0
        %v2918 = vadd.f32 0.0, %v2917
        %v2919 = vpop.f32.mrb[0].mxu0
        %v2920 = vpop.f32.mrb[0].mxu0
        %v2921 = vadd.f32 0.0, %v2920
        %v2922 = vpop.f32.mrb[0].mxu0
        %2923 = vmatprep.mubr.bf16.mxu0 0
        %2924 = vmatmul.mubr.bf16.gmra.mrb[0].mxu0 %v2816
        %v2925 = vpop.f32.mrb[0].mxu0
        %v2926 = vpop.f32.mrb[0].mxu0
        %v2927 = vpop.f32.mrb[0].mxu0
        %v2928 = vadd.f32 0.0, %v2927
        %v2929 = vpop.f32.mrb[0].mxu0
        %2930 = vmatprep.mubr.bf16.mxu0 0
        %2931 = vmatmul.mubr.bf16.gmra.mrb[0].mxu0 %v2817
        %v2932 = vpop.f32.mrb[0].mxu0
        %v2933 = vadd.f32 0.0, %v2932
        %v2934 = vpop.f32.mrb[0].mxu0
        %v2935 = vpop.f32.mrb[0].mxu0
        %v2936 = vpop.f32.mrb[0].mxu0
        %2937 = vdwg.mxu0
        %v2938 = vadd.f32 %v2805, %v2918
        %v2939 = vadd.f32 %v2806, %v2921
        %v2940 = vadd.f32 %v2807, %v2928
        %v2941 = vadd.f32 %v2808, %v2933
        %v2942 = vld [vmem:[#allocation4 + $0x7] sm:$0xff]
        %v2943 = vld [vmem:[#allocation4 + $0xf] sm:$0xff]
        %v2944 = vld [vmem:[#allocation4 + $0x17] sm:$0xff]
        %v2945 = vld [vmem:[#allocation4 + $0x1f] sm:$0xff]
        %v2946 = vld [vmem:[#allocation4 + $0x27] sm:$0xff]
        %v2947 = vld [vmem:[#allocation4 + $0x2f] sm:$0xff]
        %v2948 = vpack.c.bf16 %v2943, %v2942
        %v2949 = vpack.c.bf16 %v2945, %v2944
        %v2950 = vpack.c.bf16 %v2947, %v2946
        %s2951 = scalar_lea.vmem %s8, 128
        %v2952 = vld [vmem:[%s2951] sm:$0xf]
        %v2953 = vld [vmem:[%s2951 + $0x4] sm:$0xf]
        %v2954 = vld [vmem:[%s2951 + $0x8] sm:$0xf]
        %v2955 = vld [vmem:[%s2951 + $0xc] sm:$0xf]
        %v2956 = vld [vmem:[%s2951 + $0x10] sm:$0xf]
        %v2957 = vld [vmem:[%s2951 + $0x14] sm:$0xf]
        %v2958 = vld [vmem:[%s2951 + $0x18] sm:$0xf]
        %v2959 = vld [vmem:[%s2951 + $0x1c] sm:$0xf]
        %v2960 = vld [vmem:[%s2951 + $0x20] sm:$0xf]
        %v2961 = vld [vmem:[%s2951 + $0x24] sm:$0xf]
        %v2962 = vld [vmem:[%s2951 + $0x28] sm:$0xf]
        %v2963 = vld [vmem:[%s2951 + $0x2c] sm:$0xf]
        %v2964 = vld [vmem:[%s2951 + $0x30] sm:$0xf]
        %v2965 = vld [vmem:[%s2951 + $0x34] sm:$0xf]
        %v2966 = vld [vmem:[%s2951 + $0x38] sm:$0xf]
        %v2967 = vld [vmem:[%s2951 + $0x3c] sm:$0xf]
        %v2984 = vunpack.c.l.b16 %v2952
        %v2985 = vunpack.c.l.b16 %v2953
        %v2986 = vunpack.c.l.b16 %v2954
        %v2987 = vunpack.c.l.b16 %v2955
        %v2988 = vunpack.c.l.b16 %v2956
        %v2989 = vunpack.c.l.b16 %v2957
        %v2990 = vunpack.c.l.b16 %v2958
        %v2991 = vunpack.c.l.b16 %v2959
        %v2992 = vunpack.c.l.b16 %v2960
        %v2993 = vunpack.c.l.b16 %v2961
        %v2994 = vunpack.c.l.b16 %v2962
        %v2995 = vunpack.c.l.b16 %v2963
        %v2996 = vunpack.c.l.b16 %v2964
        %v2997 = vunpack.c.l.b16 %v2965
        %v2998 = vunpack.c.l.b16 %v2966
        %v2999 = vunpack.c.l.b16 %v2967
        %v3000 = vpack.c.b16 %v2985, %v2984
        %v3001 = vpack.c.b16 %v2987, %v2986
        %v3002 = vpack.c.b16 %v2989, %v2988
        %v3003 = vpack.c.b16 %v2991, %v2990
        %v3004 = vpack.c.b16 %v2993, %v2992
        %v3005 = vpack.c.b16 %v2995, %v2994
        %v3006 = vpack.c.b16 %v2997, %v2996
        %v3007 = vpack.c.b16 %v2999, %v2998
        %3016 = vmatprep.subr.bf16.mxu0 0
        %3017 = vmatpush1.bf16.msra.mxu0 %v3000
        %3018 = vmatprep.subr.bf16.mxu0 0
        %3019 = vmatpush1.bf16.msra.mxu0 %v3001
        %3020 = vmatprep.subr.bf16.mxu0 0
        %3021 = vmatpush1.bf16.msra.mxu0 %v3002
        %3022 = vmatprep.subr.bf16.mxu0 0
        %3023 = vmatpush1.bf16.msra.mxu0 %v3003
        %3024 = vmatprep.subr.bf16.mxu0 0
        %3025 = vmatpush1.bf16.msra.mxu0 %v3004
        %3026 = vmatprep.subr.bf16.mxu0 0
        %3027 = vmatpush1.bf16.msra.mxu0 %v3005
        %3028 = vmatprep.subr.bf16.mxu0 0
        %3029 = vmatpush1.bf16.msra.mxu0 %v3006
        %3030 = vmatprep.subr.bf16.mxu0 0
        %3031 = vmatpush1.bf16.msra.mxu0 %v3007
        %3032 = vmatprep.subr.bf16.mxu0 0
        %3033 = vmatpush1.bf16.msra.mxu0 0
        %3034 = vmatprep.subr.bf16.mxu0 0
        %3035 = vmatpush1.bf16.msra.mxu0 0
        %3036 = vmatprep.subr.bf16.mxu0 0
        %3037 = vmatpush1.bf16.msra.mxu0 0
        %3038 = vmatprep.subr.bf16.mxu0 0
        %3039 = vmatpush1.bf16.msra.mxu0 0
        %3040 = vmatprep.subr.bf16.mxu0 0
        %3041 = vmatpush1.bf16.msra.mxu0 0
        %3042 = vmatprep.subr.bf16.mxu0 0
        %3043 = vmatpush1.bf16.msra.mxu0 0
        %3044 = vmatprep.subr.bf16.mxu0 0
        %3045 = vmatpush1.bf16.msra.mxu0 0
        %3046 = vmatprep.subr.bf16.mxu0 0
        %3047 = vmatpush1.bf16.msra.mxu0 0
        %3048 = vmatprep.mubr.bf16.mxu0 0
        %3049 = vmatmul.mubr.bf16.gmra.mrb[0].mxu0 %v2948
        %v3050 = vpop.f32.mrb[0].mxu0
        %v3051 = vadd.f32 0.0, %v3050
        %v3052 = vpop.f32.mrb[0].mxu0
        %v3053 = vpop.f32.mrb[0].mxu0
        %v3054 = vadd.f32 0.0, %v3053
        %v3055 = vpop.f32.mrb[0].mxu0
        %3056 = vmatprep.mubr.bf16.mxu0 0
        %3057 = vmatmul.mubr.bf16.gmra.mrb[0].mxu0 %v2949
        %v3058 = vpop.f32.mrb[0].mxu0
        %v3059 = vpop.f32.mrb[0].mxu0
        %v3060 = vpop.f32.mrb[0].mxu0
        %v3061 = vadd.f32 0.0, %v3060
        %v3062 = vpop.f32.mrb[0].mxu0
        %3063 = vmatprep.mubr.bf16.mxu0 0
        %3064 = vmatmul.mubr.bf16.gmra.mrb[0].mxu0 %v2950
        %v3065 = vpop.f32.mrb[0].mxu0
        %v3066 = vadd.f32 0.0, %v3065
        %v3067 = vpop.f32.mrb[0].mxu0
        %v3068 = vpop.f32.mrb[0].mxu0
        %v3069 = vpop.f32.mrb[0].mxu0
        %3070 = vdwg.mxu0
        %v3071 = vadd.f32 %v2938, %v3051
        %v3072 = vadd.f32 %v2939, %v3054
        %v3073 = vadd.f32 %v2940, %v3061
        %v3074 = vadd.f32 %v2941, %v3066
        %v3075 = vld [vmem:[#allocation3 + $0x8] sm:$0xff]
        %v3076 = vld [vmem:[#allocation3 + $0x10] sm:$0xff]
        %v3077 = vld [vmem:[#allocation3 + $0x18] sm:$0xff]
        %v3078 = vld [vmem:[#allocation3 + $0x20] sm:$0xff]
        %v3079 = vld [vmem:[#allocation3 + $0x28] sm:$0xff]
        %v3080 = vld [vmem:[#allocation3 + $0x30] sm:$0xff]
        %v3081 = vpack.c.bf16 %v3076, %v3075
        %v3082 = vpack.c.bf16 %v3078, %v3077
        %v3083 = vpack.c.bf16 %v3080, %v3079
        %s3084 = scalar_lea.vmem %s7, 192
        %v3085 = vld [vmem:[%s3084] sm:$0xf]
        %v3086 = vld [vmem:[%s3084 + $0x4] sm:$0xf]
        %v3087 = vld [vmem:[%s3084 + $0x8] sm:$0xf]
        %v3088 = vld [vmem:[%s3084 + $0xc] sm:$0xf]
        %v3089 = vld [vmem:[%s3084 + $0x10] sm:$0xf]
        %v3090 = vld [vmem:[%s3084 + $0x14] sm:$0xf]
        %v3091 = vld [vmem:[%s3084 + $0x18] sm:$0xf]
        %v3092 = vld [vmem:[%s3084 + $0x1c] sm:$0xf]
        %v3093 = vld [vmem:[%s3084 + $0x20] sm:$0xf]
        %v3094 = vld [vmem:[%s3084 + $0x24] sm:$0xf]
        %v3095 = vld [vmem:[%s3084 + $0x28] sm:$0xf]
        %v3096 = vld [vmem:[%s3084 + $0x2c] sm:$0xf]
        %v3097 = vld [vmem:[%s3084 + $0x30] sm:$0xf]
        %v3098 = vld [vmem:[%s3084 + $0x34] sm:$0xf]
        %v3099 = vld [vmem:[%s3084 + $0x38] sm:$0xf]
        %v3100 = vld [vmem:[%s3084 + $0x3c] sm:$0xf]
        %v3117 = vunpack.c.l.b16 %v3085
        %v3118 = vunpack.c.l.b16 %v3086
        %v3119 = vunpack.c.l.b16 %v3087
        %v3120 = vunpack.c.l.b16 %v3088
        %v3121 = vunpack.c.l.b16 %v3089
        %v3122 = vunpack.c.l.b16 %v3090
        %v3123 = vunpack.c.l.b16 %v3091
        %v3124 = vunpack.c.l.b16 %v3092
        %v3125 = vunpack.c.l.b16 %v3093
        %v3126 = vunpack.c.l.b16 %v3094
        %v3127 = vunpack.c.l.b16 %v3095
        %v3128 = vunpack.c.l.b16 %v3096
        %v3129 = vunpack.c.l.b16 %v3097
        %v3130 = vunpack.c.l.b16 %v3098
        %v3131 = vunpack.c.l.b16 %v3099
        %v3132 = vunpack.c.l.b16 %v3100
        %v3133 = vpack.c.b16 %v3118, %v3117
        %v3134 = vpack.c.b16 %v3120, %v3119
        %v3135 = vpack.c.b16 %v3122, %v3121
        %v3136 = vpack.c.b16 %v3124, %v3123
        %v3137 = vpack.c.b16 %v3126, %v3125
        %v3138 = vpack.c.b16 %v3128, %v3127
        %v3139 = vpack.c.b16 %v3130, %v3129
        %v3140 = vpack.c.b16 %v3132, %v3131
        %3149 = vmatprep.subr.bf16.mxu0 0
        %3150 = vmatpush1.bf16.msra.mxu0 %v3133
        %3151 = vmatprep.subr.bf16.mxu0 0
        %3152 = vmatpush1.bf16.msra.mxu0 %v3134
        %3153 = vmatprep.subr.bf16.mxu0 0
        %3154 = vmatpush1.bf16.msra.mxu0 %v3135
        %3155 = vmatprep.subr.bf16.mxu0 0
        %3156 = vmatpush1.bf16.msra.mxu0 %v3136
        %3157 = vmatprep.subr.bf16.mxu0 0
        %3158 = vmatpush1.bf16.msra.mxu0 %v3137
        %3159 = vmatprep.subr.bf16.mxu0 0
        %3160 = vmatpush1.bf16.msra.mxu0 %v3138
        %3161 = vmatprep.subr.bf16.mxu0 0
        %3162 = vmatpush1.bf16.msra.mxu0 %v3139
        %3163 = vmatprep.subr.bf16.mxu0 0
        %3164 = vmatpush1.bf16.msra.mxu0 %v3140
        %3165 = vmatprep.subr.bf16.mxu0 0
        %3166 = vmatpush1.bf16.msra.mxu0 0
        %3167 = vmatprep.subr.bf16.mxu0 0
        %3168 = vmatpush1.bf16.msra.mxu0 0
        %3169 = vmatprep.subr.bf16.mxu0 0
        %3170 = vmatpush1.bf16.msra.mxu0 0
        %3171 = vmatprep.subr.bf16.mxu0 0
        %3172 = vmatpush1.bf16.msra.mxu0 0
        %3173 = vmatprep.subr.bf16.mxu0 0
        %3174 = vmatpush1.bf16.msra.mxu0 0
        %3175 = vmatprep.subr.bf16.mxu0 0
        %3176 = vmatpush1.bf16.msra.mxu0 0
        %3177 = vmatprep.subr.bf16.mxu0 0
        %3178 = vmatpush1.bf16.msra.mxu0 0
        %3179 = vmatprep.subr.bf16.mxu0 0
        %3180 = vmatpush1.bf16.msra.mxu0 0
        %3181 = vmatprep.mubr.bf16.mxu0 0
        %3182 = vmatmul.mubr.bf16.gmra.mrb[0].mxu0 %v3081
        %v3183 = vpop.f32.mrb[0].mxu0
        %v3184 = vadd.f32 0.0, %v3183
        %v3185 = vpop.f32.mrb[0].mxu0
        %v3186 = vpop.f32.mrb[0].mxu0
        %v3187 = vadd.f32 0.0, %v3186
        %v3188 = vpop.f32.mrb[0].mxu0
        %3189 = vmatprep.mubr.bf16.mxu0 0
        %3190 = vmatmul.mubr.bf16.gmra.mrb[0].mxu0 %v3082
        %v3191 = vpop.f32.mrb[0].mxu0
        %v3192 = vpop.f32.mrb[0].mxu0
        %v3193 = vpop.f32.mrb[0].mxu0
        %v3194 = vadd.f32 0.0, %v3193
        %v3195 = vpop.f32.mrb[0].mxu0
        %3196 = vmatprep.mubr.bf16.mxu0 0
        %3197 = vmatmul.mubr.bf16.gmra.mrb[0].mxu0 %v3083
        %v3198 = vpop.f32.mrb[0].mxu0
        %v3199 = vadd.f32 0.0, %v3198
        %v3200 = vpop.f32.mrb[0].mxu0
        %v3201 = vpop.f32.mrb[0].mxu0
        %v3202 = vpop.f32.mrb[0].mxu0
        %3203 = vdwg.mxu0
        %v3204 = vadd.f32 %v3071, %v3184
        %v3205 = vadd.f32 %v3072, %v3187
        %v3206 = vadd.f32 %v3073, %v3194
        %v3207 = vadd.f32 %v3074, %v3199
        %v3208 = vld [vmem:[#allocation4 + $0x8] sm:$0xff]
        %v3209 = vld [vmem:[#allocation4 + $0x10] sm:$0xff]
        %v3210 = vld [vmem:[#allocation4 + $0x18] sm:$0xff]
        %v3211 = vld [vmem:[#allocation4 + $0x20] sm:$0xff]
        %v3212 = vld [vmem:[#allocation4 + $0x28] sm:$0xff]
        %v3213 = vld [vmem:[#allocation4 + $0x30] sm:$0xff]
        %v3214 = vpack.c.bf16 %v3209, %v3208
        %v3215 = vpack.c.bf16 %v3211, %v3210
        %v3216 = vpack.c.bf16 %v3213, %v3212
        %s3217 = scalar_lea.vmem %s8, 192
        %v3218 = vld [vmem:[%s3217] sm:$0xf]
        %v3219 = vld [vmem:[%s3217 + $0x4] sm:$0xf]
        %v3220 = vld [vmem:[%s3217 + $0x8] sm:$0xf]
        %v3221 = vld [vmem:[%s3217 + $0xc] sm:$0xf]
        %v3222 = vld [vmem:[%s3217 + $0x10] sm:$0xf]
        %v3223 = vld [vmem:[%s3217 + $0x14] sm:$0xf]
        %v3224 = vld [vmem:[%s3217 + $0x18] sm:$0xf]
        %v3225 = vld [vmem:[%s3217 + $0x1c] sm:$0xf]
        %v3226 = vld [vmem:[%s3217 + $0x20] sm:$0xf]
        %v3227 = vld [vmem:[%s3217 + $0x24] sm:$0xf]
        %v3228 = vld [vmem:[%s3217 + $0x28] sm:$0xf]
        %v3229 = vld [vmem:[%s3217 + $0x2c] sm:$0xf]
        %v3230 = vld [vmem:[%s3217 + $0x30] sm:$0xf]
        %v3231 = vld [vmem:[%s3217 + $0x34] sm:$0xf]
        %v3232 = vld [vmem:[%s3217 + $0x38] sm:$0xf]
        %v3233 = vld [vmem:[%s3217 + $0x3c] sm:$0xf]
        %v3250 = vunpack.c.l.b16 %v3218
        %v3251 = vunpack.c.l.b16 %v3219
        %v3252 = vunpack.c.l.b16 %v3220
        %v3253 = vunpack.c.l.b16 %v3221
        %v3254 = vunpack.c.l.b16 %v3222
        %v3255 = vunpack.c.l.b16 %v3223
        %v3256 = vunpack.c.l.b16 %v3224
        %v3257 = vunpack.c.l.b16 %v3225
        %v3258 = vunpack.c.l.b16 %v3226
        %v3259 = vunpack.c.l.b16 %v3227
        %v3260 = vunpack.c.l.b16 %v3228
        %v3261 = vunpack.c.l.b16 %v3229
        %v3262 = vunpack.c.l.b16 %v3230
        %v3263 = vunpack.c.l.b16 %v3231
        %v3264 = vunpack.c.l.b16 %v3232
        %v3265 = vunpack.c.l.b16 %v3233
        %v3266 = vpack.c.b16 %v3251, %v3250
        %v3267 = vpack.c.b16 %v3253, %v3252
        %v3268 = vpack.c.b16 %v3255, %v3254
        %v3269 = vpack.c.b16 %v3257, %v3256
        %v3270 = vpack.c.b16 %v3259, %v3258
        %v3271 = vpack.c.b16 %v3261, %v3260
        %v3272 = vpack.c.b16 %v3263, %v3262
        %v3273 = vpack.c.b16 %v3265, %v3264
        %3282 = vmatprep.subr.bf16.mxu0 0
        %3283 = vmatpush1.bf16.msra.mxu0 %v3266
        %3284 = vmatprep.subr.bf16.mxu0 0
        %3285 = vmatpush1.bf16.msra.mxu0 %v3267
        %3286 = vmatprep.subr.bf16.mxu0 0
        %3287 = vmatpush1.bf16.msra.mxu0 %v3268
        %3288 = vmatprep.subr.bf16.mxu0 0
        %3289 = vmatpush1.bf16.msra.mxu0 %v3269
        %3290 = vmatprep.subr.bf16.mxu0 0
        %3291 = vmatpush1.bf16.msra.mxu0 %v3270
        %3292 = vmatprep.subr.bf16.mxu0 0
        %3293 = vmatpush1.bf16.msra.mxu0 %v3271
        %3294 = vmatprep.subr.bf16.mxu0 0
        %3295 = vmatpush1.bf16.msra.mxu0 %v3272
        %3296 = vmatprep.subr.bf16.mxu0 0
        %3297 = vmatpush1.bf16.msra.mxu0 %v3273
        %3298 = vmatprep.subr.bf16.mxu0 0
        %3299 = vmatpush1.bf16.msra.mxu0 0
        %3300 = vmatprep.subr.bf16.mxu0 0
        %3301 = vmatpush1.bf16.msra.mxu0 0
        %3302 = vmatprep.subr.bf16.mxu0 0
        %3303 = vmatpush1.bf16.msra.mxu0 0
        %3304 = vmatprep.subr.bf16.mxu0 0
        %3305 = vmatpush1.bf16.msra.mxu0 0
        %3306 = vmatprep.subr.bf16.mxu0 0
        %3307 = vmatpush1.bf16.msra.mxu0 0
        %3308 = vmatprep.subr.bf16.mxu0 0
        %3309 = vmatpush1.bf16.msra.mxu0 0
        %3310 = vmatprep.subr.bf16.mxu0 0
        %3311 = vmatpush1.bf16.msra.mxu0 0
        %3312 = vmatprep.subr.bf16.mxu0 0
        %3313 = vmatpush1.bf16.msra.mxu0 0
        %3314 = vmatprep.mubr.bf16.mxu0 0
        %3315 = vmatmul.mubr.bf16.gmra.mrb[0].mxu0 %v3214
        %v3316 = vpop.f32.mrb[0].mxu0
        %v3317 = vadd.f32 0.0, %v3316
        %v3318 = vpop.f32.mrb[0].mxu0
        %v3319 = vpop.f32.mrb[0].mxu0
        %v3320 = vadd.f32 0.0, %v3319
        %v3321 = vpop.f32.mrb[0].mxu0
        %3322 = vmatprep.mubr.bf16.mxu0 0
        %3323 = vmatmul.mubr.bf16.gmra.mrb[0].mxu0 %v3215
        %v3324 = vpop.f32.mrb[0].mxu0
        %v3325 = vpop.f32.mrb[0].mxu0
        %v3326 = vpop.f32.mrb[0].mxu0
        %v3327 = vadd.f32 0.0, %v3326
        %v3328 = vpop.f32.mrb[0].mxu0
        %3329 = vmatprep.mubr.bf16.mxu0 0
        %3330 = vmatmul.mubr.bf16.gmra.mrb[0].mxu0 %v3216
        %v3331 = vpop.f32.mrb[0].mxu0
        %v3332 = vadd.f32 0.0, %v3331
        %v3333 = vpop.f32.mrb[0].mxu0
        %v3334 = vpop.f32.mrb[0].mxu0
        %v3335 = vpop.f32.mrb[0].mxu0
        %3336 = vdwg.mxu0
        %v3337 = vadd.f32 %v3204, %v3317
        %v3338 = vadd.f32 %v3205, %v3320
        %v3339 = vadd.f32 %v3206, %v3327
        %v3340 = vadd.f32 %v3207, %v3332
        %v3341 = vld [vmem:[#allocation3 + $0x9] sm:$0xff]
        %v3342 = vld [vmem:[#allocation3 + $0x11] sm:$0xff]
        %v3343 = vld [vmem:[#allocation3 + $0x19] sm:$0xff]
        %v3344 = vld [vmem:[#allocation3 + $0x21] sm:$0xff]
        %v3345 = vld [vmem:[#allocation3 + $0x29] sm:$0xff]
        %v3346 = vld [vmem:[#allocation3 + $0x31] sm:$0xff]
        %v3347 = vpack.c.bf16 %v3342, %v3341
        %v3348 = vpack.c.bf16 %v3344, %v3343
        %v3349 = vpack.c.bf16 %v3346, %v3345
        %s3350 = scalar_lea.vmem %s7, 256
        %v3351 = vld [vmem:[%s3350] sm:$0xf]
        %v3352 = vld [vmem:[%s3350 + $0x4] sm:$0xf]
        %v3353 = vld [vmem:[%s3350 + $0x8] sm:$0xf]
        %v3354 = vld [vmem:[%s3350 + $0xc] sm:$0xf]
        %v3355 = vld [vmem:[%s3350 + $0x10] sm:$0xf]
        %v3356 = vld [vmem:[%s3350 + $0x14] sm:$0xf]
        %v3357 = vld [vmem:[%s3350 + $0x18] sm:$0xf]
        %v3358 = vld [vmem:[%s3350 + $0x1c] sm:$0xf]
        %v3359 = vld [vmem:[%s3350 + $0x20] sm:$0xf]
        %v3360 = vld [vmem:[%s3350 + $0x24] sm:$0xf]
        %v3361 = vld [vmem:[%s3350 + $0x28] sm:$0xf]
        %v3362 = vld [vmem:[%s3350 + $0x2c] sm:$0xf]
        %v3363 = vld [vmem:[%s3350 + $0x30] sm:$0xf]
        %v3364 = vld [vmem:[%s3350 + $0x34] sm:$0xf]
        %v3365 = vld [vmem:[%s3350 + $0x38] sm:$0xf]
        %v3366 = vld [vmem:[%s3350 + $0x3c] sm:$0xf]
        %v3383 = vunpack.c.l.b16 %v3351
        %v3384 = vunpack.c.l.b16 %v3352
        %v3385 = vunpack.c.l.b16 %v3353
        %v3386 = vunpack.c.l.b16 %v3354
        %v3387 = vunpack.c.l.b16 %v3355
        %v3388 = vunpack.c.l.b16 %v3356
        %v3389 = vunpack.c.l.b16 %v3357
        %v3390 = vunpack.c.l.b16 %v3358
        %v3391 = vunpack.c.l.b16 %v3359
        %v3392 = vunpack.c.l.b16 %v3360
        %v3393 = vunpack.c.l.b16 %v3361
        %v3394 = vunpack.c.l.b16 %v3362
        %v3395 = vunpack.c.l.b16 %v3363
        %v3396 = vunpack.c.l.b16 %v3364
        %v3397 = vunpack.c.l.b16 %v3365
        %v3398 = vunpack.c.l.b16 %v3366
        %v3399 = vpack.c.b16 %v3384, %v3383
        %v3400 = vpack.c.b16 %v3386, %v3385
        %v3401 = vpack.c.b16 %v3388, %v3387
        %v3402 = vpack.c.b16 %v3390, %v3389
        %v3403 = vpack.c.b16 %v3392, %v3391
        %v3404 = vpack.c.b16 %v3394, %v3393
        %v3405 = vpack.c.b16 %v3396, %v3395
        %v3406 = vpack.c.b16 %v3398, %v3397
        %3415 = vmatprep.subr.bf16.mxu0 0
        %3416 = vmatpush1.bf16.msra.mxu0 %v3399
        %3417 = vmatprep.subr.bf16.mxu0 0
        %3418 = vmatpush1.bf16.msra.mxu0 %v3400
        %3419 = vmatprep.subr.bf16.mxu0 0
        %3420 = vmatpush1.bf16.msra.mxu0 %v3401
        %3421 = vmatprep.subr.bf16.mxu0 0
        %3422 = vmatpush1.bf16.msra.mxu0 %v3402
        %3423 = vmatprep.subr.bf16.mxu0 0
        %3424 = vmatpush1.bf16.msra.mxu0 %v3403
        %3425 = vmatprep.subr.bf16.mxu0 0
        %3426 = vmatpush1.bf16.msra.mxu0 %v3404
        %3427 = vmatprep.subr.bf16.mxu0 0
        %3428 = vmatpush1.bf16.msra.mxu0 %v3405
        %3429 = vmatprep.subr.bf16.mxu0 0
        %3430 = vmatpush1.bf16.msra.mxu0 %v3406
        %3431 = vmatprep.subr.bf16.mxu0 0
        %3432 = vmatpush1.bf16.msra.mxu0 0
        %3433 = vmatprep.subr.bf16.mxu0 0
        %3434 = vmatpush1.bf16.msra.mxu0 0
        %3435 = vmatprep.subr.bf16.mxu0 0
        %3436 = vmatpush1.bf16.msra.mxu0 0
        %3437 = vmatprep.subr.bf16.mxu0 0
        %3438 = vmatpush1.bf16.msra.mxu0 0
        %3439 = vmatprep.subr.bf16.mxu0 0
        %3440 = vmatpush1.bf16.msra.mxu0 0
        %3441 = vmatprep.subr.bf16.mxu0 0
        %3442 = vmatpush1.bf16.msra.mxu0 0
        %3443 = vmatprep.subr.bf16.mxu0 0
        %3444 = vmatpush1.bf16.msra.mxu0 0
        %3445 = vmatprep.subr.bf16.mxu0 0
        %3446 = vmatpush1.bf16.msra.mxu0 0
        %3447 = vmatprep.mubr.bf16.mxu0 0
        %3448 = vmatmul.mubr.bf16.gmra.mrb[0].mxu0 %v3347
        %v3449 = vpop.f32.mrb[0].mxu0
        %v3450 = vadd.f32 0.0, %v3449
        %v3451 = vpop.f32.mrb[0].mxu0
        %v3452 = vpop.f32.mrb[0].mxu0
        %v3453 = vadd.f32 0.0, %v3452
        %v3454 = vpop.f32.mrb[0].mxu0
        %3455 = vmatprep.mubr.bf16.mxu0 0
        %3456 = vmatmul.mubr.bf16.gmra.mrb[0].mxu0 %v3348
        %v3457 = vpop.f32.mrb[0].mxu0
        %v3458 = vpop.f32.mrb[0].mxu0
        %v3459 = vpop.f32.mrb[0].mxu0
        %v3460 = vadd.f32 0.0, %v3459
        %v3461 = vpop.f32.mrb[0].mxu0
        %3462 = vmatprep.mubr.bf16.mxu0 0
        %3463 = vmatmul.mubr.bf16.gmra.mrb[0].mxu0 %v3349
        %v3464 = vpop.f32.mrb[0].mxu0
        %v3465 = vadd.f32 0.0, %v3464
        %v3466 = vpop.f32.mrb[0].mxu0
        %v3467 = vpop.f32.mrb[0].mxu0
        %v3468 = vpop.f32.mrb[0].mxu0
        %3469 = vdwg.mxu0
        %v3470 = vadd.f32 %v3337, %v3450
        %v3471 = vadd.f32 %v3338, %v3453
        %v3472 = vadd.f32 %v3339, %v3460
        %v3473 = vadd.f32 %v3340, %v3465
        %v3474 = vld [vmem:[#allocation4 + $0x9] sm:$0xff]
        %v3475 = vld [vmem:[#allocation4 + $0x11] sm:$0xff]
        %v3476 = vld [vmem:[#allocation4 + $0x19] sm:$0xff]
        %v3477 = vld [vmem:[#allocation4 + $0x21] sm:$0xff]
        %v3478 = vld [vmem:[#allocation4 + $0x29] sm:$0xff]
        %v3479 = vld [vmem:[#allocation4 + $0x31] sm:$0xff]
        %v3480 = vpack.c.bf16 %v3475, %v3474
        %v3481 = vpack.c.bf16 %v3477, %v3476
        %v3482 = vpack.c.bf16 %v3479, %v3478
        %s3483 = scalar_lea.vmem %s8, 256
        %v3484 = vld [vmem:[%s3483] sm:$0xf]
        %v3485 = vld [vmem:[%s3483 + $0x4] sm:$0xf]
        %v3486 = vld [vmem:[%s3483 + $0x8] sm:$0xf]
        %v3487 = vld [vmem:[%s3483 + $0xc] sm:$0xf]
        %v3488 = vld [vmem:[%s3483 + $0x10] sm:$0xf]
        %v3489 = vld [vmem:[%s3483 + $0x14] sm:$0xf]
        %v3490 = vld [vmem:[%s3483 + $0x18] sm:$0xf]
        %v3491 = vld [vmem:[%s3483 + $0x1c] sm:$0xf]
        %v3492 = vld [vmem:[%s3483 + $0x20] sm:$0xf]
        %v3493 = vld [vmem:[%s3483 + $0x24] sm:$0xf]
        %v3494 = vld [vmem:[%s3483 + $0x28] sm:$0xf]
        %v3495 = vld [vmem:[%s3483 + $0x2c] sm:$0xf]
        %v3496 = vld [vmem:[%s3483 + $0x30] sm:$0xf]
        %v3497 = vld [vmem:[%s3483 + $0x34] sm:$0xf]
        %v3498 = vld [vmem:[%s3483 + $0x38] sm:$0xf]
        %v3499 = vld [vmem:[%s3483 + $0x3c] sm:$0xf]
        %v3516 = vunpack.c.l.b16 %v3484
        %v3517 = vunpack.c.l.b16 %v3485
        %v3518 = vunpack.c.l.b16 %v3486
        %v3519 = vunpack.c.l.b16 %v3487
        %v3520 = vunpack.c.l.b16 %v3488
        %v3521 = vunpack.c.l.b16 %v3489
        %v3522 = vunpack.c.l.b16 %v3490
        %v3523 = vunpack.c.l.b16 %v3491
        %v3524 = vunpack.c.l.b16 %v3492
        %v3525 = vunpack.c.l.b16 %v3493
        %v3526 = vunpack.c.l.b16 %v3494
        %v3527 = vunpack.c.l.b16 %v3495
        %v3528 = vunpack.c.l.b16 %v3496
        %v3529 = vunpack.c.l.b16 %v3497
        %v3530 = vunpack.c.l.b16 %v3498
        %v3531 = vunpack.c.l.b16 %v3499
        %v3532 = vpack.c.b16 %v3517, %v3516
        %v3533 = vpack.c.b16 %v3519, %v3518
        %v3534 = vpack.c.b16 %v3521, %v3520
        %v3535 = vpack.c.b16 %v3523, %v3522
        %v3536 = vpack.c.b16 %v3525, %v3524
        %v3537 = vpack.c.b16 %v3527, %v3526
        %v3538 = vpack.c.b16 %v3529, %v3528
        %v3539 = vpack.c.b16 %v3531, %v3530
        %3548 = vmatprep.subr.bf16.mxu0 0
        %3549 = vmatpush1.bf16.msra.mxu0 %v3532
        %3550 = vmatprep.subr.bf16.mxu0 0
        %3551 = vmatpush1.bf16.msra.mxu0 %v3533
        %3552 = vmatprep.subr.bf16.mxu0 0
        %3553 = vmatpush1.bf16.msra.mxu0 %v3534
        %3554 = vmatprep.subr.bf16.mxu0 0
        %3555 = vmatpush1.bf16.msra.mxu0 %v3535
        %3556 = vmatprep.subr.bf16.mxu0 0
        %3557 = vmatpush1.bf16.msra.mxu0 %v3536
        %3558 = vmatprep.subr.bf16.mxu0 0
        %3559 = vmatpush1.bf16.msra.mxu0 %v3537
        %3560 = vmatprep.subr.bf16.mxu0 0
        %3561 = vmatpush1.bf16.msra.mxu0 %v3538
        %3562 = vmatprep.subr.bf16.mxu0 0
        %3563 = vmatpush1.bf16.msra.mxu0 %v3539
        %3564 = vmatprep.subr.bf16.mxu0 0
        %3565 = vmatpush1.bf16.msra.mxu0 0
        %3566 = vmatprep.subr.bf16.mxu0 0
        %3567 = vmatpush1.bf16.msra.mxu0 0
        %3568 = vmatprep.subr.bf16.mxu0 0
        %3569 = vmatpush1.bf16.msra.mxu0 0
        %3570 = vmatprep.subr.bf16.mxu0 0
        %3571 = vmatpush1.bf16.msra.mxu0 0
        %3572 = vmatprep.subr.bf16.mxu0 0
        %3573 = vmatpush1.bf16.msra.mxu0 0
        %3574 = vmatprep.subr.bf16.mxu0 0
        %3575 = vmatpush1.bf16.msra.mxu0 0
        %3576 = vmatprep.subr.bf16.mxu0 0
        %3577 = vmatpush1.bf16.msra.mxu0 0
        %3578 = vmatprep.subr.bf16.mxu0 0
        %3579 = vmatpush1.bf16.msra.mxu0 0
        %3580 = vmatprep.mubr.bf16.mxu0 0
        %3581 = vmatmul.mubr.bf16.gmra.mrb[0].mxu0 %v3480
        %v3582 = vpop.f32.mrb[0].mxu0
        %v3583 = vadd.f32 0.0, %v3582
        %v3584 = vpop.f32.mrb[0].mxu0
        %v3585 = vpop.f32.mrb[0].mxu0
        %v3586 = vadd.f32 0.0, %v3585
        %v3587 = vpop.f32.mrb[0].mxu0
        %3588 = vmatprep.mubr.bf16.mxu0 0
        %3589 = vmatmul.mubr.bf16.gmra.mrb[0].mxu0 %v3481
        %v3590 = vpop.f32.mrb[0].mxu0
        %v3591 = vpop.f32.mrb[0].mxu0
        %v3592 = vpop.f32.mrb[0].mxu0
        %v3593 = vadd.f32 0.0, %v3592
        %v3594 = vpop.f32.mrb[0].mxu0
        %3595 = vmatprep.mubr.bf16.mxu0 0
        %3596 = vmatmul.mubr.bf16.gmra.mrb[0].mxu0 %v3482
        %v3597 = vpop.f32.mrb[0].mxu0
        %v3598 = vadd.f32 0.0, %v3597
        %v3599 = vpop.f32.mrb[0].mxu0
        %v3600 = vpop.f32.mrb[0].mxu0
        %v3601 = vpop.f32.mrb[0].mxu0
        %3602 = vdwg.mxu0
        %v3603 = vadd.f32 %v3470, %v3583
        %v3604 = vadd.f32 %v3471, %v3586
        %v3605 = vadd.f32 %v3472, %v3593
        %v3606 = vadd.f32 %v3473, %v3598
        %v3607 = vld [vmem:[#allocation3 + $0xa] sm:$0xff]
        %v3608 = vld [vmem:[#allocation3 + $0x12] sm:$0xff]
        %v3609 = vld [vmem:[#allocation3 + $0x1a] sm:$0xff]
        %v3610 = vld [vmem:[#allocation3 + $0x22] sm:$0xff]
        %v3611 = vld [vmem:[#allocation3 + $0x2a] sm:$0xff]
        %v3612 = vld [vmem:[#allocation3 + $0x32] sm:$0xff]
        %v3613 = vpack.c.bf16 %v3608, %v3607
        %v3614 = vpack.c.bf16 %v3610, %v3609
        %v3615 = vpack.c.bf16 %v3612, %v3611
        %s3616 = scalar_lea.vmem %s7, 320
        %v3617 = vld [vmem:[%s3616] sm:$0xf]
        %v3618 = vld [vmem:[%s3616 + $0x4] sm:$0xf]
        %v3619 = vld [vmem:[%s3616 + $0x8] sm:$0xf]
        %v3620 = vld [vmem:[%s3616 + $0xc] sm:$0xf]
        %v3621 = vld [vmem:[%s3616 + $0x10] sm:$0xf]
        %v3622 = vld [vmem:[%s3616 + $0x14] sm:$0xf]
        %v3623 = vld [vmem:[%s3616 + $0x18] sm:$0xf]
        %v3624 = vld [vmem:[%s3616 + $0x1c] sm:$0xf]
        %v3625 = vld [vmem:[%s3616 + $0x20] sm:$0xf]
        %v3626 = vld [vmem:[%s3616 + $0x24] sm:$0xf]
        %v3627 = vld [vmem:[%s3616 + $0x28] sm:$0xf]
        %v3628 = vld [vmem:[%s3616 + $0x2c] sm:$0xf]
        %v3629 = vld [vmem:[%s3616 + $0x30] sm:$0xf]
        %v3630 = vld [vmem:[%s3616 + $0x34] sm:$0xf]
        %v3631 = vld [vmem:[%s3616 + $0x38] sm:$0xf]
        %v3632 = vld [vmem:[%s3616 + $0x3c] sm:$0xf]
        %v3649 = vunpack.c.l.b16 %v3617
        %v3650 = vunpack.c.l.b16 %v3618
        %v3651 = vunpack.c.l.b16 %v3619
        %v3652 = vunpack.c.l.b16 %v3620
        %v3653 = vunpack.c.l.b16 %v3621
        %v3654 = vunpack.c.l.b16 %v3622
        %v3655 = vunpack.c.l.b16 %v3623
        %v3656 = vunpack.c.l.b16 %v3624
        %v3657 = vunpack.c.l.b16 %v3625
        %v3658 = vunpack.c.l.b16 %v3626
        %v3659 = vunpack.c.l.b16 %v3627
        %v3660 = vunpack.c.l.b16 %v3628
        %v3661 = vunpack.c.l.b16 %v3629
        %v3662 = vunpack.c.l.b16 %v3630
        %v3663 = vunpack.c.l.b16 %v3631
        %v3664 = vunpack.c.l.b16 %v3632
        %v3665 = vpack.c.b16 %v3650, %v3649
        %v3666 = vpack.c.b16 %v3652, %v3651
        %v3667 = vpack.c.b16 %v3654, %v3653
        %v3668 = vpack.c.b16 %v3656, %v3655
        %v3669 = vpack.c.b16 %v3658, %v3657
        %v3670 = vpack.c.b16 %v3660, %v3659
        %v3671 = vpack.c.b16 %v3662, %v3661
        %v3672 = vpack.c.b16 %v3664, %v3663
        %3681 = vmatprep.subr.bf16.mxu0 0
        %3682 = vmatpush1.bf16.msra.mxu0 %v3665
        %3683 = vmatprep.subr.bf16.mxu0 0
        %3684 = vmatpush1.bf16.msra.mxu0 %v3666
        %3685 = vmatprep.subr.bf16.mxu0 0
        %3686 = vmatpush1.bf16.msra.mxu0 %v3667
        %3687 = vmatprep.subr.bf16.mxu0 0
        %3688 = vmatpush1.bf16.msra.mxu0 %v3668
        %3689 = vmatprep.subr.bf16.mxu0 0
        %3690 = vmatpush1.bf16.msra.mxu0 %v3669
        %3691 = vmatprep.subr.bf16.mxu0 0
        %3692 = vmatpush1.bf16.msra.mxu0 %v3670
        %3693 = vmatprep.subr.bf16.mxu0 0
        %3694 = vmatpush1.bf16.msra.mxu0 %v3671
        %3695 = vmatprep.subr.bf16.mxu0 0
        %3696 = vmatpush1.bf16.msra.mxu0 %v3672
        %3697 = vmatprep.subr.bf16.mxu0 0
        %3698 = vmatpush1.bf16.msra.mxu0 0
        %3699 = vmatprep.subr.bf16.mxu0 0
        %3700 = vmatpush1.bf16.msra.mxu0 0
        %3701 = vmatprep.subr.bf16.mxu0 0
        %3702 = vmatpush1.bf16.msra.mxu0 0
        %3703 = vmatprep.subr.bf16.mxu0 0
        %3704 = vmatpush1.bf16.msra.mxu0 0
        %3705 = vmatprep.subr.bf16.mxu0 0
        %3706 = vmatpush1.bf16.msra.mxu0 0
        %3707 = vmatprep.subr.bf16.mxu0 0
        %3708 = vmatpush1.bf16.msra.mxu0 0
        %3709 = vmatprep.subr.bf16.mxu0 0
        %3710 = vmatpush1.bf16.msra.mxu0 0
        %3711 = vmatprep.subr.bf16.mxu0 0
        %3712 = vmatpush1.bf16.msra.mxu0 0
        %3713 = vmatprep.mubr.bf16.mxu0 0
        %3714 = vmatmul.mubr.bf16.gmra.mrb[0].mxu0 %v3613
        %v3715 = vpop.f32.mrb[0].mxu0
        %v3716 = vadd.f32 0.0, %v3715
        %v3717 = vpop.f32.mrb[0].mxu0
        %v3718 = vpop.f32.mrb[0].mxu0
        %v3719 = vadd.f32 0.0, %v3718
        %v3720 = vpop.f32.mrb[0].mxu0
        %3721 = vmatprep.mubr.bf16.mxu0 0
        %3722 = vmatmul.mubr.bf16.gmra.mrb[0].mxu0 %v3614
        %v3723 = vpop.f32.mrb[0].mxu0
        %v3724 = vpop.f32.mrb[0].mxu0
        %v3725 = vpop.f32.mrb[0].mxu0
        %v3726 = vadd.f32 0.0, %v3725
        %v3727 = vpop.f32.mrb[0].mxu0
        %3728 = vmatprep.mubr.bf16.mxu0 0
        %3729 = vmatmul.mubr.bf16.gmra.mrb[0].mxu0 %v3615
        %v3730 = vpop.f32.mrb[0].mxu0
        %v3731 = vadd.f32 0.0, %v3730
        %v3732 = vpop.f32.mrb[0].mxu0
        %v3733 = vpop.f32.mrb[0].mxu0
        %v3734 = vpop.f32.mrb[0].mxu0
        %3735 = vdwg.mxu0
        %v3736 = vadd.f32 %v3603, %v3716
        %v3737 = vadd.f32 %v3604, %v3719
        %v3738 = vadd.f32 %v3605, %v3726
        %v3739 = vadd.f32 %v3606, %v3731
        %v3740 = vld [vmem:[#allocation4 + $0xa] sm:$0xff]
        %v3741 = vld [vmem:[#allocation4 + $0x12] sm:$0xff]
        %v3742 = vld [vmem:[#allocation4 + $0x1a] sm:$0xff]
        %v3743 = vld [vmem:[#allocation4 + $0x22] sm:$0xff]
        %v3744 = vld [vmem:[#allocation4 + $0x2a] sm:$0xff]
        %v3745 = vld [vmem:[#allocation4 + $0x32] sm:$0xff]
        %v3746 = vpack.c.bf16 %v3741, %v3740
        %v3747 = vpack.c.bf16 %v3743, %v3742
        %v3748 = vpack.c.bf16 %v3745, %v3744
        %s3749 = scalar_lea.vmem %s8, 320
        %v3750 = vld [vmem:[%s3749] sm:$0xf]
        %v3751 = vld [vmem:[%s3749 + $0x4] sm:$0xf]
        %v3752 = vld [vmem:[%s3749 + $0x8] sm:$0xf]
        %v3753 = vld [vmem:[%s3749 + $0xc] sm:$0xf]
        %v3754 = vld [vmem:[%s3749 + $0x10] sm:$0xf]
        %v3755 = vld [vmem:[%s3749 + $0x14] sm:$0xf]
        %v3756 = vld [vmem:[%s3749 + $0x18] sm:$0xf]
        %v3757 = vld [vmem:[%s3749 + $0x1c] sm:$0xf]
        %v3758 = vld [vmem:[%s3749 + $0x20] sm:$0xf]
        %v3759 = vld [vmem:[%s3749 + $0x24] sm:$0xf]
        %v3760 = vld [vmem:[%s3749 + $0x28] sm:$0xf]
        %v3761 = vld [vmem:[%s3749 + $0x2c] sm:$0xf]
        %v3762 = vld [vmem:[%s3749 + $0x30] sm:$0xf]
        %v3763 = vld [vmem:[%s3749 + $0x34] sm:$0xf]
        %v3764 = vld [vmem:[%s3749 + $0x38] sm:$0xf]
        %v3765 = vld [vmem:[%s3749 + $0x3c] sm:$0xf]
        %v3782 = vunpack.c.l.b16 %v3750
        %v3783 = vunpack.c.l.b16 %v3751
        %v3784 = vunpack.c.l.b16 %v3752
        %v3785 = vunpack.c.l.b16 %v3753
        %v3786 = vunpack.c.l.b16 %v3754
        %v3787 = vunpack.c.l.b16 %v3755
        %v3788 = vunpack.c.l.b16 %v3756
        %v3789 = vunpack.c.l.b16 %v3757
        %v3790 = vunpack.c.l.b16 %v3758
        %v3791 = vunpack.c.l.b16 %v3759
        %v3792 = vunpack.c.l.b16 %v3760
        %v3793 = vunpack.c.l.b16 %v3761
        %v3794 = vunpack.c.l.b16 %v3762
        %v3795 = vunpack.c.l.b16 %v3763
        %v3796 = vunpack.c.l.b16 %v3764
        %v3797 = vunpack.c.l.b16 %v3765
        %v3798 = vpack.c.b16 %v3783, %v3782
        %v3799 = vpack.c.b16 %v3785, %v3784
        %v3800 = vpack.c.b16 %v3787, %v3786
        %v3801 = vpack.c.b16 %v3789, %v3788
        %v3802 = vpack.c.b16 %v3791, %v3790
        %v3803 = vpack.c.b16 %v3793, %v3792
        %v3804 = vpack.c.b16 %v3795, %v3794
        %v3805 = vpack.c.b16 %v3797, %v3796
        %3814 = vmatprep.subr.bf16.mxu0 0
        %3815 = vmatpush1.bf16.msra.mxu0 %v3798
        %3816 = vmatprep.subr.bf16.mxu0 0
        %3817 = vmatpush1.bf16.msra.mxu0 %v3799
        %3818 = vmatprep.subr.bf16.mxu0 0
        %3819 = vmatpush1.bf16.msra.mxu0 %v3800
        %3820 = vmatprep.subr.bf16.mxu0 0
        %3821 = vmatpush1.bf16.msra.mxu0 %v3801
        %3822 = vmatprep.subr.bf16.mxu0 0
        %3823 = vmatpush1.bf16.msra.mxu0 %v3802
        %3824 = vmatprep.subr.bf16.mxu0 0
        %3825 = vmatpush1.bf16.msra.mxu0 %v3803
        %3826 = vmatprep.subr.bf16.mxu0 0
        %3827 = vmatpush1.bf16.msra.mxu0 %v3804
        %3828 = vmatprep.subr.bf16.mxu0 0
        %3829 = vmatpush1.bf16.msra.mxu0 %v3805
        %3830 = vmatprep.subr.bf16.mxu0 0
        %3831 = vmatpush1.bf16.msra.mxu0 0
        %3832 = vmatprep.subr.bf16.mxu0 0
        %3833 = vmatpush1.bf16.msra.mxu0 0
        %3834 = vmatprep.subr.bf16.mxu0 0
        %3835 = vmatpush1.bf16.msra.mxu0 0
        %3836 = vmatprep.subr.bf16.mxu0 0
        %3837 = vmatpush1.bf16.msra.mxu0 0
        %3838 = vmatprep.subr.bf16.mxu0 0
        %3839 = vmatpush1.bf16.msra.mxu0 0
        %3840 = vmatprep.subr.bf16.mxu0 0
        %3841 = vmatpush1.bf16.msra.mxu0 0
        %3842 = vmatprep.subr.bf16.mxu0 0
        %3843 = vmatpush1.bf16.msra.mxu0 0
        %3844 = vmatprep.subr.bf16.mxu0 0
        %3845 = vmatpush1.bf16.msra.mxu0 0
        %3846 = vmatprep.mubr.bf16.mxu0 0
        %3847 = vmatmul.mubr.bf16.gmra.mrb[0].mxu0 %v3746
        %v3848 = vpop.f32.mrb[0].mxu0
        %v3849 = vadd.f32 0.0, %v3848
        %v3850 = vpop.f32.mrb[0].mxu0
        %v3851 = vpop.f32.mrb[0].mxu0
        %v3852 = vadd.f32 0.0, %v3851
        %v3853 = vpop.f32.mrb[0].mxu0
        %3854 = vmatprep.mubr.bf16.mxu0 0
        %3855 = vmatmul.mubr.bf16.gmra.mrb[0].mxu0 %v3747
        %v3856 = vpop.f32.mrb[0].mxu0
        %v3857 = vpop.f32.mrb[0].mxu0
        %v3858 = vpop.f32.mrb[0].mxu0
        %v3859 = vadd.f32 0.0, %v3858
        %v3860 = vpop.f32.mrb[0].mxu0
        %3861 = vmatprep.mubr.bf16.mxu0 0
        %3862 = vmatmul.mubr.bf16.gmra.mrb[0].mxu0 %v3748
        %v3863 = vpop.f32.mrb[0].mxu0
        %v3864 = vadd.f32 0.0, %v3863
        %v3865 = vpop.f32.mrb[0].mxu0
        %v3866 = vpop.f32.mrb[0].mxu0
        %v3867 = vpop.f32.mrb[0].mxu0
        %3868 = vdwg.mxu0
        %v3869 = vadd.f32 %v3736, %v3849
        %v3870 = vadd.f32 %v3737, %v3852
        %v3871 = vadd.f32 %v3738, %v3859
        %v3872 = vadd.f32 %v3739, %v3864
        %v3873 = vld [vmem:[#allocation3 + $0xb] sm:$0xff]
        %v3874 = vld [vmem:[#allocation3 + $0x13] sm:$0xff]
        %v3875 = vld [vmem:[#allocation3 + $0x1b] sm:$0xff]
        %v3876 = vld [vmem:[#allocation3 + $0x23] sm:$0xff]
        %v3877 = vld [vmem:[#allocation3 + $0x2b] sm:$0xff]
        %v3878 = vld [vmem:[#allocation3 + $0x33] sm:$0xff]
        %v3879 = vpack.c.bf16 %v3874, %v3873
        %v3880 = vpack.c.bf16 %v3876, %v3875
        %v3881 = vpack.c.bf16 %v3878, %v3877
        %s3882 = scalar_lea.vmem %s7, 384
        %v3883 = vld [vmem:[%s3882] sm:$0xf]
        %v3884 = vld [vmem:[%s3882 + $0x4] sm:$0xf]
        %v3885 = vld [vmem:[%s3882 + $0x8] sm:$0xf]
        %v3886 = vld [vmem:[%s3882 + $0xc] sm:$0xf]
        %v3887 = vld [vmem:[%s3882 + $0x10] sm:$0xf]
        %v3888 = vld [vmem:[%s3882 + $0x14] sm:$0xf]
        %v3889 = vld [vmem:[%s3882 + $0x18] sm:$0xf]
        %v3890 = vld [vmem:[%s3882 + $0x1c] sm:$0xf]
        %v3891 = vld [vmem:[%s3882 + $0x20] sm:$0xf]
        %v3892 = vld [vmem:[%s3882 + $0x24] sm:$0xf]
        %v3893 = vld [vmem:[%s3882 + $0x28] sm:$0xf]
        %v3894 = vld [vmem:[%s3882 + $0x2c] sm:$0xf]
        %v3895 = vld [vmem:[%s3882 + $0x30] sm:$0xf]
        %v3896 = vld [vmem:[%s3882 + $0x34] sm:$0xf]
        %v3897 = vld [vmem:[%s3882 + $0x38] sm:$0xf]
        %v3898 = vld [vmem:[%s3882 + $0x3c] sm:$0xf]
        %v3915 = vunpack.c.l.b16 %v3883
        %v3916 = vunpack.c.l.b16 %v3884
        %v3917 = vunpack.c.l.b16 %v3885
        %v3918 = vunpack.c.l.b16 %v3886
        %v3919 = vunpack.c.l.b16 %v3887
        %v3920 = vunpack.c.l.b16 %v3888
        %v3921 = vunpack.c.l.b16 %v3889
        %v3922 = vunpack.c.l.b16 %v3890
        %v3923 = vunpack.c.l.b16 %v3891
        %v3924 = vunpack.c.l.b16 %v3892
        %v3925 = vunpack.c.l.b16 %v3893
        %v3926 = vunpack.c.l.b16 %v3894
        %v3927 = vunpack.c.l.b16 %v3895
        %v3928 = vunpack.c.l.b16 %v3896
        %v3929 = vunpack.c.l.b16 %v3897
        %v3930 = vunpack.c.l.b16 %v3898
        %v3931 = vpack.c.b16 %v3916, %v3915
        %v3932 = vpack.c.b16 %v3918, %v3917
        %v3933 = vpack.c.b16 %v3920, %v3919
        %v3934 = vpack.c.b16 %v3922, %v3921
        %v3935 = vpack.c.b16 %v3924, %v3923
        %v3936 = vpack.c.b16 %v3926, %v3925
        %v3937 = vpack.c.b16 %v3928, %v3927
        %v3938 = vpack.c.b16 %v3930, %v3929
        %3947 = vmatprep.subr.bf16.mxu0 0
        %3948 = vmatpush1.bf16.msra.mxu0 %v3931
        %3949 = vmatprep.subr.bf16.mxu0 0
        %3950 = vmatpush1.bf16.msra.mxu0 %v3932
        %3951 = vmatprep.subr.bf16.mxu0 0
        %3952 = vmatpush1.bf16.msra.mxu0 %v3933
        %3953 = vmatprep.subr.bf16.mxu0 0
        %3954 = vmatpush1.bf16.msra.mxu0 %v3934
        %3955 = vmatprep.subr.bf16.mxu0 0
        %3956 = vmatpush1.bf16.msra.mxu0 %v3935
        %3957 = vmatprep.subr.bf16.mxu0 0
        %3958 = vmatpush1.bf16.msra.mxu0 %v3936
        %3959 = vmatprep.subr.bf16.mxu0 0
        %3960 = vmatpush1.bf16.msra.mxu0 %v3937
        %3961 = vmatprep.subr.bf16.mxu0 0
        %3962 = vmatpush1.bf16.msra.mxu0 %v3938
        %3963 = vmatprep.subr.bf16.mxu0 0
        %3964 = vmatpush1.bf16.msra.mxu0 0
        %3965 = vmatprep.subr.bf16.mxu0 0
        %3966 = vmatpush1.bf16.msra.mxu0 0
        %3967 = vmatprep.subr.bf16.mxu0 0
        %3968 = vmatpush1.bf16.msra.mxu0 0
        %3969 = vmatprep.subr.bf16.mxu0 0
        %3970 = vmatpush1.bf16.msra.mxu0 0
        %3971 = vmatprep.subr.bf16.mxu0 0
        %3972 = vmatpush1.bf16.msra.mxu0 0
        %3973 = vmatprep.subr.bf16.mxu0 0
        %3974 = vmatpush1.bf16.msra.mxu0 0
        %3975 = vmatprep.subr.bf16.mxu0 0
        %3976 = vmatpush1.bf16.msra.mxu0 0
        %3977 = vmatprep.subr.bf16.mxu0 0
        %3978 = vmatpush1.bf16.msra.mxu0 0
        %3979 = vmatprep.mubr.bf16.mxu0 0
        %3980 = vmatmul.mubr.bf16.gmra.mrb[0].mxu0 %v3879
        %v3981 = vpop.f32.mrb[0].mxu0
        %v3982 = vadd.f32 0.0, %v3981
        %v3983 = vpop.f32.mrb[0].mxu0
        %v3984 = vpop.f32.mrb[0].mxu0
        %v3985 = vadd.f32 0.0, %v3984
        %v3986 = vpop.f32.mrb[0].mxu0
        %3987 = vmatprep.mubr.bf16.mxu0 0
        %3988 = vmatmul.mubr.bf16.gmra.mrb[0].mxu0 %v3880
        %v3989 = vpop.f32.mrb[0].mxu0
        %v3990 = vpop.f32.mrb[0].mxu0
        %v3991 = vpop.f32.mrb[0].mxu0
        %v3992 = vadd.f32 0.0, %v3991
        %v3993 = vpop.f32.mrb[0].mxu0
        %3994 = vmatprep.mubr.bf16.mxu0 0
        %3995 = vmatmul.mubr.bf16.gmra.mrb[0].mxu0 %v3881
        %v3996 = vpop.f32.mrb[0].mxu0
        %v3997 = vadd.f32 0.0, %v3996
        %v3998 = vpop.f32.mrb[0].mxu0
        %v3999 = vpop.f32.mrb[0].mxu0
        %v4000 = vpop.f32.mrb[0].mxu0
        %4001 = vdwg.mxu0
        %v4002 = vadd.f32 %v3869, %v3982
        %v4003 = vadd.f32 %v3870, %v3985
        %v4004 = vadd.f32 %v3871, %v3992
        %v4005 = vadd.f32 %v3872, %v3997
        %v4006 = vld [vmem:[#allocation4 + $0xb] sm:$0xff]
        %v4007 = vld [vmem:[#allocation4 + $0x13] sm:$0xff]
        %v4008 = vld [vmem:[#allocation4 + $0x1b] sm:$0xff]
        %v4009 = vld [vmem:[#allocation4 + $0x23] sm:$0xff]
        %v4010 = vld [vmem:[#allocation4 + $0x2b] sm:$0xff]
        %v4011 = vld [vmem:[#allocation4 + $0x33] sm:$0xff]
        %v4012 = vpack.c.bf16 %v4007, %v4006
        %v4013 = vpack.c.bf16 %v4009, %v4008
        %v4014 = vpack.c.bf16 %v4011, %v4010
        %s4015 = scalar_lea.vmem %s8, 384
        %v4016 = vld [vmem:[%s4015] sm:$0xf]
        %v4017 = vld [vmem:[%s4015 + $0x4] sm:$0xf]
        %v4018 = vld [vmem:[%s4015 + $0x8] sm:$0xf]
        %v4019 = vld [vmem:[%s4015 + $0xc] sm:$0xf]
        %v4020 = vld [vmem:[%s4015 + $0x10] sm:$0xf]
        %v4021 = vld [vmem:[%s4015 + $0x14] sm:$0xf]
        %v4022 = vld [vmem:[%s4015 + $0x18] sm:$0xf]
        %v4023 = vld [vmem:[%s4015 + $0x1c] sm:$0xf]
        %v4024 = vld [vmem:[%s4015 + $0x20] sm:$0xf]
        %v4025 = vld [vmem:[%s4015 + $0x24] sm:$0xf]
        %v4026 = vld [vmem:[%s4015 + $0x28] sm:$0xf]
        %v4027 = vld [vmem:[%s4015 + $0x2c] sm:$0xf]
        %v4028 = vld [vmem:[%s4015 + $0x30] sm:$0xf]
        %v4029 = vld [vmem:[%s4015 + $0x34] sm:$0xf]
        %v4030 = vld [vmem:[%s4015 + $0x38] sm:$0xf]
        %v4031 = vld [vmem:[%s4015 + $0x3c] sm:$0xf]
        %v4048 = vunpack.c.l.b16 %v4016
        %v4049 = vunpack.c.l.b16 %v4017
        %v4050 = vunpack.c.l.b16 %v4018
        %v4051 = vunpack.c.l.b16 %v4019
        %v4052 = vunpack.c.l.b16 %v4020
        %v4053 = vunpack.c.l.b16 %v4021
        %v4054 = vunpack.c.l.b16 %v4022
        %v4055 = vunpack.c.l.b16 %v4023
        %v4056 = vunpack.c.l.b16 %v4024
        %v4057 = vunpack.c.l.b16 %v4025
        %v4058 = vunpack.c.l.b16 %v4026
        %v4059 = vunpack.c.l.b16 %v4027
        %v4060 = vunpack.c.l.b16 %v4028
        %v4061 = vunpack.c.l.b16 %v4029
        %v4062 = vunpack.c.l.b16 %v4030
        %v4063 = vunpack.c.l.b16 %v4031
        %v4064 = vpack.c.b16 %v4049, %v4048
        %v4065 = vpack.c.b16 %v4051, %v4050
        %v4066 = vpack.c.b16 %v4053, %v4052
        %v4067 = vpack.c.b16 %v4055, %v4054
        %v4068 = vpack.c.b16 %v4057, %v4056
        %v4069 = vpack.c.b16 %v4059, %v4058
        %v4070 = vpack.c.b16 %v4061, %v4060
        %v4071 = vpack.c.b16 %v4063, %v4062
        %4080 = vmatprep.subr.bf16.mxu0 0
        %4081 = vmatpush1.bf16.msra.mxu0 %v4064
        %4082 = vmatprep.subr.bf16.mxu0 0
        %4083 = vmatpush1.bf16.msra.mxu0 %v4065
        %4084 = vmatprep.subr.bf16.mxu0 0
        %4085 = vmatpush1.bf16.msra.mxu0 %v4066
        %4086 = vmatprep.subr.bf16.mxu0 0
        %4087 = vmatpush1.bf16.msra.mxu0 %v4067
        %4088 = vmatprep.subr.bf16.mxu0 0
        %4089 = vmatpush1.bf16.msra.mxu0 %v4068
        %4090 = vmatprep.subr.bf16.mxu0 0
        %4091 = vmatpush1.bf16.msra.mxu0 %v4069
        %4092 = vmatprep.subr.bf16.mxu0 0
        %4093 = vmatpush1.bf16.msra.mxu0 %v4070
        %4094 = vmatprep.subr.bf16.mxu0 0
        %4095 = vmatpush1.bf16.msra.mxu0 %v4071
        %4096 = vmatprep.subr.bf16.mxu0 0
        %4097 = vmatpush1.bf16.msra.mxu0 0
        %4098 = vmatprep.subr.bf16.mxu0 0
        %4099 = vmatpush1.bf16.msra.mxu0 0
        %4100 = vmatprep.subr.bf16.mxu0 0
        %4101 = vmatpush1.bf16.msra.mxu0 0
        %4102 = vmatprep.subr.bf16.mxu0 0
        %4103 = vmatpush1.bf16.msra.mxu0 0
        %4104 = vmatprep.subr.bf16.mxu0 0
        %4105 = vmatpush1.bf16.msra.mxu0 0
        %4106 = vmatprep.subr.bf16.mxu0 0
        %4107 = vmatpush1.bf16.msra.mxu0 0
        %4108 = vmatprep.subr.bf16.mxu0 0
        %4109 = vmatpush1.bf16.msra.mxu0 0
        %4110 = vmatprep.subr.bf16.mxu0 0
        %4111 = vmatpush1.bf16.msra.mxu0 0
        %4112 = vmatprep.mubr.bf16.mxu0 0
        %4113 = vmatmul.mubr.bf16.gmra.mrb[0].mxu0 %v4012
        %v4114 = vpop.f32.mrb[0].mxu0
        %v4115 = vadd.f32 0.0, %v4114
        %v4116 = vpop.f32.mrb[0].mxu0
        %v4117 = vpop.f32.mrb[0].mxu0
        %v4118 = vadd.f32 0.0, %v4117
        %v4119 = vpop.f32.mrb[0].mxu0
        %4120 = vmatprep.mubr.bf16.mxu0 0
        %4121 = vmatmul.mubr.bf16.gmra.mrb[0].mxu0 %v4013
        %v4122 = vpop.f32.mrb[0].mxu0
        %v4123 = vpop.f32.mrb[0].mxu0
        %v4124 = vpop.f32.mrb[0].mxu0
        %v4125 = vadd.f32 0.0, %v4124
        %v4126 = vpop.f32.mrb[0].mxu0
        %4127 = vmatprep.mubr.bf16.mxu0 0
        %4128 = vmatmul.mubr.bf16.gmra.mrb[0].mxu0 %v4014
        %v4129 = vpop.f32.mrb[0].mxu0
        %v4130 = vadd.f32 0.0, %v4129
        %v4131 = vpop.f32.mrb[0].mxu0
        %v4132 = vpop.f32.mrb[0].mxu0
        %v4133 = vpop.f32.mrb[0].mxu0
        %4134 = vdwg.mxu0
        %v4135 = vadd.f32 %v4002, %v4115
        %v4136 = vadd.f32 %v4003, %v4118
        %v4137 = vadd.f32 %v4004, %v4125
        %v4138 = vadd.f32 %v4005, %v4130
        %v4139 = vlaneseq
        %v4140 = vshrl.u32 %v4139, 7
        %v4141 = vsub.s32 1, %v4140
        %v4142 = vrot.slane %v391, %v4141
        %v4143 = vadd.f32 %v4135, %v4142
        %v4144 = vadd.f32 %v4136, %v4142
        %v4145 = vadd.f32 %v4137, %v4142
        %v4146 = vadd.f32 %v4138, %v4142
        %v4147 = vld [vmem:[#allocation6 + $0x5] sm:$0xff]
        %v4148 = vld [vmem:[#allocation6 + $0xd] sm:$0xff]
        %v4149 = vld [vmem:[#allocation6 + $0x15] sm:$0xff]
        %v4150 = vld [vmem:[#allocation6 + $0x1d] sm:$0xff]
        %v4151 = vld [vmem:[#allocation6 + $0x25] sm:$0xff]
        %v4152 = vld [vmem:[#allocation6 + $0x2d] sm:$0xff]
        %v4153 = vld [vmem:[#allocation6 + $0x35] sm:$0xff]
        %v4154 = vld [vmem:[#allocation6 + $0x3d] sm:$0xff]
        %v4155 = vpack.c.bf16 %v4148, %v4147
        %v4156 = vpack.c.bf16 %v4150, %v4149
        %v4157 = vpack.c.bf16 %v4152, %v4151
        %v4158 = vpack.c.bf16 %v4154, %v4153
        %v4159 = vld [vmem:[#allocation7 + $0x5] sm:$0xff]
        %v4160 = vld [vmem:[#allocation7 + $0xd] sm:$0xff]
        %v4161 = vld [vmem:[#allocation7 + $0x15] sm:$0xff]
        %v4162 = vld [vmem:[#allocation7 + $0x1d] sm:$0xff]
        %v4163 = vld [vmem:[#allocation7 + $0x25] sm:$0xff]
        %v4164 = vld [vmem:[#allocation7 + $0x2d] sm:$0xff]
        %v4165 = vld [vmem:[#allocation7 + $0x35] sm:$0xff]
        %v4166 = vld [vmem:[#allocation7 + $0x3d] sm:$0xff]
        %v4167 = vpack.c.bf16 %v4160, %v4159
        %v4168 = vpack.c.bf16 %v4162, %v4161
        %v4169 = vpack.c.bf16 %v4164, %v4163
        %v4170 = vpack.c.bf16 %v4166, %v4165
        %4171 = vmatprep.subr.bf16.mxu0 0
        %4172 = vmatpush1.bf16.msra.mxu0 %v2369
        %4173 = vmatprep.subr.bf16.mxu0 0
        %4174 = vmatpush1.bf16.msra.mxu0 %v2370
        %4175 = vmatprep.subr.bf16.mxu0 0
        %4176 = vmatpush1.bf16.msra.mxu0 %v2371
        %4177 = vmatprep.subr.bf16.mxu0 0
        %4178 = vmatpush1.bf16.msra.mxu0 %v2372
        %4179 = vmatprep.subr.bf16.mxu0 0
        %4180 = vmatpush1.bf16.msra.mxu0 %v2373
        %4181 = vmatprep.subr.bf16.mxu0 0
        %4182 = vmatpush1.bf16.msra.mxu0 %v2374
        %4183 = vmatprep.subr.bf16.mxu0 0
        %4184 = vmatpush1.bf16.msra.mxu0 %v2375
        %4185 = vmatprep.subr.bf16.mxu0 0
        %4186 = vmatpush1.bf16.msra.mxu0 %v2376
        %4187 = vmatprep.subr.bf16.mxu0 0
        %4188 = vmatpush1.bf16.msra.mxu0 0
        %4189 = vmatprep.subr.bf16.mxu0 0
        %4190 = vmatpush1.bf16.msra.mxu0 0
        %4191 = vmatprep.subr.bf16.mxu0 0
        %4192 = vmatpush1.bf16.msra.mxu0 0
        %4193 = vmatprep.subr.bf16.mxu0 0
        %4194 = vmatpush1.bf16.msra.mxu0 0
        %4195 = vmatprep.subr.bf16.mxu0 0
        %4196 = vmatpush1.bf16.msra.mxu0 0
        %4197 = vmatprep.subr.bf16.mxu0 0
        %4198 = vmatpush1.bf16.msra.mxu0 0
        %4199 = vmatprep.subr.bf16.mxu0 0
        %4200 = vmatpush1.bf16.msra.mxu0 0
        %4201 = vmatprep.subr.bf16.mxu0 0
        %4202 = vmatpush1.bf16.msra.mxu0 0
        %4203 = vmatprep.mubr.bf16.mxu0 0
        %4204 = vmatmul.mubr.bf16.gmra.mrb[0].mxu0 %v4167
        %v4205 = vpop.f32.mrb[0].mxu0
        %v4206 = vadd.f32 0.0, %v4205
        %v4207 = vpop.f32.mrb[0].mxu0
        %v4208 = vpop.f32.mrb[0].mxu0
        %v4209 = vadd.f32 0.0, %v4208
        %v4210 = vpop.f32.mrb[0].mxu0
        %4211 = vmatprep.mubr.bf16.mxu0 0
        %4212 = vmatmul.mubr.bf16.gmra.mrb[0].mxu0 %v4168
        %v4213 = vpop.f32.mrb[0].mxu0
        %v4214 = vadd.f32 0.0, %v4213
        %v4215 = vpop.f32.mrb[0].mxu0
        %v4216 = vpop.f32.mrb[0].mxu0
        %v4217 = vpop.f32.mrb[0].mxu0
        %4218 = vmatprep.mubr.bf16.mxu0 0
        %4219 = vmatmul.mubr.bf16.gmra.mrb[0].mxu0 %v4169
        %v4220 = vpop.f32.mrb[0].mxu0
        %v4221 = vadd.f32 0.0, %v4220
        %v4222 = vpop.f32.mrb[0].mxu0
        %v4223 = vpop.f32.mrb[0].mxu0
        %v4224 = vadd.f32 0.0, %v4223
        %v4225 = vpop.f32.mrb[0].mxu0
        %4226 = vmatprep.mubr.bf16.mxu0 0
        %4227 = vmatmul.mubr.bf16.gmra.mrb[0].mxu0 %v4170
        %v4228 = vpop.f32.mrb[0].mxu0
        %v4229 = vadd.f32 0.0, %v4228
        %v4230 = vpop.f32.mrb[0].mxu0
        %v4231 = vpop.f32.mrb[0].mxu0
        %v4232 = vpop.f32.mrb[0].mxu0
        %4233 = vdwg.mxu0
        %4234 = vmatprep.subr.bf16.mxu0 0
        %4235 = vmatpush1.bf16.msra.mxu0 %v2472
        %4236 = vmatprep.subr.bf16.mxu0 0
        %4237 = vmatpush1.bf16.msra.mxu0 %v2473
        %4238 = vmatprep.subr.bf16.mxu0 0
        %4239 = vmatpush1.bf16.msra.mxu0 %v2474
        %4240 = vmatprep.subr.bf16.mxu0 0
        %4241 = vmatpush1.bf16.msra.mxu0 %v2475
        %4242 = vmatprep.subr.bf16.mxu0 0
        %4243 = vmatpush1.bf16.msra.mxu0 %v2476
        %4244 = vmatprep.subr.bf16.mxu0 0
        %4245 = vmatpush1.bf16.msra.mxu0 %v2477
        %4246 = vmatprep.subr.bf16.mxu0 0
        %4247 = vmatpush1.bf16.msra.mxu0 %v2478
        %4248 = vmatprep.subr.bf16.mxu0 0
        %4249 = vmatpush1.bf16.msra.mxu0 %v2479
        %4250 = vmatprep.subr.bf16.mxu0 0
        %4251 = vmatpush1.bf16.msra.mxu0 0
        %4252 = vmatprep.subr.bf16.mxu0 0
        %4253 = vmatpush1.bf16.msra.mxu0 0
        %4254 = vmatprep.subr.bf16.mxu0 0
        %4255 = vmatpush1.bf16.msra.mxu0 0
        %4256 = vmatprep.subr.bf16.mxu0 0
        %4257 = vmatpush1.bf16.msra.mxu0 0
        %4258 = vmatprep.subr.bf16.mxu0 0
        %4259 = vmatpush1.bf16.msra.mxu0 0
        %4260 = vmatprep.subr.bf16.mxu0 0
        %4261 = vmatpush1.bf16.msra.mxu0 0
        %4262 = vmatprep.subr.bf16.mxu0 0
        %4263 = vmatpush1.bf16.msra.mxu0 0
        %4264 = vmatprep.subr.bf16.mxu0 0
        %4265 = vmatpush1.bf16.msra.mxu0 0
        %4266 = vmatprep.mubr.bf16.mxu0 0
        %4267 = vmatmul.mubr.bf16.gmra.mrb[0].mxu0 %v4155
        %v4268 = vpop.f32.mrb[0].mxu0
        %v4269 = vadd.f32 %v4206, %v4268
        %v4270 = vpop.f32.mrb[0].mxu0
        %v4271 = vpop.f32.mrb[0].mxu0
        %v4272 = vadd.f32 %v4209, %v4271
        %v4273 = vpop.f32.mrb[0].mxu0
        %4274 = vmatprep.mubr.bf16.mxu0 0
        %4275 = vmatmul.mubr.bf16.gmra.mrb[0].mxu0 %v4156
        %v4276 = vpop.f32.mrb[0].mxu0
        %v4277 = vadd.f32 %v4214, %v4276
        %v4278 = vpop.f32.mrb[0].mxu0
        %v4279 = vpop.f32.mrb[0].mxu0
        %v4280 = vpop.f32.mrb[0].mxu0
        %4281 = vmatprep.mubr.bf16.mxu0 0
        %4282 = vmatmul.mubr.bf16.gmra.mrb[0].mxu0 %v4157
        %v4283 = vpop.f32.mrb[0].mxu0
        %v4284 = vadd.f32 %v4221, %v4283
        %v4285 = vpop.f32.mrb[0].mxu0
        %v4286 = vpop.f32.mrb[0].mxu0
        %v4287 = vadd.f32 %v4224, %v4286
        %v4288 = vpop.f32.mrb[0].mxu0
        %4289 = vmatprep.mubr.bf16.mxu0 0
        %4290 = vmatmul.mubr.bf16.gmra.mrb[0].mxu0 %v4158
        %v4291 = vpop.f32.mrb[0].mxu0
        %v4292 = vadd.f32 %v4229, %v4291
        %v4293 = vpop.f32.mrb[0].mxu0
        %v4294 = vpop.f32.mrb[0].mxu0
        %v4295 = vpop.f32.mrb[0].mxu0
        %4296 = vdwg.mxu0
        %v4297 = vld [vmem:[#allocation6 + $0x6] sm:$0xff]
        %v4298 = vld [vmem:[#allocation6 + $0xe] sm:$0xff]
        %v4299 = vld [vmem:[#allocation6 + $0x16] sm:$0xff]
        %v4300 = vld [vmem:[#allocation6 + $0x1e] sm:$0xff]
        %v4301 = vld [vmem:[#allocation6 + $0x26] sm:$0xff]
        %v4302 = vld [vmem:[#allocation6 + $0x2e] sm:$0xff]
        %v4303 = vld [vmem:[#allocation6 + $0x36] sm:$0xff]
        %v4304 = vld [vmem:[#allocation6 + $0x3e] sm:$0xff]
        %v4305 = vpack.c.bf16 %v4298, %v4297
        %v4306 = vpack.c.bf16 %v4300, %v4299
        %v4307 = vpack.c.bf16 %v4302, %v4301
        %v4308 = vpack.c.bf16 %v4304, %v4303
        %4309 = vmatprep.subr.bf16.mxu0 0
        %4310 = vmatpush1.bf16.msra.mxu0 %v2601
        %4311 = vmatprep.subr.bf16.mxu0 0
        %4312 = vmatpush1.bf16.msra.mxu0 %v2602
        %4313 = vmatprep.subr.bf16.mxu0 0
        %4314 = vmatpush1.bf16.msra.mxu0 %v2603
        %4315 = vmatprep.subr.bf16.mxu0 0
        %4316 = vmatpush1.bf16.msra.mxu0 %v2604
        %4317 = vmatprep.subr.bf16.mxu0 0
        %4318 = vmatpush1.bf16.msra.mxu0 %v2605
        %4319 = vmatprep.subr.bf16.mxu0 0
        %4320 = vmatpush1.bf16.msra.mxu0 %v2606
        %4321 = vmatprep.subr.bf16.mxu0 0
        %4322 = vmatpush1.bf16.msra.mxu0 %v2607
        %4323 = vmatprep.subr.bf16.mxu0 0
        %4324 = vmatpush1.bf16.msra.mxu0 %v2608
        %4325 = vmatprep.subr.bf16.mxu0 0
        %4326 = vmatpush1.bf16.msra.mxu0 0
        %4327 = vmatprep.subr.bf16.mxu0 0
        %4328 = vmatpush1.bf16.msra.mxu0 0
        %4329 = vmatprep.subr.bf16.mxu0 0
        %4330 = vmatpush1.bf16.msra.mxu0 0
        %4331 = vmatprep.subr.bf16.mxu0 0
        %4332 = vmatpush1.bf16.msra.mxu0 0
        %4333 = vmatprep.subr.bf16.mxu0 0
        %4334 = vmatpush1.bf16.msra.mxu0 0
        %4335 = vmatprep.subr.bf16.mxu0 0
        %4336 = vmatpush1.bf16.msra.mxu0 0
        %4337 = vmatprep.subr.bf16.mxu0 0
        %4338 = vmatpush1.bf16.msra.mxu0 0
        %4339 = vmatprep.subr.bf16.mxu0 0
        %4340 = vmatpush1.bf16.msra.mxu0 0
        %4341 = vmatprep.mubr.bf16.mxu0 0
        %4342 = vmatmul.mubr.bf16.gmra.mrb[0].mxu0 %v4305
        %v4343 = vpop.f32.mrb[0].mxu0
        %v4344 = vadd.f32 0.0, %v4343
        %v4345 = vpop.f32.mrb[0].mxu0
        %v4346 = vpop.f32.mrb[0].mxu0
        %v4347 = vadd.f32 0.0, %v4346
        %v4348 = vpop.f32.mrb[0].mxu0
        %4349 = vmatprep.mubr.bf16.mxu0 0
        %4350 = vmatmul.mubr.bf16.gmra.mrb[0].mxu0 %v4306
        %v4351 = vpop.f32.mrb[0].mxu0
        %v4352 = vadd.f32 0.0, %v4351
        %v4353 = vpop.f32.mrb[0].mxu0
        %v4354 = vpop.f32.mrb[0].mxu0
        %v4355 = vpop.f32.mrb[0].mxu0
        %4356 = vmatprep.mubr.bf16.mxu0 0
        %4357 = vmatmul.mubr.bf16.gmra.mrb[0].mxu0 %v4307
        %v4358 = vpop.f32.mrb[0].mxu0
        %v4359 = vadd.f32 0.0, %v4358
        %v4360 = vpop.f32.mrb[0].mxu0
        %v4361 = vpop.f32.mrb[0].mxu0
        %v4362 = vadd.f32 0.0, %v4361
        %v4363 = vpop.f32.mrb[0].mxu0
        %4364 = vmatprep.mubr.bf16.mxu0 0
        %4365 = vmatmul.mubr.bf16.gmra.mrb[0].mxu0 %v4308
        %v4366 = vpop.f32.mrb[0].mxu0
        %v4367 = vadd.f32 0.0, %v4366
        %v4368 = vpop.f32.mrb[0].mxu0
        %v4369 = vpop.f32.mrb[0].mxu0
        %v4370 = vpop.f32.mrb[0].mxu0
        %4371 = vdwg.mxu0
        %v4372 = vadd.f32 %v4269, %v4344
        %v4373 = vadd.f32 %v4272, %v4347
        %v4374 = vadd.f32 %v4277, %v4352
        %v4375 = vadd.f32 %v4284, %v4359
        %v4376 = vadd.f32 %v4287, %v4362
        %v4377 = vadd.f32 %v4292, %v4367
        %v4378 = vld [vmem:[#allocation7 + $0x6] sm:$0xff]
        %v4379 = vld [vmem:[#allocation7 + $0xe] sm:$0xff]
        %v4380 = vld [vmem:[#allocation7 + $0x16] sm:$0xff]
        %v4381 = vld [vmem:[#allocation7 + $0x1e] sm:$0xff]
        %v4382 = vld [vmem:[#allocation7 + $0x26] sm:$0xff]
        %v4383 = vld [vmem:[#allocation7 + $0x2e] sm:$0xff]
        %v4384 = vld [vmem:[#allocation7 + $0x36] sm:$0xff]
        %v4385 = vld [vmem:[#allocation7 + $0x3e] sm:$0xff]
        %v4386 = vpack.c.bf16 %v4379, %v4378
        %v4387 = vpack.c.bf16 %v4381, %v4380
        %v4388 = vpack.c.bf16 %v4383, %v4382
        %v4389 = vpack.c.bf16 %v4385, %v4384
        %4390 = vmatprep.subr.bf16.mxu0 0
        %4391 = vmatpush1.bf16.msra.mxu0 %v2734
        %4392 = vmatprep.subr.bf16.mxu0 0
        %4393 = vmatpush1.bf16.msra.mxu0 %v2735
        %4394 = vmatprep.subr.bf16.mxu0 0
        %4395 = vmatpush1.bf16.msra.mxu0 %v2736
        %4396 = vmatprep.subr.bf16.mxu0 0
        %4397 = vmatpush1.bf16.msra.mxu0 %v2737
        %4398 = vmatprep.subr.bf16.mxu0 0
        %4399 = vmatpush1.bf16.msra.mxu0 %v2738
        %4400 = vmatprep.subr.bf16.mxu0 0
        %4401 = vmatpush1.bf16.msra.mxu0 %v2739
        %4402 = vmatprep.subr.bf16.mxu0 0
        %4403 = vmatpush1.bf16.msra.mxu0 %v2740
        %4404 = vmatprep.subr.bf16.mxu0 0
        %4405 = vmatpush1.bf16.msra.mxu0 %v2741
        %4406 = vmatprep.subr.bf16.mxu0 0
        %4407 = vmatpush1.bf16.msra.mxu0 0
        %4408 = vmatprep.subr.bf16.mxu0 0
        %4409 = vmatpush1.bf16.msra.mxu0 0
        %4410 = vmatprep.subr.bf16.mxu0 0
        %4411 = vmatpush1.bf16.msra.mxu0 0
        %4412 = vmatprep.subr.bf16.mxu0 0
        %4413 = vmatpush1.bf16.msra.mxu0 0
        %4414 = vmatprep.subr.bf16.mxu0 0
        %4415 = vmatpush1.bf16.msra.mxu0 0
        %4416 = vmatprep.subr.bf16.mxu0 0
        %4417 = vmatpush1.bf16.msra.mxu0 0
        %4418 = vmatprep.subr.bf16.mxu0 0
        %4419 = vmatpush1.bf16.msra.mxu0 0
        %4420 = vmatprep.subr.bf16.mxu0 0
        %4421 = vmatpush1.bf16.msra.mxu0 0
        %4422 = vmatprep.mubr.bf16.mxu0 0
        %4423 = vmatmul.mubr.bf16.gmra.mrb[0].mxu0 %v4386
        %v4424 = vpop.f32.mrb[0].mxu0
        %v4425 = vadd.f32 0.0, %v4424
        %v4426 = vpop.f32.mrb[0].mxu0
        %v4427 = vpop.f32.mrb[0].mxu0
        %v4428 = vadd.f32 0.0, %v4427
        %v4429 = vpop.f32.mrb[0].mxu0
        %4430 = vmatprep.mubr.bf16.mxu0 0
        %4431 = vmatmul.mubr.bf16.gmra.mrb[0].mxu0 %v4387
        %v4432 = vpop.f32.mrb[0].mxu0
        %v4433 = vadd.f32 0.0, %v4432
        %v4434 = vpop.f32.mrb[0].mxu0
        %v4435 = vpop.f32.mrb[0].mxu0
        %v4436 = vpop.f32.mrb[0].mxu0
        %4437 = vmatprep.mubr.bf16.mxu0 0
        %4438 = vmatmul.mubr.bf16.gmra.mrb[0].mxu0 %v4388
        %v4439 = vpop.f32.mrb[0].mxu0
        %v4440 = vadd.f32 0.0, %v4439
        %v4441 = vpop.f32.mrb[0].mxu0
        %v4442 = vpop.f32.mrb[0].mxu0
        %v4443 = vadd.f32 0.0, %v4442
        %v4444 = vpop.f32.mrb[0].mxu0
        %4445 = vmatprep.mubr.bf16.mxu0 0
        %4446 = vmatmul.mubr.bf16.gmra.mrb[0].mxu0 %v4389
        %v4447 = vpop.f32.mrb[0].mxu0
        %v4448 = vadd.f32 0.0, %v4447
        %v4449 = vpop.f32.mrb[0].mxu0
        %v4450 = vpop.f32.mrb[0].mxu0
        %v4451 = vpop.f32.mrb[0].mxu0
        %4452 = vdwg.mxu0
        %v4453 = vadd.f32 %v4372, %v4425
        %v4454 = vadd.f32 %v4373, %v4428
        %v4455 = vadd.f32 %v4374, %v4433
        %v4456 = vadd.f32 %v4375, %v4440
        %v4457 = vadd.f32 %v4376, %v4443
        %v4458 = vadd.f32 %v4377, %v4448
        %v4459 = vld [vmem:[#allocation6 + $0x7] sm:$0xff]
        %v4460 = vld [vmem:[#allocation6 + $0xf] sm:$0xff]
        %v4461 = vld [vmem:[#allocation6 + $0x17] sm:$0xff]
        %v4462 = vld [vmem:[#allocation6 + $0x1f] sm:$0xff]
        %v4463 = vld [vmem:[#allocation6 + $0x27] sm:$0xff]
        %v4464 = vld [vmem:[#allocation6 + $0x2f] sm:$0xff]
        %v4465 = vld [vmem:[#allocation6 + $0x37] sm:$0xff]
        %v4466 = vld [vmem:[#allocation6 + $0x3f] sm:$0xff]
        %v4467 = vpack.c.bf16 %v4460, %v4459
        %v4468 = vpack.c.bf16 %v4462, %v4461
        %v4469 = vpack.c.bf16 %v4464, %v4463
        %v4470 = vpack.c.bf16 %v4466, %v4465
        %4471 = vmatprep.subr.bf16.mxu0 0
        %4472 = vmatpush1.bf16.msra.mxu0 %v2867
        %4473 = vmatprep.subr.bf16.mxu0 0
        %4474 = vmatpush1.bf16.msra.mxu0 %v2868
        %4475 = vmatprep.subr.bf16.mxu0 0
        %4476 = vmatpush1.bf16.msra.mxu0 %v2869
        %4477 = vmatprep.subr.bf16.mxu0 0
        %4478 = vmatpush1.bf16.msra.mxu0 %v2870
        %4479 = vmatprep.subr.bf16.mxu0 0
        %4480 = vmatpush1.bf16.msra.mxu0 %v2871
        %4481 = vmatprep.subr.bf16.mxu0 0
        %4482 = vmatpush1.bf16.msra.mxu0 %v2872
        %4483 = vmatprep.subr.bf16.mxu0 0
        %4484 = vmatpush1.bf16.msra.mxu0 %v2873
        %4485 = vmatprep.subr.bf16.mxu0 0
        %4486 = vmatpush1.bf16.msra.mxu0 %v2874
        %4487 = vmatprep.subr.bf16.mxu0 0
        %4488 = vmatpush1.bf16.msra.mxu0 0
        %4489 = vmatprep.subr.bf16.mxu0 0
        %4490 = vmatpush1.bf16.msra.mxu0 0
        %4491 = vmatprep.subr.bf16.mxu0 0
        %4492 = vmatpush1.bf16.msra.mxu0 0
        %4493 = vmatprep.subr.bf16.mxu0 0
        %4494 = vmatpush1.bf16.msra.mxu0 0
        %4495 = vmatprep.subr.bf16.mxu0 0
        %4496 = vmatpush1.bf16.msra.mxu0 0
        %4497 = vmatprep.subr.bf16.mxu0 0
        %4498 = vmatpush1.bf16.msra.mxu0 0
        %4499 = vmatprep.subr.bf16.mxu0 0
        %4500 = vmatpush1.bf16.msra.mxu0 0
        %4501 = vmatprep.subr.bf16.mxu0 0
        %4502 = vmatpush1.bf16.msra.mxu0 0
        %4503 = vmatprep.mubr.bf16.mxu0 0
        %4504 = vmatmul.mubr.bf16.gmra.mrb[0].mxu0 %v4467
        %v4505 = vpop.f32.mrb[0].mxu0
        %v4506 = vadd.f32 0.0, %v4505
        %v4507 = vpop.f32.mrb[0].mxu0
        %v4508 = vpop.f32.mrb[0].mxu0
        %v4509 = vadd.f32 0.0, %v4508
        %v4510 = vpop.f32.mrb[0].mxu0
        %4511 = vmatprep.mubr.bf16.mxu0 0
        %4512 = vmatmul.mubr.bf16.gmra.mrb[0].mxu0 %v4468
        %v4513 = vpop.f32.mrb[0].mxu0
        %v4514 = vadd.f32 0.0, %v4513
        %v4515 = vpop.f32.mrb[0].mxu0
        %v4516 = vpop.f32.mrb[0].mxu0
        %v4517 = vpop.f32.mrb[0].mxu0
        %4518 = vmatprep.mubr.bf16.mxu0 0
        %4519 = vmatmul.mubr.bf16.gmra.mrb[0].mxu0 %v4469
        %v4520 = vpop.f32.mrb[0].mxu0
        %v4521 = vadd.f32 0.0, %v4520
        %v4522 = vpop.f32.mrb[0].mxu0
        %v4523 = vpop.f32.mrb[0].mxu0
        %v4524 = vadd.f32 0.0, %v4523
        %v4525 = vpop.f32.mrb[0].mxu0
        %4526 = vmatprep.mubr.bf16.mxu0 0
        %4527 = vmatmul.mubr.bf16.gmra.mrb[0].mxu0 %v4470
        %v4528 = vpop.f32.mrb[0].mxu0
        %v4529 = vadd.f32 0.0, %v4528
        %v4530 = vpop.f32.mrb[0].mxu0
        %v4531 = vpop.f32.mrb[0].mxu0
        %v4532 = vpop.f32.mrb[0].mxu0
        %4533 = vdwg.mxu0
        %v4534 = vadd.f32 %v4453, %v4506
        %v4535 = vadd.f32 %v4454, %v4509
        %v4536 = vadd.f32 %v4455, %v4514
        %v4537 = vadd.f32 %v4456, %v4521
        %v4538 = vadd.f32 %v4457, %v4524
        %v4539 = vadd.f32 %v4458, %v4529
        %v4540 = vld [vmem:[#allocation7 + $0x7] sm:$0xff]
        %v4541 = vld [vmem:[#allocation7 + $0xf] sm:$0xff]
        %v4542 = vld [vmem:[#allocation7 + $0x17] sm:$0xff]
        %v4543 = vld [vmem:[#allocation7 + $0x1f] sm:$0xff]
        %v4544 = vld [vmem:[#allocation7 + $0x27] sm:$0xff]
        %v4545 = vld [vmem:[#allocation7 + $0x2f] sm:$0xff]
        %v4546 = vld [vmem:[#allocation7 + $0x37] sm:$0xff]
        %v4547 = vld [vmem:[#allocation7 + $0x3f] sm:$0xff]
        %v4548 = vpack.c.bf16 %v4541, %v4540
        %v4549 = vpack.c.bf16 %v4543, %v4542
        %v4550 = vpack.c.bf16 %v4545, %v4544
        %v4551 = vpack.c.bf16 %v4547, %v4546
        %4552 = vmatprep.subr.bf16.mxu0 0
        %4553 = vmatpush1.bf16.msra.mxu0 %v3000
        %4554 = vmatprep.subr.bf16.mxu0 0
        %4555 = vmatpush1.bf16.msra.mxu0 %v3001
        %4556 = vmatprep.subr.bf16.mxu0 0
        %4557 = vmatpush1.bf16.msra.mxu0 %v3002
        %4558 = vmatprep.subr.bf16.mxu0 0
        %4559 = vmatpush1.bf16.msra.mxu0 %v3003
        %4560 = vmatprep.subr.bf16.mxu0 0
        %4561 = vmatpush1.bf16.msra.mxu0 %v3004
        %4562 = vmatprep.subr.bf16.mxu0 0
        %4563 = vmatpush1.bf16.msra.mxu0 %v3005
        %4564 = vmatprep.subr.bf16.mxu0 0
        %4565 = vmatpush1.bf16.msra.mxu0 %v3006
        %4566 = vmatprep.subr.bf16.mxu0 0
        %4567 = vmatpush1.bf16.msra.mxu0 %v3007
        %4568 = vmatprep.subr.bf16.mxu0 0
        %4569 = vmatpush1.bf16.msra.mxu0 0
        %4570 = vmatprep.subr.bf16.mxu0 0
        %4571 = vmatpush1.bf16.msra.mxu0 0
        %4572 = vmatprep.subr.bf16.mxu0 0
        %4573 = vmatpush1.bf16.msra.mxu0 0
        %4574 = vmatprep.subr.bf16.mxu0 0
        %4575 = vmatpush1.bf16.msra.mxu0 0
        %4576 = vmatprep.subr.bf16.mxu0 0
        %4577 = vmatpush1.bf16.msra.mxu0 0
        %4578 = vmatprep.subr.bf16.mxu0 0
        %4579 = vmatpush1.bf16.msra.mxu0 0
        %4580 = vmatprep.subr.bf16.mxu0 0
        %4581 = vmatpush1.bf16.msra.mxu0 0
        %4582 = vmatprep.subr.bf16.mxu0 0
        %4583 = vmatpush1.bf16.msra.mxu0 0
        %4584 = vmatprep.mubr.bf16.mxu0 0
        %4585 = vmatmul.mubr.bf16.gmra.mrb[0].mxu0 %v4548
        %v4586 = vpop.f32.mrb[0].mxu0
        %v4587 = vadd.f32 0.0, %v4586
        %v4588 = vpop.f32.mrb[0].mxu0
        %v4589 = vpop.f32.mrb[0].mxu0
        %v4590 = vadd.f32 0.0, %v4589
        %v4591 = vpop.f32.mrb[0].mxu0
        %4592 = vmatprep.mubr.bf16.mxu0 0
        %4593 = vmatmul.mubr.bf16.gmra.mrb[0].mxu0 %v4549
        %v4594 = vpop.f32.mrb[0].mxu0
        %v4595 = vadd.f32 0.0, %v4594
        %v4596 = vpop.f32.mrb[0].mxu0
        %v4597 = vpop.f32.mrb[0].mxu0
        %v4598 = vpop.f32.mrb[0].mxu0
        %4599 = vmatprep.mubr.bf16.mxu0 0
        %4600 = vmatmul.mubr.bf16.gmra.mrb[0].mxu0 %v4550
        %v4601 = vpop.f32.mrb[0].mxu0
        %v4602 = vadd.f32 0.0, %v4601
        %v4603 = vpop.f32.mrb[0].mxu0
        %v4604 = vpop.f32.mrb[0].mxu0
        %v4605 = vadd.f32 0.0, %v4604
        %v4606 = vpop.f32.mrb[0].mxu0
        %4607 = vmatprep.mubr.bf16.mxu0 0
        %4608 = vmatmul.mubr.bf16.gmra.mrb[0].mxu0 %v4551
        %v4609 = vpop.f32.mrb[0].mxu0
        %v4610 = vadd.f32 0.0, %v4609
        %v4611 = vpop.f32.mrb[0].mxu0
        %v4612 = vpop.f32.mrb[0].mxu0
        %v4613 = vpop.f32.mrb[0].mxu0
        %4614 = vdwg.mxu0
        %v4615 = vadd.f32 %v4534, %v4587
        %v4616 = vadd.f32 %v4535, %v4590
        %v4617 = vadd.f32 %v4536, %v4595
        %v4618 = vadd.f32 %v4537, %v4602
        %v4619 = vadd.f32 %v4538, %v4605
        %v4620 = vadd.f32 %v4539, %v4610
        %v4621 = vld [vmem:[#allocation6 + $0x8] sm:$0xff]
        %v4622 = vld [vmem:[#allocation6 + $0x10] sm:$0xff]
        %v4623 = vld [vmem:[#allocation6 + $0x18] sm:$0xff]
        %v4624 = vld [vmem:[#allocation6 + $0x20] sm:$0xff]
        %v4625 = vld [vmem:[#allocation6 + $0x28] sm:$0xff]
        %v4626 = vld [vmem:[#allocation6 + $0x30] sm:$0xff]
        %v4627 = vld [vmem:[#allocation6 + $0x38] sm:$0xff]
        %v4628 = vld [vmem:[#allocation6 + $0x40] sm:$0xff]
        %v4629 = vpack.c.bf16 %v4622, %v4621
        %v4630 = vpack.c.bf16 %v4624, %v4623
        %v4631 = vpack.c.bf16 %v4626, %v4625
        %v4632 = vpack.c.bf16 %v4628, %v4627
        %4633 = vmatprep.subr.bf16.mxu0 0
        %4634 = vmatpush1.bf16.msra.mxu0 %v3133
        %4635 = vmatprep.subr.bf16.mxu0 0
        %4636 = vmatpush1.bf16.msra.mxu0 %v3134
        %4637 = vmatprep.subr.bf16.mxu0 0
        %4638 = vmatpush1.bf16.msra.mxu0 %v3135
        %4639 = vmatprep.subr.bf16.mxu0 0
        %4640 = vmatpush1.bf16.msra.mxu0 %v3136
        %4641 = vmatprep.subr.bf16.mxu0 0
        %4642 = vmatpush1.bf16.msra.mxu0 %v3137
        %4643 = vmatprep.subr.bf16.mxu0 0
        %4644 = vmatpush1.bf16.msra.mxu0 %v3138
        %4645 = vmatprep.subr.bf16.mxu0 0
        %4646 = vmatpush1.bf16.msra.mxu0 %v3139
        %4647 = vmatprep.subr.bf16.mxu0 0
        %4648 = vmatpush1.bf16.msra.mxu0 %v3140
        %4649 = vmatprep.subr.bf16.mxu0 0
        %4650 = vmatpush1.bf16.msra.mxu0 0
        %4651 = vmatprep.subr.bf16.mxu0 0
        %4652 = vmatpush1.bf16.msra.mxu0 0
        %4653 = vmatprep.subr.bf16.mxu0 0
        %4654 = vmatpush1.bf16.msra.mxu0 0
        %4655 = vmatprep.subr.bf16.mxu0 0
        %4656 = vmatpush1.bf16.msra.mxu0 0
        %4657 = vmatprep.subr.bf16.mxu0 0
        %4658 = vmatpush1.bf16.msra.mxu0 0
        %4659 = vmatprep.subr.bf16.mxu0 0
        %4660 = vmatpush1.bf16.msra.mxu0 0
        %4661 = vmatprep.subr.bf16.mxu0 0
        %4662 = vmatpush1.bf16.msra.mxu0 0
        %4663 = vmatprep.subr.bf16.mxu0 0
        %4664 = vmatpush1.bf16.msra.mxu0 0
        %4665 = vmatprep.mubr.bf16.mxu0 0
        %4666 = vmatmul.mubr.bf16.gmra.mrb[0].mxu0 %v4629
        %v4667 = vpop.f32.mrb[0].mxu0
        %v4668 = vadd.f32 0.0, %v4667
        %v4669 = vpop.f32.mrb[0].mxu0
        %v4670 = vpop.f32.mrb[0].mxu0
        %v4671 = vadd.f32 0.0, %v4670
        %v4672 = vpop.f32.mrb[0].mxu0
        %4673 = vmatprep.mubr.bf16.mxu0 0
        %4674 = vmatmul.mubr.bf16.gmra.mrb[0].mxu0 %v4630
        %v4675 = vpop.f32.mrb[0].mxu0
        %v4676 = vadd.f32 0.0, %v4675
        %v4677 = vpop.f32.mrb[0].mxu0
        %v4678 = vpop.f32.mrb[0].mxu0
        %v4679 = vpop.f32.mrb[0].mxu0
        %4680 = vmatprep.mubr.bf16.mxu0 0
        %4681 = vmatmul.mubr.bf16.gmra.mrb[0].mxu0 %v4631
        %v4682 = vpop.f32.mrb[0].mxu0
        %v4683 = vadd.f32 0.0, %v4682
        %v4684 = vpop.f32.mrb[0].mxu0
        %v4685 = vpop.f32.mrb[0].mxu0
        %v4686 = vadd.f32 0.0, %v4685
        %v4687 = vpop.f32.mrb[0].mxu0
        %4688 = vmatprep.mubr.bf16.mxu0 0
        %4689 = vmatmul.mubr.bf16.gmra.mrb[0].mxu0 %v4632
        %v4690 = vpop.f32.mrb[0].mxu0
        %v4691 = vadd.f32 0.0, %v4690
        %v4692 = vpop.f32.mrb[0].mxu0
        %v4693 = vpop.f32.mrb[0].mxu0
        %v4694 = vpop.f32.mrb[0].mxu0
        %4695 = vdwg.mxu0
        %v4696 = vadd.f32 %v4615, %v4668
        %v4697 = vadd.f32 %v4616, %v4671
        %v4698 = vadd.f32 %v4617, %v4676
        %v4699 = vadd.f32 %v4618, %v4683
        %v4700 = vadd.f32 %v4619, %v4686
        %v4701 = vadd.f32 %v4620, %v4691
        %v4702 = vld [vmem:[#allocation7 + $0x8] sm:$0xff]
        %v4703 = vld [vmem:[#allocation7 + $0x10] sm:$0xff]
        %v4704 = vld [vmem:[#allocation7 + $0x18] sm:$0xff]
        %v4705 = vld [vmem:[#allocation7 + $0x20] sm:$0xff]
        %v4706 = vld [vmem:[#allocation7 + $0x28] sm:$0xff]
        %v4707 = vld [vmem:[#allocation7 + $0x30] sm:$0xff]
        %v4708 = vld [vmem:[#allocation7 + $0x38] sm:$0xff]
        %v4709 = vld [vmem:[#allocation7 + $0x40] sm:$0xff]
        %v4710 = vpack.c.bf16 %v4703, %v4702
        %v4711 = vpack.c.bf16 %v4705, %v4704
        %v4712 = vpack.c.bf16 %v4707, %v4706
        %v4713 = vpack.c.bf16 %v4709, %v4708
        %4714 = vmatprep.subr.bf16.mxu0 0
        %4715 = vmatpush1.bf16.msra.mxu0 %v3266
        %4716 = vmatprep.subr.bf16.mxu0 0
        %4717 = vmatpush1.bf16.msra.mxu0 %v3267
        %4718 = vmatprep.subr.bf16.mxu0 0
        %4719 = vmatpush1.bf16.msra.mxu0 %v3268
        %4720 = vmatprep.subr.bf16.mxu0 0
        %4721 = vmatpush1.bf16.msra.mxu0 %v3269
        %4722 = vmatprep.subr.bf16.mxu0 0
        %4723 = vmatpush1.bf16.msra.mxu0 %v3270
        %4724 = vmatprep.subr.bf16.mxu0 0
        %4725 = vmatpush1.bf16.msra.mxu0 %v3271
        %4726 = vmatprep.subr.bf16.mxu0 0
        %4727 = vmatpush1.bf16.msra.mxu0 %v3272
        %4728 = vmatprep.subr.bf16.mxu0 0
        %4729 = vmatpush1.bf16.msra.mxu0 %v3273
        %4730 = vmatprep.subr.bf16.mxu0 0
        %4731 = vmatpush1.bf16.msra.mxu0 0
        %4732 = vmatprep.subr.bf16.mxu0 0
        %4733 = vmatpush1.bf16.msra.mxu0 0
        %4734 = vmatprep.subr.bf16.mxu0 0
        %4735 = vmatpush1.bf16.msra.mxu0 0
        %4736 = vmatprep.subr.bf16.mxu0 0
        %4737 = vmatpush1.bf16.msra.mxu0 0
        %4738 = vmatprep.subr.bf16.mxu0 0
        %4739 = vmatpush1.bf16.msra.mxu0 0
        %4740 = vmatprep.subr.bf16.mxu0 0
        %4741 = vmatpush1.bf16.msra.mxu0 0
        %4742 = vmatprep.subr.bf16.mxu0 0
        %4743 = vmatpush1.bf16.msra.mxu0 0
        %4744 = vmatprep.subr.bf16.mxu0 0
        %4745 = vmatpush1.bf16.msra.mxu0 0
        %4746 = vmatprep.mubr.bf16.mxu0 0
        %4747 = vmatmul.mubr.bf16.gmra.mrb[0].mxu0 %v4710
        %v4748 = vpop.f32.mrb[0].mxu0
        %v4749 = vadd.f32 0.0, %v4748
        %v4750 = vpop.f32.mrb[0].mxu0
        %v4751 = vpop.f32.mrb[0].mxu0
        %v4752 = vadd.f32 0.0, %v4751
        %v4753 = vpop.f32.mrb[0].mxu0
        %4754 = vmatprep.mubr.bf16.mxu0 0
        %4755 = vmatmul.mubr.bf16.gmra.mrb[0].mxu0 %v4711
        %v4756 = vpop.f32.mrb[0].mxu0
        %v4757 = vadd.f32 0.0, %v4756
        %v4758 = vpop.f32.mrb[0].mxu0
        %v4759 = vpop.f32.mrb[0].mxu0
        %v4760 = vpop.f32.mrb[0].mxu0
        %4761 = vmatprep.mubr.bf16.mxu0 0
        %4762 = vmatmul.mubr.bf16.gmra.mrb[0].mxu0 %v4712
        %v4763 = vpop.f32.mrb[0].mxu0
        %v4764 = vadd.f32 0.0, %v4763
        %v4765 = vpop.f32.mrb[0].mxu0
        %v4766 = vpop.f32.mrb[0].mxu0
        %v4767 = vadd.f32 0.0, %v4766
        %v4768 = vpop.f32.mrb[0].mxu0
        %4769 = vmatprep.mubr.bf16.mxu0 0
        %4770 = vmatmul.mubr.bf16.gmra.mrb[0].mxu0 %v4713
        %v4771 = vpop.f32.mrb[0].mxu0
        %v4772 = vadd.f32 0.0, %v4771
        %v4773 = vpop.f32.mrb[0].mxu0
        %v4774 = vpop.f32.mrb[0].mxu0
        %v4775 = vpop.f32.mrb[0].mxu0
        %4776 = vdwg.mxu0
        %v4777 = vadd.f32 %v4696, %v4749
        %v4778 = vadd.f32 %v4697, %v4752
        %v4779 = vadd.f32 %v4698, %v4757
        %v4780 = vadd.f32 %v4699, %v4764
        %v4781 = vadd.f32 %v4700, %v4767
        %v4782 = vadd.f32 %v4701, %v4772
        %v4783 = vld [vmem:[#allocation6 + $0x9] sm:$0xff]
        %v4784 = vld [vmem:[#allocation6 + $0x11] sm:$0xff]
        %v4785 = vld [vmem:[#allocation6 + $0x19] sm:$0xff]
        %v4786 = vld [vmem:[#allocation6 + $0x21] sm:$0xff]
        %v4787 = vld [vmem:[#allocation6 + $0x29] sm:$0xff]
        %v4788 = vld [vmem:[#allocation6 + $0x31] sm:$0xff]
        %v4789 = vld [vmem:[#allocation6 + $0x39] sm:$0xff]
        %v4790 = vld [vmem:[#allocation6 + $0x41] sm:$0xff]
        %v4791 = vpack.c.bf16 %v4784, %v4783
        %v4792 = vpack.c.bf16 %v4786, %v4785
        %v4793 = vpack.c.bf16 %v4788, %v4787
        %v4794 = vpack.c.bf16 %v4790, %v4789
        %4795 = vmatprep.subr.bf16.mxu0 0
        %4796 = vmatpush1.bf16.msra.mxu0 %v3399
        %4797 = vmatprep.subr.bf16.mxu0 0
        %4798 = vmatpush1.bf16.msra.mxu0 %v3400
        %4799 = vmatprep.subr.bf16.mxu0 0
        %4800 = vmatpush1.bf16.msra.mxu0 %v3401
        %4801 = vmatprep.subr.bf16.mxu0 0
        %4802 = vmatpush1.bf16.msra.mxu0 %v3402
        %4803 = vmatprep.subr.bf16.mxu0 0
        %4804 = vmatpush1.bf16.msra.mxu0 %v3403
        %4805 = vmatprep.subr.bf16.mxu0 0
        %4806 = vmatpush1.bf16.msra.mxu0 %v3404
        %4807 = vmatprep.subr.bf16.mxu0 0
        %4808 = vmatpush1.bf16.msra.mxu0 %v3405
        %4809 = vmatprep.subr.bf16.mxu0 0
        %4810 = vmatpush1.bf16.msra.mxu0 %v3406
        %4811 = vmatprep.subr.bf16.mxu0 0
        %4812 = vmatpush1.bf16.msra.mxu0 0
        %4813 = vmatprep.subr.bf16.mxu0 0
        %4814 = vmatpush1.bf16.msra.mxu0 0
        %4815 = vmatprep.subr.bf16.mxu0 0
        %4816 = vmatpush1.bf16.msra.mxu0 0
        %4817 = vmatprep.subr.bf16.mxu0 0
        %4818 = vmatpush1.bf16.msra.mxu0 0
        %4819 = vmatprep.subr.bf16.mxu0 0
        %4820 = vmatpush1.bf16.msra.mxu0 0
        %4821 = vmatprep.subr.bf16.mxu0 0
        %4822 = vmatpush1.bf16.msra.mxu0 0
        %4823 = vmatprep.subr.bf16.mxu0 0
        %4824 = vmatpush1.bf16.msra.mxu0 0
        %4825 = vmatprep.subr.bf16.mxu0 0
        %4826 = vmatpush1.bf16.msra.mxu0 0
        %4827 = vmatprep.mubr.bf16.mxu0 0
        %4828 = vmatmul.mubr.bf16.gmra.mrb[0].mxu0 %v4791
        %v4829 = vpop.f32.mrb[0].mxu0
        %v4830 = vadd.f32 0.0, %v4829
        %v4831 = vpop.f32.mrb[0].mxu0
        %v4832 = vpop.f32.mrb[0].mxu0
        %v4833 = vadd.f32 0.0, %v4832
        %v4834 = vpop.f32.mrb[0].mxu0
        %4835 = vmatprep.mubr.bf16.mxu0 0
        %4836 = vmatmul.mubr.bf16.gmra.mrb[0].mxu0 %v4792
        %v4837 = vpop.f32.mrb[0].mxu0
        %v4838 = vadd.f32 0.0, %v4837
        %v4839 = vpop.f32.mrb[0].mxu0
        %v4840 = vpop.f32.mrb[0].mxu0
        %v4841 = vpop.f32.mrb[0].mxu0
        %4842 = vmatprep.mubr.bf16.mxu0 0
        %4843 = vmatmul.mubr.bf16.gmra.mrb[0].mxu0 %v4793
        %v4844 = vpop.f32.mrb[0].mxu0
        %v4845 = vadd.f32 0.0, %v4844
        %v4846 = vpop.f32.mrb[0].mxu0
        %v4847 = vpop.f32.mrb[0].mxu0
        %v4848 = vadd.f32 0.0, %v4847
        %v4849 = vpop.f32.mrb[0].mxu0
        %4850 = vmatprep.mubr.bf16.mxu0 0
        %4851 = vmatmul.mubr.bf16.gmra.mrb[0].mxu0 %v4794
        %v4852 = vpop.f32.mrb[0].mxu0
        %v4853 = vadd.f32 0.0, %v4852
        %v4854 = vpop.f32.mrb[0].mxu0
        %v4855 = vpop.f32.mrb[0].mxu0
        %v4856 = vpop.f32.mrb[0].mxu0
        %4857 = vdwg.mxu0
        %v4858 = vadd.f32 %v4777, %v4830
        %v4859 = vadd.f32 %v4778, %v4833
        %v4860 = vadd.f32 %v4779, %v4838
        %v4861 = vadd.f32 %v4780, %v4845
        %v4862 = vadd.f32 %v4781, %v4848
        %v4863 = vadd.f32 %v4782, %v4853
        %v4864 = vld [vmem:[#allocation7 + $0x9] sm:$0xff]
        %v4865 = vld [vmem:[#allocation7 + $0x11] sm:$0xff]
        %v4866 = vld [vmem:[#allocation7 + $0x19] sm:$0xff]
        %v4867 = vld [vmem:[#allocation7 + $0x21] sm:$0xff]
        %v4868 = vld [vmem:[#allocation7 + $0x29] sm:$0xff]
        %v4869 = vld [vmem:[#allocation7 + $0x31] sm:$0xff]
        %v4870 = vld [vmem:[#allocation7 + $0x39] sm:$0xff]
        %v4871 = vld [vmem:[#allocation7 + $0x41] sm:$0xff]
        %v4872 = vpack.c.bf16 %v4865, %v4864
        %v4873 = vpack.c.bf16 %v4867, %v4866
        %v4874 = vpack.c.bf16 %v4869, %v4868
        %v4875 = vpack.c.bf16 %v4871, %v4870
        %4876 = vmatprep.subr.bf16.mxu0 0
        %4877 = vmatpush1.bf16.msra.mxu0 %v3532
        %4878 = vmatprep.subr.bf16.mxu0 0
        %4879 = vmatpush1.bf16.msra.mxu0 %v3533
        %4880 = vmatprep.subr.bf16.mxu0 0
        %4881 = vmatpush1.bf16.msra.mxu0 %v3534
        %4882 = vmatprep.subr.bf16.mxu0 0
        %4883 = vmatpush1.bf16.msra.mxu0 %v3535
        %4884 = vmatprep.subr.bf16.mxu0 0
        %4885 = vmatpush1.bf16.msra.mxu0 %v3536
        %4886 = vmatprep.subr.bf16.mxu0 0
        %4887 = vmatpush1.bf16.msra.mxu0 %v3537
        %4888 = vmatprep.subr.bf16.mxu0 0
        %4889 = vmatpush1.bf16.msra.mxu0 %v3538
        %4890 = vmatprep.subr.bf16.mxu0 0
        %4891 = vmatpush1.bf16.msra.mxu0 %v3539
        %4892 = vmatprep.subr.bf16.mxu0 0
        %4893 = vmatpush1.bf16.msra.mxu0 0
        %4894 = vmatprep.subr.bf16.mxu0 0
        %4895 = vmatpush1.bf16.msra.mxu0 0
        %4896 = vmatprep.subr.bf16.mxu0 0
        %4897 = vmatpush1.bf16.msra.mxu0 0
        %4898 = vmatprep.subr.bf16.mxu0 0
        %4899 = vmatpush1.bf16.msra.mxu0 0
        %4900 = vmatprep.subr.bf16.mxu0 0
        %4901 = vmatpush1.bf16.msra.mxu0 0
        %4902 = vmatprep.subr.bf16.mxu0 0
        %4903 = vmatpush1.bf16.msra.mxu0 0
        %4904 = vmatprep.subr.bf16.mxu0 0
        %4905 = vmatpush1.bf16.msra.mxu0 0
        %4906 = vmatprep.subr.bf16.mxu0 0
        %4907 = vmatpush1.bf16.msra.mxu0 0
        %4908 = vmatprep.mubr.bf16.mxu0 0
        %4909 = vmatmul.mubr.bf16.gmra.mrb[0].mxu0 %v4872
        %v4910 = vpop.f32.mrb[0].mxu0
        %v4911 = vadd.f32 0.0, %v4910
        %v4912 = vpop.f32.mrb[0].mxu0
        %v4913 = vpop.f32.mrb[0].mxu0
        %v4914 = vadd.f32 0.0, %v4913
        %v4915 = vpop.f32.mrb[0].mxu0
        %4916 = vmatprep.mubr.bf16.mxu0 0
        %4917 = vmatmul.mubr.bf16.gmra.mrb[0].mxu0 %v4873
        %v4918 = vpop.f32.mrb[0].mxu0
        %v4919 = vadd.f32 0.0, %v4918
        %v4920 = vpop.f32.mrb[0].mxu0
        %v4921 = vpop.f32.mrb[0].mxu0
        %v4922 = vpop.f32.mrb[0].mxu0
        %4923 = vmatprep.mubr.bf16.mxu0 0
        %4924 = vmatmul.mubr.bf16.gmra.mrb[0].mxu0 %v4874
        %v4925 = vpop.f32.mrb[0].mxu0
        %v4926 = vadd.f32 0.0, %v4925
        %v4927 = vpop.f32.mrb[0].mxu0
        %v4928 = vpop.f32.mrb[0].mxu0
        %v4929 = vadd.f32 0.0, %v4928
        %v4930 = vpop.f32.mrb[0].mxu0
        %4931 = vmatprep.mubr.bf16.mxu0 0
        %4932 = vmatmul.mubr.bf16.gmra.mrb[0].mxu0 %v4875
        %v4933 = vpop.f32.mrb[0].mxu0
        %v4934 = vadd.f32 0.0, %v4933
        %v4935 = vpop.f32.mrb[0].mxu0
        %v4936 = vpop.f32.mrb[0].mxu0
        %v4937 = vpop.f32.mrb[0].mxu0
        %4938 = vdwg.mxu0
        %v4939 = vadd.f32 %v4858, %v4911
        %v4940 = vadd.f32 %v4859, %v4914
        %v4941 = vadd.f32 %v4860, %v4919
        %v4942 = vadd.f32 %v4861, %v4926
        %v4943 = vadd.f32 %v4862, %v4929
        %v4944 = vadd.f32 %v4863, %v4934
        %v4945 = vld [vmem:[#allocation6 + $0xa] sm:$0xff]
        %v4946 = vld [vmem:[#allocation6 + $0x12] sm:$0xff]
        %v4947 = vld [vmem:[#allocation6 + $0x1a] sm:$0xff]
        %v4948 = vld [vmem:[#allocation6 + $0x22] sm:$0xff]
        %v4949 = vld [vmem:[#allocation6 + $0x2a] sm:$0xff]
        %v4950 = vld [vmem:[#allocation6 + $0x32] sm:$0xff]
        %v4951 = vld [vmem:[#allocation6 + $0x3a] sm:$0xff]
        %v4952 = vld [vmem:[#allocation6 + $0x42] sm:$0xff]
        %v4953 = vpack.c.bf16 %v4946, %v4945
        %v4954 = vpack.c.bf16 %v4948, %v4947
        %v4955 = vpack.c.bf16 %v4950, %v4949
        %v4956 = vpack.c.bf16 %v4952, %v4951
        %4957 = vmatprep.subr.bf16.mxu0 0
        %4958 = vmatpush1.bf16.msra.mxu0 %v3665
        %4959 = vmatprep.subr.bf16.mxu0 0
        %4960 = vmatpush1.bf16.msra.mxu0 %v3666
        %4961 = vmatprep.subr.bf16.mxu0 0
        %4962 = vmatpush1.bf16.msra.mxu0 %v3667
        %4963 = vmatprep.subr.bf16.mxu0 0
        %4964 = vmatpush1.bf16.msra.mxu0 %v3668
        %4965 = vmatprep.subr.bf16.mxu0 0
        %4966 = vmatpush1.bf16.msra.mxu0 %v3669
        %4967 = vmatprep.subr.bf16.mxu0 0
        %4968 = vmatpush1.bf16.msra.mxu0 %v3670
        %4969 = vmatprep.subr.bf16.mxu0 0
        %4970 = vmatpush1.bf16.msra.mxu0 %v3671
        %4971 = vmatprep.subr.bf16.mxu0 0
        %4972 = vmatpush1.bf16.msra.mxu0 %v3672
        %4973 = vmatprep.subr.bf16.mxu0 0
        %4974 = vmatpush1.bf16.msra.mxu0 0
        %4975 = vmatprep.subr.bf16.mxu0 0
        %4976 = vmatpush1.bf16.msra.mxu0 0
        %4977 = vmatprep.subr.bf16.mxu0 0
        %4978 = vmatpush1.bf16.msra.mxu0 0
        %4979 = vmatprep.subr.bf16.mxu0 0
        %4980 = vmatpush1.bf16.msra.mxu0 0
        %4981 = vmatprep.subr.bf16.mxu0 0
        %4982 = vmatpush1.bf16.msra.mxu0 0
        %4983 = vmatprep.subr.bf16.mxu0 0
        %4984 = vmatpush1.bf16.msra.mxu0 0
        %4985 = vmatprep.subr.bf16.mxu0 0
        %4986 = vmatpush1.bf16.msra.mxu0 0
        %4987 = vmatprep.subr.bf16.mxu0 0
        %4988 = vmatpush1.bf16.msra.mxu0 0
        %4989 = vmatprep.mubr.bf16.mxu0 0
        %4990 = vmatmul.mubr.bf16.gmra.mrb[0].mxu0 %v4953
        %v4991 = vpop.f32.mrb[0].mxu0
        %v4992 = vadd.f32 0.0, %v4991
        %v4993 = vpop.f32.mrb[0].mxu0
        %v4994 = vpop.f32.mrb[0].mxu0
        %v4995 = vadd.f32 0.0, %v4994
        %v4996 = vpop.f32.mrb[0].mxu0
        %4997 = vmatprep.mubr.bf16.mxu0 0
        %4998 = vmatmul.mubr.bf16.gmra.mrb[0].mxu0 %v4954
        %v4999 = vpop.f32.mrb[0].mxu0
        %v5000 = vadd.f32 0.0, %v4999
        %v5001 = vpop.f32.mrb[0].mxu0
        %v5002 = vpop.f32.mrb[0].mxu0
        %v5003 = vpop.f32.mrb[0].mxu0
        %5004 = vmatprep.mubr.bf16.mxu0 0
        %5005 = vmatmul.mubr.bf16.gmra.mrb[0].mxu0 %v4955
        %v5006 = vpop.f32.mrb[0].mxu0
        %v5007 = vadd.f32 0.0, %v5006
        %v5008 = vpop.f32.mrb[0].mxu0
        %v5009 = vpop.f32.mrb[0].mxu0
        %v5010 = vadd.f32 0.0, %v5009
        %v5011 = vpop.f32.mrb[0].mxu0
        %5012 = vmatprep.mubr.bf16.mxu0 0
        %5013 = vmatmul.mubr.bf16.gmra.mrb[0].mxu0 %v4956
        %v5014 = vpop.f32.mrb[0].mxu0
        %v5015 = vadd.f32 0.0, %v5014
        %v5016 = vpop.f32.mrb[0].mxu0
        %v5017 = vpop.f32.mrb[0].mxu0
        %v5018 = vpop.f32.mrb[0].mxu0
        %5019 = vdwg.mxu0
        %v5020 = vadd.f32 %v4939, %v4992
        %v5021 = vadd.f32 %v4940, %v4995
        %v5022 = vadd.f32 %v4941, %v5000
        %v5023 = vadd.f32 %v4942, %v5007
        %v5024 = vadd.f32 %v4943, %v5010
        %v5025 = vadd.f32 %v4944, %v5015
        %v5026 = vld [vmem:[#allocation7 + $0xa] sm:$0xff]
        %v5027 = vld [vmem:[#allocation7 + $0x12] sm:$0xff]
        %v5028 = vld [vmem:[#allocation7 + $0x1a] sm:$0xff]
        %v5029 = vld [vmem:[#allocation7 + $0x22] sm:$0xff]
        %v5030 = vld [vmem:[#allocation7 + $0x2a] sm:$0xff]
        %v5031 = vld [vmem:[#allocation7 + $0x32] sm:$0xff]
        %v5032 = vld [vmem:[#allocation7 + $0x3a] sm:$0xff]
        %v5033 = vld [vmem:[#allocation7 + $0x42] sm:$0xff]
        %v5034 = vpack.c.bf16 %v5027, %v5026
        %v5035 = vpack.c.bf16 %v5029, %v5028
        %v5036 = vpack.c.bf16 %v5031, %v5030
        %v5037 = vpack.c.bf16 %v5033, %v5032
        %5038 = vmatprep.subr.bf16.mxu0 0
        %5039 = vmatpush1.bf16.msra.mxu0 %v3798
        %5040 = vmatprep.subr.bf16.mxu0 0
        %5041 = vmatpush1.bf16.msra.mxu0 %v3799
        %5042 = vmatprep.subr.bf16.mxu0 0
        %5043 = vmatpush1.bf16.msra.mxu0 %v3800
        %5044 = vmatprep.subr.bf16.mxu0 0
        %5045 = vmatpush1.bf16.msra.mxu0 %v3801
        %5046 = vmatprep.subr.bf16.mxu0 0
        %5047 = vmatpush1.bf16.msra.mxu0 %v3802
        %5048 = vmatprep.subr.bf16.mxu0 0
        %5049 = vmatpush1.bf16.msra.mxu0 %v3803
        %5050 = vmatprep.subr.bf16.mxu0 0
        %5051 = vmatpush1.bf16.msra.mxu0 %v3804
        %5052 = vmatprep.subr.bf16.mxu0 0
        %5053 = vmatpush1.bf16.msra.mxu0 %v3805
        %5054 = vmatprep.subr.bf16.mxu0 0
        %5055 = vmatpush1.bf16.msra.mxu0 0
        %5056 = vmatprep.subr.bf16.mxu0 0
        %5057 = vmatpush1.bf16.msra.mxu0 0
        %5058 = vmatprep.subr.bf16.mxu0 0
        %5059 = vmatpush1.bf16.msra.mxu0 0
        %5060 = vmatprep.subr.bf16.mxu0 0
        %5061 = vmatpush1.bf16.msra.mxu0 0
        %5062 = vmatprep.subr.bf16.mxu0 0
        %5063 = vmatpush1.bf16.msra.mxu0 0
        %5064 = vmatprep.subr.bf16.mxu0 0
        %5065 = vmatpush1.bf16.msra.mxu0 0
        %5066 = vmatprep.subr.bf16.mxu0 0
        %5067 = vmatpush1.bf16.msra.mxu0 0
        %5068 = vmatprep.subr.bf16.mxu0 0
        %5069 = vmatpush1.bf16.msra.mxu0 0
        %5070 = vmatprep.mubr.bf16.mxu0 0
        %5071 = vmatmul.mubr.bf16.gmra.mrb[0].mxu0 %v5034
        %v5072 = vpop.f32.mrb[0].mxu0
        %v5073 = vadd.f32 0.0, %v5072
        %v5074 = vpop.f32.mrb[0].mxu0
        %v5075 = vpop.f32.mrb[0].mxu0
        %v5076 = vadd.f32 0.0, %v5075
        %v5077 = vpop.f32.mrb[0].mxu0
        %5078 = vmatprep.mubr.bf16.mxu0 0
        %5079 = vmatmul.mubr.bf16.gmra.mrb[0].mxu0 %v5035
        %v5080 = vpop.f32.mrb[0].mxu0
        %v5081 = vadd.f32 0.0, %v5080
        %v5082 = vpop.f32.mrb[0].mxu0
        %v5083 = vpop.f32.mrb[0].mxu0
        %v5084 = vpop.f32.mrb[0].mxu0
        %5085 = vmatprep.mubr.bf16.mxu0 0
        %5086 = vmatmul.mubr.bf16.gmra.mrb[0].mxu0 %v5036
        %v5087 = vpop.f32.mrb[0].mxu0
        %v5088 = vadd.f32 0.0, %v5087
        %v5089 = vpop.f32.mrb[0].mxu0
        %v5090 = vpop.f32.mrb[0].mxu0
        %v5091 = vadd.f32 0.0, %v5090
        %v5092 = vpop.f32.mrb[0].mxu0
        %5093 = vmatprep.mubr.bf16.mxu0 0
        %5094 = vmatmul.mubr.bf16.gmra.mrb[0].mxu0 %v5037
        %v5095 = vpop.f32.mrb[0].mxu0
        %v5096 = vadd.f32 0.0, %v5095
        %v5097 = vpop.f32.mrb[0].mxu0
        %v5098 = vpop.f32.mrb[0].mxu0
        %v5099 = vpop.f32.mrb[0].mxu0
        %5100 = vdwg.mxu0
        %v5101 = vadd.f32 %v5020, %v5073
        %v5102 = vadd.f32 %v5021, %v5076
        %v5103 = vadd.f32 %v5022, %v5081
        %v5104 = vadd.f32 %v5023, %v5088
        %v5105 = vadd.f32 %v5024, %v5091
        %v5106 = vadd.f32 %v5025, %v5096
        %v5107 = vld [vmem:[#allocation6 + $0xb] sm:$0xff]
        %v5108 = vld [vmem:[#allocation6 + $0x13] sm:$0xff]
        %v5109 = vld [vmem:[#allocation6 + $0x1b] sm:$0xff]
        %v5110 = vld [vmem:[#allocation6 + $0x23] sm:$0xff]
        %v5111 = vld [vmem:[#allocation6 + $0x2b] sm:$0xff]
        %v5112 = vld [vmem:[#allocation6 + $0x33] sm:$0xff]
        %v5113 = vld [vmem:[#allocation6 + $0x3b] sm:$0xff]
        %v5114 = vld [vmem:[#allocation6 + $0x43] sm:$0xff]
        %v5115 = vpack.c.bf16 %v5108, %v5107
        %v5116 = vpack.c.bf16 %v5110, %v5109
        %v5117 = vpack.c.bf16 %v5112, %v5111
        %v5118 = vpack.c.bf16 %v5114, %v5113
        %5119 = vmatprep.subr.bf16.mxu0 0
        %5120 = vmatpush1.bf16.msra.mxu0 %v3931
        %5121 = vmatprep.subr.bf16.mxu0 0
        %5122 = vmatpush1.bf16.msra.mxu0 %v3932
        %5123 = vmatprep.subr.bf16.mxu0 0
        %5124 = vmatpush1.bf16.msra.mxu0 %v3933
        %5125 = vmatprep.subr.bf16.mxu0 0
        %5126 = vmatpush1.bf16.msra.mxu0 %v3934
        %5127 = vmatprep.subr.bf16.mxu0 0
        %5128 = vmatpush1.bf16.msra.mxu0 %v3935
        %5129 = vmatprep.subr.bf16.mxu0 0
        %5130 = vmatpush1.bf16.msra.mxu0 %v3936
        %5131 = vmatprep.subr.bf16.mxu0 0
        %5132 = vmatpush1.bf16.msra.mxu0 %v3937
        %5133 = vmatprep.subr.bf16.mxu0 0
        %5134 = vmatpush1.bf16.msra.mxu0 %v3938
        %5135 = vmatprep.subr.bf16.mxu0 0
        %5136 = vmatpush1.bf16.msra.mxu0 0
        %5137 = vmatprep.subr.bf16.mxu0 0
        %5138 = vmatpush1.bf16.msra.mxu0 0
        %5139 = vmatprep.subr.bf16.mxu0 0
        %5140 = vmatpush1.bf16.msra.mxu0 0
        %5141 = vmatprep.subr.bf16.mxu0 0
        %5142 = vmatpush1.bf16.msra.mxu0 0
        %5143 = vmatprep.subr.bf16.mxu0 0
        %5144 = vmatpush1.bf16.msra.mxu0 0
        %5145 = vmatprep.subr.bf16.mxu0 0
        %5146 = vmatpush1.bf16.msra.mxu0 0
        %5147 = vmatprep.subr.bf16.mxu0 0
        %5148 = vmatpush1.bf16.msra.mxu0 0
        %5149 = vmatprep.subr.bf16.mxu0 0
        %5150 = vmatpush1.bf16.msra.mxu0 0
        %5151 = vmatprep.mubr.bf16.mxu0 0
        %5152 = vmatmul.mubr.bf16.gmra.mrb[0].mxu0 %v5115
        %v5153 = vpop.f32.mrb[0].mxu0
        %v5154 = vadd.f32 0.0, %v5153
        %v5155 = vpop.f32.mrb[0].mxu0
        %v5156 = vpop.f32.mrb[0].mxu0
        %v5157 = vadd.f32 0.0, %v5156
        %v5158 = vpop.f32.mrb[0].mxu0
        %5159 = vmatprep.mubr.bf16.mxu0 0
        %5160 = vmatmul.mubr.bf16.gmra.mrb[0].mxu0 %v5116
        %v5161 = vpop.f32.mrb[0].mxu0
        %v5162 = vadd.f32 0.0, %v5161
        %v5163 = vpop.f32.mrb[0].mxu0
        %v5164 = vpop.f32.mrb[0].mxu0
        %v5165 = vpop.f32.mrb[0].mxu0
        %5166 = vmatprep.mubr.bf16.mxu0 0
        %5167 = vmatmul.mubr.bf16.gmra.mrb[0].mxu0 %v5117
        %v5168 = vpop.f32.mrb[0].mxu0
        %v5169 = vadd.f32 0.0, %v5168
        %v5170 = vpop.f32.mrb[0].mxu0
        %v5171 = vpop.f32.mrb[0].mxu0
        %v5172 = vadd.f32 0.0, %v5171
        %v5173 = vpop.f32.mrb[0].mxu0
        %5174 = vmatprep.mubr.bf16.mxu0 0
        %5175 = vmatmul.mubr.bf16.gmra.mrb[0].mxu0 %v5118
        %v5176 = vpop.f32.mrb[0].mxu0
        %v5177 = vadd.f32 0.0, %v5176
        %v5178 = vpop.f32.mrb[0].mxu0
        %v5179 = vpop.f32.mrb[0].mxu0
        %v5180 = vpop.f32.mrb[0].mxu0
        %5181 = vdwg.mxu0
        %v5182 = vadd.f32 %v5101, %v5154
        %v5183 = vadd.f32 %v5102, %v5157
        %v5184 = vadd.f32 %v5103, %v5162
        %v5185 = vadd.f32 %v5104, %v5169
        %v5186 = vadd.f32 %v5105, %v5172
        %v5187 = vadd.f32 %v5106, %v5177
        %v5188 = vld [vmem:[#allocation7 + $0xb] sm:$0xff]
        %v5189 = vld [vmem:[#allocation7 + $0x13] sm:$0xff]
        %v5190 = vld [vmem:[#allocation7 + $0x1b] sm:$0xff]
        %v5191 = vld [vmem:[#allocation7 + $0x23] sm:$0xff]
        %v5192 = vld [vmem:[#allocation7 + $0x2b] sm:$0xff]
        %v5193 = vld [vmem:[#allocation7 + $0x33] sm:$0xff]
        %v5194 = vld [vmem:[#allocation7 + $0x3b] sm:$0xff]
        %v5195 = vld [vmem:[#allocation7 + $0x43] sm:$0xff]
        %v5196 = vpack.c.bf16 %v5189, %v5188
        %v5197 = vpack.c.bf16 %v5191, %v5190
        %v5198 = vpack.c.bf16 %v5193, %v5192
        %v5199 = vpack.c.bf16 %v5195, %v5194
        %5200 = vmatprep.subr.bf16.mxu0 0
        %5201 = vmatpush1.bf16.msra.mxu0 %v4064
        %5202 = vmatprep.subr.bf16.mxu0 0
        %5203 = vmatpush1.bf16.msra.mxu0 %v4065
        %5204 = vmatprep.subr.bf16.mxu0 0
        %5205 = vmatpush1.bf16.msra.mxu0 %v4066
        %5206 = vmatprep.subr.bf16.mxu0 0
        %5207 = vmatpush1.bf16.msra.mxu0 %v4067
        %5208 = vmatprep.subr.bf16.mxu0 0
        %5209 = vmatpush1.bf16.msra.mxu0 %v4068
        %5210 = vmatprep.subr.bf16.mxu0 0
        %5211 = vmatpush1.bf16.msra.mxu0 %v4069
        %5212 = vmatprep.subr.bf16.mxu0 0
        %5213 = vmatpush1.bf16.msra.mxu0 %v4070
        %5214 = vmatprep.subr.bf16.mxu0 0
        %5215 = vmatpush1.bf16.msra.mxu0 %v4071
        %5216 = vmatprep.subr.bf16.mxu0 0
        %5217 = vmatpush1.bf16.msra.mxu0 0
        %5218 = vmatprep.subr.bf16.mxu0 0
        %5219 = vmatpush1.bf16.msra.mxu0 0
        %5220 = vmatprep.subr.bf16.mxu0 0
        %5221 = vmatpush1.bf16.msra.mxu0 0
        %5222 = vmatprep.subr.bf16.mxu0 0
        %5223 = vmatpush1.bf16.msra.mxu0 0
        %5224 = vmatprep.subr.bf16.mxu0 0
        %5225 = vmatpush1.bf16.msra.mxu0 0
        %5226 = vmatprep.subr.bf16.mxu0 0
        %5227 = vmatpush1.bf16.msra.mxu0 0
        %5228 = vmatprep.subr.bf16.mxu0 0
        %5229 = vmatpush1.bf16.msra.mxu0 0
        %5230 = vmatprep.subr.bf16.mxu0 0
        %5231 = vmatpush1.bf16.msra.mxu0 0
        %5232 = vmatprep.mubr.bf16.mxu0 0
        %5233 = vmatmul.mubr.bf16.gmra.mrb[0].mxu0 %v5196
        %v5234 = vpop.f32.mrb[0].mxu0
        %v5235 = vadd.f32 0.0, %v5234
        %v5236 = vpop.f32.mrb[0].mxu0
        %v5237 = vpop.f32.mrb[0].mxu0
        %v5238 = vadd.f32 0.0, %v5237
        %v5239 = vpop.f32.mrb[0].mxu0
        %5240 = vmatprep.mubr.bf16.mxu0 0
        %5241 = vmatmul.mubr.bf16.gmra.mrb[0].mxu0 %v5197
        %v5242 = vpop.f32.mrb[0].mxu0
        %v5243 = vadd.f32 0.0, %v5242
        %v5244 = vpop.f32.mrb[0].mxu0
        %v5245 = vpop.f32.mrb[0].mxu0
        %v5246 = vpop.f32.mrb[0].mxu0
        %5247 = vmatprep.mubr.bf16.mxu0 0
        %5248 = vmatmul.mubr.bf16.gmra.mrb[0].mxu0 %v5198
        %v5249 = vpop.f32.mrb[0].mxu0
        %v5250 = vadd.f32 0.0, %v5249
        %v5251 = vpop.f32.mrb[0].mxu0
        %v5252 = vpop.f32.mrb[0].mxu0
        %v5253 = vadd.f32 0.0, %v5252
        %v5254 = vpop.f32.mrb[0].mxu0
        %5255 = vmatprep.mubr.bf16.mxu0 0
        %5256 = vmatmul.mubr.bf16.gmra.mrb[0].mxu0 %v5199
        %v5257 = vpop.f32.mrb[0].mxu0
        %v5258 = vadd.f32 0.0, %v5257
        %v5259 = vpop.f32.mrb[0].mxu0
        %v5260 = vpop.f32.mrb[0].mxu0
        %v5261 = vpop.f32.mrb[0].mxu0
        %5262 = vdwg.mxu0
        %v5263 = vadd.f32 %v5182, %v5235
        %v5264 = vadd.f32 %v5183, %v5238
        %v5265 = vadd.f32 %v5184, %v5243
        %v5266 = vadd.f32 %v5185, %v5250
        %v5267 = vadd.f32 %v5186, %v5253
        %v5268 = vadd.f32 %v5187, %v5258
        %v5269 = vadd.f32 %v5263, %v4142
        %v5270 = vadd.f32 %v5264, %v4142
        %v5271 = vadd.f32 %v5265, %v4142
        %v5272 = vadd.f32 %v5266, %v4142
        %v5273 = vadd.f32 %v5267, %v4142
        %v5274 = vadd.f32 %v5268, %v4142
        %5275 = vst [vmem:[%s373] sm:$0xff] %v4143
        %5276 = vst [vmem:[%s373 + $0x8] sm:$0xff] %v4144
        %5277 = vst [vmem:[%s373 + $0x10] sm:$0xff] %v5269
        %5278 = vst [vmem:[%s373 + $0x18] sm:$0xff] %v5270
        %5279 = vst [vmem:[%s373 + $0x20] sm:$0xff] %v5271
        %s5280 = scalar_lea.vmem %s373, 40 [#allocation8]
        %5281 = vst [vmem:[%s5280] sm:$0xff] %v4145
        %5282 = vst [vmem:[%s5280 + $0x8] sm:$0xff] %v4146
        %5283 = vst [vmem:[%s5280 + $0x10] sm:$0xff] %v5272
        %5284 = vst [vmem:[%s5280 + $0x18] sm:$0xff] %v5273
        %5285 = vst [vmem:[%s5280 + $0x20] sm:$0xff] %v5274
        %s5286 = sand.u32 %s252, 1
        %s5287 = scalar_lea.sflag [#allocation9], %s5286
        %s5288 = sand.u32 %s252, 1
        %s5289 = smul.addr %s5288, 80
        %s5290 = scalar_lea.vmem [#allocation8], %s5289
        // Predicated region
        $region61: #{gltb_forward.1} parent=59 // pred_check
          %p5291 = pneg %p262
        $region62: #{gltb_forward.1} parent=59 // pred_check_branch
          %5293 = sbr.rel (%p5291) target = $region64
        $region63: #{gltb_forward.1} parent=59 // pred_region
          %s5294 = smul.u32 2, %s24
          %s5296 = ssub.s32 1280, 1280
          %5297 = vsyncadd %s5287, %s5296
          %s5298 = smul.addr %s5294, 5
          %s5299 = smul.addr %s5298, 128
          %s5300 = scalar_lea.hbm %s10, %s5299
          %s5301 = sshll.u32 %s5290, 4
          %s5302 = int_to_ptr.vmem [resolvable:$true] %s5301
          %5307 = dma.vmem_to_hbm [thread:$0]  %s5302, 1280, %s5300, %s5287, 128, 128, 8
        $region64: #{gltb_forward.1} parent=59 // pred_fallthru
          _
      $region60: #{gltb_forward.1} parent=5 // pred_fallthru
        _
      %p5308 = scmp.le.s32.totalorder 2, %s19
      // Predicated region
      $region65: #{gltb_forward.1} parent=5 // pred_check
        %p5309 = pneg %p5308
      $region66: #{gltb_forward.1} parent=5 // pred_check_branch
        %5311 = sbr.rel (%p5309) target = $region68
      $region67: #{gltb_forward.1} parent=5 // pred_region
        %s5312 = ssub.s32 %s19, 2
        // Predicated region
        $region69: #{gltb_forward.1} parent=67 // pred_check
          %p5313 = pneg %p268
        $region70: #{gltb_forward.1} parent=67 // pred_check_branch
          %5315 = sbr.rel (%p5313) target = $region72
        $region71: #{gltb_forward.1} parent=67 // pred_region
          %s5316 = sand.u32 %s253, 1
          %s5317 = scalar_lea.sflag [#allocation9], %s5316
          %s5318 = sand.u32 %s253, 1
          %s5319 = smul.addr %s5318, 80
          %s5320 = scalar_lea.vmem [#allocation8], %s5319
          %5321 = dma.done %s5317, 1280
        $region72: #{gltb_forward.1} parent=67 // pred_fallthru
          _
      $region68: #{gltb_forward.1} parent=5 // pred_fallthru
        _
    $region6: #{gltb_forward.1} parent=1 // loop_footer
      %s23 = sadd.s32 1, %s19
    $region7: #{gltb_forward.1} parent=1 // loop_footer_branch
      %18 = sbr.rel target = $region3
    $region8: #{gltb_forward.1} parent=1 // loop_exit
      _
    %5322 = vsyncpa [#allocation9], 1
    %s5323 = scalar_lea.sflag [#allocation9], 1
    %5324 = vsyncpa %s5323, 1

</llo_original>
